<compile_context>
chip_gen: v7x
topology: tpu7x:2x2x1
jax: 0.10.0
libtpu: 0.0.40
codegen_flags: <defaults>
</compile_context>

<pallas_src>
import functools

import jax
import jax.numpy as jnp
import numpy as np
from jax.experimental import pallas as pl
from jax.experimental.pallas import tpu as pltpu


# ----------------------------------------------------------------------------
# Sub-pixel phase decomposition of ConvTranspose2d(kernel=4, stride=2, pad=1):
# output row 2m+py gathers padded input row m+a with kernel row-tap kh.
# ----------------------------------------------------------------------------
_A_OFF = ((0, 1), (1, 2))      # padded-row offset a, indexed [py][ai]
_KH_TAP = ((3, 1), (2, 0))     # kernel row tap kh,   indexed [py][ai]
# column-offset b -> ((px, kw), ...) pairs it feeds (same decomposition in W)
_B_TAP = {0: ((0, 3),), 1: ((0, 1), (1, 2)), 2: ((1, 0),)}


# ----------------------------------------------------------------------------
# Pallas kernels
# ----------------------------------------------------------------------------
def _sum_all(v):
    """Full reduction of a 2-D value to a (1, 1) array (safe single-axis reduces)."""
    return jnp.sum(jnp.sum(v, axis=1, keepdims=True), axis=0, keepdims=True)


def _head_kernel(hz_ref, w1_ref, w2_ref, b2_ref, g_ref, be_ref, o_ref):
    """Linear(no bias) -> Linear(+bias, conv-block-1 folded in) -> LN -> SiLU."""
    x = hz_ref[...].astype(jnp.bfloat16)                              # (tb, Din)
    h1 = jnp.dot(x, w1_ref[...], preferred_element_type=jnp.float32)  # (tb, hid)
    h2 = jnp.dot(h1.astype(jnp.bfloat16), w2_ref[...],
                 preferred_element_type=jnp.float32) + b2_ref[...]    # (tb, F1)
    mean = jnp.mean(h2, axis=-1, keepdims=True)
    var = jnp.mean((h2 - mean) ** 2, axis=-1, keepdims=True)
    y = (h2 - mean) * jax.lax.rsqrt(var + 1e-5) * g_ref[...] + be_ref[...]
    o_ref[...] = (y * jax.nn.sigmoid(y)).astype(o_ref.dtype)


def _phase_matmuls(x, w_ref, H, W, Ci, Nout):
    """x: (H+2, (W+2)*Ci) f32 padded NHWC-flat input.
    Returns [Y_py0, Y_py1], each (H, Nout) f32, Nout = 2W*Co (px interleaved)."""
    ys = []
    for py in range(2):
        acc = jnp.zeros((H, Nout), jnp.float32)
        for ai in range(2):
            a = _A_OFF[py][ai]
            for b in range(3):
                sl = x[a:a + H, b * Ci:b * Ci + W * Ci].astype(jnp.bfloat16)
                acc = acc + jnp.dot(sl, w_ref[py * 6 + ai * 3 + b],
                                    preferred_element_type=jnp.float32)
        ys.append(acc)
    return ys


def _conv_ln_silu_kernel(x_ref, w_ref, g_ref, be_ref, o_ref, *, H, W, Ci, Nout):
    """Fused ConvTranspose2d(k4,s2,p1) + LayerNorm([C,2H,2W]) + SiLU, per sample."""
    ys = _phase_matmuls(x_ref[0], w_ref, H, W, Ci, Nout)
    n = float(2 * H * Nout)
    mean = (_sum_all(ys[0]) + _sum_all(ys[1])) / n
    var = (_sum_all((ys[0] - mean) ** 2) + _sum_all((ys[1] - mean) ** 2)) / n
    inv = jax.lax.rsqrt(var + 1e-5)
    for py in range(2):
        y = (ys[py] - mean) * inv * g_ref[py] + be_ref[py]
        o_ref[0, py] = (y * jax.nn.sigmoid(y)).astype(o_ref.dtype)


def _conv_bias_kernel(x_ref, w_ref, bias_ref, o_ref, *, H, W, Ci, Nout):
    """Final ConvTranspose2d(k4,s2,p1) + bias (no norm / activation)."""
    ys = _phase_matmuls(x_ref[0], w_ref, H, W, Ci, Nout)
    for py in range(2):
        o_ref[0, py] = (ys[py] + bias_ref[...]).astype(o_ref.dtype)


# ----------------------------------------------------------------------------
# pallas_call wrappers
# ----------------------------------------------------------------------------
def _head_call(hz, w1, w2c, b2c, g1, be1):
    B, din = hz.shape
    hid = w1.shape[1]
    f1 = w2c.shape[1]
    tb = next((t for t in (512, 256, 128, 64, 32, 16, 8) if B % t == 0), B)
    return pl.pallas_call(
        _head_kernel,
        out_shape=jax.ShapeDtypeStruct((B, f1), jnp.float32),
        grid_spec=pltpu.PrefetchScalarGridSpec(
            num_scalar_prefetch=0,
            grid=(B // tb,),
            in_specs=[
                pl.BlockSpec((tb, din), lambda i: (i, 0)),
                pl.BlockSpec((din, hid), lambda i: (0, 0)),
                pl.BlockSpec((hid, f1), lambda i: (0, 0)),
                pl.BlockSpec((1, f1), lambda i: (0, 0)),
                pl.BlockSpec((1, f1), lambda i: (0, 0)),
                pl.BlockSpec((1, f1), lambda i: (0, 0)),
            ],
            out_specs=pl.BlockSpec((tb, f1), lambda i: (i, 0)),
        ),
        compiler_params=pltpu.CompilerParams(dimension_semantics=("parallel",)),
    )(hz, w1, w2c, b2c, g1, be1)


def _conv_block_call(x_pad, w_stack, g, be, *, H, W, Ci, Nout):
    B = x_pad.shape[0]
    kern = functools.partial(_conv_ln_silu_kernel, H=H, W=W, Ci=Ci, Nout=Nout)
    return pl.pallas_call(
        kern,
        out_shape=jax.ShapeDtypeStruct((B, 2, H, Nout), jnp.float32),
        grid_spec=pltpu.PrefetchScalarGridSpec(
            num_scalar_prefetch=0,
            grid=(B,),
            in_specs=[
                pl.BlockSpec((1, H + 2, (W + 2) * Ci), lambda i: (i, 0, 0)),
                pl.BlockSpec((12, W * Ci, Nout), lambda i: (0, 0, 0)),
                pl.BlockSpec((2, H, Nout), lambda i: (0, 0, 0)),
                pl.BlockSpec((2, H, Nout), lambda i: (0, 0, 0)),
            ],
            out_specs=pl.BlockSpec((1, 2, H, Nout), lambda i: (i, 0, 0, 0)),
        ),
        compiler_params=pltpu.CompilerParams(dimension_semantics=("parallel",)),
    )(x_pad, w_stack, g, be)


def _conv_final_call(x_pad, w_stack, bias, *, H, W, Ci, Nout):
    B = x_pad.shape[0]
    kern = functools.partial(_conv_bias_kernel, H=H, W=W, Ci=Ci, Nout=Nout)
    return pl.pallas_call(
        kern,
        out_shape=jax.ShapeDtypeStruct((B, 2, H, Nout), jnp.float32),
        grid_spec=pltpu.PrefetchScalarGridSpec(
            num_scalar_prefetch=0,
            grid=(B,),
            in_specs=[
                pl.BlockSpec((1, H + 2, (W + 2) * Ci), lambda i: (i, 0, 0)),
                pl.BlockSpec((12, W * Ci, Nout), lambda i: (0, 0, 0)),
                pl.BlockSpec((1, Nout), lambda i: (0, 0)),
            ],
            out_specs=pl.BlockSpec((1, 2, H, Nout), lambda i: (i, 0, 0, 0)),
        ),
        compiler_params=pltpu.CompilerParams(dimension_semantics=("parallel",)),
    )(x_pad, w_stack, bias)


# ----------------------------------------------------------------------------
# Parameters: raw init + one-time repacking (hoisted out of the forward pass)
# ----------------------------------------------------------------------------
def init_decoder_params(key, out_channels=3, cnn_multi=8, mlp_hidden=64,
                        h_size=32, z_size=8, z_cls=8):
    cm = cnn_multi
    in_dim = z_cls * z_size + h_size
    ks = jax.random.split(key, 6)

    def w(k, shape, scale=0.02):
        return (scale * jax.random.normal(k, shape)).astype(jnp.float32)

    return {
        "w1": w(ks[0], (in_dim, mlp_hidden)),                 # Linear, bias=False
        "w2": w(ks[1], (mlp_hidden, 4 * 4 * cm * 8)),         # Linear, bias=True
        "b2": jnp.zeros((4 * 4 * cm * 8,), jnp.float32),
        # DecoderConvBlock weights, torch ConvTranspose2d layout (Ci, Co, 4, 4)
        "dc1_w": w(ks[2], (cm * 8, cm * 4, 4, 4)),
        "dc1_g": jnp.ones((cm * 4, 8, 8), jnp.float32),
        "dc1_b": jnp.zeros((cm * 4, 8, 8), jnp.float32),
        "dc2_w": w(ks[3], (cm * 4, cm * 2, 4, 4)),
        "dc2_g": jnp.ones((cm * 2, 16, 16), jnp.float32),
        "dc2_b": jnp.zeros((cm * 2, 16, 16), jnp.float32),
        "dc3_w": w(ks[4], (cm * 2, cm, 4, 4)),
        "dc3_g": jnp.ones((cm, 32, 32), jnp.float32),
        "dc3_b": jnp.zeros((cm, 32, 32), jnp.float32),
        "dc4_w": w(ks[5], (cm, out_channels, 4, 4)),          # bias=True block
        "dc4_b": jnp.zeros((out_channels,), jnp.float32),
    }


def _fold_convT_dense(w, h_in, w_in):
    """Dense matrix of ConvTranspose2d(k4,s2,p1): rows = NCHW-flat input
    (Unflatten order), cols = NHWC-flat output."""
    w = np.asarray(w, np.float32)
    ci, co = w.shape[0], w.shape[1]
    ho, wo = 2 * h_in, 2 * w_in
    m = np.zeros((ci * h_in * w_in, ho * wo * co), np.float32)
    for iy in range(h_in):
        for ix in range(w_in):
            rows = np.arange(ci) * (h_in * w_in) + iy * w_in + ix
            for kh in range(4):
                oy = 2 * iy - 1 + kh
                if not 0 <= oy < ho:
                    continue
                for kw in range(4):
                    ox = 2 * ix - 1 + kw
                    if not 0 <= ox < wo:
                        continue
                    cols = (oy * wo + ox) * co + np.arange(co)
                    m[np.ix_(rows, cols)] += w[:, :, kh, kw]
    return m


def _fold_convT_rowphase(w, w_in):
    """(12, W*Ci, 2W*Co) block-diagonal matrices: entry [py*6+ai*3+b] maps the
    (row-offset a=_A_OFF[py][ai], col-offset b) shifted slice of the padded
    NHWC input, flattened (w, c), to output row-phase py flattened (2n+px, co).
    The sub-pixel column interleave is baked into the column layout."""
    w = np.asarray(w, np.float32)
    ci, co = w.shape[0], w.shape[1]
    mats = np.zeros((12, w_in * ci, 2 * w_in * co), np.float32)
    for py in range(2):
        for ai in range(2):
            kh = _KH_TAP[py][ai]
            for b in range(3):
                idx = py * 6 + ai * 3 + b
                for px, kw in _B_TAP[b]:
                    sub = w[:, :, kh, kw]                       # (Ci, Co)
                    for n in range(w_in):
                        r0, c0 = n * ci, (2 * n + px) * co
                        mats[idx, r0:r0 + ci, c0:c0 + co] += sub
    return mats


def _pack_ln_rowphase(p):
    """(C, 2H, 2W) torch LayerNorm param -> (2, H, 2W*C) row-phase layout."""
    p = np.asarray(p, np.float32)
    c, ho, wo = p.shape
    q = p.transpose(1, 2, 0).reshape(ho // 2, 2, wo * c)        # [m, py, w*C+c]
    return np.ascontiguousarray(q.transpose(1, 0, 2))           # (2, H, 2W*C)


def pack_decoder_params(raw, cnn_multi=8, out_channels=3):
    """One-time weight repacking (run once, outside jit)."""
    # Fold conv block 1 (a pure linear map) into the second Linear.
    m1 = _fold_convT_dense(raw["dc1_w"], 4, 4)
    w2c = np.asarray(raw["w2"], np.float32) @ m1
    b2c = np.asarray(raw["b2"], np.float32) @ m1

    def ln_flat(p):   # (C, 8, 8) -> (1, 8*8*C) NHWC-flat
        p = np.asarray(p, np.float32)
        return p.transpose(1, 2, 0).reshape(1, -1)

    return {
        "w1": jnp.asarray(raw["w1"], jnp.bfloat16),
        "w2c": jnp.asarray(w2c, jnp.bfloat16),
        "b2c": jnp.asarray(b2c.reshape(1, -1), jnp.float32),
        "g1": jnp.asarray(ln_flat(raw["dc1_g"])),
        "be1": jnp.asarray(ln_flat(raw["dc1_b"])),
        "wc2": jnp.asarray(_fold_convT_rowphase(raw["dc2_w"], 8), jnp.bfloat16),
        "g2": jnp.asarray(_pack_ln_rowphase(raw["dc2_g"])),
        "be2": jnp.asarray(_pack_ln_rowphase(raw["dc2_b"])),
        "wc3": jnp.asarray(_fold_convT_rowphase(raw["dc3_w"], 16), jnp.bfloat16),
        "g3": jnp.asarray(_pack_ln_rowphase(raw["dc3_g"])),
        "be3": jnp.asarray(_pack_ln_rowphase(raw["dc3_b"])),
        "wc4": jnp.asarray(_fold_convT_rowphase(raw["dc4_w"], 32), jnp.bfloat16),
        "b4": jnp.asarray(np.tile(np.asarray(raw["dc4_b"], np.float32), 64)
                          .reshape(1, -1)),
    }


# ----------------------------------------------------------------------------
# Forward
# ----------------------------------------------------------------------------
@functools.partial(jax.jit, static_argnames=("cnn_multi", "out_channels"))
def decoder_forward(params, h, z, cnn_multi=8, out_channels=3):
    """h: (..., h_size), z: (..., z_size, z_cls). Returns ImageMSEDist mode,
    shape (..., out_channels, 64, 64)."""
    cm = cnn_multi
    c2, c3, c4, c5 = cm * 4, cm * 2, cm, out_channels
    lead = h.shape[:-1]

    z_flat = z.reshape(z.shape[:-2] + (-1,))
    hz = jnp.concatenate([h, z_flat], axis=-1)
    hz = hz.reshape(-1, hz.shape[-1])
    B = hz.shape[0]

    # 1) MLP head + folded conv block 1 + LayerNorm + SiLU  -> (B, 8*8*c2)
    y = _head_call(hz, params["w1"], params["w2c"], params["b2c"],
                   params["g1"], params["be1"])

    # 2) conv block 2: 8x8xc2 -> 16x16xc3
    xp = jnp.pad(y.reshape(B, 8, 8 * c2), ((0, 0), (1, 1), (c2, c2)))
    y = _conv_block_call(xp, params["wc2"], params["g2"], params["be2"],
                         H=8, W=8, Ci=c2, Nout=16 * c3)

    # 3) conv block 3: 16x16xc3 -> 32x32xc4  (row-phase interleave + pad in XLA)
    y = y.transpose(0, 2, 1, 3).reshape(B, 16, 16 * c3)
    xp = jnp.pad(y, ((0, 0), (1, 1), (c3, c3)))
    y = _conv_block_call(xp, params["wc3"], params["g3"], params["be3"],
                         H=16, W=16, Ci=c3, Nout=32 * c4)

    # 4) final conv block: 32x32xc4 -> 64x64xc5 (+bias, no norm / activation)
    y = y.transpose(0, 2, 1, 3).reshape(B, 32, 32 * c4)
    xp = jnp.pad(y, ((0, 0), (1, 1), (c4, c4)))
    y = _conv_final_call(xp, params["wc4"], params["b4"],
                         H=32, W=32, Ci=c4, Nout=64 * c5)

    # (B, 2, 32, 64*c5) -> NCHW (B, c5, 64, 64); restore leading (T, N) dims.
    img = (y.reshape(B, 2, 32, 64, c5)
             .transpose(0, 4, 2, 1, 3)
             .reshape(B, c5, 64, 64))
    return img.reshape(lead + (c5, 64, 64))


if __name__ == "__main__":
    key = jax.random.PRNGKey(0)
    kp, kh, kz = jax.random.split(key, 3)

    # small config: out_channels=3, cnn_multi=8, mlp_hidden=64,
    #               h_size=32, z_size=8, z_cls=8
    raw = init_decoder_params(kp)
    params = pack_decoder_params(raw)    # hoisted one-time weight repacking

    T, N = 2, 2
    h = jax.random.normal(kh, (T, N, 32), jnp.float32)
    z = jax.random.normal(kz, (T, N, 8, 8), jnp.float32)   # (z_size, z_cls)

    out = decoder_forward(params, h, z, cnn_multi=8, out_channels=3)
    jax.block_until_ready(out)
    assert out.shape == (T, N, 3, 64, 64), out.shape
    assert out.dtype == jnp.float32
    print("KERNEL_OK")
</pallas_src>

<mosaic_0001>
module attributes {stable_mosaic.version = 11 : i64} {
  func.func @_head_kernel(%arg0: i32, %arg1: memref<4x96xf32, #tpu.memory_space<vmem>>, %arg2: memref<96x64xbf16, #tpu.memory_space<vmem>>, %arg3: memref<64x2048xbf16, #tpu.memory_space<vmem>>, %arg4: memref<1x2048xf32, #tpu.memory_space<vmem>>, %arg5: memref<1x2048xf32, #tpu.memory_space<vmem>>, %arg6: memref<1x2048xf32, #tpu.memory_space<vmem>>, %arg7: memref<4x2048xf32, #tpu.memory_space<vmem>>) attributes {dimension_semantics = [#tpu.dimension_semantics<parallel>], iteration_bounds = array<i64: 1>, scalar_prefetch = 0 : i64, scratch_operands = 0 : i64, tpu.core_type = #tpu.core_type<tc>, window_params = [{transform_indices = @transform_0, window_bounds = array<i64: 4, 96>}, {pipeline_mode = #tpu.pipeline_mode<synchronous>, transform_indices = @transform_1, window_bounds = array<i64: 96, 64>}, {pipeline_mode = #tpu.pipeline_mode<synchronous>, transform_indices = @transform_2, window_bounds = array<i64: 64, 2048>}, {pipeline_mode = #tpu.pipeline_mode<synchronous>, transform_indices = @transform_3, window_bounds = array<i64: 1, 2048>}, {pipeline_mode = #tpu.pipeline_mode<synchronous>, transform_indices = @transform_4, window_bounds = array<i64: 1, 2048>}, {pipeline_mode = #tpu.pipeline_mode<synchronous>, transform_indices = @transform_5, window_bounds = array<i64: 1, 2048>}, {transform_indices = @transform_6, window_bounds = array<i64: 4, 2048>}]} {
    %c0 = arith.constant 0 : index
    %c0_0 = arith.constant 0 : index
    %0 = vector.load %arg1[%c0, %c0_0] : memref<4x96xf32, #tpu.memory_space<vmem>>, vector<4x96xf32>
    %1 = arith.truncf %0 : vector<4x96xf32> to vector<4x96xbf16>
    %c0_1 = arith.constant 0 : index
    %c0_2 = arith.constant 0 : index
    %2 = vector.load %arg2[%c0_1, %c0_2] : memref<96x64xbf16, #tpu.memory_space<vmem>>, vector<96x64xbf16>
    %cst = arith.constant dense<0.000000e+00> : vector<4x64xf32>
    %3 = tpu.matmul %1, %2, %cst {dimension_numbers = #tpu.dot_dimension_numbers<[1], [0], [0], [1], [0, 0, 1, 1], [], []>} : vector<4x96xbf16>, vector<96x64xbf16>, vector<4x64xf32> -> vector<4x64xf32>
    %4 = arith.truncf %3 : vector<4x64xf32> to vector<4x64xbf16>
    %c0_3 = arith.constant 0 : index
    %c0_4 = arith.constant 0 : index
    %5 = vector.load %arg3[%c0_3, %c0_4] : memref<64x2048xbf16, #tpu.memory_space<vmem>>, vector<64x2048xbf16>
    %cst_5 = arith.constant dense<0.000000e+00> : vector<4x2048xf32>
    %6 = tpu.matmul %4, %5, %cst_5 {dimension_numbers = #tpu.dot_dimension_numbers<[1], [0], [0], [1], [0, 0, 1, 1], [], []>} : vector<4x64xbf16>, vector<64x2048xbf16>, vector<4x2048xf32> -> vector<4x2048xf32>
    %c0_6 = arith.constant 0 : index
    %c0_7 = arith.constant 0 : index
    %7 = vector.load %arg4[%c0_6, %c0_7] : memref<1x2048xf32, #tpu.memory_space<vmem>>, vector<1x2048xf32>
    %8 = vector.broadcast %7 : vector<1x2048xf32> to vector<4x2048xf32>
    %9 = arith.addf %6, %8 : vector<4x2048xf32>
    %cst_8 = arith.constant dense<0.000000e+00> : vector<4xf32>
    %10 = vector.multi_reduction <add>, %9, %cst_8 [1] : vector<4x2048xf32> to vector<4xf32>
    %11 = vector.shape_cast %10 : vector<4xf32> to vector<4x1xf32>
    %cst_9 = arith.constant 2.048000e+03 : f32
    %12 = vector.broadcast %cst_9 : f32 to vector<4x1xf32>
    %13 = arith.divf %11, %12 : vector<4x1xf32>
    %14 = vector.broadcast %13 : vector<4x1xf32> to vector<4x2048xf32>
    %15 = arith.subf %9, %14 : vector<4x2048xf32>
    %16 = arith.mulf %15, %15 : vector<4x2048xf32>
    %cst_10 = arith.constant dense<0.000000e+00> : vector<4xf32>
    %17 = vector.multi_reduction <add>, %16, %cst_10 [1] : vector<4x2048xf32> to vector<4xf32>
    %18 = vector.shape_cast %17 : vector<4xf32> to vector<4x1xf32>
    %cst_11 = arith.constant 2.048000e+03 : f32
    %19 = vector.broadcast %cst_11 : f32 to vector<4x1xf32>
    %20 = arith.divf %18, %19 : vector<4x1xf32>
    %21 = vector.broadcast %13 : vector<4x1xf32> to vector<4x2048xf32>
    %22 = arith.subf %9, %21 : vector<4x2048xf32>
    %cst_12 = arith.constant 9.99999974E-6 : f32
    %23 = vector.broadcast %cst_12 : f32 to vector<4x1xf32>
    %24 = arith.addf %20, %23 : vector<4x1xf32>
    %25 = math.rsqrt %24 : vector<4x1xf32>
    %26 = vector.broadcast %25 : vector<4x1xf32> to vector<4x2048xf32>
    %27 = arith.mulf %22, %26 : vector<4x2048xf32>
    %c0_13 = arith.constant 0 : index
    %c0_14 = arith.constant 0 : index
    %28 = vector.load %arg5[%c0_13, %c0_14] : memref<1x2048xf32, #tpu.memory_space<vmem>>, vector<1x2048xf32>
    %29 = vector.broadcast %28 : vector<1x2048xf32> to vector<4x2048xf32>
    %30 = arith.mulf %27, %29 : vector<4x2048xf32>
    %c0_15 = arith.constant 0 : index
    %c0_16 = arith.constant 0 : index
    %31 = vector.load %arg6[%c0_15, %c0_16] : memref<1x2048xf32, #tpu.memory_space<vmem>>, vector<1x2048xf32>
    %32 = vector.broadcast %31 : vector<1x2048xf32> to vector<4x2048xf32>
    %33 = arith.addf %30, %32 : vector<4x2048xf32>
    %34 = arith.negf %33 : vector<4x2048xf32>
    %35 = math.exp %34 : vector<4x2048xf32>
    %cst_17 = arith.constant 1.000000e+00 : f32
    %36 = vector.broadcast %cst_17 : f32 to vector<4x2048xf32>
    %37 = arith.addf %36, %35 : vector<4x2048xf32>
    %38 = arith.divf %36, %37 : vector<4x2048xf32>
    %39 = arith.mulf %33, %38 : vector<4x2048xf32>
    %c0_18 = arith.constant 0 : index
    %c0_19 = arith.constant 0 : index
    %40 = vector.load %arg7[%c0_18, %c0_19] : memref<4x2048xf32, #tpu.memory_space<vmem>>, vector<4x2048xf32>
    tpu.vector_store %arg7[%c0_18, %c0_19], %39 {strides = array<i32>} : memref<4x2048xf32, #tpu.memory_space<vmem>>, vector<4x2048xf32>,
    return
  }
  func.func @transform_0(%arg0: i32) -> (i32, i32) {
    %c0_i32 = arith.constant 0 : i32
    %c0_i32_0 = arith.constant 0 : i32
    return %arg0, %c0_i32 : i32, i32
  }
  func.func @transform_1(%arg0: i32) -> (i32, i32) {
    %c0_i32 = arith.constant 0 : i32
    %c0_i32_0 = arith.constant 0 : i32
    %c0_i32_1 = arith.constant 0 : i32
    return %c0_i32, %c0_i32_0 : i32, i32
  }
  func.func @transform_2(%arg0: i32) -> (i32, i32) {
    %c0_i32 = arith.constant 0 : i32
    %c0_i32_0 = arith.constant 0 : i32
    %c0_i32_1 = arith.constant 0 : i32
    return %c0_i32, %c0_i32_0 : i32, i32
  }
  func.func @transform_3(%arg0: i32) -> (i32, i32) {
    %c0_i32 = arith.constant 0 : i32
    %c0_i32_0 = arith.constant 0 : i32
    %c0_i32_1 = arith.constant 0 : i32
    return %c0_i32, %c0_i32_0 : i32, i32
  }
  func.func @transform_4(%arg0: i32) -> (i32, i32) {
    %c0_i32 = arith.constant 0 : i32
    %c0_i32_0 = arith.constant 0 : i32
    %c0_i32_1 = arith.constant 0 : i32
    return %c0_i32, %c0_i32_0 : i32, i32
  }
  func.func @transform_5(%arg0: i32) -> (i32, i32) {
    %c0_i32 = arith.constant 0 : i32
    %c0_i32_0 = arith.constant 0 : i32
    %c0_i32_1 = arith.constant 0 : i32
    return %c0_i32, %c0_i32_0 : i32, i32
  }
  func.func @transform_6(%arg0: i32) -> (i32, i32) {
    %c0_i32 = arith.constant 0 : i32
    %c0_i32_0 = arith.constant 0 : i32
    return %arg0, %c0_i32 : i32, i32
  }
}

module attributes {stable_mosaic.version = 11 : i64} {
  func.func @_conv_ln_silu_kernel(%arg0: i32, %arg1: memref<1x10x320xf32, #tpu.memory_space<vmem>>, %arg2: memref<12x256x256xbf16, #tpu.memory_space<vmem>>, %arg3: memref<2x8x256xf32, #tpu.memory_space<vmem>>, %arg4: memref<2x8x256xf32, #tpu.memory_space<vmem>>, %arg5: memref<1x2x8x256xf32, #tpu.memory_space<vmem>>) attributes {dimension_semantics = [#tpu.dimension_semantics<parallel>], iteration_bounds = array<i64: 4>, scalar_prefetch = 0 : i64, scratch_operands = 0 : i64, tpu.core_type = #tpu.core_type<tc>, window_params = [{transform_indices = @transform_0, window_bounds = array<i64: 1, 10, 320>}, {pipeline_mode = #tpu.pipeline_mode<synchronous>, transform_indices = @transform_1, window_bounds = array<i64: 12, 256, 256>}, {pipeline_mode = #tpu.pipeline_mode<synchronous>, transform_indices = @transform_2, window_bounds = array<i64: 2, 8, 256>}, {pipeline_mode = #tpu.pipeline_mode<synchronous>, transform_indices = @transform_3, window_bounds = array<i64: 2, 8, 256>}, {transform_indices = @transform_4, window_bounds = array<i64: 1, 2, 8, 256>}]} {
    %c0 = arith.constant 0 : index
    %c0_0 = arith.constant 0 : index
    %c0_1 = arith.constant 0 : index
    %0 = vector.load %arg1[%c0, %c0_0, %c0_1] : memref<1x10x320xf32, #tpu.memory_space<vmem>>, vector<1x10x320xf32>
    %1 = vector.shape_cast %0 : vector<1x10x320xf32> to vector<10x320xf32>
    %cst = arith.constant 0.000000e+00 : f32
    %2 = vector.broadcast %cst : f32 to vector<8x256xf32>
    %3 = vector.extract_strided_slice %1 {offsets = [0, 0], sizes = [8, 256], strides = [1, 1]} : vector<10x320xf32> to vector<8x256xf32>
    %4 = arith.truncf %3 : vector<8x256xf32> to vector<8x256xbf16>
    %c0_2 = arith.constant 0 : index
    %c0_3 = arith.constant 0 : index
    %c0_4 = arith.constant 0 : index
    %5 = vector.load %arg2[%c0_2, %c0_3, %c0_4] : memref<12x256x256xbf16, #tpu.memory_space<vmem>>, vector<1x256x256xbf16>
    %6 = vector.shape_cast %5 : vector<1x256x256xbf16> to vector<256x256xbf16>
    %cst_5 = arith.constant dense<0.000000e+00> : vector<8x256xf32>
    %7 = tpu.matmul %4, %6, %cst_5 {dimension_numbers = #tpu.dot_dimension_numbers<[1], [0], [0], [1], [0, 0, 1, 1], [], []>} : vector<8x256xbf16>, vector<256x256xbf16>, vector<8x256xf32> -> vector<8x256xf32>
    %8 = arith.addf %2, %7 : vector<8x256xf32>
    %9 = vector.extract_strided_slice %1 {offsets = [0, 32], sizes = [8, 256], strides = [1, 1]} : vector<10x320xf32> to vector<8x256xf32>
    %10 = arith.truncf %9 : vector<8x256xf32> to vector<8x256xbf16>
    %c1 = arith.constant 1 : index
    %c0_6 = arith.constant 0 : index
    %c0_7 = arith.constant 0 : index
    %11 = vector.load %arg2[%c1, %c0_6, %c0_7] : memref<12x256x256xbf16, #tpu.memory_space<vmem>>, vector<1x256x256xbf16>
    %12 = vector.shape_cast %11 : vector<1x256x256xbf16> to vector<256x256xbf16>
    %cst_8 = arith.constant dense<0.000000e+00> : vector<8x256xf32>
    %13 = tpu.matmul %10, %12, %cst_8 {dimension_numbers = #tpu.dot_dimension_numbers<[1], [0], [0], [1], [0, 0, 1, 1], [], []>} : vector<8x256xbf16>, vector<256x256xbf16>, vector<8x256xf32> -> vector<8x256xf32>
    %14 = arith.addf %8, %13 : vector<8x256xf32>
    %15 = vector.extract_strided_slice %1 {offsets = [0, 64], sizes = [8, 256], strides = [1, 1]} : vector<10x320xf32> to vector<8x256xf32>
    %16 = arith.truncf %15 : vector<8x256xf32> to vector<8x256xbf16>
    %c2 = arith.constant 2 : index
    %c0_9 = arith.constant 0 : index
    %c0_10 = arith.constant 0 : index
    %17 = vector.load %arg2[%c2, %c0_9, %c0_10] : memref<12x256x256xbf16, #tpu.memory_space<vmem>>, vector<1x256x256xbf16>
    %18 = vector.shape_cast %17 : vector<1x256x256xbf16> to vector<256x256xbf16>
    %cst_11 = arith.constant dense<0.000000e+00> : vector<8x256xf32>
    %19 = tpu.matmul %16, %18, %cst_11 {dimension_numbers = #tpu.dot_dimension_numbers<[1], [0], [0], [1], [0, 0, 1, 1], [], []>} : vector<8x256xbf16>, vector<256x256xbf16>, vector<8x256xf32> -> vector<8x256xf32>
    %20 = arith.addf %14, %19 : vector<8x256xf32>
    %21 = vector.extract_strided_slice %1 {offsets = [1, 0], sizes = [8, 256], strides = [1, 1]} : vector<10x320xf32> to vector<8x256xf32>
    %22 = arith.truncf %21 : vector<8x256xf32> to vector<8x256xbf16>
    %c3 = arith.constant 3 : index
    %c0_12 = arith.constant 0 : index
    %c0_13 = arith.constant 0 : index
    %23 = vector.load %arg2[%c3, %c0_12, %c0_13] : memref<12x256x256xbf16, #tpu.memory_space<vmem>>, vector<1x256x256xbf16>
    %24 = vector.shape_cast %23 : vector<1x256x256xbf16> to vector<256x256xbf16>
    %cst_14 = arith.constant dense<0.000000e+00> : vector<8x256xf32>
    %25 = tpu.matmul %22, %24, %cst_14 {dimension_numbers = #tpu.dot_dimension_numbers<[1], [0], [0], [1], [0, 0, 1, 1], [], []>} : vector<8x256xbf16>, vector<256x256xbf16>, vector<8x256xf32> -> vector<8x256xf32>
    %26 = arith.addf %20, %25 : vector<8x256xf32>
    %27 = vector.extract_strided_slice %1 {offsets = [1, 32], sizes = [8, 256], strides = [1, 1]} : vector<10x320xf32> to vector<8x256xf32>
    %28 = arith.truncf %27 : vector<8x256xf32> to vector<8x256xbf16>
    %c4 = arith.constant 4 : index
    %c0_15 = arith.constant 0 : index
    %c0_16 = arith.constant 0 : index
    %29 = vector.load %arg2[%c4, %c0_15, %c0_16] : memref<12x256x256xbf16, #tpu.memory_space<vmem>>, vector<1x256x256xbf16>
    %30 = vector.shape_cast %29 : vector<1x256x256xbf16> to vector<256x256xbf16>
    %cst_17 = arith.constant dense<0.000000e+00> : vector<8x256xf32>
    %31 = tpu.matmul %28, %30, %cst_17 {dimension_numbers = #tpu.dot_dimension_numbers<[1], [0], [0], [1], [0, 0, 1, 1], [], []>} : vector<8x256xbf16>, vector<256x256xbf16>, vector<8x256xf32> -> vector<8x256xf32>
    %32 = arith.addf %26, %31 : vector<8x256xf32>
    %33 = vector.extract_strided_slice %1 {offsets = [1, 64], sizes = [8, 256], strides = [1, 1]} : vector<10x320xf32> to vector<8x256xf32>
    %34 = arith.truncf %33 : vector<8x256xf32> to vector<8x256xbf16>
    %c5 = arith.constant 5 : index
    %c0_18 = arith.constant 0 : index
    %c0_19 = arith.constant 0 : index
    %35 = vector.load %arg2[%c5, %c0_18, %c0_19] : memref<12x256x256xbf16, #tpu.memory_space<vmem>>, vector<1x256x256xbf16>
    %36 = vector.shape_cast %35 : vector<1x256x256xbf16> to vector<256x256xbf16>
    %cst_20 = arith.constant dense<0.000000e+00> : vector<8x256xf32>
    %37 = tpu.matmul %34, %36, %cst_20 {dimension_numbers = #tpu.dot_dimension_numbers<[1], [0], [0], [1], [0, 0, 1, 1], [], []>} : vector<8x256xbf16>, vector<256x256xbf16>, vector<8x256xf32> -> vector<8x256xf32>
    %38 = arith.addf %32, %37 : vector<8x256xf32>
    %cst_21 = arith.constant 0.000000e+00 : f32
    %39 = vector.broadcast %cst_21 : f32 to vector<8x256xf32>
    %40 = vector.extract_strided_slice %1 {offsets = [1, 0], sizes = [8, 256], strides = [1, 1]} : vector<10x320xf32> to vector<8x256xf32>
    %41 = arith.truncf %40 : vector<8x256xf32> to vector<8x256xbf16>
    %c6 = arith.constant 6 : index
    %c0_22 = arith.constant 0 : index
    %c0_23 = arith.constant 0 : index
    %42 = vector.load %arg2[%c6, %c0_22, %c0_23] : memref<12x256x256xbf16, #tpu.memory_space<vmem>>, vector<1x256x256xbf16>
    %43 = vector.shape_cast %42 : vector<1x256x256xbf16> to vector<256x256xbf16>
    %cst_24 = arith.constant dense<0.000000e+00> : vector<8x256xf32>
    %44 = tpu.matmul %41, %43, %cst_24 {dimension_numbers = #tpu.dot_dimension_numbers<[1], [0], [0], [1], [0, 0, 1, 1], [], []>} : vector<8x256xbf16>, vector<256x256xbf16>, vector<8x256xf32> -> vector<8x256xf32>
    %45 = arith.addf %39, %44 : vector<8x256xf32>
    %46 = vector.extract_strided_slice %1 {offsets = [1, 32], sizes = [8, 256], strides = [1, 1]} : vector<10x320xf32> to vector<8x256xf32>
    %47 = arith.truncf %46 : vector<8x256xf32> to vector<8x256xbf16>
    %c7 = arith.constant 7 : index
    %c0_25 = arith.constant 0 : index
    %c0_26 = arith.constant 0 : index
    %48 = vector.load %arg2[%c7, %c0_25, %c0_26] : memref<12x256x256xbf16, #tpu.memory_space<vmem>>, vector<1x256x256xbf16>
    %49 = vector.shape_cast %48 : vector<1x256x256xbf16> to vector<256x256xbf16>
    %cst_27 = arith.constant dense<0.000000e+00> : vector<8x256xf32>
    %50 = tpu.matmul %47, %49, %cst_27 {dimension_numbers = #tpu.dot_dimension_numbers<[1], [0], [0], [1], [0, 0, 1, 1], [], []>} : vector<8x256xbf16>, vector<256x256xbf16>, vector<8x256xf32> -> vector<8x256xf32>
    %51 = arith.addf %45, %50 : vector<8x256xf32>
    %52 = vector.extract_strided_slice %1 {offsets = [1, 64], sizes = [8, 256], strides = [1, 1]} : vector<10x320xf32> to vector<8x256xf32>
    %53 = arith.truncf %52 : vector<8x256xf32> to vector<8x256xbf16>
    %c8 = arith.constant 8 : index
    %c0_28 = arith.constant 0 : index
    %c0_29 = arith.constant 0 : index
    %54 = vector.load %arg2[%c8, %c0_28, %c0_29] : memref<12x256x256xbf16, #tpu.memory_space<vmem>>, vector<1x256x256xbf16>
    %55 = vector.shape_cast %54 : vector<1x256x256xbf16> to vector<256x256xbf16>
    %cst_30 = arith.constant dense<0.000000e+00> : vector<8x256xf32>
    %56 = tpu.matmul %53, %55, %cst_30 {dimension_numbers = #tpu.dot_dimension_numbers<[1], [0], [0], [1], [0, 0, 1, 1], [], []>} : vector<8x256xbf16>, vector<256x256xbf16>, vector<8x256xf32> -> vector<8x256xf32>
    %57 = arith.addf %51, %56 : vector<8x256xf32>
    %58 = vector.extract_strided_slice %1 {offsets = [2, 0], sizes = [8, 256], strides = [1, 1]} : vector<10x320xf32> to vector<8x256xf32>
    %59 = arith.truncf %58 : vector<8x256xf32> to vector<8x256xbf16>
    %c9 = arith.constant 9 : index
    %c0_31 = arith.constant 0 : index
    %c0_32 = arith.constant 0 : index
    %60 = vector.load %arg2[%c9, %c0_31, %c0_32] : memref<12x256x256xbf16, #tpu.memory_space<vmem>>, vector<1x256x256xbf16>
    %61 = vector.shape_cast %60 : vector<1x256x256xbf16> to vector<256x256xbf16>
    %cst_33 = arith.constant dense<0.000000e+00> : vector<8x256xf32>
    %62 = tpu.matmul %59, %61, %cst_33 {dimension_numbers = #tpu.dot_dimension_numbers<[1], [0], [0], [1], [0, 0, 1, 1], [], []>} : vector<8x256xbf16>, vector<256x256xbf16>, vector<8x256xf32> -> vector<8x256xf32>
    %63 = arith.addf %57, %62 : vector<8x256xf32>
    %64 = vector.extract_strided_slice %1 {offsets = [2, 32], sizes = [8, 256], strides = [1, 1]} : vector<10x320xf32> to vector<8x256xf32>
    %65 = arith.truncf %64 : vector<8x256xf32> to vector<8x256xbf16>
    %c10 = arith.constant 10 : index
    %c0_34 = arith.constant 0 : index
    %c0_35 = arith.constant 0 : index
    %66 = vector.load %arg2[%c10, %c0_34, %c0_35] : memref<12x256x256xbf16, #tpu.memory_space<vmem>>, vector<1x256x256xbf16>
    %67 = vector.shape_cast %66 : vector<1x256x256xbf16> to vector<256x256xbf16>
    %cst_36 = arith.constant dense<0.000000e+00> : vector<8x256xf32>
    %68 = tpu.matmul %65, %67, %cst_36 {dimension_numbers = #tpu.dot_dimension_numbers<[1], [0], [0], [1], [0, 0, 1, 1], [], []>} : vector<8x256xbf16>, vector<256x256xbf16>, vector<8x256xf32> -> vector<8x256xf32>
    %69 = arith.addf %63, %68 : vector<8x256xf32>
    %70 = vector.extract_strided_slice %1 {offsets = [2, 64], sizes = [8, 256], strides = [1, 1]} : vector<10x320xf32> to vector<8x256xf32>
    %71 = arith.truncf %70 : vector<8x256xf32> to vector<8x256xbf16>
    %c11 = arith.constant 11 : index
    %c0_37 = arith.constant 0 : index
    %c0_38 = arith.constant 0 : index
    %72 = vector.load %arg2[%c11, %c0_37, %c0_38] : memref<12x256x256xbf16, #tpu.memory_space<vmem>>, vector<1x256x256xbf16>
    %73 = vector.shape_cast %72 : vector<1x256x256xbf16> to vector<256x256xbf16>
    %cst_39 = arith.constant dense<0.000000e+00> : vector<8x256xf32>
    %74 = tpu.matmul %71, %73, %cst_39 {dimension_numbers = #tpu.dot_dimension_numbers<[1], [0], [0], [1], [0, 0, 1, 1], [], []>} : vector<8x256xbf16>, vector<256x256xbf16>, vector<8x256xf32> -> vector<8x256xf32>
    %75 = arith.addf %69, %74 : vector<8x256xf32>
    %cst_40 = arith.constant dense<0.000000e+00> : vector<8xf32>
    %76 = vector.multi_reduction <add>, %38, %cst_40 [1] : vector<8x256xf32> to vector<8xf32>
    %77 = vector.shape_cast %76 : vector<8xf32> to vector<8x1xf32>
    %cst_41 = arith.constant dense<0.000000e+00> : vector<1xf32>
    %78 = vector.multi_reduction <add>, %77, %cst_41 [0] : vector<8x1xf32> to vector<1xf32>
    %79 = vector.shape_cast %78 : vector<1xf32> to vector<1x1xf32>
    %cst_42 = arith.constant dense<0.000000e+00> : vector<8xf32>
    %80 = vector.multi_reduction <add>, %75, %cst_42 [1] : vector<8x256xf32> to vector<8xf32>
    %81 = vector.shape_cast %80 : vector<8xf32> to vector<8x1xf32>
    %cst_43 = arith.constant dense<0.000000e+00> : vector<1xf32>
    %82 = vector.multi_reduction <add>, %81, %cst_43 [0] : vector<8x1xf32> to vector<1xf32>
    %83 = vector.shape_cast %82 : vector<1xf32> to vector<1x1xf32>
    %84 = arith.addf %79, %83 : vector<1x1xf32>
    %cst_44 = arith.constant 4.096000e+03 : f32
    %85 = vector.broadcast %cst_44 : f32 to vector<1x1xf32>
    %86 = arith.divf %84, %85 : vector<1x1xf32>
    %87 = vector.broadcast %86 : vector<1x1xf32> to vector<8x256xf32>
    %88 = arith.subf %38, %87 : vector<8x256xf32>
    %89 = arith.mulf %88, %88 : vector<8x256xf32>
    %cst_45 = arith.constant dense<0.000000e+00> : vector<8xf32>
    %90 = vector.multi_reduction <add>, %89, %cst_45 [1] : vector<8x256xf32> to vector<8xf32>
    %91 = vector.shape_cast %90 : vector<8xf32> to vector<8x1xf32>
    %cst_46 = arith.constant dense<0.000000e+00> : vector<1xf32>
    %92 = vector.multi_reduction <add>, %91, %cst_46 [0] : vector<8x1xf32> to vector<1xf32>
    %93 = vector.shape_cast %92 : vector<1xf32> to vector<1x1xf32>
    %94 = vector.broadcast %86 : vector<1x1xf32> to vector<8x256xf32>
    %95 = arith.subf %75, %94 : vector<8x256xf32>
    %96 = arith.mulf %95, %95 : vector<8x256xf32>
    %cst_47 = arith.constant dense<0.000000e+00> : vector<8xf32>
    %97 = vector.multi_reduction <add>, %96, %cst_47 [1] : vector<8x256xf32> to vector<8xf32>
    %98 = vector.shape_cast %97 : vector<8xf32> to vector<8x1xf32>
    %cst_48 = arith.constant dense<0.000000e+00> : vector<1xf32>
    %99 = vector.multi_reduction <add>, %98, %cst_48 [0] : vector<8x1xf32> to vector<1xf32>
    %100 = vector.shape_cast %99 : vector<1xf32> to vector<1x1xf32>
    %101 = arith.addf %93, %100 : vector<1x1xf32>
    %cst_49 = arith.constant 4.096000e+03 : f32
    %102 = vector.broadcast %cst_49 : f32 to vector<1x1xf32>
    %103 = arith.divf %101, %102 : vector<1x1xf32>
    %cst_50 = arith.constant 9.99999974E-6 : f32
    %104 = vector.broadcast %cst_50 : f32 to vector<1x1xf32>
    %105 = arith.addf %103, %104 : vector<1x1xf32>
    %106 = math.rsqrt %105 : vector<1x1xf32>
    %107 = vector.broadcast %86 : vector<1x1xf32> to vector<8x256xf32>
    %108 = arith.subf %38, %107 : vector<8x256xf32>
    %109 = vector.broadcast %106 : vector<1x1xf32> to vector<8x256xf32>
    %110 = arith.mulf %108, %109 : vector<8x256xf32>
    %c0_51 = arith.constant 0 : index
    %c0_52 = arith.constant 0 : index
    %c0_53 = arith.constant 0 : index
    %111 = vector.load %arg3[%c0_51, %c0_52, %c0_53] : memref<2x8x256xf32, #tpu.memory_space<vmem>>, vector<1x8x256xf32>
    %112 = vector.shape_cast %111 : vector<1x8x256xf32> to vector<8x256xf32>
    %113 = arith.mulf %110, %112 : vector<8x256xf32>
    %c0_54 = arith.constant 0 : index
    %c0_55 = arith.constant 0 : index
    %c0_56 = arith.constant 0 : index
    %114 = vector.load %arg4[%c0_54, %c0_55, %c0_56] : memref<2x8x256xf32, #tpu.memory_space<vmem>>, vector<1x8x256xf32>
    %115 = vector.shape_cast %114 : vector<1x8x256xf32> to vector<8x256xf32>
    %116 = arith.addf %113, %115 : vector<8x256xf32>
    %117 = arith.negf %116 : vector<8x256xf32>
    %118 = math.exp %117 : vector<8x256xf32>
    %cst_57 = arith.constant 1.000000e+00 : f32
    %119 = vector.broadcast %cst_57 : f32 to vector<8x256xf32>
    %120 = arith.addf %119, %118 : vector<8x256xf32>
    %121 = arith.divf %119, %120 : vector<8x256xf32>
    %122 = arith.mulf %116, %121 : vector<8x256xf32>
    %c0_58 = arith.constant 0 : index
    %c0_59 = arith.constant 0 : index
    %c0_60 = arith.constant 0 : index
    %c0_61 = arith.constant 0 : index
    %123 = vector.load %arg5[%c0_58, %c0_59, %c0_60, %c0_61] : memref<1x2x8x256xf32, #tpu.memory_space<vmem>>, vector<1x1x8x256xf32>
    %124 = vector.shape_cast %123 : vector<1x1x8x256xf32> to vector<8x256xf32>
    %125 = vector.shape_cast %122 : vector<8x256xf32> to vector<1x1x8x256xf32>
    tpu.vector_store %arg5[%c0_58, %c0_59, %c0_60, %c0_61], %125 {strides = array<i32>} : memref<1x2x8x256xf32, #tpu.memory_space<vmem>>, vector<1x1x8x256xf32>,
    %126 = vector.broadcast %86 : vector<1x1xf32> to vector<8x256xf32>
    %127 = arith.subf %75, %126 : vector<8x256xf32>
    %128 = vector.broadcast %106 : vector<1x1xf32> to vector<8x256xf32>
    %129 = arith.mulf %127, %128 : vector<8x256xf32>
    %c1_62 = arith.constant 1 : index
    %c0_63 = arith.constant 0 : index
    %c0_64 = arith.constant 0 : index
    %130 = vector.load %arg3[%c1_62, %c0_63, %c0_64] : memref<2x8x256xf32, #tpu.memory_space<vmem>>, vector<1x8x256xf32>
    %131 = vector.shape_cast %130 : vector<1x8x256xf32> to vector<8x256xf32>
    %132 = arith.mulf %129, %131 : vector<8x256xf32>
    %c1_65 = arith.constant 1 : index
    %c0_66 = arith.constant 0 : index
    %c0_67 = arith.constant 0 : index
    %133 = vector.load %arg4[%c1_65, %c0_66, %c0_67] : memref<2x8x256xf32, #tpu.memory_space<vmem>>, vector<1x8x256xf32>
    %134 = vector.shape_cast %133 : vector<1x8x256xf32> to vector<8x256xf32>
    %135 = arith.addf %132, %134 : vector<8x256xf32>
    %136 = arith.negf %135 : vector<8x256xf32>
    %137 = math.exp %136 : vector<8x256xf32>
    %cst_68 = arith.constant 1.000000e+00 : f32
    %138 = vector.broadcast %cst_68 : f32 to vector<8x256xf32>
    %139 = arith.addf %138, %137 : vector<8x256xf32>
    %140 = arith.divf %138, %139 : vector<8x256xf32>
    %141 = arith.mulf %135, %140 : vector<8x256xf32>
    %c0_69 = arith.constant 0 : index
    %c1_70 = arith.constant 1 : index
    %c0_71 = arith.constant 0 : index
    %c0_72 = arith.constant 0 : index
    %142 = vector.load %arg5[%c0_69, %c1_70, %c0_71, %c0_72] : memref<1x2x8x256xf32, #tpu.memory_space<vmem>>, vector<1x1x8x256xf32>
    %143 = vector.shape_cast %142 : vector<1x1x8x256xf32> to vector<8x256xf32>
    %144 = vector.shape_cast %141 : vector<8x256xf32> to vector<1x1x8x256xf32>
    tpu.vector_store %arg5[%c0_69, %c1_70, %c0_71, %c0_72], %144 {strides = array<i32>} : memref<1x2x8x256xf32, #tpu.memory_space<vmem>>, vector<1x1x8x256xf32>,
    return
  }
  func.func @transform_0(%arg0: i32) -> (i32, i32, i32) {
    %c0_i32 = arith.constant 0 : i32
    %c0_i32_0 = arith.constant 0 : i32
    %c0_i32_1 = arith.constant 0 : i32
    return %arg0, %c0_i32, %c0_i32_0 : i32, i32, i32
  }
  func.func @transform_1(%arg0: i32) -> (i32, i32, i32) {
    %c0_i32 = arith.constant 0 : i32
    %c0_i32_0 = arith.constant 0 : i32
    %c0_i32_1 = arith.constant 0 : i32
    %c0_i32_2 = arith.constant 0 : i32
    return %c0_i32, %c0_i32_0, %c0_i32_1 : i32, i32, i32
  }
  func.func @transform_2(%arg0: i32) -> (i32, i32, i32) {
    %c0_i32 = arith.constant 0 : i32
    %c0_i32_0 = arith.constant 0 : i32
    %c0_i32_1 = arith.constant 0 : i32
    %c0_i32_2 = arith.constant 0 : i32
    return %c0_i32, %c0_i32_0, %c0_i32_1 : i32, i32, i32
  }
  func.func @transform_3(%arg0: i32) -> (i32, i32, i32) {
    %c0_i32 = arith.constant 0 : i32
    %c0_i32_0 = arith.constant 0 : i32
    %c0_i32_1 = arith.constant 0 : i32
    %c0_i32_2 = arith.constant 0 : i32
    return %c0_i32, %c0_i32_0, %c0_i32_1 : i32, i32, i32
  }
  func.func @transform_4(%arg0: i32) -> (i32, i32, i32, i32) {
    %c0_i32 = arith.constant 0 : i32
    %c0_i32_0 = arith.constant 0 : i32
    %c0_i32_1 = arith.constant 0 : i32
    %c0_i32_2 = arith.constant 0 : i32
    return %arg0, %c0_i32, %c0_i32_0, %c0_i32_1 : i32, i32, i32, i32
  }
}

module attributes {stable_mosaic.version = 11 : i64} {
  func.func @_conv_ln_silu_kernel(%arg0: i32, %arg1: memref<1x18x288xf32, #tpu.memory_space<vmem>>, %arg2: memref<12x256x256xbf16, #tpu.memory_space<vmem>>, %arg3: memref<2x16x256xf32, #tpu.memory_space<vmem>>, %arg4: memref<2x16x256xf32, #tpu.memory_space<vmem>>, %arg5: memref<1x2x16x256xf32, #tpu.memory_space<vmem>>) attributes {dimension_semantics = [#tpu.dimension_semantics<parallel>], iteration_bounds = array<i64: 4>, scalar_prefetch = 0 : i64, scratch_operands = 0 : i64, tpu.core_type = #tpu.core_type<tc>, window_params = [{transform_indices = @transform_0, window_bounds = array<i64: 1, 18, 288>}, {pipeline_mode = #tpu.pipeline_mode<synchronous>, transform_indices = @transform_1, window_bounds = array<i64: 12, 256, 256>}, {pipeline_mode = #tpu.pipeline_mode<synchronous>, transform_indices = @transform_2, window_bounds = array<i64: 2, 16, 256>}, {pipeline_mode = #tpu.pipeline_mode<synchronous>, transform_indices = @transform_3, window_bounds = array<i64: 2, 16, 256>}, {transform_indices = @transform_4, window_bounds = array<i64: 1, 2, 16, 256>}]} {
    %c0 = arith.constant 0 : index
    %c0_0 = arith.constant 0 : index
    %c0_1 = arith.constant 0 : index
    %0 = vector.load %arg1[%c0, %c0_0, %c0_1] : memref<1x18x288xf32, #tpu.memory_space<vmem>>, vector<1x18x288xf32>
    %1 = vector.shape_cast %0 : vector<1x18x288xf32> to vector<18x288xf32>
    %cst = arith.constant 0.000000e+00 : f32
    %2 = vector.broadcast %cst : f32 to vector<16x256xf32>
    %3 = vector.extract_strided_slice %1 {offsets = [0, 0], sizes = [16, 256], strides = [1, 1]} : vector<18x288xf32> to vector<16x256xf32>
    %4 = arith.truncf %3 : vector<16x256xf32> to vector<16x256xbf16>
    %c0_2 = arith.constant 0 : index
    %c0_3 = arith.constant 0 : index
    %c0_4 = arith.constant 0 : index
    %5 = vector.load %arg2[%c0_2, %c0_3, %c0_4] : memref<12x256x256xbf16, #tpu.memory_space<vmem>>, vector<1x256x256xbf16>
    %6 = vector.shape_cast %5 : vector<1x256x256xbf16> to vector<256x256xbf16>
    %cst_5 = arith.constant dense<0.000000e+00> : vector<16x256xf32>
    %7 = tpu.matmul %4, %6, %cst_5 {dimension_numbers = #tpu.dot_dimension_numbers<[1], [0], [0], [1], [0, 0, 1, 1], [], []>} : vector<16x256xbf16>, vector<256x256xbf16>, vector<16x256xf32> -> vector<16x256xf32>
    %8 = arith.addf %2, %7 : vector<16x256xf32>
    %9 = vector.extract_strided_slice %1 {offsets = [0, 16], sizes = [16, 256], strides = [1, 1]} : vector<18x288xf32> to vector<16x256xf32>
    %10 = arith.truncf %9 : vector<16x256xf32> to vector<16x256xbf16>
    %c1 = arith.constant 1 : index
    %c0_6 = arith.constant 0 : index
    %c0_7 = arith.constant 0 : index
    %11 = vector.load %arg2[%c1, %c0_6, %c0_7] : memref<12x256x256xbf16, #tpu.memory_space<vmem>>, vector<1x256x256xbf16>
    %12 = vector.shape_cast %11 : vector<1x256x256xbf16> to vector<256x256xbf16>
    %cst_8 = arith.constant dense<0.000000e+00> : vector<16x256xf32>
    %13 = tpu.matmul %10, %12, %cst_8 {dimension_numbers = #tpu.dot_dimension_numbers<[1], [0], [0], [1], [0, 0, 1, 1], [], []>} : vector<16x256xbf16>, vector<256x256xbf16>, vector<16x256xf32> -> vector<16x256xf32>
    %14 = arith.addf %8, %13 : vector<16x256xf32>
    %15 = vector.extract_strided_slice %1 {offsets = [0, 32], sizes = [16, 256], strides = [1, 1]} : vector<18x288xf32> to vector<16x256xf32>
    %16 = arith.truncf %15 : vector<16x256xf32> to vector<16x256xbf16>
    %c2 = arith.constant 2 : index
    %c0_9 = arith.constant 0 : index
    %c0_10 = arith.constant 0 : index
    %17 = vector.load %arg2[%c2, %c0_9, %c0_10] : memref<12x256x256xbf16, #tpu.memory_space<vmem>>, vector<1x256x256xbf16>
    %18 = vector.shape_cast %17 : vector<1x256x256xbf16> to vector<256x256xbf16>
    %cst_11 = arith.constant dense<0.000000e+00> : vector<16x256xf32>
    %19 = tpu.matmul %16, %18, %cst_11 {dimension_numbers = #tpu.dot_dimension_numbers<[1], [0], [0], [1], [0, 0, 1, 1], [], []>} : vector<16x256xbf16>, vector<256x256xbf16>, vector<16x256xf32> -> vector<16x256xf32>
    %20 = arith.addf %14, %19 : vector<16x256xf32>
    %21 = vector.extract_strided_slice %1 {offsets = [1, 0], sizes = [16, 256], strides = [1, 1]} : vector<18x288xf32> to vector<16x256xf32>
    %22 = arith.truncf %21 : vector<16x256xf32> to vector<16x256xbf16>
    %c3 = arith.constant 3 : index
    %c0_12 = arith.constant 0 : index
    %c0_13 = arith.constant 0 : index
    %23 = vector.load %arg2[%c3, %c0_12, %c0_13] : memref<12x256x256xbf16, #tpu.memory_space<vmem>>, vector<1x256x256xbf16>
    %24 = vector.shape_cast %23 : vector<1x256x256xbf16> to vector<256x256xbf16>
    %cst_14 = arith.constant dense<0.000000e+00> : vector<16x256xf32>
    %25 = tpu.matmul %22, %24, %cst_14 {dimension_numbers = #tpu.dot_dimension_numbers<[1], [0], [0], [1], [0, 0, 1, 1], [], []>} : vector<16x256xbf16>, vector<256x256xbf16>, vector<16x256xf32> -> vector<16x256xf32>
    %26 = arith.addf %20, %25 : vector<16x256xf32>
    %27 = vector.extract_strided_slice %1 {offsets = [1, 16], sizes = [16, 256], strides = [1, 1]} : vector<18x288xf32> to vector<16x256xf32>
    %28 = arith.truncf %27 : vector<16x256xf32> to vector<16x256xbf16>
    %c4 = arith.constant 4 : index
    %c0_15 = arith.constant 0 : index
    %c0_16 = arith.constant 0 : index
    %29 = vector.load %arg2[%c4, %c0_15, %c0_16] : memref<12x256x256xbf16, #tpu.memory_space<vmem>>, vector<1x256x256xbf16>
    %30 = vector.shape_cast %29 : vector<1x256x256xbf16> to vector<256x256xbf16>
    %cst_17 = arith.constant dense<0.000000e+00> : vector<16x256xf32>
    %31 = tpu.matmul %28, %30, %cst_17 {dimension_numbers = #tpu.dot_dimension_numbers<[1], [0], [0], [1], [0, 0, 1, 1], [], []>} : vector<16x256xbf16>, vector<256x256xbf16>, vector<16x256xf32> -> vector<16x256xf32>
    %32 = arith.addf %26, %31 : vector<16x256xf32>
    %33 = vector.extract_strided_slice %1 {offsets = [1, 32], sizes = [16, 256], strides = [1, 1]} : vector<18x288xf32> to vector<16x256xf32>
    %34 = arith.truncf %33 : vector<16x256xf32> to vector<16x256xbf16>
    %c5 = arith.constant 5 : index
    %c0_18 = arith.constant 0 : index
    %c0_19 = arith.constant 0 : index
    %35 = vector.load %arg2[%c5, %c0_18, %c0_19] : memref<12x256x256xbf16, #tpu.memory_space<vmem>>, vector<1x256x256xbf16>
    %36 = vector.shape_cast %35 : vector<1x256x256xbf16> to vector<256x256xbf16>
    %cst_20 = arith.constant dense<0.000000e+00> : vector<16x256xf32>
    %37 = tpu.matmul %34, %36, %cst_20 {dimension_numbers = #tpu.dot_dimension_numbers<[1], [0], [0], [1], [0, 0, 1, 1], [], []>} : vector<16x256xbf16>, vector<256x256xbf16>, vector<16x256xf32> -> vector<16x256xf32>
    %38 = arith.addf %32, %37 : vector<16x256xf32>
    %cst_21 = arith.constant 0.000000e+00 : f32
    %39 = vector.broadcast %cst_21 : f32 to vector<16x256xf32>
    %40 = vector.extract_strided_slice %1 {offsets = [1, 0], sizes = [16, 256], strides = [1, 1]} : vector<18x288xf32> to vector<16x256xf32>
    %41 = arith.truncf %40 : vector<16x256xf32> to vector<16x256xbf16>
    %c6 = arith.constant 6 : index
    %c0_22 = arith.constant 0 : index
    %c0_23 = arith.constant 0 : index
    %42 = vector.load %arg2[%c6, %c0_22, %c0_23] : memref<12x256x256xbf16, #tpu.memory_space<vmem>>, vector<1x256x256xbf16>
    %43 = vector.shape_cast %42 : vector<1x256x256xbf16> to vector<256x256xbf16>
    %cst_24 = arith.constant dense<0.000000e+00> : vector<16x256xf32>
    %44 = tpu.matmul %41, %43, %cst_24 {dimension_numbers = #tpu.dot_dimension_numbers<[1], [0], [0], [1], [0, 0, 1, 1], [], []>} : vector<16x256xbf16>, vector<256x256xbf16>, vector<16x256xf32> -> vector<16x256xf32>
    %45 = arith.addf %39, %44 : vector<16x256xf32>
    %46 = vector.extract_strided_slice %1 {offsets = [1, 16], sizes = [16, 256], strides = [1, 1]} : vector<18x288xf32> to vector<16x256xf32>
    %47 = arith.truncf %46 : vector<16x256xf32> to vector<16x256xbf16>
    %c7 = arith.constant 7 : index
    %c0_25 = arith.constant 0 : index
    %c0_26 = arith.constant 0 : index
    %48 = vector.load %arg2[%c7, %c0_25, %c0_26] : memref<12x256x256xbf16, #tpu.memory_space<vmem>>, vector<1x256x256xbf16>
    %49 = vector.shape_cast %48 : vector<1x256x256xbf16> to vector<256x256xbf16>
    %cst_27 = arith.constant dense<0.000000e+00> : vector<16x256xf32>
    %50 = tpu.matmul %47, %49, %cst_27 {dimension_numbers = #tpu.dot_dimension_numbers<[1], [0], [0], [1], [0, 0, 1, 1], [], []>} : vector<16x256xbf16>, vector<256x256xbf16>, vector<16x256xf32> -> vector<16x256xf32>
    %51 = arith.addf %45, %50 : vector<16x256xf32>
    %52 = vector.extract_strided_slice %1 {offsets = [1, 32], sizes = [16, 256], strides = [1, 1]} : vector<18x288xf32> to vector<16x256xf32>
    %53 = arith.truncf %52 : vector<16x256xf32> to vector<16x256xbf16>
    %c8 = arith.constant 8 : index
    %c0_28 = arith.constant 0 : index
    %c0_29 = arith.constant 0 : index
    %54 = vector.load %arg2[%c8, %c0_28, %c0_29] : memref<12x256x256xbf16, #tpu.memory_space<vmem>>, vector<1x256x256xbf16>
    %55 = vector.shape_cast %54 : vector<1x256x256xbf16> to vector<256x256xbf16>
    %cst_30 = arith.constant dense<0.000000e+00> : vector<16x256xf32>
    %56 = tpu.matmul %53, %55, %cst_30 {dimension_numbers = #tpu.dot_dimension_numbers<[1], [0], [0], [1], [0, 0, 1, 1], [], []>} : vector<16x256xbf16>, vector<256x256xbf16>, vector<16x256xf32> -> vector<16x256xf32>
    %57 = arith.addf %51, %56 : vector<16x256xf32>
    %58 = vector.extract_strided_slice %1 {offsets = [2, 0], sizes = [16, 256], strides = [1, 1]} : vector<18x288xf32> to vector<16x256xf32>
    %59 = arith.truncf %58 : vector<16x256xf32> to vector<16x256xbf16>
    %c9 = arith.constant 9 : index
    %c0_31 = arith.constant 0 : index
    %c0_32 = arith.constant 0 : index
    %60 = vector.load %arg2[%c9, %c0_31, %c0_32] : memref<12x256x256xbf16, #tpu.memory_space<vmem>>, vector<1x256x256xbf16>
    %61 = vector.shape_cast %60 : vector<1x256x256xbf16> to vector<256x256xbf16>
    %cst_33 = arith.constant dense<0.000000e+00> : vector<16x256xf32>
    %62 = tpu.matmul %59, %61, %cst_33 {dimension_numbers = #tpu.dot_dimension_numbers<[1], [0], [0], [1], [0, 0, 1, 1], [], []>} : vector<16x256xbf16>, vector<256x256xbf16>, vector<16x256xf32> -> vector<16x256xf32>
    %63 = arith.addf %57, %62 : vector<16x256xf32>
    %64 = vector.extract_strided_slice %1 {offsets = [2, 16], sizes = [16, 256], strides = [1, 1]} : vector<18x288xf32> to vector<16x256xf32>
    %65 = arith.truncf %64 : vector<16x256xf32> to vector<16x256xbf16>
    %c10 = arith.constant 10 : index
    %c0_34 = arith.constant 0 : index
    %c0_35 = arith.constant 0 : index
    %66 = vector.load %arg2[%c10, %c0_34, %c0_35] : memref<12x256x256xbf16, #tpu.memory_space<vmem>>, vector<1x256x256xbf16>
    %67 = vector.shape_cast %66 : vector<1x256x256xbf16> to vector<256x256xbf16>
    %cst_36 = arith.constant dense<0.000000e+00> : vector<16x256xf32>
    %68 = tpu.matmul %65, %67, %cst_36 {dimension_numbers = #tpu.dot_dimension_numbers<[1], [0], [0], [1], [0, 0, 1, 1], [], []>} : vector<16x256xbf16>, vector<256x256xbf16>, vector<16x256xf32> -> vector<16x256xf32>
    %69 = arith.addf %63, %68 : vector<16x256xf32>
    %70 = vector.extract_strided_slice %1 {offsets = [2, 32], sizes = [16, 256], strides = [1, 1]} : vector<18x288xf32> to vector<16x256xf32>
    %71 = arith.truncf %70 : vector<16x256xf32> to vector<16x256xbf16>
    %c11 = arith.constant 11 : index
    %c0_37 = arith.constant 0 : index
    %c0_38 = arith.constant 0 : index
    %72 = vector.load %arg2[%c11, %c0_37, %c0_38] : memref<12x256x256xbf16, #tpu.memory_space<vmem>>, vector<1x256x256xbf16>
    %73 = vector.shape_cast %72 : vector<1x256x256xbf16> to vector<256x256xbf16>
    %cst_39 = arith.constant dense<0.000000e+00> : vector<16x256xf32>
    %74 = tpu.matmul %71, %73, %cst_39 {dimension_numbers = #tpu.dot_dimension_numbers<[1], [0], [0], [1], [0, 0, 1, 1], [], []>} : vector<16x256xbf16>, vector<256x256xbf16>, vector<16x256xf32> -> vector<16x256xf32>
    %75 = arith.addf %69, %74 : vector<16x256xf32>
    %cst_40 = arith.constant dense<0.000000e+00> : vector<16xf32>
    %76 = vector.multi_reduction <add>, %38, %cst_40 [1] : vector<16x256xf32> to vector<16xf32>
    %77 = vector.shape_cast %76 : vector<16xf32> to vector<16x1xf32>
    %cst_41 = arith.constant dense<0.000000e+00> : vector<1xf32>
    %78 = vector.multi_reduction <add>, %77, %cst_41 [0] : vector<16x1xf32> to vector<1xf32>
    %79 = vector.shape_cast %78 : vector<1xf32> to vector<1x1xf32>
    %cst_42 = arith.constant dense<0.000000e+00> : vector<16xf32>
    %80 = vector.multi_reduction <add>, %75, %cst_42 [1] : vector<16x256xf32> to vector<16xf32>
    %81 = vector.shape_cast %80 : vector<16xf32> to vector<16x1xf32>
    %cst_43 = arith.constant dense<0.000000e+00> : vector<1xf32>
    %82 = vector.multi_reduction <add>, %81, %cst_43 [0] : vector<16x1xf32> to vector<1xf32>
    %83 = vector.shape_cast %82 : vector<1xf32> to vector<1x1xf32>
    %84 = arith.addf %79, %83 : vector<1x1xf32>
    %cst_44 = arith.constant 8.192000e+03 : f32
    %85 = vector.broadcast %cst_44 : f32 to vector<1x1xf32>
    %86 = arith.divf %84, %85 : vector<1x1xf32>
    %87 = vector.broadcast %86 : vector<1x1xf32> to vector<16x256xf32>
    %88 = arith.subf %38, %87 : vector<16x256xf32>
    %89 = arith.mulf %88, %88 : vector<16x256xf32>
    %cst_45 = arith.constant dense<0.000000e+00> : vector<16xf32>
    %90 = vector.multi_reduction <add>, %89, %cst_45 [1] : vector<16x256xf32> to vector<16xf32>
    %91 = vector.shape_cast %90 : vector<16xf32> to vector<16x1xf32>
    %cst_46 = arith.constant dense<0.000000e+00> : vector<1xf32>
    %92 = vector.multi_reduction <add>, %91, %cst_46 [0] : vector<16x1xf32> to vector<1xf32>
    %93 = vector.shape_cast %92 : vector<1xf32> to vector<1x1xf32>
    %94 = vector.broadcast %86 : vector<1x1xf32> to vector<16x256xf32>
    %95 = arith.subf %75, %94 : vector<16x256xf32>
    %96 = arith.mulf %95, %95 : vector<16x256xf32>
    %cst_47 = arith.constant dense<0.000000e+00> : vector<16xf32>
    %97 = vector.multi_reduction <add>, %96, %cst_47 [1] : vector<16x256xf32> to vector<16xf32>
    %98 = vector.shape_cast %97 : vector<16xf32> to vector<16x1xf32>
    %cst_48 = arith.constant dense<0.000000e+00> : vector<1xf32>
    %99 = vector.multi_reduction <add>, %98, %cst_48 [0] : vector<16x1xf32> to vector<1xf32>
    %100 = vector.shape_cast %99 : vector<1xf32> to vector<1x1xf32>
    %101 = arith.addf %93, %100 : vector<1x1xf32>
    %cst_49 = arith.constant 8.192000e+03 : f32
    %102 = vector.broadcast %cst_49 : f32 to vector<1x1xf32>
    %103 = arith.divf %101, %102 : vector<1x1xf32>
    %cst_50 = arith.constant 9.99999974E-6 : f32
    %104 = vector.broadcast %cst_50 : f32 to vector<1x1xf32>
    %105 = arith.addf %103, %104 : vector<1x1xf32>
    %106 = math.rsqrt %105 : vector<1x1xf32>
    %107 = vector.broadcast %86 : vector<1x1xf32> to vector<16x256xf32>
    %108 = arith.subf %38, %107 : vector<16x256xf32>
    %109 = vector.broadcast %106 : vector<1x1xf32> to vector<16x256xf32>
    %110 = arith.mulf %108, %109 : vector<16x256xf32>
    %c0_51 = arith.constant 0 : index
    %c0_52 = arith.constant 0 : index
    %c0_53 = arith.constant 0 : index
    %111 = vector.load %arg3[%c0_51, %c0_52, %c0_53] : memref<2x16x256xf32, #tpu.memory_space<vmem>>, vector<1x16x256xf32>
    %112 = vector.shape_cast %111 : vector<1x16x256xf32> to vector<16x256xf32>
    %113 = arith.mulf %110, %112 : vector<16x256xf32>
    %c0_54 = arith.constant 0 : index
    %c0_55 = arith.constant 0 : index
    %c0_56 = arith.constant 0 : index
    %114 = vector.load %arg4[%c0_54, %c0_55, %c0_56] : memref<2x16x256xf32, #tpu.memory_space<vmem>>, vector<1x16x256xf32>
    %115 = vector.shape_cast %114 : vector<1x16x256xf32> to vector<16x256xf32>
    %116 = arith.addf %113, %115 : vector<16x256xf32>
    %117 = arith.negf %116 : vector<16x256xf32>
    %118 = math.exp %117 : vector<16x256xf32>
    %cst_57 = arith.constant 1.000000e+00 : f32
    %119 = vector.broadcast %cst_57 : f32 to vector<16x256xf32>
    %120 = arith.addf %119, %118 : vector<16x256xf32>
    %121 = arith.divf %119, %120 : vector<16x256xf32>
    %122 = arith.mulf %116, %121 : vector<16x256xf32>
    %c0_58 = arith.constant 0 : index
    %c0_59 = arith.constant 0 : index
    %c0_60 = arith.constant 0 : index
    %c0_61 = arith.constant 0 : index
    %123 = vector.load %arg5[%c0_58, %c0_59, %c0_60, %c0_61] : memref<1x2x16x256xf32, #tpu.memory_space<vmem>>, vector<1x1x16x256xf32>
    %124 = vector.shape_cast %123 : vector<1x1x16x256xf32> to vector<16x256xf32>
    %125 = vector.shape_cast %122 : vector<16x256xf32> to vector<1x1x16x256xf32>
    tpu.vector_store %arg5[%c0_58, %c0_59, %c0_60, %c0_61], %125 {strides = array<i32>} : memref<1x2x16x256xf32, #tpu.memory_space<vmem>>, vector<1x1x16x256xf32>,
    %126 = vector.broadcast %86 : vector<1x1xf32> to vector<16x256xf32>
    %127 = arith.subf %75, %126 : vector<16x256xf32>
    %128 = vector.broadcast %106 : vector<1x1xf32> to vector<16x256xf32>
    %129 = arith.mulf %127, %128 : vector<16x256xf32>
    %c1_62 = arith.constant 1 : index
    %c0_63 = arith.constant 0 : index
    %c0_64 = arith.constant 0 : index
    %130 = vector.load %arg3[%c1_62, %c0_63, %c0_64] : memref<2x16x256xf32, #tpu.memory_space<vmem>>, vector<1x16x256xf32>
    %131 = vector.shape_cast %130 : vector<1x16x256xf32> to vector<16x256xf32>
    %132 = arith.mulf %129, %131 : vector<16x256xf32>
    %c1_65 = arith.constant 1 : index
    %c0_66 = arith.constant 0 : index
    %c0_67 = arith.constant 0 : index
    %133 = vector.load %arg4[%c1_65, %c0_66, %c0_67] : memref<2x16x256xf32, #tpu.memory_space<vmem>>, vector<1x16x256xf32>
    %134 = vector.shape_cast %133 : vector<1x16x256xf32> to vector<16x256xf32>
    %135 = arith.addf %132, %134 : vector<16x256xf32>
    %136 = arith.negf %135 : vector<16x256xf32>
    %137 = math.exp %136 : vector<16x256xf32>
    %cst_68 = arith.constant 1.000000e+00 : f32
    %138 = vector.broadcast %cst_68 : f32 to vector<16x256xf32>
    %139 = arith.addf %138, %137 : vector<16x256xf32>
    %140 = arith.divf %138, %139 : vector<16x256xf32>
    %141 = arith.mulf %135, %140 : vector<16x256xf32>
    %c0_69 = arith.constant 0 : index
    %c1_70 = arith.constant 1 : index
    %c0_71 = arith.constant 0 : index
    %c0_72 = arith.constant 0 : index
    %142 = vector.load %arg5[%c0_69, %c1_70, %c0_71, %c0_72] : memref<1x2x16x256xf32, #tpu.memory_space<vmem>>, vector<1x1x16x256xf32>
    %143 = vector.shape_cast %142 : vector<1x1x16x256xf32> to vector<16x256xf32>
    %144 = vector.shape_cast %141 : vector<16x256xf32> to vector<1x1x16x256xf32>
    tpu.vector_store %arg5[%c0_69, %c1_70, %c0_71, %c0_72], %144 {strides = array<i32>} : memref<1x2x16x256xf32, #tpu.memory_space<vmem>>, vector<1x1x16x256xf32>,
    return
  }
  func.func @transform_0(%arg0: i32) -> (i32, i32, i32) {
    %c0_i32 = arith.constant 0 : i32
    %c0_i32_0 = arith.constant 0 : i32
    %c0_i32_1 = arith.constant 0 : i32
    return %arg0, %c0_i32, %c0_i32_0 : i32, i32, i32
  }
  func.func @transform_1(%arg0: i32) -> (i32, i32, i32) {
    %c0_i32 = arith.constant 0 : i32
    %c0_i32_0 = arith.constant 0 : i32
    %c0_i32_1 = arith.constant 0 : i32
    %c0_i32_2 = arith.constant 0 : i32
    return %c0_i32, %c0_i32_0, %c0_i32_1 : i32, i32, i32
  }
  func.func @transform_2(%arg0: i32) -> (i32, i32, i32) {
    %c0_i32 = arith.constant 0 : i32
    %c0_i32_0 = arith.constant 0 : i32
    %c0_i32_1 = arith.constant 0 : i32
    %c0_i32_2 = arith.constant 0 : i32
    return %c0_i32, %c0_i32_0, %c0_i32_1 : i32, i32, i32
  }
  func.func @transform_3(%arg0: i32) -> (i32, i32, i32) {
    %c0_i32 = arith.constant 0 : i32
    %c0_i32_0 = arith.constant 0 : i32
    %c0_i32_1 = arith.constant 0 : i32
    %c0_i32_2 = arith.constant 0 : i32
    return %c0_i32, %c0_i32_0, %c0_i32_1 : i32, i32, i32
  }
  func.func @transform_4(%arg0: i32) -> (i32, i32, i32, i32) {
    %c0_i32 = arith.constant 0 : i32
    %c0_i32_0 = arith.constant 0 : i32
    %c0_i32_1 = arith.constant 0 : i32
    %c0_i32_2 = arith.constant 0 : i32
    return %arg0, %c0_i32, %c0_i32_0, %c0_i32_1 : i32, i32, i32, i32
  }
}

module attributes {stable_mosaic.version = 11 : i64} {
  func.func @_conv_bias_kernel(%arg0: i32, %arg1: memref<1x34x272xf32, #tpu.memory_space<vmem>>, %arg2: memref<12x256x192xbf16, #tpu.memory_space<vmem>>, %arg3: memref<1x192xf32, #tpu.memory_space<vmem>>, %arg4: memref<1x2x32x192xf32, #tpu.memory_space<vmem>>) attributes {dimension_semantics = [#tpu.dimension_semantics<parallel>], iteration_bounds = array<i64: 4>, scalar_prefetch = 0 : i64, scratch_operands = 0 : i64, tpu.core_type = #tpu.core_type<tc>, window_params = [{transform_indices = @transform_0, window_bounds = array<i64: 1, 34, 272>}, {pipeline_mode = #tpu.pipeline_mode<synchronous>, transform_indices = @transform_1, window_bounds = array<i64: 12, 256, 192>}, {pipeline_mode = #tpu.pipeline_mode<synchronous>, transform_indices = @transform_2, window_bounds = array<i64: 1, 192>}, {transform_indices = @transform_3, window_bounds = array<i64: 1, 2, 32, 192>}]} {
    %c0 = arith.constant 0 : index
    %c0_0 = arith.constant 0 : index
    %c0_1 = arith.constant 0 : index
    %0 = vector.load %arg1[%c0, %c0_0, %c0_1] : memref<1x34x272xf32, #tpu.memory_space<vmem>>, vector<1x34x272xf32>
    %1 = vector.shape_cast %0 : vector<1x34x272xf32> to vector<34x272xf32>
    %cst = arith.constant 0.000000e+00 : f32
    %2 = vector.broadcast %cst : f32 to vector<32x192xf32>
    %3 = vector.extract_strided_slice %1 {offsets = [0, 0], sizes = [32, 256], strides = [1, 1]} : vector<34x272xf32> to vector<32x256xf32>
    %4 = arith.truncf %3 : vector<32x256xf32> to vector<32x256xbf16>
    %c0_2 = arith.constant 0 : index
    %c0_3 = arith.constant 0 : index
    %c0_4 = arith.constant 0 : index
    %5 = vector.load %arg2[%c0_2, %c0_3, %c0_4] : memref<12x256x192xbf16, #tpu.memory_space<vmem>>, vector<1x256x192xbf16>
    %6 = vector.shape_cast %5 : vector<1x256x192xbf16> to vector<256x192xbf16>
    %cst_5 = arith.constant dense<0.000000e+00> : vector<32x192xf32>
    %7 = tpu.matmul %4, %6, %cst_5 {dimension_numbers = #tpu.dot_dimension_numbers<[1], [0], [0], [1], [0, 0, 1, 1], [], []>} : vector<32x256xbf16>, vector<256x192xbf16>, vector<32x192xf32> -> vector<32x192xf32>
    %8 = arith.addf %2, %7 : vector<32x192xf32>
    %9 = vector.extract_strided_slice %1 {offsets = [0, 8], sizes = [32, 256], strides = [1, 1]} : vector<34x272xf32> to vector<32x256xf32>
    %10 = arith.truncf %9 : vector<32x256xf32> to vector<32x256xbf16>
    %c1 = arith.constant 1 : index
    %c0_6 = arith.constant 0 : index
    %c0_7 = arith.constant 0 : index
    %11 = vector.load %arg2[%c1, %c0_6, %c0_7] : memref<12x256x192xbf16, #tpu.memory_space<vmem>>, vector<1x256x192xbf16>
    %12 = vector.shape_cast %11 : vector<1x256x192xbf16> to vector<256x192xbf16>
    %cst_8 = arith.constant dense<0.000000e+00> : vector<32x192xf32>
    %13 = tpu.matmul %10, %12, %cst_8 {dimension_numbers = #tpu.dot_dimension_numbers<[1], [0], [0], [1], [0, 0, 1, 1], [], []>} : vector<32x256xbf16>, vector<256x192xbf16>, vector<32x192xf32> -> vector<32x192xf32>
    %14 = arith.addf %8, %13 : vector<32x192xf32>
    %15 = vector.extract_strided_slice %1 {offsets = [0, 16], sizes = [32, 256], strides = [1, 1]} : vector<34x272xf32> to vector<32x256xf32>
    %16 = arith.truncf %15 : vector<32x256xf32> to vector<32x256xbf16>
    %c2 = arith.constant 2 : index
    %c0_9 = arith.constant 0 : index
    %c0_10 = arith.constant 0 : index
    %17 = vector.load %arg2[%c2, %c0_9, %c0_10] : memref<12x256x192xbf16, #tpu.memory_space<vmem>>, vector<1x256x192xbf16>
    %18 = vector.shape_cast %17 : vector<1x256x192xbf16> to vector<256x192xbf16>
    %cst_11 = arith.constant dense<0.000000e+00> : vector<32x192xf32>
    %19 = tpu.matmul %16, %18, %cst_11 {dimension_numbers = #tpu.dot_dimension_numbers<[1], [0], [0], [1], [0, 0, 1, 1], [], []>} : vector<32x256xbf16>, vector<256x192xbf16>, vector<32x192xf32> -> vector<32x192xf32>
    %20 = arith.addf %14, %19 : vector<32x192xf32>
    %21 = vector.extract_strided_slice %1 {offsets = [1, 0], sizes = [32, 256], strides = [1, 1]} : vector<34x272xf32> to vector<32x256xf32>
    %22 = arith.truncf %21 : vector<32x256xf32> to vector<32x256xbf16>
    %c3 = arith.constant 3 : index
    %c0_12 = arith.constant 0 : index
    %c0_13 = arith.constant 0 : index
    %23 = vector.load %arg2[%c3, %c0_12, %c0_13] : memref<12x256x192xbf16, #tpu.memory_space<vmem>>, vector<1x256x192xbf16>
    %24 = vector.shape_cast %23 : vector<1x256x192xbf16> to vector<256x192xbf16>
    %cst_14 = arith.constant dense<0.000000e+00> : vector<32x192xf32>
    %25 = tpu.matmul %22, %24, %cst_14 {dimension_numbers = #tpu.dot_dimension_numbers<[1], [0], [0], [1], [0, 0, 1, 1], [], []>} : vector<32x256xbf16>, vector<256x192xbf16>, vector<32x192xf32> -> vector<32x192xf32>
    %26 = arith.addf %20, %25 : vector<32x192xf32>
    %27 = vector.extract_strided_slice %1 {offsets = [1, 8], sizes = [32, 256], strides = [1, 1]} : vector<34x272xf32> to vector<32x256xf32>
    %28 = arith.truncf %27 : vector<32x256xf32> to vector<32x256xbf16>
    %c4 = arith.constant 4 : index
    %c0_15 = arith.constant 0 : index
    %c0_16 = arith.constant 0 : index
    %29 = vector.load %arg2[%c4, %c0_15, %c0_16] : memref<12x256x192xbf16, #tpu.memory_space<vmem>>, vector<1x256x192xbf16>
    %30 = vector.shape_cast %29 : vector<1x256x192xbf16> to vector<256x192xbf16>
    %cst_17 = arith.constant dense<0.000000e+00> : vector<32x192xf32>
    %31 = tpu.matmul %28, %30, %cst_17 {dimension_numbers = #tpu.dot_dimension_numbers<[1], [0], [0], [1], [0, 0, 1, 1], [], []>} : vector<32x256xbf16>, vector<256x192xbf16>, vector<32x192xf32> -> vector<32x192xf32>
    %32 = arith.addf %26, %31 : vector<32x192xf32>
    %33 = vector.extract_strided_slice %1 {offsets = [1, 16], sizes = [32, 256], strides = [1, 1]} : vector<34x272xf32> to vector<32x256xf32>
    %34 = arith.truncf %33 : vector<32x256xf32> to vector<32x256xbf16>
    %c5 = arith.constant 5 : index
    %c0_18 = arith.constant 0 : index
    %c0_19 = arith.constant 0 : index
    %35 = vector.load %arg2[%c5, %c0_18, %c0_19] : memref<12x256x192xbf16, #tpu.memory_space<vmem>>, vector<1x256x192xbf16>
    %36 = vector.shape_cast %35 : vector<1x256x192xbf16> to vector<256x192xbf16>
    %cst_20 = arith.constant dense<0.000000e+00> : vector<32x192xf32>
    %37 = tpu.matmul %34, %36, %cst_20 {dimension_numbers = #tpu.dot_dimension_numbers<[1], [0], [0], [1], [0, 0, 1, 1], [], []>} : vector<32x256xbf16>, vector<256x192xbf16>, vector<32x192xf32> -> vector<32x192xf32>
    %38 = arith.addf %32, %37 : vector<32x192xf32>
    %cst_21 = arith.constant 0.000000e+00 : f32
    %39 = vector.broadcast %cst_21 : f32 to vector<32x192xf32>
    %40 = vector.extract_strided_slice %1 {offsets = [1, 0], sizes = [32, 256], strides = [1, 1]} : vector<34x272xf32> to vector<32x256xf32>
    %41 = arith.truncf %40 : vector<32x256xf32> to vector<32x256xbf16>
    %c6 = arith.constant 6 : index
    %c0_22 = arith.constant 0 : index
    %c0_23 = arith.constant 0 : index
    %42 = vector.load %arg2[%c6, %c0_22, %c0_23] : memref<12x256x192xbf16, #tpu.memory_space<vmem>>, vector<1x256x192xbf16>
    %43 = vector.shape_cast %42 : vector<1x256x192xbf16> to vector<256x192xbf16>
    %cst_24 = arith.constant dense<0.000000e+00> : vector<32x192xf32>
    %44 = tpu.matmul %41, %43, %cst_24 {dimension_numbers = #tpu.dot_dimension_numbers<[1], [0], [0], [1], [0, 0, 1, 1], [], []>} : vector<32x256xbf16>, vector<256x192xbf16>, vector<32x192xf32> -> vector<32x192xf32>
    %45 = arith.addf %39, %44 : vector<32x192xf32>
    %46 = vector.extract_strided_slice %1 {offsets = [1, 8], sizes = [32, 256], strides = [1, 1]} : vector<34x272xf32> to vector<32x256xf32>
    %47 = arith.truncf %46 : vector<32x256xf32> to vector<32x256xbf16>
    %c7 = arith.constant 7 : index
    %c0_25 = arith.constant 0 : index
    %c0_26 = arith.constant 0 : index
    %48 = vector.load %arg2[%c7, %c0_25, %c0_26] : memref<12x256x192xbf16, #tpu.memory_space<vmem>>, vector<1x256x192xbf16>
    %49 = vector.shape_cast %48 : vector<1x256x192xbf16> to vector<256x192xbf16>
    %cst_27 = arith.constant dense<0.000000e+00> : vector<32x192xf32>
    %50 = tpu.matmul %47, %49, %cst_27 {dimension_numbers = #tpu.dot_dimension_numbers<[1], [0], [0], [1], [0, 0, 1, 1], [], []>} : vector<32x256xbf16>, vector<256x192xbf16>, vector<32x192xf32> -> vector<32x192xf32>
    %51 = arith.addf %45, %50 : vector<32x192xf32>
    %52 = vector.extract_strided_slice %1 {offsets = [1, 16], sizes = [32, 256], strides = [1, 1]} : vector<34x272xf32> to vector<32x256xf32>
    %53 = arith.truncf %52 : vector<32x256xf32> to vector<32x256xbf16>
    %c8 = arith.constant 8 : index
    %c0_28 = arith.constant 0 : index
    %c0_29 = arith.constant 0 : index
    %54 = vector.load %arg2[%c8, %c0_28, %c0_29] : memref<12x256x192xbf16, #tpu.memory_space<vmem>>, vector<1x256x192xbf16>
    %55 = vector.shape_cast %54 : vector<1x256x192xbf16> to vector<256x192xbf16>
    %cst_30 = arith.constant dense<0.000000e+00> : vector<32x192xf32>
    %56 = tpu.matmul %53, %55, %cst_30 {dimension_numbers = #tpu.dot_dimension_numbers<[1], [0], [0], [1], [0, 0, 1, 1], [], []>} : vector<32x256xbf16>, vector<256x192xbf16>, vector<32x192xf32> -> vector<32x192xf32>
    %57 = arith.addf %51, %56 : vector<32x192xf32>
    %58 = vector.extract_strided_slice %1 {offsets = [2, 0], sizes = [32, 256], strides = [1, 1]} : vector<34x272xf32> to vector<32x256xf32>
    %59 = arith.truncf %58 : vector<32x256xf32> to vector<32x256xbf16>
    %c9 = arith.constant 9 : index
    %c0_31 = arith.constant 0 : index
    %c0_32 = arith.constant 0 : index
    %60 = vector.load %arg2[%c9, %c0_31, %c0_32] : memref<12x256x192xbf16, #tpu.memory_space<vmem>>, vector<1x256x192xbf16>
    %61 = vector.shape_cast %60 : vector<1x256x192xbf16> to vector<256x192xbf16>
    %cst_33 = arith.constant dense<0.000000e+00> : vector<32x192xf32>
    %62 = tpu.matmul %59, %61, %cst_33 {dimension_numbers = #tpu.dot_dimension_numbers<[1], [0], [0], [1], [0, 0, 1, 1], [], []>} : vector<32x256xbf16>, vector<256x192xbf16>, vector<32x192xf32> -> vector<32x192xf32>
    %63 = arith.addf %57, %62 : vector<32x192xf32>
    %64 = vector.extract_strided_slice %1 {offsets = [2, 8], sizes = [32, 256], strides = [1, 1]} : vector<34x272xf32> to vector<32x256xf32>
    %65 = arith.truncf %64 : vector<32x256xf32> to vector<32x256xbf16>
    %c10 = arith.constant 10 : index
    %c0_34 = arith.constant 0 : index
    %c0_35 = arith.constant 0 : index
    %66 = vector.load %arg2[%c10, %c0_34, %c0_35] : memref<12x256x192xbf16, #tpu.memory_space<vmem>>, vector<1x256x192xbf16>
    %67 = vector.shape_cast %66 : vector<1x256x192xbf16> to vector<256x192xbf16>
    %cst_36 = arith.constant dense<0.000000e+00> : vector<32x192xf32>
    %68 = tpu.matmul %65, %67, %cst_36 {dimension_numbers = #tpu.dot_dimension_numbers<[1], [0], [0], [1], [0, 0, 1, 1], [], []>} : vector<32x256xbf16>, vector<256x192xbf16>, vector<32x192xf32> -> vector<32x192xf32>
    %69 = arith.addf %63, %68 : vector<32x192xf32>
    %70 = vector.extract_strided_slice %1 {offsets = [2, 16], sizes = [32, 256], strides = [1, 1]} : vector<34x272xf32> to vector<32x256xf32>
    %71 = arith.truncf %70 : vector<32x256xf32> to vector<32x256xbf16>
    %c11 = arith.constant 11 : index
    %c0_37 = arith.constant 0 : index
    %c0_38 = arith.constant 0 : index
    %72 = vector.load %arg2[%c11, %c0_37, %c0_38] : memref<12x256x192xbf16, #tpu.memory_space<vmem>>, vector<1x256x192xbf16>
    %73 = vector.shape_cast %72 : vector<1x256x192xbf16> to vector<256x192xbf16>
    %cst_39 = arith.constant dense<0.000000e+00> : vector<32x192xf32>
    %74 = tpu.matmul %71, %73, %cst_39 {dimension_numbers = #tpu.dot_dimension_numbers<[1], [0], [0], [1], [0, 0, 1, 1], [], []>} : vector<32x256xbf16>, vector<256x192xbf16>, vector<32x192xf32> -> vector<32x192xf32>
    %75 = arith.addf %69, %74 : vector<32x192xf32>
    %c0_40 = arith.constant 0 : index
    %c0_41 = arith.constant 0 : index
    %76 = vector.load %arg3[%c0_40, %c0_41] : memref<1x192xf32, #tpu.memory_space<vmem>>, vector<1x192xf32>
    %77 = vector.broadcast %76 : vector<1x192xf32> to vector<32x192xf32>
    %78 = arith.addf %38, %77 : vector<32x192xf32>
    %c0_42 = arith.constant 0 : index
    %c0_43 = arith.constant 0 : index
    %c0_44 = arith.constant 0 : index
    %c0_45 = arith.constant 0 : index
    %79 = vector.load %arg4[%c0_42, %c0_43, %c0_44, %c0_45] : memref<1x2x32x192xf32, #tpu.memory_space<vmem>>, vector<1x1x32x192xf32>
    %80 = vector.shape_cast %79 : vector<1x1x32x192xf32> to vector<32x192xf32>
    %81 = vector.shape_cast %78 : vector<32x192xf32> to vector<1x1x32x192xf32>
    tpu.vector_store %arg4[%c0_42, %c0_43, %c0_44, %c0_45], %81 {strides = array<i32>} : memref<1x2x32x192xf32, #tpu.memory_space<vmem>>, vector<1x1x32x192xf32>,
    %c0_46 = arith.constant 0 : index
    %c0_47 = arith.constant 0 : index
    %82 = vector.load %arg3[%c0_46, %c0_47] : memref<1x192xf32, #tpu.memory_space<vmem>>, vector<1x192xf32>
    %83 = vector.broadcast %82 : vector<1x192xf32> to vector<32x192xf32>
    %84 = arith.addf %75, %83 : vector<32x192xf32>
    %c0_48 = arith.constant 0 : index
    %c1_49 = arith.constant 1 : index
    %c0_50 = arith.constant 0 : index
    %c0_51 = arith.constant 0 : index
    %85 = vector.load %arg4[%c0_48, %c1_49, %c0_50, %c0_51] : memref<1x2x32x192xf32, #tpu.memory_space<vmem>>, vector<1x1x32x192xf32>
    %86 = vector.shape_cast %85 : vector<1x1x32x192xf32> to vector<32x192xf32>
    %87 = vector.shape_cast %84 : vector<32x192xf32> to vector<1x1x32x192xf32>
    tpu.vector_store %arg4[%c0_48, %c1_49, %c0_50, %c0_51], %87 {strides = array<i32>} : memref<1x2x32x192xf32, #tpu.memory_space<vmem>>, vector<1x1x32x192xf32>,
    return
  }
  func.func @transform_0(%arg0: i32) -> (i32, i32, i32) {
    %c0_i32 = arith.constant 0 : i32
    %c0_i32_0 = arith.constant 0 : i32
    %c0_i32_1 = arith.constant 0 : i32
    return %arg0, %c0_i32, %c0_i32_0 : i32, i32, i32
  }
  func.func @transform_1(%arg0: i32) -> (i32, i32, i32) {
    %c0_i32 = arith.constant 0 : i32
    %c0_i32_0 = arith.constant 0 : i32
    %c0_i32_1 = arith.constant 0 : i32
    %c0_i32_2 = arith.constant 0 : i32
    return %c0_i32, %c0_i32_0, %c0_i32_1 : i32, i32, i32
  }
  func.func @transform_2(%arg0: i32) -> (i32, i32) {
    %c0_i32 = arith.constant 0 : i32
    %c0_i32_0 = arith.constant 0 : i32
    %c0_i32_1 = arith.constant 0 : i32
    return %c0_i32, %c0_i32_0 : i32, i32
  }
  func.func @transform_3(%arg0: i32) -> (i32, i32, i32, i32) {
    %c0_i32 = arith.constant 0 : i32
    %c0_i32_0 = arith.constant 0 : i32
    %c0_i32_1 = arith.constant 0 : i32
    %c0_i32_2 = arith.constant 0 : i32
    return %arg0, %c0_i32, %c0_i32_0, %c0_i32_1 : i32, i32, i32, i32
  }
}

</mosaic_0001>

<llo_original>
// kernel: decoder_forward.4
$region0: #{decoder_forward.4}
  #allocation0 [shape = 'u32[]', space=smem, size = 0x4, offset = 0x4, fixed_abs, tag = 'smem constant byte address 0x4 - core index']
  #allocation1 [shape = 'u32[144,128]{1,0:T(1,128)}', space=vmem, size = 0x12000, scoped, tag = 'internal scratch']
  %s0 = inlined_call_operand.vmem [shape: f32[4,96], index: 0, kind: input, shape index: {}]
  %s1 = inlined_call_operand.vmem [shape: bf16[96,64], index: 1, kind: input, shape index: {}]
  %s2 = inlined_call_operand.hbm [shape: bf16[64,2048], index: 2, kind: input, shape index: {}]
  %s3 = inlined_call_operand.hbm [shape: f32[1,2048], index: 3, kind: input, shape index: {}]
  %s4 = inlined_call_operand.hbm [shape: f32[1,2048], index: 4, kind: input, shape index: {}]
  %s5 = inlined_call_operand.hbm [shape: f32[1,2048], index: 5, kind: input, shape index: {}]
  %s6 = inlined_call_operand.vmem [shape: f32[4,2048], index: 6, kind: output, shape index: {}]
  %s7 = sld [smem:[#allocation0]]
  $region50: #{decoder_forward.4} parent=0
    _
  %s9 = ssub.s32 1, %s7
  %s10 = scalar_select 0, %s9, %s7
  $region1: #{decoder_forward.4} parent=0
    #allocation2 [shape = 'u8[262144]{0}', space=vmem, size = 0x40000, scoped, tag = 'input window, operand 2, single buffered']
    #allocation3 [shape = 's32[1]{0}', space=sflag, size = 0x4, scoped, tag = 'scoped memory for decoder_forward.4']
    #allocation4 [shape = 'u8[8192]{0}', space=vmem, size = 0x2000, scoped, tag = 'input window, operand 3, single buffered']
    #allocation5 [shape = 's32[1]{0}', space=sflag, size = 0x4, scoped, tag = 'scoped memory for decoder_forward.4']
    #allocation6 [shape = 'u8[8192]{0}', space=vmem, size = 0x2000, scoped, tag = 'input window, operand 4, single buffered']
    #allocation7 [shape = 'u8[8192]{0}', space=vmem, size = 0x2000, scoped, tag = 'input window, operand 5, single buffered']
    #allocation8 [shape = 's32[1]{0}', space=sflag, size = 0x4, scoped, tag = 'scoped memory for decoder_forward.4']
    %11 = vsyncpa [#allocation3], 0
    %12 = vsyncpa [#allocation5], 0
    %13 = vsyncpa [#allocation8], 0
    // Predicated region
    $region2: #{decoder_forward.4} parent=1 // pred_check
      _
    $region3: #{decoder_forward.4} parent=1 // pred_check_branch
      %15 = sbr.rel (0) target = $region5
    $region4: #{decoder_forward.4} parent=1 // pred_region
      _
    $region5: #{decoder_forward.4} parent=1 // pred_fallthru
      _
    // Predicated region
    $region6: #{decoder_forward.4} parent=1 // pred_check
      _
    $region7: #{decoder_forward.4} parent=1 // pred_check_branch
      %17 = sbr.rel (0) target = $region9
    $region8: #{decoder_forward.4} parent=1 // pred_region
      _
    $region9: #{decoder_forward.4} parent=1 // pred_fallthru
      _
    // Predicated region
    $region10: #{decoder_forward.4} parent=1 // pred_check
      _
    $region11: #{decoder_forward.4} parent=1 // pred_check_branch
      %19 = sbr.rel (0) target = $region13
    $region12: #{decoder_forward.4} parent=1 // pred_region
      %s21 = ssub.s32 8192, 8192
      %22 = vsyncadd [#allocation3], %s21
      %s23 = sshll.u32 [#allocation2], 4
      %s24 = int_to_ptr.vmem [resolvable:$true] %s23
      %29 = dma.hbm_to_vmem [thread:$0]  %s2, 8192, %s24, [#allocation3], 1024, 1024, 64
    $region13: #{decoder_forward.4} parent=1 // pred_fallthru
      _
    // Predicated region
    $region14: #{decoder_forward.4} parent=1 // pred_check
      _
    $region15: #{decoder_forward.4} parent=1 // pred_check_branch
      %31 = sbr.rel (0) target = $region17
    $region16: #{decoder_forward.4} parent=1 // pred_region
      %s33 = ssub.s32 256, 256
      %34 = vsyncadd [#allocation5], %s33
      %s36 = sshll.u32 [#allocation4], 4
      %s37 = int_to_ptr.vmem [resolvable:$true] %s36
      %39 = dma.hbm_to_vmem [thread:$0]  %s3, 256, %s37, [#allocation5]
    $region17: #{decoder_forward.4} parent=1 // pred_fallthru
      _
    // Predicated region
    $region18: #{decoder_forward.4} parent=1 // pred_check
      _
    $region19: #{decoder_forward.4} parent=1 // pred_check_branch
      %41 = sbr.rel (0) target = $region21
    $region20: #{decoder_forward.4} parent=1 // pred_region
      %s43 = ssub.s32 256, 256
      %44 = vsyncadd [#allocation5], %s43
      %s46 = sshll.u32 [#allocation6], 4
      %s47 = int_to_ptr.vmem [resolvable:$true] %s46
      %49 = dma.hbm_to_vmem [thread:$0]  %s4, 256, %s47, [#allocation5]
    $region21: #{decoder_forward.4} parent=1 // pred_fallthru
      _
    // Predicated region
    $region22: #{decoder_forward.4} parent=1 // pred_check
      _
    $region23: #{decoder_forward.4} parent=1 // pred_check_branch
      %51 = sbr.rel (0) target = $region25
    $region24: #{decoder_forward.4} parent=1 // pred_region
      %s53 = ssub.s32 256, 256
      %54 = vsyncadd [#allocation8], %s53
      %s56 = sshll.u32 [#allocation7], 4
      %s57 = int_to_ptr.vmem [resolvable:$true] %s56
      %59 = dma.hbm_to_vmem [thread:$0]  %s5, 256, %s57, [#allocation8]
    $region25: #{decoder_forward.4} parent=1 // pred_fallthru
      _
    // Predicated region
    $region26: #{decoder_forward.4} parent=1 // pred_check
      _
    $region27: #{decoder_forward.4} parent=1 // pred_check_branch
      %61 = sbr.rel (0) target = $region29
    $region28: #{decoder_forward.4} parent=1 // pred_region
      %62 = dma.done [#allocation3], 8192
    $region29: #{decoder_forward.4} parent=1 // pred_fallthru
      _
    // Predicated region
    $region30: #{decoder_forward.4} parent=1 // pred_check
      _
    $region31: #{decoder_forward.4} parent=1 // pred_check_branch
      %64 = sbr.rel (0) target = $region33
    $region32: #{decoder_forward.4} parent=1 // pred_region
      %65 = dma.done [#allocation5], 256
    $region33: #{decoder_forward.4} parent=1 // pred_fallthru
      _
    // Predicated region
    $region34: #{decoder_forward.4} parent=1 // pred_check
      _
    $region35: #{decoder_forward.4} parent=1 // pred_check_branch
      %67 = sbr.rel (0) target = $region37
    $region36: #{decoder_forward.4} parent=1 // pred_region
      %68 = dma.done [#allocation5], 256
    $region37: #{decoder_forward.4} parent=1 // pred_fallthru
      _
    // Predicated region
    $region38: #{decoder_forward.4} parent=1 // pred_check
      _
    $region39: #{decoder_forward.4} parent=1 // pred_check_branch
      %70 = sbr.rel (0) target = $region41
    $region40: #{decoder_forward.4} parent=1 // pred_region
      %71 = dma.done [#allocation8], 256
    $region41: #{decoder_forward.4} parent=1 // pred_fallthru
      _
    %v73 = vld [vmem:[%s0] sm:$0xf]
    %v74 = vpack.c.bf16 %v73, %v73
    %v75 = vld [vmem:[%s1] sm:$0xf]
    %v76 = vld [vmem:[%s1 + $0x4] sm:$0xf]
    %v77 = vld [vmem:[%s1 + $0x8] sm:$0xf]
    %v78 = vld [vmem:[%s1 + $0xc] sm:$0xf]
    %v79 = vld [vmem:[%s1 + $0x10] sm:$0xf]
    %v80 = vld [vmem:[%s1 + $0x14] sm:$0xf]
    %v81 = vld [vmem:[%s1 + $0x18] sm:$0xf]
    %v82 = vld [vmem:[%s1 + $0x1c] sm:$0xf]
    %v83 = vld [vmem:[%s1 + $0x20] sm:$0xf]
    %v84 = vld [vmem:[%s1 + $0x24] sm:$0xf]
    %v85 = vld [vmem:[%s1 + $0x28] sm:$0xf]
    %v86 = vld [vmem:[%s1 + $0x2c] sm:$0xf]
    %v99 = vunpack.c.l.b16 %v75
    %v100 = vunpack.c.l.b16 %v76
    %v101 = vunpack.c.l.b16 %v77
    %v102 = vunpack.c.l.b16 %v78
    %v103 = vunpack.c.l.b16 %v79
    %v104 = vunpack.c.l.b16 %v80
    %v105 = vunpack.c.l.b16 %v81
    %v106 = vunpack.c.l.b16 %v82
    %v107 = vunpack.c.l.b16 %v83
    %v108 = vunpack.c.l.b16 %v84
    %v109 = vunpack.c.l.b16 %v85
    %v110 = vunpack.c.l.b16 %v86
    %v111 = vpack.c.b16 %v100, %v99
    %v112 = vpack.c.b16 %v102, %v101
    %v113 = vpack.c.b16 %v104, %v103
    %v114 = vpack.c.b16 %v106, %v105
    %v115 = vpack.c.b16 %v108, %v107
    %v116 = vpack.c.b16 %v110, %v109
    %vm123 = vcmask 785408
    %v125 = vsel %vm123, %v74, 0
    %127 = vmatprep.subr.bf16.mxu0 0
    %128 = vmatpush1.bf16.msra.mxu0 %v111
    %129 = vmatprep.subr.bf16.mxu0 0
    %130 = vmatpush1.bf16.msra.mxu0 %v112
    %131 = vmatprep.subr.bf16.mxu0 0
    %132 = vmatpush1.bf16.msra.mxu0 %v113
    %133 = vmatprep.subr.bf16.mxu0 0
    %134 = vmatpush1.bf16.msra.mxu0 %v114
    %135 = vmatprep.subr.bf16.mxu0 0
    %136 = vmatpush1.bf16.msra.mxu0 %v115
    %137 = vmatprep.subr.bf16.mxu0 0
    %138 = vmatpush1.bf16.msra.mxu0 %v116
    %139 = vmatprep.subr.bf16.mxu0 0
    %140 = vmatpush1.bf16.msra.mxu0 0
    %141 = vmatprep.subr.bf16.mxu0 0
    %142 = vmatpush1.bf16.msra.mxu0 0
    %143 = vmatprep.subr.bf16.mxu0 0
    %144 = vmatpush1.bf16.msra.mxu0 0
    %145 = vmatprep.subr.bf16.mxu0 0
    %146 = vmatpush1.bf16.msra.mxu0 0
    %147 = vmatprep.subr.bf16.mxu0 0
    %148 = vmatpush1.bf16.msra.mxu0 0
    %149 = vmatprep.subr.bf16.mxu0 0
    %150 = vmatpush1.bf16.msra.mxu0 0
    %151 = vmatprep.subr.bf16.mxu0 0
    %152 = vmatpush1.bf16.msra.mxu0 0
    %153 = vmatprep.subr.bf16.mxu0 0
    %154 = vmatpush1.bf16.msra.mxu0 0
    %155 = vmatprep.subr.bf16.mxu0 0
    %156 = vmatpush1.bf16.msra.mxu0 0
    %157 = vmatprep.subr.bf16.mxu0 0
    %158 = vmatpush1.bf16.msra.mxu0 0
    %159 = vmatprep.mubr.bf16.mxu0 0
    %160 = vmatmul.mubr.bf16.gmra.mrb[0].mxu0 %v125
    %v161 = vpop.f32.mrb[0].mxu0
    %v162 = vadd.f32 0.0, %v161
    %v163 = vpop.f32.mrb[0].mxu0
    %v164 = vpop.f32.mrb[0].mxu0
    %v165 = vpop.f32.mrb[0].mxu0
    %166 = vdwg.mxu0
    %v167 = vpack.c.bf16 %v162, %v162
    %v168 = vld [vmem:[#allocation2] sm:$0xff]
    %v169 = vld [vmem:[#allocation2 + $0x8] sm:$0xff]
    %v170 = vld [vmem:[#allocation2 + $0x10] sm:$0xff]
    %v171 = vld [vmem:[#allocation2 + $0x18] sm:$0xff]
    %v172 = vld [vmem:[#allocation2 + $0x20] sm:$0xff]
    %v173 = vld [vmem:[#allocation2 + $0x28] sm:$0xff]
    %v174 = vld [vmem:[#allocation2 + $0x30] sm:$0xff]
    %v175 = vld [vmem:[#allocation2 + $0x38] sm:$0xff]
    %v176 = vld [vmem:[#allocation2 + $0x40] sm:$0xff]
    %v177 = vld [vmem:[#allocation2 + $0x48] sm:$0xff]
    %v178 = vld [vmem:[#allocation2 + $0x50] sm:$0xff]
    %v179 = vld [vmem:[#allocation2 + $0x58] sm:$0xff]
    %v180 = vld [vmem:[#allocation2 + $0x60] sm:$0xff]
    %v181 = vld [vmem:[#allocation2 + $0x68] sm:$0xff]
    %v182 = vld [vmem:[#allocation2 + $0x70] sm:$0xff]
    %v183 = vld [vmem:[#allocation2 + $0x78] sm:$0xff]
    %v184 = vld [vmem:[#allocation2 + $0x80] sm:$0xff]
    %v185 = vld [vmem:[#allocation2 + $0x88] sm:$0xff]
    %v186 = vld [vmem:[#allocation2 + $0x90] sm:$0xff]
    %v187 = vld [vmem:[#allocation2 + $0x98] sm:$0xff]
    %v188 = vld [vmem:[#allocation2 + $0xa0] sm:$0xff]
    %v189 = vld [vmem:[#allocation2 + $0xa8] sm:$0xff]
    %v190 = vld [vmem:[#allocation2 + $0xb0] sm:$0xff]
    %v191 = vld [vmem:[#allocation2 + $0xb8] sm:$0xff]
    %v192 = vld [vmem:[#allocation2 + $0xc0] sm:$0xff]
    %v193 = vld [vmem:[#allocation2 + $0xc8] sm:$0xff]
    %v194 = vld [vmem:[#allocation2 + $0xd0] sm:$0xff]
    %v195 = vld [vmem:[#allocation2 + $0xd8] sm:$0xff]
    %v196 = vld [vmem:[#allocation2 + $0xe0] sm:$0xff]
    %v197 = vld [vmem:[#allocation2 + $0xe8] sm:$0xff]
    %v198 = vld [vmem:[#allocation2 + $0xf0] sm:$0xff]
    %v199 = vld [vmem:[#allocation2 + $0xf8] sm:$0xff]
    %v200 = vld [vmem:[#allocation2 + $0x100] sm:$0xff]
    %v201 = vld [vmem:[#allocation2 + $0x108] sm:$0xff]
    %v202 = vld [vmem:[#allocation2 + $0x110] sm:$0xff]
    %v203 = vld [vmem:[#allocation2 + $0x118] sm:$0xff]
    %v204 = vld [vmem:[#allocation2 + $0x120] sm:$0xff]
    %v205 = vld [vmem:[#allocation2 + $0x128] sm:$0xff]
    %v206 = vld [vmem:[#allocation2 + $0x130] sm:$0xff]
    %v207 = vld [vmem:[#allocation2 + $0x138] sm:$0xff]
    %v208 = vld [vmem:[#allocation2 + $0x140] sm:$0xff]
    %v209 = vld [vmem:[#allocation2 + $0x148] sm:$0xff]
    %v210 = vld [vmem:[#allocation2 + $0x150] sm:$0xff]
    %v211 = vld [vmem:[#allocation2 + $0x158] sm:$0xff]
    %v212 = vld [vmem:[#allocation2 + $0x160] sm:$0xff]
    %v213 = vld [vmem:[#allocation2 + $0x168] sm:$0xff]
    %v214 = vld [vmem:[#allocation2 + $0x170] sm:$0xff]
    %v215 = vld [vmem:[#allocation2 + $0x178] sm:$0xff]
    %v216 = vld [vmem:[#allocation2 + $0x180] sm:$0xff]
    %v217 = vld [vmem:[#allocation2 + $0x188] sm:$0xff]
    %v218 = vld [vmem:[#allocation2 + $0x190] sm:$0xff]
    %v219 = vld [vmem:[#allocation2 + $0x198] sm:$0xff]
    %v220 = vld [vmem:[#allocation2 + $0x1a0] sm:$0xff]
    %v221 = vld [vmem:[#allocation2 + $0x1a8] sm:$0xff]
    %v222 = vld [vmem:[#allocation2 + $0x1b0] sm:$0xff]
    %v223 = vld [vmem:[#allocation2 + $0x1b8] sm:$0xff]
    %v224 = vld [vmem:[#allocation2 + $0x1c0] sm:$0xff]
    %v225 = vld [vmem:[#allocation2 + $0x1c8] sm:$0xff]
    %v226 = vld [vmem:[#allocation2 + $0x1d0] sm:$0xff]
    %v227 = vld [vmem:[#allocation2 + $0x1d8] sm:$0xff]
    %v228 = vld [vmem:[#allocation2 + $0x1e0] sm:$0xff]
    %v229 = vld [vmem:[#allocation2 + $0x1e8] sm:$0xff]
    %v230 = vld [vmem:[#allocation2 + $0x1f0] sm:$0xff]
    %v231 = vld [vmem:[#allocation2 + $0x1f8] sm:$0xff]
    %v232 = vld [vmem:[#allocation4] sm:$0xff]
    %v233 = vld [vmem:[#allocation4 + $0x8] sm:$0xff]
    %v236 = vlaneseq
    %v237 = vshrl.u32 %v236, 7
    %v238 = vsub.s32 0, %v237
    %v239 = vrot.slane %v232, %v238
    %v240 = vlaneseq
    %v241 = vshrl.u32 %v240, 7
    %v242 = vsub.s32 1, %v241
    %v243 = vrot.slane %v232, %v242
    %v244 = vlaneseq
    %v245 = vshrl.u32 %v244, 7
    %v246 = vsub.s32 2, %v245
    %v247 = vrot.slane %v232, %v246
    %v248 = vlaneseq
    %v249 = vshrl.u32 %v248, 7
    %v250 = vsub.s32 3, %v249
    %v251 = vrot.slane %v232, %v250
    %v252 = vlaneseq
    %v253 = vshrl.u32 %v252, 7
    %v254 = vsub.s32 4, %v253
    %v255 = vrot.slane %v232, %v254
    %v256 = vlaneseq
    %v257 = vshrl.u32 %v256, 7
    %v258 = vsub.s32 5, %v257
    %v259 = vrot.slane %v232, %v258
    %v260 = vlaneseq
    %v261 = vshrl.u32 %v260, 7
    %v262 = vsub.s32 6, %v261
    %v263 = vrot.slane %v232, %v262
    %v264 = vlaneseq
    %v265 = vshrl.u32 %v264, 7
    %v266 = vsub.s32 7, %v265
    %v267 = vrot.slane %v232, %v266
    %v268 = vlaneseq
    %v269 = vshrl.u32 %v268, 7
    %v270 = vsub.s32 0, %v269
    %v271 = vrot.slane %v233, %v270
    %v272 = vlaneseq
    %v273 = vshrl.u32 %v272, 7
    %v274 = vsub.s32 1, %v273
    %v275 = vrot.slane %v233, %v274
    %v276 = vlaneseq
    %v277 = vshrl.u32 %v276, 7
    %v278 = vsub.s32 2, %v277
    %v279 = vrot.slane %v233, %v278
    %v280 = vlaneseq
    %v281 = vshrl.u32 %v280, 7
    %v282 = vsub.s32 3, %v281
    %v283 = vrot.slane %v233, %v282
    %v284 = vlaneseq
    %v285 = vshrl.u32 %v284, 7
    %v286 = vsub.s32 4, %v285
    %v287 = vrot.slane %v233, %v286
    %v288 = vlaneseq
    %v289 = vshrl.u32 %v288, 7
    %v290 = vsub.s32 5, %v289
    %v291 = vrot.slane %v233, %v290
    %v292 = vlaneseq
    %v293 = vshrl.u32 %v292, 7
    %v294 = vsub.s32 6, %v293
    %v295 = vrot.slane %v233, %v294
    %v296 = vlaneseq
    %v297 = vshrl.u32 %v296, 7
    %v298 = vsub.s32 7, %v297
    %v299 = vrot.slane %v233, %v298
    %v380 = vunpack.c.l.b16 %v168
    %v381 = vunpack.c.h.b16 %v168
    %v382 = vunpack.c.l.b16 %v169
    %v383 = vunpack.c.h.b16 %v169
    %v384 = vunpack.c.l.b16 %v170
    %v385 = vunpack.c.h.b16 %v170
    %v386 = vunpack.c.l.b16 %v171
    %v387 = vunpack.c.h.b16 %v171
    %v388 = vunpack.c.l.b16 %v172
    %v389 = vunpack.c.h.b16 %v172
    %v390 = vunpack.c.l.b16 %v173
    %v391 = vunpack.c.h.b16 %v173
    %v392 = vunpack.c.l.b16 %v174
    %v393 = vunpack.c.h.b16 %v174
    %v394 = vunpack.c.l.b16 %v175
    %v395 = vunpack.c.h.b16 %v175
    %v396 = vunpack.c.l.b16 %v176
    %v397 = vunpack.c.h.b16 %v176
    %v398 = vunpack.c.l.b16 %v177
    %v399 = vunpack.c.h.b16 %v177
    %v400 = vunpack.c.l.b16 %v178
    %v401 = vunpack.c.h.b16 %v178
    %v402 = vunpack.c.l.b16 %v179
    %v403 = vunpack.c.h.b16 %v179
    %v404 = vunpack.c.l.b16 %v180
    %v405 = vunpack.c.h.b16 %v180
    %v406 = vunpack.c.l.b16 %v181
    %v407 = vunpack.c.h.b16 %v181
    %v408 = vunpack.c.l.b16 %v182
    %v409 = vunpack.c.h.b16 %v182
    %v410 = vunpack.c.l.b16 %v183
    %v411 = vunpack.c.h.b16 %v183
    %v412 = vunpack.c.l.b16 %v184
    %v413 = vunpack.c.h.b16 %v184
    %v414 = vunpack.c.l.b16 %v185
    %v415 = vunpack.c.h.b16 %v185
    %v416 = vunpack.c.l.b16 %v186
    %v417 = vunpack.c.h.b16 %v186
    %v418 = vunpack.c.l.b16 %v187
    %v419 = vunpack.c.h.b16 %v187
    %v420 = vunpack.c.l.b16 %v188
    %v421 = vunpack.c.h.b16 %v188
    %v422 = vunpack.c.l.b16 %v189
    %v423 = vunpack.c.h.b16 %v189
    %v424 = vunpack.c.l.b16 %v190
    %v425 = vunpack.c.h.b16 %v190
    %v426 = vunpack.c.l.b16 %v191
    %v427 = vunpack.c.h.b16 %v191
    %v428 = vunpack.c.l.b16 %v192
    %v429 = vunpack.c.h.b16 %v192
    %v430 = vunpack.c.l.b16 %v193
    %v431 = vunpack.c.h.b16 %v193
    %v432 = vunpack.c.l.b16 %v194
    %v433 = vunpack.c.h.b16 %v194
    %v434 = vunpack.c.l.b16 %v195
    %v435 = vunpack.c.h.b16 %v195
    %v436 = vunpack.c.l.b16 %v196
    %v437 = vunpack.c.h.b16 %v196
    %v438 = vunpack.c.l.b16 %v197
    %v439 = vunpack.c.h.b16 %v197
    %v440 = vunpack.c.l.b16 %v198
    %v441 = vunpack.c.h.b16 %v198
    %v442 = vunpack.c.l.b16 %v199
    %v443 = vunpack.c.h.b16 %v199
    %v444 = vunpack.c.l.b16 %v200
    %v445 = vunpack.c.h.b16 %v200
    %v446 = vunpack.c.l.b16 %v201
    %v447 = vunpack.c.h.b16 %v201
    %v448 = vunpack.c.l.b16 %v202
    %v449 = vunpack.c.h.b16 %v202
    %v450 = vunpack.c.l.b16 %v203
    %v451 = vunpack.c.h.b16 %v203
    %v452 = vunpack.c.l.b16 %v204
    %v453 = vunpack.c.h.b16 %v204
    %v454 = vunpack.c.l.b16 %v205
    %v455 = vunpack.c.h.b16 %v205
    %v456 = vunpack.c.l.b16 %v206
    %v457 = vunpack.c.h.b16 %v206
    %v458 = vunpack.c.l.b16 %v207
    %v459 = vunpack.c.h.b16 %v207
    %v460 = vunpack.c.l.b16 %v208
    %v461 = vunpack.c.h.b16 %v208
    %v462 = vunpack.c.l.b16 %v209
    %v463 = vunpack.c.h.b16 %v209
    %v464 = vunpack.c.l.b16 %v210
    %v465 = vunpack.c.h.b16 %v210
    %v466 = vunpack.c.l.b16 %v211
    %v467 = vunpack.c.h.b16 %v211
    %v468 = vunpack.c.l.b16 %v212
    %v469 = vunpack.c.h.b16 %v212
    %v470 = vunpack.c.l.b16 %v213
    %v471 = vunpack.c.h.b16 %v213
    %v472 = vunpack.c.l.b16 %v214
    %v473 = vunpack.c.h.b16 %v214
    %v474 = vunpack.c.l.b16 %v215
    %v475 = vunpack.c.h.b16 %v215
    %v476 = vunpack.c.l.b16 %v216
    %v477 = vunpack.c.h.b16 %v216
    %v478 = vunpack.c.l.b16 %v217
    %v479 = vunpack.c.h.b16 %v217
    %v480 = vunpack.c.l.b16 %v218
    %v481 = vunpack.c.h.b16 %v218
    %v482 = vunpack.c.l.b16 %v219
    %v483 = vunpack.c.h.b16 %v219
    %v484 = vunpack.c.l.b16 %v220
    %v485 = vunpack.c.h.b16 %v220
    %v486 = vunpack.c.l.b16 %v221
    %v487 = vunpack.c.h.b16 %v221
    %v488 = vunpack.c.l.b16 %v222
    %v489 = vunpack.c.h.b16 %v222
    %v490 = vunpack.c.l.b16 %v223
    %v491 = vunpack.c.h.b16 %v223
    %v492 = vunpack.c.l.b16 %v224
    %v493 = vunpack.c.h.b16 %v224
    %v494 = vunpack.c.l.b16 %v225
    %v495 = vunpack.c.h.b16 %v225
    %v496 = vunpack.c.l.b16 %v226
    %v497 = vunpack.c.h.b16 %v226
    %v498 = vunpack.c.l.b16 %v227
    %v499 = vunpack.c.h.b16 %v227
    %v500 = vunpack.c.l.b16 %v228
    %v501 = vunpack.c.h.b16 %v228
    %v502 = vunpack.c.l.b16 %v229
    %v503 = vunpack.c.h.b16 %v229
    %v504 = vunpack.c.l.b16 %v230
    %v505 = vunpack.c.h.b16 %v230
    %v506 = vunpack.c.l.b16 %v231
    %v507 = vunpack.c.h.b16 %v231
    %v508 = vpack.c.b16 %v396, %v380
    %v509 = vpack.c.b16 %v397, %v381
    %v510 = vpack.c.b16 %v398, %v382
    %v511 = vpack.c.b16 %v399, %v383
    %v512 = vpack.c.b16 %v400, %v384
    %v513 = vpack.c.b16 %v401, %v385
    %v514 = vpack.c.b16 %v402, %v386
    %v515 = vpack.c.b16 %v403, %v387
    %v516 = vpack.c.b16 %v404, %v388
    %v517 = vpack.c.b16 %v405, %v389
    %v518 = vpack.c.b16 %v406, %v390
    %v519 = vpack.c.b16 %v407, %v391
    %v520 = vpack.c.b16 %v408, %v392
    %v521 = vpack.c.b16 %v409, %v393
    %v522 = vpack.c.b16 %v410, %v394
    %v523 = vpack.c.b16 %v411, %v395
    %v524 = vpack.c.b16 %v428, %v412
    %v525 = vpack.c.b16 %v429, %v413
    %v526 = vpack.c.b16 %v430, %v414
    %v527 = vpack.c.b16 %v431, %v415
    %v528 = vpack.c.b16 %v432, %v416
    %v529 = vpack.c.b16 %v433, %v417
    %v530 = vpack.c.b16 %v434, %v418
    %v531 = vpack.c.b16 %v435, %v419
    %v532 = vpack.c.b16 %v436, %v420
    %v533 = vpack.c.b16 %v437, %v421
    %v534 = vpack.c.b16 %v438, %v422
    %v535 = vpack.c.b16 %v439, %v423
    %v536 = vpack.c.b16 %v440, %v424
    %v537 = vpack.c.b16 %v441, %v425
    %v538 = vpack.c.b16 %v442, %v426
    %v539 = vpack.c.b16 %v443, %v427
    %v540 = vpack.c.b16 %v460, %v444
    %v541 = vpack.c.b16 %v461, %v445
    %v542 = vpack.c.b16 %v462, %v446
    %v543 = vpack.c.b16 %v463, %v447
    %v544 = vpack.c.b16 %v464, %v448
    %v545 = vpack.c.b16 %v465, %v449
    %v546 = vpack.c.b16 %v466, %v450
    %v547 = vpack.c.b16 %v467, %v451
    %v548 = vpack.c.b16 %v468, %v452
    %v549 = vpack.c.b16 %v469, %v453
    %v550 = vpack.c.b16 %v470, %v454
    %v551 = vpack.c.b16 %v471, %v455
    %v552 = vpack.c.b16 %v472, %v456
    %v553 = vpack.c.b16 %v473, %v457
    %v554 = vpack.c.b16 %v474, %v458
    %v555 = vpack.c.b16 %v475, %v459
    %v556 = vpack.c.b16 %v492, %v476
    %v557 = vpack.c.b16 %v493, %v477
    %v558 = vpack.c.b16 %v494, %v478
    %v559 = vpack.c.b16 %v495, %v479
    %v560 = vpack.c.b16 %v496, %v480
    %v561 = vpack.c.b16 %v497, %v481
    %v562 = vpack.c.b16 %v498, %v482
    %v563 = vpack.c.b16 %v499, %v483
    %v564 = vpack.c.b16 %v500, %v484
    %v565 = vpack.c.b16 %v501, %v485
    %v566 = vpack.c.b16 %v502, %v486
    %v567 = vpack.c.b16 %v503, %v487
    %v568 = vpack.c.b16 %v504, %v488
    %v569 = vpack.c.b16 %v505, %v489
    %v570 = vpack.c.b16 %v506, %v490
    %v571 = vpack.c.b16 %v507, %v491
    %vm636 = vcmask 523264
    %v638 = vsel %vm636, %v167, 0
    %640 = vmatprep.subr.bf16.mxu0 %v509
    %641 = vmatpush1.bf16.msra.mxu0 %v508
    %642 = vmatprep.subr.bf16.mxu0 %v525
    %643 = vmatpush1.bf16.msra.mxu0 %v524
    %644 = vmatprep.subr.bf16.mxu0 %v541
    %645 = vmatpush1.bf16.msra.mxu0 %v540
    %646 = vmatprep.subr.bf16.mxu0 %v557
    %647 = vmatpush1.bf16.msra.mxu0 %v556
    %648 = vmatprep.subr.bf16.mxu0 0
    %649 = vmatpush1.bf16.msra.mxu0 0
    %650 = vmatprep.subr.bf16.mxu0 0
    %651 = vmatpush1.bf16.msra.mxu0 0
    %652 = vmatprep.subr.bf16.mxu0 0
    %653 = vmatpush1.bf16.msra.mxu0 0
    %654 = vmatprep.subr.bf16.mxu0 0
    %655 = vmatpush1.bf16.msra.mxu0 0
    %656 = vmatprep.subr.bf16.mxu0 0
    %657 = vmatpush1.bf16.msra.mxu0 0
    %658 = vmatprep.subr.bf16.mxu0 0
    %659 = vmatpush1.bf16.msra.mxu0 0
    %660 = vmatprep.subr.bf16.mxu0 0
    %661 = vmatpush1.bf16.msra.mxu0 0
    %662 = vmatprep.subr.bf16.mxu0 0
    %663 = vmatpush1.bf16.msra.mxu0 0
    %664 = vmatprep.subr.bf16.mxu0 0
    %665 = vmatpush1.bf16.msra.mxu0 0
    %666 = vmatprep.subr.bf16.mxu0 0
    %667 = vmatpush1.bf16.msra.mxu0 0
    %668 = vmatprep.subr.bf16.mxu0 0
    %669 = vmatpush1.bf16.msra.mxu0 0
    %670 = vmatprep.subr.bf16.mxu0 0
    %671 = vmatpush1.bf16.msra.mxu0 0
    %672 = vmatprep.mubr.bf16.mxu0 0
    %673 = vmatmul.mubr.bf16.gmra.mrb[0].mxu0 %v638
    %v674 = vpop.f32.mrb[0].mxu0
    %v675 = vadd.f32 %v239, %v674
    %v676 = vpop.f32.mrb[0].mxu0
    %v677 = vadd.f32 %v243, %v676
    %v678 = vpop.f32.mrb[0].mxu0
    %v679 = vpop.f32.mrb[0].mxu0
    %680 = vdwg.mxu0
    %681 = vmatprep.subr.bf16.mxu0 %v511
    %682 = vmatpush1.bf16.msra.mxu0 %v510
    %683 = vmatprep.subr.bf16.mxu0 %v527
    %684 = vmatpush1.bf16.msra.mxu0 %v526
    %685 = vmatprep.subr.bf16.mxu0 %v543
    %686 = vmatpush1.bf16.msra.mxu0 %v542
    %687 = vmatprep.subr.bf16.mxu0 %v559
    %688 = vmatpush1.bf16.msra.mxu0 %v558
    %689 = vmatprep.subr.bf16.mxu0 0
    %690 = vmatpush1.bf16.msra.mxu0 0
    %691 = vmatprep.subr.bf16.mxu0 0
    %692 = vmatpush1.bf16.msra.mxu0 0
    %693 = vmatprep.subr.bf16.mxu0 0
    %694 = vmatpush1.bf16.msra.mxu0 0
    %695 = vmatprep.subr.bf16.mxu0 0
    %696 = vmatpush1.bf16.msra.mxu0 0
    %697 = vmatprep.subr.bf16.mxu0 0
    %698 = vmatpush1.bf16.msra.mxu0 0
    %699 = vmatprep.subr.bf16.mxu0 0
    %700 = vmatpush1.bf16.msra.mxu0 0
    %701 = vmatprep.subr.bf16.mxu0 0
    %702 = vmatpush1.bf16.msra.mxu0 0
    %703 = vmatprep.subr.bf16.mxu0 0
    %704 = vmatpush1.bf16.msra.mxu0 0
    %705 = vmatprep.subr.bf16.mxu0 0
    %706 = vmatpush1.bf16.msra.mxu0 0
    %707 = vmatprep.subr.bf16.mxu0 0
    %708 = vmatpush1.bf16.msra.mxu0 0
    %709 = vmatprep.subr.bf16.mxu0 0
    %710 = vmatpush1.bf16.msra.mxu0 0
    %711 = vmatprep.subr.bf16.mxu0 0
    %712 = vmatpush1.bf16.msra.mxu0 0
    %713 = vmatprep.mubr.bf16.mxu0 0
    %714 = vmatmul.mubr.bf16.gmra.mrb[0].mxu0 %v638
    %v715 = vpop.f32.mrb[0].mxu0
    %v716 = vadd.f32 %v247, %v715
    %v717 = vpop.f32.mrb[0].mxu0
    %v718 = vadd.f32 %v251, %v717
    %v719 = vpop.f32.mrb[0].mxu0
    %v720 = vpop.f32.mrb[0].mxu0
    %721 = vdwg.mxu0
    %722 = vmatprep.subr.bf16.mxu0 %v513
    %723 = vmatpush1.bf16.msra.mxu0 %v512
    %724 = vmatprep.subr.bf16.mxu0 %v529
    %725 = vmatpush1.bf16.msra.mxu0 %v528
    %726 = vmatprep.subr.bf16.mxu0 %v545
    %727 = vmatpush1.bf16.msra.mxu0 %v544
    %728 = vmatprep.subr.bf16.mxu0 %v561
    %729 = vmatpush1.bf16.msra.mxu0 %v560
    %730 = vmatprep.subr.bf16.mxu0 0
    %731 = vmatpush1.bf16.msra.mxu0 0
    %732 = vmatprep.subr.bf16.mxu0 0
    %733 = vmatpush1.bf16.msra.mxu0 0
    %734 = vmatprep.subr.bf16.mxu0 0
    %735 = vmatpush1.bf16.msra.mxu0 0
    %736 = vmatprep.subr.bf16.mxu0 0
    %737 = vmatpush1.bf16.msra.mxu0 0
    %738 = vmatprep.subr.bf16.mxu0 0
    %739 = vmatpush1.bf16.msra.mxu0 0
    %740 = vmatprep.subr.bf16.mxu0 0
    %741 = vmatpush1.bf16.msra.mxu0 0
    %742 = vmatprep.subr.bf16.mxu0 0
    %743 = vmatpush1.bf16.msra.mxu0 0
    %744 = vmatprep.subr.bf16.mxu0 0
    %745 = vmatpush1.bf16.msra.mxu0 0
    %746 = vmatprep.subr.bf16.mxu0 0
    %747 = vmatpush1.bf16.msra.mxu0 0
    %748 = vmatprep.subr.bf16.mxu0 0
    %749 = vmatpush1.bf16.msra.mxu0 0
    %750 = vmatprep.subr.bf16.mxu0 0
    %751 = vmatpush1.bf16.msra.mxu0 0
    %752 = vmatprep.subr.bf16.mxu0 0
    %753 = vmatpush1.bf16.msra.mxu0 0
    %754 = vmatprep.mubr.bf16.mxu0 0
    %755 = vmatmul.mubr.bf16.gmra.mrb[0].mxu0 %v638
    %v756 = vpop.f32.mrb[0].mxu0
    %v757 = vadd.f32 %v255, %v756
    %v758 = vpop.f32.mrb[0].mxu0
    %v759 = vadd.f32 %v259, %v758
    %v760 = vpop.f32.mrb[0].mxu0
    %v761 = vpop.f32.mrb[0].mxu0
    %762 = vdwg.mxu0
    %763 = vmatprep.subr.bf16.mxu0 %v515
    %764 = vmatpush1.bf16.msra.mxu0 %v514
    %765 = vmatprep.subr.bf16.mxu0 %v531
    %766 = vmatpush1.bf16.msra.mxu0 %v530
    %767 = vmatprep.subr.bf16.mxu0 %v547
    %768 = vmatpush1.bf16.msra.mxu0 %v546
    %769 = vmatprep.subr.bf16.mxu0 %v563
    %770 = vmatpush1.bf16.msra.mxu0 %v562
    %771 = vmatprep.subr.bf16.mxu0 0
    %772 = vmatpush1.bf16.msra.mxu0 0
    %773 = vmatprep.subr.bf16.mxu0 0
    %774 = vmatpush1.bf16.msra.mxu0 0
    %775 = vmatprep.subr.bf16.mxu0 0
    %776 = vmatpush1.bf16.msra.mxu0 0
    %777 = vmatprep.subr.bf16.mxu0 0
    %778 = vmatpush1.bf16.msra.mxu0 0
    %779 = vmatprep.subr.bf16.mxu0 0
    %780 = vmatpush1.bf16.msra.mxu0 0
    %781 = vmatprep.subr.bf16.mxu0 0
    %782 = vmatpush1.bf16.msra.mxu0 0
    %783 = vmatprep.subr.bf16.mxu0 0
    %784 = vmatpush1.bf16.msra.mxu0 0
    %785 = vmatprep.subr.bf16.mxu0 0
    %786 = vmatpush1.bf16.msra.mxu0 0
    %787 = vmatprep.subr.bf16.mxu0 0
    %788 = vmatpush1.bf16.msra.mxu0 0
    %789 = vmatprep.subr.bf16.mxu0 0
    %790 = vmatpush1.bf16.msra.mxu0 0
    %791 = vmatprep.subr.bf16.mxu0 0
    %792 = vmatpush1.bf16.msra.mxu0 0
    %793 = vmatprep.subr.bf16.mxu0 0
    %794 = vmatpush1.bf16.msra.mxu0 0
    %795 = vmatprep.mubr.bf16.mxu0 0
    %796 = vmatmul.mubr.bf16.gmra.mrb[0].mxu0 %v638
    %v797 = vpop.f32.mrb[0].mxu0
    %v798 = vadd.f32 %v263, %v797
    %v799 = vpop.f32.mrb[0].mxu0
    %v800 = vadd.f32 %v267, %v799
    %v801 = vpop.f32.mrb[0].mxu0
    %v802 = vpop.f32.mrb[0].mxu0
    %803 = vdwg.mxu0
    %804 = vmatprep.subr.bf16.mxu0 %v517
    %805 = vmatpush1.bf16.msra.mxu0 %v516
    %806 = vmatprep.subr.bf16.mxu0 %v533
    %807 = vmatpush1.bf16.msra.mxu0 %v532
    %808 = vmatprep.subr.bf16.mxu0 %v549
    %809 = vmatpush1.bf16.msra.mxu0 %v548
    %810 = vmatprep.subr.bf16.mxu0 %v565
    %811 = vmatpush1.bf16.msra.mxu0 %v564
    %812 = vmatprep.subr.bf16.mxu0 0
    %813 = vmatpush1.bf16.msra.mxu0 0
    %814 = vmatprep.subr.bf16.mxu0 0
    %815 = vmatpush1.bf16.msra.mxu0 0
    %816 = vmatprep.subr.bf16.mxu0 0
    %817 = vmatpush1.bf16.msra.mxu0 0
    %818 = vmatprep.subr.bf16.mxu0 0
    %819 = vmatpush1.bf16.msra.mxu0 0
    %820 = vmatprep.subr.bf16.mxu0 0
    %821 = vmatpush1.bf16.msra.mxu0 0
    %822 = vmatprep.subr.bf16.mxu0 0
    %823 = vmatpush1.bf16.msra.mxu0 0
    %824 = vmatprep.subr.bf16.mxu0 0
    %825 = vmatpush1.bf16.msra.mxu0 0
    %826 = vmatprep.subr.bf16.mxu0 0
    %827 = vmatpush1.bf16.msra.mxu0 0
    %828 = vmatprep.subr.bf16.mxu0 0
    %829 = vmatpush1.bf16.msra.mxu0 0
    %830 = vmatprep.subr.bf16.mxu0 0
    %831 = vmatpush1.bf16.msra.mxu0 0
    %832 = vmatprep.subr.bf16.mxu0 0
    %833 = vmatpush1.bf16.msra.mxu0 0
    %834 = vmatprep.subr.bf16.mxu0 0
    %835 = vmatpush1.bf16.msra.mxu0 0
    %836 = vmatprep.mubr.bf16.mxu0 0
    %837 = vmatmul.mubr.bf16.gmra.mrb[0].mxu0 %v638
    %v838 = vpop.f32.mrb[0].mxu0
    %v839 = vadd.f32 %v271, %v838
    %v840 = vpop.f32.mrb[0].mxu0
    %v841 = vadd.f32 %v275, %v840
    %v842 = vpop.f32.mrb[0].mxu0
    %v843 = vpop.f32.mrb[0].mxu0
    %844 = vdwg.mxu0
    %845 = vmatprep.subr.bf16.mxu0 %v519
    %846 = vmatpush1.bf16.msra.mxu0 %v518
    %847 = vmatprep.subr.bf16.mxu0 %v535
    %848 = vmatpush1.bf16.msra.mxu0 %v534
    %849 = vmatprep.subr.bf16.mxu0 %v551
    %850 = vmatpush1.bf16.msra.mxu0 %v550
    %851 = vmatprep.subr.bf16.mxu0 %v567
    %852 = vmatpush1.bf16.msra.mxu0 %v566
    %853 = vmatprep.subr.bf16.mxu0 0
    %854 = vmatpush1.bf16.msra.mxu0 0
    %855 = vmatprep.subr.bf16.mxu0 0
    %856 = vmatpush1.bf16.msra.mxu0 0
    %857 = vmatprep.subr.bf16.mxu0 0
    %858 = vmatpush1.bf16.msra.mxu0 0
    %859 = vmatprep.subr.bf16.mxu0 0
    %860 = vmatpush1.bf16.msra.mxu0 0
    %861 = vmatprep.subr.bf16.mxu0 0
    %862 = vmatpush1.bf16.msra.mxu0 0
    %863 = vmatprep.subr.bf16.mxu0 0
    %864 = vmatpush1.bf16.msra.mxu0 0
    %865 = vmatprep.subr.bf16.mxu0 0
    %866 = vmatpush1.bf16.msra.mxu0 0
    %867 = vmatprep.subr.bf16.mxu0 0
    %868 = vmatpush1.bf16.msra.mxu0 0
    %869 = vmatprep.subr.bf16.mxu0 0
    %870 = vmatpush1.bf16.msra.mxu0 0
    %871 = vmatprep.subr.bf16.mxu0 0
    %872 = vmatpush1.bf16.msra.mxu0 0
    %873 = vmatprep.subr.bf16.mxu0 0
    %874 = vmatpush1.bf16.msra.mxu0 0
    %875 = vmatprep.subr.bf16.mxu0 0
    %876 = vmatpush1.bf16.msra.mxu0 0
    %877 = vmatprep.mubr.bf16.mxu0 0
    %878 = vmatmul.mubr.bf16.gmra.mrb[0].mxu0 %v638
    %v879 = vpop.f32.mrb[0].mxu0
    %v880 = vadd.f32 %v279, %v879
    %v881 = vpop.f32.mrb[0].mxu0
    %v882 = vadd.f32 %v283, %v881
    %v883 = vpop.f32.mrb[0].mxu0
    %v884 = vpop.f32.mrb[0].mxu0
    %885 = vdwg.mxu0
    %886 = vmatprep.subr.bf16.mxu0 %v521
    %887 = vmatpush1.bf16.msra.mxu0 %v520
    %888 = vmatprep.subr.bf16.mxu0 %v537
    %889 = vmatpush1.bf16.msra.mxu0 %v536
    %890 = vmatprep.subr.bf16.mxu0 %v553
    %891 = vmatpush1.bf16.msra.mxu0 %v552
    %892 = vmatprep.subr.bf16.mxu0 %v569
    %893 = vmatpush1.bf16.msra.mxu0 %v568
    %894 = vmatprep.subr.bf16.mxu0 0
    %895 = vmatpush1.bf16.msra.mxu0 0
    %896 = vmatprep.subr.bf16.mxu0 0
    %897 = vmatpush1.bf16.msra.mxu0 0
    %898 = vmatprep.subr.bf16.mxu0 0
    %899 = vmatpush1.bf16.msra.mxu0 0
    %900 = vmatprep.subr.bf16.mxu0 0
    %901 = vmatpush1.bf16.msra.mxu0 0
    %902 = vmatprep.subr.bf16.mxu0 0
    %903 = vmatpush1.bf16.msra.mxu0 0
    %904 = vmatprep.subr.bf16.mxu0 0
    %905 = vmatpush1.bf16.msra.mxu0 0
    %906 = vmatprep.subr.bf16.mxu0 0
    %907 = vmatpush1.bf16.msra.mxu0 0
    %908 = vmatprep.subr.bf16.mxu0 0
    %909 = vmatpush1.bf16.msra.mxu0 0
    %910 = vmatprep.subr.bf16.mxu0 0
    %911 = vmatpush1.bf16.msra.mxu0 0
    %912 = vmatprep.subr.bf16.mxu0 0
    %913 = vmatpush1.bf16.msra.mxu0 0
    %914 = vmatprep.subr.bf16.mxu0 0
    %915 = vmatpush1.bf16.msra.mxu0 0
    %916 = vmatprep.subr.bf16.mxu0 0
    %917 = vmatpush1.bf16.msra.mxu0 0
    %918 = vmatprep.mubr.bf16.mxu0 0
    %919 = vmatmul.mubr.bf16.gmra.mrb[0].mxu0 %v638
    %v920 = vpop.f32.mrb[0].mxu0
    %v921 = vadd.f32 %v287, %v920
    %v922 = vpop.f32.mrb[0].mxu0
    %v923 = vadd.f32 %v291, %v922
    %v924 = vpop.f32.mrb[0].mxu0
    %v925 = vpop.f32.mrb[0].mxu0
    %926 = vdwg.mxu0
    %927 = vmatprep.subr.bf16.mxu0 %v523
    %928 = vmatpush1.bf16.msra.mxu0 %v522
    %929 = vmatprep.subr.bf16.mxu0 %v539
    %930 = vmatpush1.bf16.msra.mxu0 %v538
    %931 = vmatprep.subr.bf16.mxu0 %v555
    %932 = vmatpush1.bf16.msra.mxu0 %v554
    %933 = vmatprep.subr.bf16.mxu0 %v571
    %934 = vmatpush1.bf16.msra.mxu0 %v570
    %935 = vmatprep.subr.bf16.mxu0 0
    %936 = vmatpush1.bf16.msra.mxu0 0
    %937 = vmatprep.subr.bf16.mxu0 0
    %938 = vmatpush1.bf16.msra.mxu0 0
    %939 = vmatprep.subr.bf16.mxu0 0
    %940 = vmatpush1.bf16.msra.mxu0 0
    %941 = vmatprep.subr.bf16.mxu0 0
    %942 = vmatpush1.bf16.msra.mxu0 0
    %943 = vmatprep.subr.bf16.mxu0 0
    %944 = vmatpush1.bf16.msra.mxu0 0
    %945 = vmatprep.subr.bf16.mxu0 0
    %946 = vmatpush1.bf16.msra.mxu0 0
    %947 = vmatprep.subr.bf16.mxu0 0
    %948 = vmatpush1.bf16.msra.mxu0 0
    %949 = vmatprep.subr.bf16.mxu0 0
    %950 = vmatpush1.bf16.msra.mxu0 0
    %951 = vmatprep.subr.bf16.mxu0 0
    %952 = vmatpush1.bf16.msra.mxu0 0
    %953 = vmatprep.subr.bf16.mxu0 0
    %954 = vmatpush1.bf16.msra.mxu0 0
    %955 = vmatprep.subr.bf16.mxu0 0
    %956 = vmatpush1.bf16.msra.mxu0 0
    %957 = vmatprep.subr.bf16.mxu0 0
    %958 = vmatpush1.bf16.msra.mxu0 0
    %959 = vmatprep.mubr.bf16.mxu0 0
    %960 = vmatmul.mubr.bf16.gmra.mrb[0].mxu0 %v638
    %v961 = vpop.f32.mrb[0].mxu0
    %v962 = vadd.f32 %v295, %v961
    %v963 = vpop.f32.mrb[0].mxu0
    %v964 = vadd.f32 %v299, %v963
    %v965 = vpop.f32.mrb[0].mxu0
    %v966 = vpop.f32.mrb[0].mxu0
    %967 = vdwg.mxu0
    %vm968 = vcmask 1043456
    %v969 = vsel %vm968, %v675, 0.0
    %v970 = vsel %vm968, %v677, 0.0
    %v971 = vadd.f32 %v969, %v970
    %v972 = vsel %vm968, %v716, 0.0
    %v973 = vadd.f32 %v971, %v972
    %v974 = vsel %vm968, %v718, 0.0
    %v975 = vadd.f32 %v973, %v974
    %v976 = vsel %vm968, %v757, 0.0
    %v977 = vadd.f32 %v975, %v976
    %v978 = vsel %vm968, %v759, 0.0
    %v979 = vadd.f32 %v977, %v978
    %v980 = vsel %vm968, %v798, 0.0
    %v981 = vadd.f32 %v979, %v980
    %v982 = vsel %vm968, %v800, 0.0
    %v983 = vadd.f32 %v981, %v982
    %v984 = vsel %vm968, %v839, 0.0
    %v985 = vadd.f32 %v983, %v984
    %v986 = vsel %vm968, %v841, 0.0
    %v987 = vadd.f32 %v985, %v986
    %v988 = vsel %vm968, %v880, 0.0
    %v989 = vadd.f32 %v987, %v988
    %v990 = vsel %vm968, %v882, 0.0
    %v991 = vadd.f32 %v989, %v990
    %v992 = vsel %vm968, %v921, 0.0
    %v993 = vadd.f32 %v991, %v992
    %v994 = vsel %vm968, %v923, 0.0
    %v995 = vadd.f32 %v993, %v994
    %v996 = vsel %vm968, %v962, 0.0
    %v997 = vadd.f32 %v995, %v996
    %v998 = vsel %vm968, %v964, 0.0
    %v999 = vadd.f32 %v997, %v998
    %1000 = vadd.xlane.f32.xlu0 %v999
    %v1001 = vpop.xlane.xlu0 %1000
    %v1002 = vrcp.pop 2048.0
    %v1003 = vmul.f32 %v1001, %v1002
    %v1004 = vsub.f32 %v675, %v1003
    %v1005 = vsub.f32 %v677, %v1003
    %v1006 = vsub.f32 %v716, %v1003
    %v1007 = vsub.f32 %v718, %v1003
    %v1008 = vsub.f32 %v757, %v1003
    %v1009 = vsub.f32 %v759, %v1003
    %v1010 = vsub.f32 %v798, %v1003
    %v1011 = vsub.f32 %v800, %v1003
    %v1012 = vsub.f32 %v839, %v1003
    %v1013 = vsub.f32 %v841, %v1003
    %v1014 = vsub.f32 %v880, %v1003
    %v1015 = vsub.f32 %v882, %v1003
    %v1016 = vsub.f32 %v921, %v1003
    %v1017 = vsub.f32 %v923, %v1003
    %v1018 = vsub.f32 %v962, %v1003
    %v1019 = vsub.f32 %v964, %v1003
    %v1020 = vmul.f32 %v1004, %v1004
    %v1021 = vmul.f32 %v1005, %v1005
    %v1022 = vmul.f32 %v1006, %v1006
    %v1023 = vmul.f32 %v1007, %v1007
    %v1024 = vmul.f32 %v1008, %v1008
    %v1025 = vmul.f32 %v1009, %v1009
    %v1026 = vmul.f32 %v1010, %v1010
    %v1027 = vmul.f32 %v1011, %v1011
    %v1028 = vmul.f32 %v1012, %v1012
    %v1029 = vmul.f32 %v1013, %v1013
    %v1030 = vmul.f32 %v1014, %v1014
    %v1031 = vmul.f32 %v1015, %v1015
    %v1032 = vmul.f32 %v1016, %v1016
    %v1033 = vmul.f32 %v1017, %v1017
    %v1034 = vmul.f32 %v1018, %v1018
    %v1035 = vmul.f32 %v1019, %v1019
    %v1036 = vsel %vm968, %v1020, 0.0
    %v1037 = vsel %vm968, %v1021, 0.0
    %v1038 = vadd.f32 %v1036, %v1037
    %v1039 = vsel %vm968, %v1022, 0.0
    %v1040 = vadd.f32 %v1038, %v1039
    %v1041 = vsel %vm968, %v1023, 0.0
    %v1042 = vadd.f32 %v1040, %v1041
    %v1043 = vsel %vm968, %v1024, 0.0
    %v1044 = vadd.f32 %v1042, %v1043
    %v1045 = vsel %vm968, %v1025, 0.0
    %v1046 = vadd.f32 %v1044, %v1045
    %v1047 = vsel %vm968, %v1026, 0.0
    %v1048 = vadd.f32 %v1046, %v1047
    %v1049 = vsel %vm968, %v1027, 0.0
    %v1050 = vadd.f32 %v1048, %v1049
    %v1051 = vsel %vm968, %v1028, 0.0
    %v1052 = vadd.f32 %v1050, %v1051
    %v1053 = vsel %vm968, %v1029, 0.0
    %v1054 = vadd.f32 %v1052, %v1053
    %v1055 = vsel %vm968, %v1030, 0.0
    %v1056 = vadd.f32 %v1054, %v1055
    %v1057 = vsel %vm968, %v1031, 0.0
    %v1058 = vadd.f32 %v1056, %v1057
    %v1059 = vsel %vm968, %v1032, 0.0
    %v1060 = vadd.f32 %v1058, %v1059
    %v1061 = vsel %vm968, %v1033, 0.0
    %v1062 = vadd.f32 %v1060, %v1061
    %v1063 = vsel %vm968, %v1034, 0.0
    %v1064 = vadd.f32 %v1062, %v1063
    %v1065 = vsel %vm968, %v1035, 0.0
    %v1066 = vadd.f32 %v1064, %v1065
    %1067 = vadd.xlane.f32.xlu0 %v1066
    %v1068 = vpop.xlane.xlu0 %1067
    %v1069 = vmul.f32 %v1068, %v1002
    %v1070 = vadd.f32 %v1069, 1e-05
    %v1071 = vrsqrt.pop %v1070
    %v1072 = vmul.f32 %v1004, %v1071
    %v1073 = vmul.f32 %v1005, %v1071
    %v1074 = vmul.f32 %v1006, %v1071
    %v1075 = vmul.f32 %v1007, %v1071
    %v1076 = vmul.f32 %v1008, %v1071
    %v1077 = vmul.f32 %v1009, %v1071
    %v1078 = vmul.f32 %v1010, %v1071
    %v1079 = vmul.f32 %v1011, %v1071
    %v1080 = vmul.f32 %v1012, %v1071
    %v1081 = vmul.f32 %v1013, %v1071
    %v1082 = vmul.f32 %v1014, %v1071
    %v1083 = vmul.f32 %v1015, %v1071
    %v1084 = vmul.f32 %v1016, %v1071
    %v1085 = vmul.f32 %v1017, %v1071
    %v1086 = vmul.f32 %v1018, %v1071
    %v1087 = vmul.f32 %v1019, %v1071
    %v1088 = vld [vmem:[#allocation6] sm:$0xff]
    %v1089 = vld [vmem:[#allocation6 + $0x8] sm:$0xff]
    %v1092 = vlaneseq
    %v1093 = vshrl.u32 %v1092, 7
    %v1094 = vsub.s32 0, %v1093
    %v1095 = vrot.slane %v1088, %v1094
    %v1096 = vlaneseq
    %v1097 = vshrl.u32 %v1096, 7
    %v1098 = vsub.s32 1, %v1097
    %v1099 = vrot.slane %v1088, %v1098
    %v1100 = vlaneseq
    %v1101 = vshrl.u32 %v1100, 7
    %v1102 = vsub.s32 2, %v1101
    %v1103 = vrot.slane %v1088, %v1102
    %v1104 = vlaneseq
    %v1105 = vshrl.u32 %v1104, 7
    %v1106 = vsub.s32 3, %v1105
    %v1107 = vrot.slane %v1088, %v1106
    %v1108 = vlaneseq
    %v1109 = vshrl.u32 %v1108, 7
    %v1110 = vsub.s32 4, %v1109
    %v1111 = vrot.slane %v1088, %v1110
    %v1112 = vlaneseq
    %v1113 = vshrl.u32 %v1112, 7
    %v1114 = vsub.s32 5, %v1113
    %v1115 = vrot.slane %v1088, %v1114
    %v1116 = vlaneseq
    %v1117 = vshrl.u32 %v1116, 7
    %v1118 = vsub.s32 6, %v1117
    %v1119 = vrot.slane %v1088, %v1118
    %v1120 = vlaneseq
    %v1121 = vshrl.u32 %v1120, 7
    %v1122 = vsub.s32 7, %v1121
    %v1123 = vrot.slane %v1088, %v1122
    %v1124 = vlaneseq
    %v1125 = vshrl.u32 %v1124, 7
    %v1126 = vsub.s32 0, %v1125
    %v1127 = vrot.slane %v1089, %v1126
    %v1128 = vlaneseq
    %v1129 = vshrl.u32 %v1128, 7
    %v1130 = vsub.s32 1, %v1129
    %v1131 = vrot.slane %v1089, %v1130
    %v1132 = vlaneseq
    %v1133 = vshrl.u32 %v1132, 7
    %v1134 = vsub.s32 2, %v1133
    %v1135 = vrot.slane %v1089, %v1134
    %v1136 = vlaneseq
    %v1137 = vshrl.u32 %v1136, 7
    %v1138 = vsub.s32 3, %v1137
    %v1139 = vrot.slane %v1089, %v1138
    %v1140 = vlaneseq
    %v1141 = vshrl.u32 %v1140, 7
    %v1142 = vsub.s32 4, %v1141
    %v1143 = vrot.slane %v1089, %v1142
    %v1144 = vlaneseq
    %v1145 = vshrl.u32 %v1144, 7
    %v1146 = vsub.s32 5, %v1145
    %v1147 = vrot.slane %v1089, %v1146
    %v1148 = vlaneseq
    %v1149 = vshrl.u32 %v1148, 7
    %v1150 = vsub.s32 6, %v1149
    %v1151 = vrot.slane %v1089, %v1150
    %v1152 = vlaneseq
    %v1153 = vshrl.u32 %v1152, 7
    %v1154 = vsub.s32 7, %v1153
    %v1155 = vrot.slane %v1089, %v1154
    %v1172 = vmul.f32 %v1072, %v1095
    %v1173 = vmul.f32 %v1073, %v1099
    %v1174 = vmul.f32 %v1074, %v1103
    %v1175 = vmul.f32 %v1075, %v1107
    %v1176 = vmul.f32 %v1076, %v1111
    %v1177 = vmul.f32 %v1077, %v1115
    %v1178 = vmul.f32 %v1078, %v1119
    %v1179 = vmul.f32 %v1079, %v1123
    %v1180 = vmul.f32 %v1080, %v1127
    %v1181 = vmul.f32 %v1081, %v1131
    %v1182 = vmul.f32 %v1082, %v1135
    %v1183 = vmul.f32 %v1083, %v1139
    %v1184 = vmul.f32 %v1084, %v1143
    %v1185 = vmul.f32 %v1085, %v1147
    %v1186 = vmul.f32 %v1086, %v1151
    %v1187 = vmul.f32 %v1087, %v1155
    %v1188 = vld [vmem:[#allocation7] sm:$0xff]
    %v1189 = vld [vmem:[#allocation7 + $0x8] sm:$0xff]
    %v1192 = vlaneseq
    %v1193 = vshrl.u32 %v1192, 7
    %v1194 = vsub.s32 0, %v1193
    %v1195 = vrot.slane %v1188, %v1194
    %v1196 = vlaneseq
    %v1197 = vshrl.u32 %v1196, 7
    %v1198 = vsub.s32 1, %v1197
    %v1199 = vrot.slane %v1188, %v1198
    %v1200 = vlaneseq
    %v1201 = vshrl.u32 %v1200, 7
    %v1202 = vsub.s32 2, %v1201
    %v1203 = vrot.slane %v1188, %v1202
    %v1204 = vlaneseq
    %v1205 = vshrl.u32 %v1204, 7
    %v1206 = vsub.s32 3, %v1205
    %v1207 = vrot.slane %v1188, %v1206
    %v1208 = vlaneseq
    %v1209 = vshrl.u32 %v1208, 7
    %v1210 = vsub.s32 4, %v1209
    %v1211 = vrot.slane %v1188, %v1210
    %v1212 = vlaneseq
    %v1213 = vshrl.u32 %v1212, 7
    %v1214 = vsub.s32 5, %v1213
    %v1215 = vrot.slane %v1188, %v1214
    %v1216 = vlaneseq
    %v1217 = vshrl.u32 %v1216, 7
    %v1218 = vsub.s32 6, %v1217
    %v1219 = vrot.slane %v1188, %v1218
    %v1220 = vlaneseq
    %v1221 = vshrl.u32 %v1220, 7
    %v1222 = vsub.s32 7, %v1221
    %v1223 = vrot.slane %v1188, %v1222
    %v1224 = vlaneseq
    %v1225 = vshrl.u32 %v1224, 7
    %v1226 = vsub.s32 0, %v1225
    %v1227 = vrot.slane %v1189, %v1226
    %v1228 = vlaneseq
    %v1229 = vshrl.u32 %v1228, 7
    %v1230 = vsub.s32 1, %v1229
    %v1231 = vrot.slane %v1189, %v1230
    %v1232 = vlaneseq
    %v1233 = vshrl.u32 %v1232, 7
    %v1234 = vsub.s32 2, %v1233
    %v1235 = vrot.slane %v1189, %v1234
    %v1236 = vlaneseq
    %v1237 = vshrl.u32 %v1236, 7
    %v1238 = vsub.s32 3, %v1237
    %v1239 = vrot.slane %v1189, %v1238
    %v1240 = vlaneseq
    %v1241 = vshrl.u32 %v1240, 7
    %v1242 = vsub.s32 4, %v1241
    %v1243 = vrot.slane %v1189, %v1242
    %v1244 = vlaneseq
    %v1245 = vshrl.u32 %v1244, 7
    %v1246 = vsub.s32 5, %v1245
    %v1247 = vrot.slane %v1189, %v1246
    %v1248 = vlaneseq
    %v1249 = vshrl.u32 %v1248, 7
    %v1250 = vsub.s32 6, %v1249
    %v1251 = vrot.slane %v1189, %v1250
    %v1252 = vlaneseq
    %v1253 = vshrl.u32 %v1252, 7
    %v1254 = vsub.s32 7, %v1253
    %v1255 = vrot.slane %v1189, %v1254
    %v1272 = vadd.f32 %v1172, %v1195
    %v1273 = vadd.f32 %v1173, %v1199
    %v1274 = vadd.f32 %v1174, %v1203
    %v1275 = vadd.f32 %v1175, %v1207
    %v1276 = vadd.f32 %v1176, %v1211
    %v1277 = vadd.f32 %v1177, %v1215
    %v1278 = vadd.f32 %v1178, %v1219
    %v1279 = vadd.f32 %v1179, %v1223
    %v1280 = vadd.f32 %v1180, %v1227
    %v1281 = vadd.f32 %v1181, %v1231
    %v1282 = vadd.f32 %v1182, %v1235
    %v1283 = vadd.f32 %v1183, %v1239
    %v1284 = vadd.f32 %v1184, %v1243
    %v1285 = vadd.f32 %v1185, %v1247
    %v1286 = vadd.f32 %v1186, %v1251
    %v1287 = vadd.f32 %v1187, %v1255
    %v1288 = vxor.u32 %v1272, 2147483648
    %v1289 = vxor.u32 %v1273, 2147483648
    %v1290 = vxor.u32 %v1274, 2147483648
    %v1291 = vxor.u32 %v1275, 2147483648
    %v1292 = vxor.u32 %v1276, 2147483648
    %v1293 = vxor.u32 %v1277, 2147483648
    %v1294 = vxor.u32 %v1278, 2147483648
    %v1295 = vxor.u32 %v1279, 2147483648
    %v1296 = vxor.u32 %v1280, 2147483648
    %v1297 = vxor.u32 %v1281, 2147483648
    %v1298 = vxor.u32 %v1282, 2147483648
    %v1299 = vxor.u32 %v1283, 2147483648
    %v1300 = vxor.u32 %v1284, 2147483648
    %v1301 = vxor.u32 %v1285, 2147483648
    %v1302 = vxor.u32 %v1286, 2147483648
    %v1303 = vxor.u32 %v1287, 2147483648
    %v1304 = vmul.f32 %v1288, 1.442695
    %v1305 = vpow.pop %v1304
    %v1306 = vmul.f32 %v1289, 1.442695
    %v1307 = vpow.pop %v1306
    %v1308 = vmul.f32 %v1290, 1.442695
    %v1309 = vpow.pop %v1308
    %v1310 = vmul.f32 %v1291, 1.442695
    %v1311 = vpow.pop %v1310
    %v1312 = vmul.f32 %v1292, 1.442695
    %v1313 = vpow.pop %v1312
    %v1314 = vmul.f32 %v1293, 1.442695
    %v1315 = vpow.pop %v1314
    %v1316 = vmul.f32 %v1294, 1.442695
    %v1317 = vpow.pop %v1316
    %v1318 = vmul.f32 %v1295, 1.442695
    %v1319 = vpow.pop %v1318
    %v1320 = vmul.f32 %v1296, 1.442695
    %v1321 = vpow.pop %v1320
    %v1322 = vmul.f32 %v1297, 1.442695
    %v1323 = vpow.pop %v1322
    %v1324 = vmul.f32 %v1298, 1.442695
    %v1325 = vpow.pop %v1324
    %v1326 = vmul.f32 %v1299, 1.442695
    %v1327 = vpow.pop %v1326
    %v1328 = vmul.f32 %v1300, 1.442695
    %v1329 = vpow.pop %v1328
    %v1330 = vmul.f32 %v1301, 1.442695
    %v1331 = vpow.pop %v1330
    %v1332 = vmul.f32 %v1302, 1.442695
    %v1333 = vpow.pop %v1332
    %v1334 = vmul.f32 %v1303, 1.442695
    %v1335 = vpow.pop %v1334
    %v1336 = vadd.f32 %v1305, 1.0
    %v1337 = vadd.f32 %v1307, 1.0
    %v1338 = vadd.f32 %v1309, 1.0
    %v1339 = vadd.f32 %v1311, 1.0
    %v1340 = vadd.f32 %v1313, 1.0
    %v1341 = vadd.f32 %v1315, 1.0
    %v1342 = vadd.f32 %v1317, 1.0
    %v1343 = vadd.f32 %v1319, 1.0
    %v1344 = vadd.f32 %v1321, 1.0
    %v1345 = vadd.f32 %v1323, 1.0
    %v1346 = vadd.f32 %v1325, 1.0
    %v1347 = vadd.f32 %v1327, 1.0
    %v1348 = vadd.f32 %v1329, 1.0
    %v1349 = vadd.f32 %v1331, 1.0
    %v1350 = vadd.f32 %v1333, 1.0
    %v1351 = vadd.f32 %v1335, 1.0
    %v1352 = vrcp.pop %v1336
    %v1353 = vmul.f32 1.0, %v1352
    %v1354 = vrcp.pop %v1337
    %v1355 = vmul.f32 1.0, %v1354
    %v1356 = vrcp.pop %v1338
    %v1357 = vmul.f32 1.0, %v1356
    %v1358 = vrcp.pop %v1339
    %v1359 = vmul.f32 1.0, %v1358
    %v1360 = vrcp.pop %v1340
    %v1361 = vmul.f32 1.0, %v1360
    %v1362 = vrcp.pop %v1341
    %v1363 = vmul.f32 1.0, %v1362
    %v1364 = vrcp.pop %v1342
    %v1365 = vmul.f32 1.0, %v1364
    %v1366 = vrcp.pop %v1343
    %v1367 = vmul.f32 1.0, %v1366
    %v1368 = vrcp.pop %v1344
    %v1369 = vmul.f32 1.0, %v1368
    %v1370 = vrcp.pop %v1345
    %v1371 = vmul.f32 1.0, %v1370
    %v1372 = vrcp.pop %v1346
    %v1373 = vmul.f32 1.0, %v1372
    %v1374 = vrcp.pop %v1347
    %v1375 = vmul.f32 1.0, %v1374
    %v1376 = vrcp.pop %v1348
    %v1377 = vmul.f32 1.0, %v1376
    %v1378 = vrcp.pop %v1349
    %v1379 = vmul.f32 1.0, %v1378
    %v1380 = vrcp.pop %v1350
    %v1381 = vmul.f32 1.0, %v1380
    %v1382 = vrcp.pop %v1351
    %v1383 = vmul.f32 1.0, %v1382
    %v1384 = vmul.f32 %v1272, %v1353
    %v1385 = vmul.f32 %v1273, %v1355
    %v1386 = vmul.f32 %v1274, %v1357
    %v1387 = vmul.f32 %v1275, %v1359
    %v1388 = vmul.f32 %v1276, %v1361
    %v1389 = vmul.f32 %v1277, %v1363
    %v1390 = vmul.f32 %v1278, %v1365
    %v1391 = vmul.f32 %v1279, %v1367
    %v1392 = vmul.f32 %v1280, %v1369
    %v1393 = vmul.f32 %v1281, %v1371
    %v1394 = vmul.f32 %v1282, %v1373
    %v1395 = vmul.f32 %v1283, %v1375
    %v1396 = vmul.f32 %v1284, %v1377
    %v1397 = vmul.f32 %v1285, %v1379
    %v1398 = vmul.f32 %v1286, %v1381
    %v1399 = vmul.f32 %v1287, %v1383
    %v1416 = vcombine.low %v1384, %v1385
    %v1417 = vcombine.low %v1386, %v1387
    %v1418 = vcombine.low %v1388, %v1389
    %v1419 = vcombine.low %v1390, %v1391
    %v1420 = vcombine.low %v1392, %v1393
    %v1421 = vcombine.low %v1394, %v1395
    %v1422 = vcombine.low %v1396, %v1397
    %v1423 = vcombine.low %v1398, %v1399
    %1432 = vst [vmem:[%s6] sm:$0xff] %v1416
    %1433 = vst [vmem:[%s6 + $0x8] sm:$0xff] %v1417
    %1434 = vst [vmem:[%s6 + $0x10] sm:$0xff] %v1418
    %1435 = vst [vmem:[%s6 + $0x18] sm:$0xff] %v1419
    %1436 = vst [vmem:[%s6 + $0x20] sm:$0xff] %v1420
    %1437 = vst [vmem:[%s6 + $0x28] sm:$0xff] %v1421
    %1438 = vst [vmem:[%s6 + $0x30] sm:$0xff] %v1422
    %1439 = vst [vmem:[%s6 + $0x38] sm:$0xff] %v1423
    // Predicated region
    $region42: #{decoder_forward.4} parent=1 // pred_check
      _
    $region43: #{decoder_forward.4} parent=1 // pred_check_branch
      %1441 = sbr.rel (0) target = $region45
    $region44: #{decoder_forward.4} parent=1 // pred_region
      _
    $region45: #{decoder_forward.4} parent=1 // pred_fallthru
      _
    // Predicated region
    $region46: #{decoder_forward.4} parent=1 // pred_check
      _
    $region47: #{decoder_forward.4} parent=1 // pred_check_branch
      %1443 = sbr.rel (0) target = $region49
    $region48: #{decoder_forward.4} parent=1 // pred_region
      _
    $region49: #{decoder_forward.4} parent=1 // pred_fallthru
      _
    %1444 = vsyncpa [#allocation3], 1
    %1445 = vsyncpa [#allocation5], 1
    %1446 = vsyncpa [#allocation8], 1

// kernel: decoder_forward.5
$region0: #{decoder_forward.5}
  #allocation0 [shape = 'u32[]', space=smem, size = 0x4, offset = 0x4, fixed_abs, tag = 'smem constant byte address 0x4 - core index']
  #allocation1 [shape = 'u32[144,128]{1,0:T(1,128)}', space=vmem, size = 0x12000, scoped, tag = 'internal scratch']
  %s0 = inlined_call_operand.vmem [shape: f32[4,10,320], index: 0, kind: input, shape index: {}]
  %s1 = inlined_call_operand.hbm [shape: bf16[12,256,256], index: 1, kind: input, shape index: {}]
  %s2 = inlined_call_operand.hbm [shape: f32[2,8,256], index: 2, kind: input, shape index: {}]
  %s3 = inlined_call_operand.hbm [shape: f32[2,8,256], index: 3, kind: input, shape index: {}]
  %s4 = inlined_call_operand.vmem [shape: f32[4,2,8,256], index: 4, kind: output, shape index: {}]
  %s5 = sld [smem:[#allocation0]]
  $region61: #{decoder_forward.5} parent=0
    _
  %s7 = ssub.s32 1, %s5
  %s8 = scalar_select 0, %s7, %s5
  $region1: #{decoder_forward.5} parent=0
    #allocation2 [shape = 'u8[1572864]{0}', space=vmem, size = 0x180000, scoped, tag = 'input window, operand 1, single buffered']
    #allocation3 [shape = 's32[2]{0}', space=sflag, size = 0x8, scoped, tag = 'scoped memory for decoder_forward.5']
    #allocation4 [shape = 'u8[16384]{0}', space=vmem, size = 0x4000, scoped, tag = 'input window, operand 2, single buffered']
    #allocation5 [shape = 's32[1]{0}', space=sflag, size = 0x4, scoped, tag = 'scoped memory for decoder_forward.5']
    #allocation6 [shape = 'u8[16384]{0}', space=vmem, size = 0x4000, scoped, tag = 'input window, operand 3, single buffered']
    %9 = vsyncpa [#allocation3], 0
    %10 = vsyncpa [#allocation5], 0
    loop: start=0, step=1, limit=6
    $region2: #{decoder_forward.5} parent=1 // loop_pre_header
      _
    $region3: #{decoder_forward.5} parent=1 // loop_header
      %s12 = sphi 0, %s16
      %p13 = scmp.ge.s32.totalorder %s12, 6
      %s22 = sphi 0, %s24
      %s25 = sphi 0, %s22
      %s26 = sphi 0, %s25
      %s42 = sphi 0, %s26
      %s46 = sphi 0, %s46
      %s48 = sphi 0, %s46
      %s49 = sphi 0, %s48
      %s63 = sphi 0, %s49
      %s67 = sphi 0, %s67
      %s69 = sphi 0, %s67
      %s70 = sphi 0, %s69
      %s84 = sphi 0, %s70
      %s88 = sphi 0, %s88
      %s90 = sphi 0, %s88
      %s91 = sphi 0, %s90
      %s105 = sphi 0, %s91
      %s111 = sphi 0, %s113
      %s114 = sphi 0, %s111
      %s115 = sphi 0, %s114
      %s131 = sphi 0, %s115
    $region4: #{decoder_forward.5} parent=1 // loop_header_branch
      %15 = sbr.rel (%p13) target = $region8
    $region5: #{decoder_forward.5} parent=1 // loop_body
      %s17 = ssub.s32 %s12, 1
      %s18 = ssub.s32 %s12, 2
      %s19 = sadd.s32 %s12, 1
      %s20 = ssub.s32 %s12, %s19
      %p21 = scmp.eq.s32.totalorder %s20, 0
      %s23 = sadd.s32 %s22, 1
      %s24 = scalar_select %p21, %s22, %s23
      %p27 = pneg %p21
      %p28 = scmp.eq.s32.totalorder %s12, 3
      %p29 = por %p27, %p28
      %p30 = scmp.ne.s32.totalorder %s22, %s25
      %p31 = scmp.eq.s32.totalorder %s12, 0
      %p32 = por %p30, %p31
      %p33 = scmp.ne.s32.totalorder %s22, %s25
      %p34 = scmp.eq.s32.totalorder %s17, 3
      %p35 = por %p33, %p34
      %p36 = scmp.ne.s32.totalorder %s25, %s26
      %p37 = scmp.eq.s32.totalorder %s17, 0
      %p38 = por %p36, %p37
      %p39 = scmp.ne.s32.totalorder %s25, %s26
      %p40 = scmp.eq.s32.totalorder %s18, 3
      %p41 = por %p39, %p40
      %p43 = scmp.ne.s32.totalorder %s26, %s42
      %p44 = scmp.eq.s32.totalorder %s18, 0
      %p45 = por %p43, %p44
      %s47 = sadd.s32 %s46, 1
      %p50 = scmp.eq.s32.totalorder %s12, 3
      %p51 = scmp.ne.s32.totalorder %s46, %s48
      %p52 = scmp.eq.s32.totalorder %s12, 0
      %p53 = por %p51, %p52
      %p54 = scmp.ne.s32.totalorder %s46, %s48
      %p55 = scmp.eq.s32.totalorder %s17, 3
      %p56 = por %p54, %p55
      %p57 = scmp.ne.s32.totalorder %s48, %s49
      %p58 = scmp.eq.s32.totalorder %s17, 0
      %p59 = por %p57, %p58
      %p60 = scmp.ne.s32.totalorder %s48, %s49
      %p61 = scmp.eq.s32.totalorder %s18, 3
      %p62 = por %p60, %p61
      %p64 = scmp.ne.s32.totalorder %s49, %s63
      %p65 = scmp.eq.s32.totalorder %s18, 0
      %p66 = por %p64, %p65
      %s68 = sadd.s32 %s67, 1
      %p71 = scmp.eq.s32.totalorder %s12, 3
      %p72 = scmp.ne.s32.totalorder %s67, %s69
      %p73 = scmp.eq.s32.totalorder %s12, 0
      %p74 = por %p72, %p73
      %p75 = scmp.ne.s32.totalorder %s67, %s69
      %p76 = scmp.eq.s32.totalorder %s17, 3
      %p77 = por %p75, %p76
      %p78 = scmp.ne.s32.totalorder %s69, %s70
      %p79 = scmp.eq.s32.totalorder %s17, 0
      %p80 = por %p78, %p79
      %p81 = scmp.ne.s32.totalorder %s69, %s70
      %p82 = scmp.eq.s32.totalorder %s18, 3
      %p83 = por %p81, %p82
      %p85 = scmp.ne.s32.totalorder %s70, %s84
      %p86 = scmp.eq.s32.totalorder %s18, 0
      %p87 = por %p85, %p86
      %s89 = sadd.s32 %s88, 1
      %p92 = scmp.eq.s32.totalorder %s12, 3
      %p93 = scmp.ne.s32.totalorder %s88, %s90
      %p94 = scmp.eq.s32.totalorder %s12, 0
      %p95 = por %p93, %p94
      %p96 = scmp.ne.s32.totalorder %s88, %s90
      %p97 = scmp.eq.s32.totalorder %s17, 3
      %p98 = por %p96, %p97
      %p99 = scmp.ne.s32.totalorder %s90, %s91
      %p100 = scmp.eq.s32.totalorder %s17, 0
      %p101 = por %p99, %p100
      %p102 = scmp.ne.s32.totalorder %s90, %s91
      %p103 = scmp.eq.s32.totalorder %s18, 3
      %p104 = por %p102, %p103
      %p106 = scmp.ne.s32.totalorder %s91, %s105
      %p107 = scmp.eq.s32.totalorder %s18, 0
      %p108 = por %p106, %p107
      %s109 = ssub.s32 %s12, %s19
      %p110 = scmp.eq.s32.totalorder %s109, 0
      %s112 = sadd.s32 %s111, 1
      %s113 = scalar_select %p110, %s111, %s112
      %p116 = pneg %p110
      %p117 = scmp.eq.s32.totalorder %s12, 3
      %p118 = por %p116, %p117
      %p119 = scmp.ne.s32.totalorder %s111, %s114
      %p120 = scmp.eq.s32.totalorder %s12, 0
      %p121 = por %p119, %p120
      %p122 = scmp.ne.s32.totalorder %s111, %s114
      %p123 = scmp.eq.s32.totalorder %s17, 3
      %p124 = por %p122, %p123
      %p125 = scmp.ne.s32.totalorder %s114, %s115
      %p126 = scmp.eq.s32.totalorder %s17, 0
      %p127 = por %p125, %p126
      %p128 = scmp.ne.s32.totalorder %s114, %s115
      %p129 = scmp.eq.s32.totalorder %s18, 3
      %p130 = por %p128, %p129
      %p132 = scmp.ne.s32.totalorder %s115, %s131
      %p133 = scmp.eq.s32.totalorder %s18, 0
      %p134 = por %p132, %p133
      %p135 = scmp.le.s32.totalorder 1, %s12
      %p136 = scmp.lt.s32.totalorder %s12, 5
      %p137 = pnand %p135, %p136
      %p138 = pneg %p137
      // Predicated region
      $region9: #{decoder_forward.5} parent=5 // pred_check
        _
      $region10: #{decoder_forward.5} parent=5 // pred_check_branch
        %140 = sbr.rel (%p137) target = $region12
      $region11: #{decoder_forward.5} parent=5 // pred_region
        %s141 = ssub.s32 %s12, 1
        // Predicated region
        $region13: #{decoder_forward.5} parent=11 // pred_check
          %p142 = pneg %p59
        $region14: #{decoder_forward.5} parent=11 // pred_check_branch
          %144 = sbr.rel (%p142) target = $region16
        $region15: #{decoder_forward.5} parent=11 // pred_region
          %s146 = ssub.s32 49152, 49152
          %147 = vsyncadd [#allocation3], %s146
          %s148 = sshll.u32 [#allocation2], 4
          %s149 = int_to_ptr.vmem [resolvable:$true] %s148
          %154 = dma.hbm_to_vmem [thread:$0]  %s1, 49152, %s149, [#allocation3], 128, 128, 8
        $region16: #{decoder_forward.5} parent=11 // pred_fallthru
          _
        // Predicated region
        $region17: #{decoder_forward.5} parent=11 // pred_check
          %p155 = pneg %p80
        $region18: #{decoder_forward.5} parent=11 // pred_check_branch
          %157 = sbr.rel (%p155) target = $region20
        $region19: #{decoder_forward.5} parent=11 // pred_region
          %s159 = ssub.s32 512, 512
          %160 = vsyncadd [#allocation5], %s159
          %s161 = sshll.u32 [#allocation4], 4
          %s162 = int_to_ptr.vmem [resolvable:$true] %s161
          %167 = dma.hbm_to_vmem [thread:$0]  %s2, 512, %s162, [#allocation5], 256, 256, 16
        $region20: #{decoder_forward.5} parent=11 // pred_fallthru
          _
        // Predicated region
        $region21: #{decoder_forward.5} parent=11 // pred_check
          %p168 = pneg %p101
        $region22: #{decoder_forward.5} parent=11 // pred_check_branch
          %170 = sbr.rel (%p168) target = $region24
        $region23: #{decoder_forward.5} parent=11 // pred_region
          %s172 = ssub.s32 512, 512
          %173 = vsyncadd [#allocation5], %s172
          %s174 = sshll.u32 [#allocation6], 4
          %s175 = int_to_ptr.vmem [resolvable:$true] %s174
          %180 = dma.hbm_to_vmem [thread:$0]  %s3, 512, %s175, [#allocation5], 256, 256, 16
        $region24: #{decoder_forward.5} parent=11 // pred_fallthru
          _
      $region12: #{decoder_forward.5} parent=5 // pred_fallthru
        _
      %p181 = scmp.lt.s32.totalorder %s12, 4
      // Predicated region
      $region25: #{decoder_forward.5} parent=5 // pred_check
        %p182 = pneg %p181
      $region26: #{decoder_forward.5} parent=5 // pred_check_branch
        %184 = sbr.rel (%p182) target = $region28
      $region27: #{decoder_forward.5} parent=5 // pred_region
        // Predicated region
        $region29: #{decoder_forward.5} parent=27 // pred_check
          %p185 = pneg %p32
        $region30: #{decoder_forward.5} parent=27 // pred_check_branch
          %187 = sbr.rel (%p185) target = $region32
        $region31: #{decoder_forward.5} parent=27 // pred_region
          %p188 = scmp.lt.s32.totalorder %s12, 3
          %s189 = scalar_select %p188, %s12, 3
          %s190 = smul.addr %s189, 6
          %s191 = smul.addr %s190, 8
          %s192 = scalar_lea.vmem %s0, %s191
        $region32: #{decoder_forward.5} parent=27 // pred_fallthru
          _
      $region28: #{decoder_forward.5} parent=5 // pred_fallthru
        _
      %p193 = scmp.le.s32.totalorder 1, %s12
      %p194 = scmp.lt.s32.totalorder %s12, 5
      %p195 = pnand %p193, %p194
      %p196 = pneg %p195
      // Predicated region
      $region33: #{decoder_forward.5} parent=5 // pred_check
        _
      $region34: #{decoder_forward.5} parent=5 // pred_check_branch
        %198 = sbr.rel (%p195) target = $region36
      $region35: #{decoder_forward.5} parent=5 // pred_region
        %s199 = ssub.s32 %s12, 1
        // Predicated region
        $region37: #{decoder_forward.5} parent=35 // pred_check
          %p200 = pneg %p59
        $region38: #{decoder_forward.5} parent=35 // pred_check_branch
          %202 = sbr.rel (%p200) target = $region40
        $region39: #{decoder_forward.5} parent=35 // pred_region
          %203 = dma.done [#allocation3], 49152
        $region40: #{decoder_forward.5} parent=35 // pred_fallthru
          _
        // Predicated region
        $region41: #{decoder_forward.5} parent=35 // pred_check
          %p204 = pneg %p80
        $region42: #{decoder_forward.5} parent=35 // pred_check_branch
          %206 = sbr.rel (%p204) target = $region44
        $region43: #{decoder_forward.5} parent=35 // pred_region
          %207 = dma.done [#allocation5], 512
        $region44: #{decoder_forward.5} parent=35 // pred_fallthru
          _
        // Predicated region
        $region45: #{decoder_forward.5} parent=35 // pred_check
          %p208 = pneg %p101
        $region46: #{decoder_forward.5} parent=35 // pred_check_branch
          %210 = sbr.rel (%p208) target = $region48
        $region47: #{decoder_forward.5} parent=35 // pred_region
          %211 = dma.done [#allocation5], 512
        $region48: #{decoder_forward.5} parent=35 // pred_fallthru
          _
        %p212 = scmp.lt.s32.totalorder %s17, 3
        %s213 = scalar_select %p212, %s17, 3
        %s214 = smul.addr %s213, 6
        %s215 = smul.addr %s214, 8
        %s216 = scalar_lea.vmem %s0, %s215
        %p217 = pneg %p38
        %p218 = pneg %p35
        %p219 = pneg %p59
        %p220 = pneg %p56
        %p221 = pneg %p80
        %p222 = pneg %p77
        %p223 = pneg %p101
        %p224 = pneg %p98
        %p225 = pneg %p127
        %p226 = pneg %p124
        %p227 = scmp.lt.s32.totalorder %s17, 3
        %s228 = scalar_select %p227, %s17, 3
        %s229 = smul.addr %s228, 4
        %s230 = smul.addr %s229, 8
        %s231 = scalar_lea.vmem %s4, %s230
        %p232 = scmp.lt.s32.totalorder %s17, 3
        %s233 = scalar_select %p232, %s17, 3
        %s234 = smul.addr %s233, 6
        %s235 = smul.addr %s234, 8
        %s236 = scalar_lea.vmem %s0, %s235
        %p237 = scmp.lt.s32.totalorder %s17, 3
        %s238 = scalar_select %p237, %s17, 3
        %s239 = smul.addr %s238, 4
        %s240 = smul.addr %s239, 8
        %s241 = scalar_lea.vmem %s4, %s240
        %v242 = vld [vmem:[%s236] sm:$0xff]
        %v243 = vld [vmem:[%s236 + $0x8] sm:$0xff]
        %v244 = vld [vmem:[%s236 + $0x10] sm:$0xff]
        %v245 = vld [vmem:[%s236 + $0x18] sm:$0x3]
        %v246 = vld [vmem:[%s236 + $0x20] sm:$0x3]
        %v247 = vld [vmem:[%s236 + $0x28] sm:$0x3]
        %v248 = vpack.c.bf16 %v242, %v242
        %v249 = vpack.c.bf16 %v243, %v243
        %v250 = vld [vmem:[#allocation2] sm:$0xff]
        %v251 = vld [vmem:[#allocation2 + $0x8] sm:$0xff]
        %v252 = vld [vmem:[#allocation2 + $0x10] sm:$0xff]
        %v253 = vld [vmem:[#allocation2 + $0x18] sm:$0xff]
        %v254 = vld [vmem:[#allocation2 + $0x20] sm:$0xff]
        %v255 = vld [vmem:[#allocation2 + $0x28] sm:$0xff]
        %v256 = vld [vmem:[#allocation2 + $0x30] sm:$0xff]
        %v257 = vld [vmem:[#allocation2 + $0x38] sm:$0xff]
        %v258 = vld [vmem:[#allocation2 + $0x40] sm:$0xff]
        %v259 = vld [vmem:[#allocation2 + $0x48] sm:$0xff]
        %v260 = vld [vmem:[#allocation2 + $0x50] sm:$0xff]
        %v261 = vld [vmem:[#allocation2 + $0x58] sm:$0xff]
        %v262 = vld [vmem:[#allocation2 + $0x60] sm:$0xff]
        %v263 = vld [vmem:[#allocation2 + $0x68] sm:$0xff]
        %v264 = vld [vmem:[#allocation2 + $0x70] sm:$0xff]
        %v265 = vld [vmem:[#allocation2 + $0x78] sm:$0xff]
        %v266 = vld [vmem:[#allocation2 + $0x80] sm:$0xff]
        %v267 = vld [vmem:[#allocation2 + $0x88] sm:$0xff]
        %v268 = vld [vmem:[#allocation2 + $0x90] sm:$0xff]
        %v269 = vld [vmem:[#allocation2 + $0x98] sm:$0xff]
        %v270 = vld [vmem:[#allocation2 + $0xa0] sm:$0xff]
        %v271 = vld [vmem:[#allocation2 + $0xa8] sm:$0xff]
        %v272 = vld [vmem:[#allocation2 + $0xb0] sm:$0xff]
        %v273 = vld [vmem:[#allocation2 + $0xb8] sm:$0xff]
        %v274 = vld [vmem:[#allocation2 + $0xc0] sm:$0xff]
        %v275 = vld [vmem:[#allocation2 + $0xc8] sm:$0xff]
        %v276 = vld [vmem:[#allocation2 + $0xd0] sm:$0xff]
        %v277 = vld [vmem:[#allocation2 + $0xd8] sm:$0xff]
        %v278 = vld [vmem:[#allocation2 + $0xe0] sm:$0xff]
        %v279 = vld [vmem:[#allocation2 + $0xe8] sm:$0xff]
        %v280 = vld [vmem:[#allocation2 + $0xf0] sm:$0xff]
        %v281 = vld [vmem:[#allocation2 + $0xf8] sm:$0xff]
        %v282 = vpack.c.bf16 %v244, %v244
        %s283 = scalar_lea.vmem [#allocation2], 256
        %v284 = vld [vmem:[%s283] sm:$0xff]
        %v285 = vld [vmem:[%s283 + $0x8] sm:$0xff]
        %v286 = vld [vmem:[%s283 + $0x10] sm:$0xff]
        %v287 = vld [vmem:[%s283 + $0x18] sm:$0xff]
        %v288 = vld [vmem:[%s283 + $0x20] sm:$0xff]
        %v289 = vld [vmem:[%s283 + $0x28] sm:$0xff]
        %v290 = vld [vmem:[%s283 + $0x30] sm:$0xff]
        %v291 = vld [vmem:[%s283 + $0x38] sm:$0xff]
        %v292 = vld [vmem:[%s283 + $0x40] sm:$0xff]
        %v293 = vld [vmem:[%s283 + $0x48] sm:$0xff]
        %v294 = vld [vmem:[%s283 + $0x50] sm:$0xff]
        %v295 = vld [vmem:[%s283 + $0x58] sm:$0xff]
        %v296 = vld [vmem:[%s283 + $0x60] sm:$0xff]
        %v297 = vld [vmem:[%s283 + $0x68] sm:$0xff]
        %v298 = vld [vmem:[%s283 + $0x70] sm:$0xff]
        %v299 = vld [vmem:[%s283 + $0x78] sm:$0xff]
        %v300 = vld [vmem:[%s283 + $0x80] sm:$0xff]
        %v301 = vld [vmem:[%s283 + $0x88] sm:$0xff]
        %v302 = vld [vmem:[%s283 + $0x90] sm:$0xff]
        %v303 = vld [vmem:[%s283 + $0x98] sm:$0xff]
        %v304 = vld [vmem:[%s283 + $0xa0] sm:$0xff]
        %v305 = vld [vmem:[%s283 + $0xa8] sm:$0xff]
        %v306 = vld [vmem:[%s283 + $0xb0] sm:$0xff]
        %v307 = vld [vmem:[%s283 + $0xb8] sm:$0xff]
        %v308 = vld [vmem:[%s283 + $0xc0] sm:$0xff]
        %v309 = vld [vmem:[%s283 + $0xc8] sm:$0xff]
        %v310 = vld [vmem:[%s283 + $0xd0] sm:$0xff]
        %v311 = vld [vmem:[%s283 + $0xd8] sm:$0xff]
        %v312 = vld [vmem:[%s283 + $0xe0] sm:$0xff]
        %v313 = vld [vmem:[%s283 + $0xe8] sm:$0xff]
        %v314 = vld [vmem:[%s283 + $0xf0] sm:$0xff]
        %v315 = vld [vmem:[%s283 + $0xf8] sm:$0xff]
        %319 = vrot.lane.b32.xlu0 %v248, 96
        %v320 = vpop.permute.xlu0 %319
        %321 = vrot.lane.b32.xlu0 %v249, 96
        %v322 = vpop.permute.xlu0 %321
        %323 = vrot.lane.b32.xlu0 %v282, 96
        %v324 = vpop.permute.xlu0 %323
        %vm325 = vcmask 785408
        %v326 = vsel %vm325, %v320, %v322
        %v327 = vsel %vm325, %v322, %v324
        %v362 = vunpack.c.l.b16 %v284
        %v363 = vunpack.c.h.b16 %v284
        %v364 = vunpack.c.l.b16 %v285
        %v365 = vunpack.c.h.b16 %v285
        %v366 = vunpack.c.l.b16 %v286
        %v367 = vunpack.c.h.b16 %v286
        %v368 = vunpack.c.l.b16 %v287
        %v369 = vunpack.c.h.b16 %v287
        %v370 = vunpack.c.l.b16 %v288
        %v371 = vunpack.c.h.b16 %v288
        %v372 = vunpack.c.l.b16 %v289
        %v373 = vunpack.c.h.b16 %v289
        %v374 = vunpack.c.l.b16 %v290
        %v375 = vunpack.c.h.b16 %v290
        %v376 = vunpack.c.l.b16 %v291
        %v377 = vunpack.c.h.b16 %v291
        %v378 = vunpack.c.l.b16 %v292
        %v379 = vunpack.c.h.b16 %v292
        %v380 = vunpack.c.l.b16 %v293
        %v381 = vunpack.c.h.b16 %v293
        %v382 = vunpack.c.l.b16 %v294
        %v383 = vunpack.c.h.b16 %v294
        %v384 = vunpack.c.l.b16 %v295
        %v385 = vunpack.c.h.b16 %v295
        %v386 = vunpack.c.l.b16 %v296
        %v387 = vunpack.c.h.b16 %v296
        %v388 = vunpack.c.l.b16 %v297
        %v389 = vunpack.c.h.b16 %v297
        %v390 = vunpack.c.l.b16 %v298
        %v391 = vunpack.c.h.b16 %v298
        %v392 = vunpack.c.l.b16 %v299
        %v393 = vunpack.c.h.b16 %v299
        %v394 = vunpack.c.l.b16 %v300
        %v395 = vunpack.c.h.b16 %v300
        %v396 = vunpack.c.l.b16 %v301
        %v397 = vunpack.c.h.b16 %v301
        %v398 = vunpack.c.l.b16 %v302
        %v399 = vunpack.c.h.b16 %v302
        %v400 = vunpack.c.l.b16 %v303
        %v401 = vunpack.c.h.b16 %v303
        %v402 = vunpack.c.l.b16 %v304
        %v403 = vunpack.c.h.b16 %v304
        %v404 = vunpack.c.l.b16 %v305
        %v405 = vunpack.c.h.b16 %v305
        %v406 = vunpack.c.l.b16 %v306
        %v407 = vunpack.c.h.b16 %v306
        %v408 = vunpack.c.l.b16 %v307
        %v409 = vunpack.c.h.b16 %v307
        %v410 = vunpack.c.l.b16 %v308
        %v411 = vunpack.c.h.b16 %v308
        %v412 = vunpack.c.l.b16 %v309
        %v413 = vunpack.c.h.b16 %v309
        %v414 = vunpack.c.l.b16 %v310
        %v415 = vunpack.c.h.b16 %v310
        %v416 = vunpack.c.l.b16 %v311
        %v417 = vunpack.c.h.b16 %v311
        %v418 = vunpack.c.l.b16 %v312
        %v419 = vunpack.c.h.b16 %v312
        %v420 = vunpack.c.l.b16 %v313
        %v421 = vunpack.c.h.b16 %v313
        %v422 = vunpack.c.l.b16 %v314
        %v423 = vunpack.c.h.b16 %v314
        %v424 = vunpack.c.l.b16 %v315
        %v425 = vunpack.c.h.b16 %v315
        %v426 = vpack.c.b16 %v364, %v362
        %v427 = vpack.c.b16 %v365, %v363
        %v428 = vpack.c.b16 %v368, %v366
        %v429 = vpack.c.b16 %v369, %v367
        %v430 = vpack.c.b16 %v372, %v370
        %v431 = vpack.c.b16 %v373, %v371
        %v432 = vpack.c.b16 %v376, %v374
        %v433 = vpack.c.b16 %v377, %v375
        %v434 = vpack.c.b16 %v380, %v378
        %v435 = vpack.c.b16 %v381, %v379
        %v436 = vpack.c.b16 %v384, %v382
        %v437 = vpack.c.b16 %v385, %v383
        %v438 = vpack.c.b16 %v388, %v386
        %v439 = vpack.c.b16 %v389, %v387
        %v440 = vpack.c.b16 %v392, %v390
        %v441 = vpack.c.b16 %v393, %v391
        %v442 = vpack.c.b16 %v396, %v394
        %v443 = vpack.c.b16 %v397, %v395
        %v444 = vpack.c.b16 %v400, %v398
        %v445 = vpack.c.b16 %v401, %v399
        %v446 = vpack.c.b16 %v404, %v402
        %v447 = vpack.c.b16 %v405, %v403
        %v448 = vpack.c.b16 %v408, %v406
        %v449 = vpack.c.b16 %v409, %v407
        %v450 = vpack.c.b16 %v412, %v410
        %v451 = vpack.c.b16 %v413, %v411
        %v452 = vpack.c.b16 %v416, %v414
        %v453 = vpack.c.b16 %v417, %v415
        %v454 = vpack.c.b16 %v420, %v418
        %v455 = vpack.c.b16 %v421, %v419
        %v456 = vpack.c.b16 %v424, %v422
        %v457 = vpack.c.b16 %v425, %v423
        %490 = vmatprep.subr.bf16.mxu0 %v427
        %491 = vmatpush1.bf16.msra.mxu0 %v426
        %492 = vmatprep.subr.bf16.mxu0 %v429
        %493 = vmatpush1.bf16.msra.mxu0 %v428
        %494 = vmatprep.subr.bf16.mxu0 %v431
        %495 = vmatpush1.bf16.msra.mxu0 %v430
        %496 = vmatprep.subr.bf16.mxu0 %v433
        %497 = vmatpush1.bf16.msra.mxu0 %v432
        %498 = vmatprep.subr.bf16.mxu0 %v435
        %499 = vmatpush1.bf16.msra.mxu0 %v434
        %500 = vmatprep.subr.bf16.mxu0 %v437
        %501 = vmatpush1.bf16.msra.mxu0 %v436
        %502 = vmatprep.subr.bf16.mxu0 %v439
        %503 = vmatpush1.bf16.msra.mxu0 %v438
        %504 = vmatprep.subr.bf16.mxu0 %v441
        %505 = vmatpush1.bf16.msra.mxu0 %v440
        %506 = vmatprep.subr.bf16.mxu0 %v443
        %507 = vmatpush1.bf16.msra.mxu0 %v442
        %508 = vmatprep.subr.bf16.mxu0 %v445
        %509 = vmatpush1.bf16.msra.mxu0 %v444
        %510 = vmatprep.subr.bf16.mxu0 %v447
        %511 = vmatpush1.bf16.msra.mxu0 %v446
        %512 = vmatprep.subr.bf16.mxu0 %v449
        %513 = vmatpush1.bf16.msra.mxu0 %v448
        %514 = vmatprep.subr.bf16.mxu0 %v451
        %515 = vmatpush1.bf16.msra.mxu0 %v450
        %516 = vmatprep.subr.bf16.mxu0 %v453
        %517 = vmatpush1.bf16.msra.mxu0 %v452
        %518 = vmatprep.subr.bf16.mxu0 %v455
        %519 = vmatpush1.bf16.msra.mxu0 %v454
        %520 = vmatprep.subr.bf16.mxu0 %v457
        %521 = vmatpush1.bf16.msra.mxu0 %v456
        %522 = vmatprep.mubr.bf16.mxu0 %v327
        %523 = vmatmul.mubr.bf16.gmra.mrb[0].mxu0 %v326
        %v524 = vpop.f32.mrb[0].mxu0
        %v525 = vadd.f32 0.0, %v524
        %v526 = vpop.f32.mrb[0].mxu0
        %v527 = vadd.f32 0.0, %v526
        %v528 = vpop.f32.mrb[0].mxu0
        %v529 = vpop.f32.mrb[0].mxu0
        %530 = vdwg.mxu0
        %v563 = vunpack.c.l.b16 %v250
        %v564 = vunpack.c.h.b16 %v250
        %v565 = vunpack.c.l.b16 %v251
        %v566 = vunpack.c.h.b16 %v251
        %v567 = vunpack.c.l.b16 %v252
        %v568 = vunpack.c.h.b16 %v252
        %v569 = vunpack.c.l.b16 %v253
        %v570 = vunpack.c.h.b16 %v253
        %v571 = vunpack.c.l.b16 %v254
        %v572 = vunpack.c.h.b16 %v254
        %v573 = vunpack.c.l.b16 %v255
        %v574 = vunpack.c.h.b16 %v255
        %v575 = vunpack.c.l.b16 %v256
        %v576 = vunpack.c.h.b16 %v256
        %v577 = vunpack.c.l.b16 %v257
        %v578 = vunpack.c.h.b16 %v257
        %v579 = vunpack.c.l.b16 %v258
        %v580 = vunpack.c.h.b16 %v258
        %v581 = vunpack.c.l.b16 %v259
        %v582 = vunpack.c.h.b16 %v259
        %v583 = vunpack.c.l.b16 %v260
        %v584 = vunpack.c.h.b16 %v260
        %v585 = vunpack.c.l.b16 %v261
        %v586 = vunpack.c.h.b16 %v261
        %v587 = vunpack.c.l.b16 %v262
        %v588 = vunpack.c.h.b16 %v262
        %v589 = vunpack.c.l.b16 %v263
        %v590 = vunpack.c.h.b16 %v263
        %v591 = vunpack.c.l.b16 %v264
        %v592 = vunpack.c.h.b16 %v264
        %v593 = vunpack.c.l.b16 %v265
        %v594 = vunpack.c.h.b16 %v265
        %v595 = vunpack.c.l.b16 %v266
        %v596 = vunpack.c.h.b16 %v266
        %v597 = vunpack.c.l.b16 %v267
        %v598 = vunpack.c.h.b16 %v267
        %v599 = vunpack.c.l.b16 %v268
        %v600 = vunpack.c.h.b16 %v268
        %v601 = vunpack.c.l.b16 %v269
        %v602 = vunpack.c.h.b16 %v269
        %v603 = vunpack.c.l.b16 %v270
        %v604 = vunpack.c.h.b16 %v270
        %v605 = vunpack.c.l.b16 %v271
        %v606 = vunpack.c.h.b16 %v271
        %v607 = vunpack.c.l.b16 %v272
        %v608 = vunpack.c.h.b16 %v272
        %v609 = vunpack.c.l.b16 %v273
        %v610 = vunpack.c.h.b16 %v273
        %v611 = vunpack.c.l.b16 %v274
        %v612 = vunpack.c.h.b16 %v274
        %v613 = vunpack.c.l.b16 %v275
        %v614 = vunpack.c.h.b16 %v275
        %v615 = vunpack.c.l.b16 %v276
        %v616 = vunpack.c.h.b16 %v276
        %v617 = vunpack.c.l.b16 %v277
        %v618 = vunpack.c.h.b16 %v277
        %v619 = vunpack.c.l.b16 %v278
        %v620 = vunpack.c.h.b16 %v278
        %v621 = vunpack.c.l.b16 %v279
        %v622 = vunpack.c.h.b16 %v279
        %v623 = vunpack.c.l.b16 %v280
        %v624 = vunpack.c.h.b16 %v280
        %v625 = vunpack.c.l.b16 %v281
        %v626 = vunpack.c.h.b16 %v281
        %v627 = vpack.c.b16 %v565, %v563
        %v628 = vpack.c.b16 %v566, %v564
        %v629 = vpack.c.b16 %v569, %v567
        %v630 = vpack.c.b16 %v570, %v568
        %v631 = vpack.c.b16 %v573, %v571
        %v632 = vpack.c.b16 %v574, %v572
        %v633 = vpack.c.b16 %v577, %v575
        %v634 = vpack.c.b16 %v578, %v576
        %v635 = vpack.c.b16 %v581, %v579
        %v636 = vpack.c.b16 %v582, %v580
        %v637 = vpack.c.b16 %v585, %v583
        %v638 = vpack.c.b16 %v586, %v584
        %v639 = vpack.c.b16 %v589, %v587
        %v640 = vpack.c.b16 %v590, %v588
        %v641 = vpack.c.b16 %v593, %v591
        %v642 = vpack.c.b16 %v594, %v592
        %v643 = vpack.c.b16 %v597, %v595
        %v644 = vpack.c.b16 %v598, %v596
        %v645 = vpack.c.b16 %v601, %v599
        %v646 = vpack.c.b16 %v602, %v600
        %v647 = vpack.c.b16 %v605, %v603
        %v648 = vpack.c.b16 %v606, %v604
        %v649 = vpack.c.b16 %v609, %v607
        %v650 = vpack.c.b16 %v610, %v608
        %v651 = vpack.c.b16 %v613, %v611
        %v652 = vpack.c.b16 %v614, %v612
        %v653 = vpack.c.b16 %v617, %v615
        %v654 = vpack.c.b16 %v618, %v616
        %v655 = vpack.c.b16 %v621, %v619
        %v656 = vpack.c.b16 %v622, %v620
        %v657 = vpack.c.b16 %v625, %v623
        %v658 = vpack.c.b16 %v626, %v624
        %691 = vmatprep.subr.bf16.mxu0 %v628
        %692 = vmatpush1.bf16.msra.mxu0 %v627
        %693 = vmatprep.subr.bf16.mxu0 %v630
        %694 = vmatpush1.bf16.msra.mxu0 %v629
        %695 = vmatprep.subr.bf16.mxu0 %v632
        %696 = vmatpush1.bf16.msra.mxu0 %v631
        %697 = vmatprep.subr.bf16.mxu0 %v634
        %698 = vmatpush1.bf16.msra.mxu0 %v633
        %699 = vmatprep.subr.bf16.mxu0 %v636
        %700 = vmatpush1.bf16.msra.mxu0 %v635
        %701 = vmatprep.subr.bf16.mxu0 %v638
        %702 = vmatpush1.bf16.msra.mxu0 %v637
        %703 = vmatprep.subr.bf16.mxu0 %v640
        %704 = vmatpush1.bf16.msra.mxu0 %v639
        %705 = vmatprep.subr.bf16.mxu0 %v642
        %706 = vmatpush1.bf16.msra.mxu0 %v641
        %707 = vmatprep.subr.bf16.mxu0 %v644
        %708 = vmatpush1.bf16.msra.mxu0 %v643
        %709 = vmatprep.subr.bf16.mxu0 %v646
        %710 = vmatpush1.bf16.msra.mxu0 %v645
        %711 = vmatprep.subr.bf16.mxu0 %v648
        %712 = vmatpush1.bf16.msra.mxu0 %v647
        %713 = vmatprep.subr.bf16.mxu0 %v650
        %714 = vmatpush1.bf16.msra.mxu0 %v649
        %715 = vmatprep.subr.bf16.mxu0 %v652
        %716 = vmatpush1.bf16.msra.mxu0 %v651
        %717 = vmatprep.subr.bf16.mxu0 %v654
        %718 = vmatpush1.bf16.msra.mxu0 %v653
        %719 = vmatprep.subr.bf16.mxu0 %v656
        %720 = vmatpush1.bf16.msra.mxu0 %v655
        %721 = vmatprep.subr.bf16.mxu0 %v658
        %722 = vmatpush1.bf16.msra.mxu0 %v657
        %723 = vmatprep.mubr.bf16.mxu0 %v249
        %724 = vmatmul.mubr.bf16.gmra.mrb[0].mxu0 %v248
        %v725 = vpop.f32.mrb[0].mxu0
        %v726 = vadd.f32 %v525, %v725
        %v727 = vpop.f32.mrb[0].mxu0
        %v728 = vadd.f32 %v527, %v727
        %v729 = vpop.f32.mrb[0].mxu0
        %v730 = vpop.f32.mrb[0].mxu0
        %731 = vdwg.mxu0
        %s732 = scalar_lea.vmem [#allocation2], 512
        %v733 = vld [vmem:[%s732] sm:$0xff]
        %v734 = vld [vmem:[%s732 + $0x8] sm:$0xff]
        %v735 = vld [vmem:[%s732 + $0x10] sm:$0xff]
        %v736 = vld [vmem:[%s732 + $0x18] sm:$0xff]
        %v737 = vld [vmem:[%s732 + $0x20] sm:$0xff]
        %v738 = vld [vmem:[%s732 + $0x28] sm:$0xff]
        %v739 = vld [vmem:[%s732 + $0x30] sm:$0xff]
        %v740 = vld [vmem:[%s732 + $0x38] sm:$0xff]
        %v741 = vld [vmem:[%s732 + $0x40] sm:$0xff]
        %v742 = vld [vmem:[%s732 + $0x48] sm:$0xff]
        %v743 = vld [vmem:[%s732 + $0x50] sm:$0xff]
        %v744 = vld [vmem:[%s732 + $0x58] sm:$0xff]
        %v745 = vld [vmem:[%s732 + $0x60] sm:$0xff]
        %v746 = vld [vmem:[%s732 + $0x68] sm:$0xff]
        %v747 = vld [vmem:[%s732 + $0x70] sm:$0xff]
        %v748 = vld [vmem:[%s732 + $0x78] sm:$0xff]
        %v749 = vld [vmem:[%s732 + $0x80] sm:$0xff]
        %v750 = vld [vmem:[%s732 + $0x88] sm:$0xff]
        %v751 = vld [vmem:[%s732 + $0x90] sm:$0xff]
        %v752 = vld [vmem:[%s732 + $0x98] sm:$0xff]
        %v753 = vld [vmem:[%s732 + $0xa0] sm:$0xff]
        %v754 = vld [vmem:[%s732 + $0xa8] sm:$0xff]
        %v755 = vld [vmem:[%s732 + $0xb0] sm:$0xff]
        %v756 = vld [vmem:[%s732 + $0xb8] sm:$0xff]
        %v757 = vld [vmem:[%s732 + $0xc0] sm:$0xff]
        %v758 = vld [vmem:[%s732 + $0xc8] sm:$0xff]
        %v759 = vld [vmem:[%s732 + $0xd0] sm:$0xff]
        %v760 = vld [vmem:[%s732 + $0xd8] sm:$0xff]
        %v761 = vld [vmem:[%s732 + $0xe0] sm:$0xff]
        %v762 = vld [vmem:[%s732 + $0xe8] sm:$0xff]
        %v763 = vld [vmem:[%s732 + $0xf0] sm:$0xff]
        %v764 = vld [vmem:[%s732 + $0xf8] sm:$0xff]
        %765 = vrot.lane.b32.xlu0 %v248, 64
        %v766 = vpop.permute.xlu0 %765
        %767 = vrot.lane.b32.xlu0 %v249, 64
        %v768 = vpop.permute.xlu0 %767
        %769 = vrot.lane.b32.xlu0 %v282, 64
        %v770 = vpop.permute.xlu0 %769
        %vm771 = vcmask 523264
        %v772 = vsel %vm771, %v766, %v768
        %v773 = vsel %vm771, %v768, %v770
        %v808 = vunpack.c.l.b16 %v733
        %v809 = vunpack.c.h.b16 %v733
        %v810 = vunpack.c.l.b16 %v734
        %v811 = vunpack.c.h.b16 %v734
        %v812 = vunpack.c.l.b16 %v735
        %v813 = vunpack.c.h.b16 %v735
        %v814 = vunpack.c.l.b16 %v736
        %v815 = vunpack.c.h.b16 %v736
        %v816 = vunpack.c.l.b16 %v737
        %v817 = vunpack.c.h.b16 %v737
        %v818 = vunpack.c.l.b16 %v738
        %v819 = vunpack.c.h.b16 %v738
        %v820 = vunpack.c.l.b16 %v739
        %v821 = vunpack.c.h.b16 %v739
        %v822 = vunpack.c.l.b16 %v740
        %v823 = vunpack.c.h.b16 %v740
        %v824 = vunpack.c.l.b16 %v741
        %v825 = vunpack.c.h.b16 %v741
        %v826 = vunpack.c.l.b16 %v742
        %v827 = vunpack.c.h.b16 %v742
        %v828 = vunpack.c.l.b16 %v743
        %v829 = vunpack.c.h.b16 %v743
        %v830 = vunpack.c.l.b16 %v744
        %v831 = vunpack.c.h.b16 %v744
        %v832 = vunpack.c.l.b16 %v745
        %v833 = vunpack.c.h.b16 %v745
        %v834 = vunpack.c.l.b16 %v746
        %v835 = vunpack.c.h.b16 %v746
        %v836 = vunpack.c.l.b16 %v747
        %v837 = vunpack.c.h.b16 %v747
        %v838 = vunpack.c.l.b16 %v748
        %v839 = vunpack.c.h.b16 %v748
        %v840 = vunpack.c.l.b16 %v749
        %v841 = vunpack.c.h.b16 %v749
        %v842 = vunpack.c.l.b16 %v750
        %v843 = vunpack.c.h.b16 %v750
        %v844 = vunpack.c.l.b16 %v751
        %v845 = vunpack.c.h.b16 %v751
        %v846 = vunpack.c.l.b16 %v752
        %v847 = vunpack.c.h.b16 %v752
        %v848 = vunpack.c.l.b16 %v753
        %v849 = vunpack.c.h.b16 %v753
        %v850 = vunpack.c.l.b16 %v754
        %v851 = vunpack.c.h.b16 %v754
        %v852 = vunpack.c.l.b16 %v755
        %v853 = vunpack.c.h.b16 %v755
        %v854 = vunpack.c.l.b16 %v756
        %v855 = vunpack.c.h.b16 %v756
        %v856 = vunpack.c.l.b16 %v757
        %v857 = vunpack.c.h.b16 %v757
        %v858 = vunpack.c.l.b16 %v758
        %v859 = vunpack.c.h.b16 %v758
        %v860 = vunpack.c.l.b16 %v759
        %v861 = vunpack.c.h.b16 %v759
        %v862 = vunpack.c.l.b16 %v760
        %v863 = vunpack.c.h.b16 %v760
        %v864 = vunpack.c.l.b16 %v761
        %v865 = vunpack.c.h.b16 %v761
        %v866 = vunpack.c.l.b16 %v762
        %v867 = vunpack.c.h.b16 %v762
        %v868 = vunpack.c.l.b16 %v763
        %v869 = vunpack.c.h.b16 %v763
        %v870 = vunpack.c.l.b16 %v764
        %v871 = vunpack.c.h.b16 %v764
        %v872 = vpack.c.b16 %v810, %v808
        %v873 = vpack.c.b16 %v811, %v809
        %v874 = vpack.c.b16 %v814, %v812
        %v875 = vpack.c.b16 %v815, %v813
        %v876 = vpack.c.b16 %v818, %v816
        %v877 = vpack.c.b16 %v819, %v817
        %v878 = vpack.c.b16 %v822, %v820
        %v879 = vpack.c.b16 %v823, %v821
        %v880 = vpack.c.b16 %v826, %v824
        %v881 = vpack.c.b16 %v827, %v825
        %v882 = vpack.c.b16 %v830, %v828
        %v883 = vpack.c.b16 %v831, %v829
        %v884 = vpack.c.b16 %v834, %v832
        %v885 = vpack.c.b16 %v835, %v833
        %v886 = vpack.c.b16 %v838, %v836
        %v887 = vpack.c.b16 %v839, %v837
        %v888 = vpack.c.b16 %v842, %v840
        %v889 = vpack.c.b16 %v843, %v841
        %v890 = vpack.c.b16 %v846, %v844
        %v891 = vpack.c.b16 %v847, %v845
        %v892 = vpack.c.b16 %v850, %v848
        %v893 = vpack.c.b16 %v851, %v849
        %v894 = vpack.c.b16 %v854, %v852
        %v895 = vpack.c.b16 %v855, %v853
        %v896 = vpack.c.b16 %v858, %v856
        %v897 = vpack.c.b16 %v859, %v857
        %v898 = vpack.c.b16 %v862, %v860
        %v899 = vpack.c.b16 %v863, %v861
        %v900 = vpack.c.b16 %v866, %v864
        %v901 = vpack.c.b16 %v867, %v865
        %v902 = vpack.c.b16 %v870, %v868
        %v903 = vpack.c.b16 %v871, %v869
        %936 = vmatprep.subr.bf16.mxu0 %v873
        %937 = vmatpush1.bf16.msra.mxu0 %v872
        %938 = vmatprep.subr.bf16.mxu0 %v875
        %939 = vmatpush1.bf16.msra.mxu0 %v874
        %940 = vmatprep.subr.bf16.mxu0 %v877
        %941 = vmatpush1.bf16.msra.mxu0 %v876
        %942 = vmatprep.subr.bf16.mxu0 %v879
        %943 = vmatpush1.bf16.msra.mxu0 %v878
        %944 = vmatprep.subr.bf16.mxu0 %v881
        %945 = vmatpush1.bf16.msra.mxu0 %v880
        %946 = vmatprep.subr.bf16.mxu0 %v883
        %947 = vmatpush1.bf16.msra.mxu0 %v882
        %948 = vmatprep.subr.bf16.mxu0 %v885
        %949 = vmatpush1.bf16.msra.mxu0 %v884
        %950 = vmatprep.subr.bf16.mxu0 %v887
        %951 = vmatpush1.bf16.msra.mxu0 %v886
        %952 = vmatprep.subr.bf16.mxu0 %v889
        %953 = vmatpush1.bf16.msra.mxu0 %v888
        %954 = vmatprep.subr.bf16.mxu0 %v891
        %955 = vmatpush1.bf16.msra.mxu0 %v890
        %956 = vmatprep.subr.bf16.mxu0 %v893
        %957 = vmatpush1.bf16.msra.mxu0 %v892
        %958 = vmatprep.subr.bf16.mxu0 %v895
        %959 = vmatpush1.bf16.msra.mxu0 %v894
        %960 = vmatprep.subr.bf16.mxu0 %v897
        %961 = vmatpush1.bf16.msra.mxu0 %v896
        %962 = vmatprep.subr.bf16.mxu0 %v899
        %963 = vmatpush1.bf16.msra.mxu0 %v898
        %964 = vmatprep.subr.bf16.mxu0 %v901
        %965 = vmatpush1.bf16.msra.mxu0 %v900
        %966 = vmatprep.subr.bf16.mxu0 %v903
        %967 = vmatpush1.bf16.msra.mxu0 %v902
        %968 = vmatprep.mubr.bf16.mxu0 %v773
        %969 = vmatmul.mubr.bf16.gmra.mrb[0].mxu0 %v772
        %v970 = vpop.f32.mrb[0].mxu0
        %v971 = vadd.f32 0.0, %v970
        %v972 = vpop.f32.mrb[0].mxu0
        %v973 = vadd.f32 0.0, %v972
        %v974 = vpop.f32.mrb[0].mxu0
        %v975 = vpop.f32.mrb[0].mxu0
        %976 = vdwg.mxu0
        %v977 = vadd.f32 %v726, %v971
        %v978 = vadd.f32 %v728, %v973
        %v979 = vpack.c.bf16 %v245, %v242
        %v980 = vpack.c.bf16 %v246, %v243
        %s981 = scalar_lea.vmem [#allocation2], 768
        %v982 = vld [vmem:[%s981] sm:$0xff]
        %v983 = vld [vmem:[%s981 + $0x8] sm:$0xff]
        %v984 = vld [vmem:[%s981 + $0x10] sm:$0xff]
        %v985 = vld [vmem:[%s981 + $0x18] sm:$0xff]
        %v986 = vld [vmem:[%s981 + $0x20] sm:$0xff]
        %v987 = vld [vmem:[%s981 + $0x28] sm:$0xff]
        %v988 = vld [vmem:[%s981 + $0x30] sm:$0xff]
        %v989 = vld [vmem:[%s981 + $0x38] sm:$0xff]
        %v990 = vld [vmem:[%s981 + $0x40] sm:$0xff]
        %v991 = vld [vmem:[%s981 + $0x48] sm:$0xff]
        %v992 = vld [vmem:[%s981 + $0x50] sm:$0xff]
        %v993 = vld [vmem:[%s981 + $0x58] sm:$0xff]
        %v994 = vld [vmem:[%s981 + $0x60] sm:$0xff]
        %v995 = vld [vmem:[%s981 + $0x68] sm:$0xff]
        %v996 = vld [vmem:[%s981 + $0x70] sm:$0xff]
        %v997 = vld [vmem:[%s981 + $0x78] sm:$0xff]
        %v998 = vld [vmem:[%s981 + $0x80] sm:$0xff]
        %v999 = vld [vmem:[%s981 + $0x88] sm:$0xff]
        %v1000 = vld [vmem:[%s981 + $0x90] sm:$0xff]
        %v1001 = vld [vmem:[%s981 + $0x98] sm:$0xff]
        %v1002 = vld [vmem:[%s981 + $0xa0] sm:$0xff]
        %v1003 = vld [vmem:[%s981 + $0xa8] sm:$0xff]
        %v1004 = vld [vmem:[%s981 + $0xb0] sm:$0xff]
        %v1005 = vld [vmem:[%s981 + $0xb8] sm:$0xff]
        %v1006 = vld [vmem:[%s981 + $0xc0] sm:$0xff]
        %v1007 = vld [vmem:[%s981 + $0xc8] sm:$0xff]
        %v1008 = vld [vmem:[%s981 + $0xd0] sm:$0xff]
        %v1009 = vld [vmem:[%s981 + $0xd8] sm:$0xff]
        %v1010 = vld [vmem:[%s981 + $0xe0] sm:$0xff]
        %v1011 = vld [vmem:[%s981 + $0xe8] sm:$0xff]
        %v1012 = vld [vmem:[%s981 + $0xf0] sm:$0xff]
        %v1013 = vld [vmem:[%s981 + $0xf8] sm:$0xff]
        %v1015 = vshrl.u32 %v979, 16
        %v1017 = vshll.u32 %v979, 16
        %v1019 = vrot.slane %v1017, 1
        %v1020 = vor.u32 %v1015, %v1019
        %v1022 = vshrl.u32 %v980, 16
        %v1024 = vshll.u32 %v980, 16
        %v1026 = vrot.slane %v1024, 1
        %v1027 = vor.u32 %v1022, %v1026
        %v1062 = vunpack.c.l.b16 %v982
        %v1063 = vunpack.c.h.b16 %v982
        %v1064 = vunpack.c.l.b16 %v983
        %v1065 = vunpack.c.h.b16 %v983
        %v1066 = vunpack.c.l.b16 %v984
        %v1067 = vunpack.c.h.b16 %v984
        %v1068 = vunpack.c.l.b16 %v985
        %v1069 = vunpack.c.h.b16 %v985
        %v1070 = vunpack.c.l.b16 %v986
        %v1071 = vunpack.c.h.b16 %v986
        %v1072 = vunpack.c.l.b16 %v987
        %v1073 = vunpack.c.h.b16 %v987
        %v1074 = vunpack.c.l.b16 %v988
        %v1075 = vunpack.c.h.b16 %v988
        %v1076 = vunpack.c.l.b16 %v989
        %v1077 = vunpack.c.h.b16 %v989
        %v1078 = vunpack.c.l.b16 %v990
        %v1079 = vunpack.c.h.b16 %v990
        %v1080 = vunpack.c.l.b16 %v991
        %v1081 = vunpack.c.h.b16 %v991
        %v1082 = vunpack.c.l.b16 %v992
        %v1083 = vunpack.c.h.b16 %v992
        %v1084 = vunpack.c.l.b16 %v993
        %v1085 = vunpack.c.h.b16 %v993
        %v1086 = vunpack.c.l.b16 %v994
        %v1087 = vunpack.c.h.b16 %v994
        %v1088 = vunpack.c.l.b16 %v995
        %v1089 = vunpack.c.h.b16 %v995
        %v1090 = vunpack.c.l.b16 %v996
        %v1091 = vunpack.c.h.b16 %v996
        %v1092 = vunpack.c.l.b16 %v997
        %v1093 = vunpack.c.h.b16 %v997
        %v1094 = vunpack.c.l.b16 %v998
        %v1095 = vunpack.c.h.b16 %v998
        %v1096 = vunpack.c.l.b16 %v999
        %v1097 = vunpack.c.h.b16 %v999
        %v1098 = vunpack.c.l.b16 %v1000
        %v1099 = vunpack.c.h.b16 %v1000
        %v1100 = vunpack.c.l.b16 %v1001
        %v1101 = vunpack.c.h.b16 %v1001
        %v1102 = vunpack.c.l.b16 %v1002
        %v1103 = vunpack.c.h.b16 %v1002
        %v1104 = vunpack.c.l.b16 %v1003
        %v1105 = vunpack.c.h.b16 %v1003
        %v1106 = vunpack.c.l.b16 %v1004
        %v1107 = vunpack.c.h.b16 %v1004
        %v1108 = vunpack.c.l.b16 %v1005
        %v1109 = vunpack.c.h.b16 %v1005
        %v1110 = vunpack.c.l.b16 %v1006
        %v1111 = vunpack.c.h.b16 %v1006
        %v1112 = vunpack.c.l.b16 %v1007
        %v1113 = vunpack.c.h.b16 %v1007
        %v1114 = vunpack.c.l.b16 %v1008
        %v1115 = vunpack.c.h.b16 %v1008
        %v1116 = vunpack.c.l.b16 %v1009
        %v1117 = vunpack.c.h.b16 %v1009
        %v1118 = vunpack.c.l.b16 %v1010
        %v1119 = vunpack.c.h.b16 %v1010
        %v1120 = vunpack.c.l.b16 %v1011
        %v1121 = vunpack.c.h.b16 %v1011
        %v1122 = vunpack.c.l.b16 %v1012
        %v1123 = vunpack.c.h.b16 %v1012
        %v1124 = vunpack.c.l.b16 %v1013
        %v1125 = vunpack.c.h.b16 %v1013
        %v1126 = vpack.c.b16 %v1064, %v1062
        %v1127 = vpack.c.b16 %v1065, %v1063
        %v1128 = vpack.c.b16 %v1068, %v1066
        %v1129 = vpack.c.b16 %v1069, %v1067
        %v1130 = vpack.c.b16 %v1072, %v1070
        %v1131 = vpack.c.b16 %v1073, %v1071
        %v1132 = vpack.c.b16 %v1076, %v1074
        %v1133 = vpack.c.b16 %v1077, %v1075
        %v1134 = vpack.c.b16 %v1080, %v1078
        %v1135 = vpack.c.b16 %v1081, %v1079
        %v1136 = vpack.c.b16 %v1084, %v1082
        %v1137 = vpack.c.b16 %v1085, %v1083
        %v1138 = vpack.c.b16 %v1088, %v1086
        %v1139 = vpack.c.b16 %v1089, %v1087
        %v1140 = vpack.c.b16 %v1092, %v1090
        %v1141 = vpack.c.b16 %v1093, %v1091
        %v1142 = vpack.c.b16 %v1096, %v1094
        %v1143 = vpack.c.b16 %v1097, %v1095
        %v1144 = vpack.c.b16 %v1100, %v1098
        %v1145 = vpack.c.b16 %v1101, %v1099
        %v1146 = vpack.c.b16 %v1104, %v1102
        %v1147 = vpack.c.b16 %v1105, %v1103
        %v1148 = vpack.c.b16 %v1108, %v1106
        %v1149 = vpack.c.b16 %v1109, %v1107
        %v1150 = vpack.c.b16 %v1112, %v1110
        %v1151 = vpack.c.b16 %v1113, %v1111
        %v1152 = vpack.c.b16 %v1116, %v1114
        %v1153 = vpack.c.b16 %v1117, %v1115
        %v1154 = vpack.c.b16 %v1120, %v1118
        %v1155 = vpack.c.b16 %v1121, %v1119
        %v1156 = vpack.c.b16 %v1124, %v1122
        %v1157 = vpack.c.b16 %v1125, %v1123
        %1190 = vmatprep.subr.bf16.mxu0 %v1127
        %1191 = vmatpush1.bf16.msra.mxu0 %v1126
        %1192 = vmatprep.subr.bf16.mxu0 %v1129
        %1193 = vmatpush1.bf16.msra.mxu0 %v1128
        %1194 = vmatprep.subr.bf16.mxu0 %v1131
        %1195 = vmatpush1.bf16.msra.mxu0 %v1130
        %1196 = vmatprep.subr.bf16.mxu0 %v1133
        %1197 = vmatpush1.bf16.msra.mxu0 %v1132
        %1198 = vmatprep.subr.bf16.mxu0 %v1135
        %1199 = vmatpush1.bf16.msra.mxu0 %v1134
        %1200 = vmatprep.subr.bf16.mxu0 %v1137
        %1201 = vmatpush1.bf16.msra.mxu0 %v1136
        %1202 = vmatprep.subr.bf16.mxu0 %v1139
        %1203 = vmatpush1.bf16.msra.mxu0 %v1138
        %1204 = vmatprep.subr.bf16.mxu0 %v1141
        %1205 = vmatpush1.bf16.msra.mxu0 %v1140
        %1206 = vmatprep.subr.bf16.mxu0 %v1143
        %1207 = vmatpush1.bf16.msra.mxu0 %v1142
        %1208 = vmatprep.subr.bf16.mxu0 %v1145
        %1209 = vmatpush1.bf16.msra.mxu0 %v1144
        %1210 = vmatprep.subr.bf16.mxu0 %v1147
        %1211 = vmatpush1.bf16.msra.mxu0 %v1146
        %1212 = vmatprep.subr.bf16.mxu0 %v1149
        %1213 = vmatpush1.bf16.msra.mxu0 %v1148
        %1214 = vmatprep.subr.bf16.mxu0 %v1151
        %1215 = vmatpush1.bf16.msra.mxu0 %v1150
        %1216 = vmatprep.subr.bf16.mxu0 %v1153
        %1217 = vmatpush1.bf16.msra.mxu0 %v1152
        %1218 = vmatprep.subr.bf16.mxu0 %v1155
        %1219 = vmatpush1.bf16.msra.mxu0 %v1154
        %1220 = vmatprep.subr.bf16.mxu0 %v1157
        %1221 = vmatpush1.bf16.msra.mxu0 %v1156
        %1222 = vmatprep.mubr.bf16.mxu0 %v1027
        %1223 = vmatmul.mubr.bf16.gmra.mrb[0].mxu0 %v1020
        %v1224 = vpop.f32.mrb[0].mxu0
        %v1225 = vadd.f32 0.0, %v1224
        %v1226 = vpop.f32.mrb[0].mxu0
        %v1227 = vadd.f32 0.0, %v1226
        %v1228 = vpop.f32.mrb[0].mxu0
        %v1229 = vpop.f32.mrb[0].mxu0
        %1230 = vdwg.mxu0
        %v1231 = vadd.f32 %v977, %v1225
        %v1232 = vadd.f32 %v978, %v1227
        %v1233 = vpack.c.bf16 %v247, %v244
        %s1234 = scalar_lea.vmem [#allocation2], 1024
        %v1235 = vld [vmem:[%s1234] sm:$0xff]
        %v1236 = vld [vmem:[%s1234 + $0x8] sm:$0xff]
        %v1237 = vld [vmem:[%s1234 + $0x10] sm:$0xff]
        %v1238 = vld [vmem:[%s1234 + $0x18] sm:$0xff]
        %v1239 = vld [vmem:[%s1234 + $0x20] sm:$0xff]
        %v1240 = vld [vmem:[%s1234 + $0x28] sm:$0xff]
        %v1241 = vld [vmem:[%s1234 + $0x30] sm:$0xff]
        %v1242 = vld [vmem:[%s1234 + $0x38] sm:$0xff]
        %v1243 = vld [vmem:[%s1234 + $0x40] sm:$0xff]
        %v1244 = vld [vmem:[%s1234 + $0x48] sm:$0xff]
        %v1245 = vld [vmem:[%s1234 + $0x50] sm:$0xff]
        %v1246 = vld [vmem:[%s1234 + $0x58] sm:$0xff]
        %v1247 = vld [vmem:[%s1234 + $0x60] sm:$0xff]
        %v1248 = vld [vmem:[%s1234 + $0x68] sm:$0xff]
        %v1249 = vld [vmem:[%s1234 + $0x70] sm:$0xff]
        %v1250 = vld [vmem:[%s1234 + $0x78] sm:$0xff]
        %v1251 = vld [vmem:[%s1234 + $0x80] sm:$0xff]
        %v1252 = vld [vmem:[%s1234 + $0x88] sm:$0xff]
        %v1253 = vld [vmem:[%s1234 + $0x90] sm:$0xff]
        %v1254 = vld [vmem:[%s1234 + $0x98] sm:$0xff]
        %v1255 = vld [vmem:[%s1234 + $0xa0] sm:$0xff]
        %v1256 = vld [vmem:[%s1234 + $0xa8] sm:$0xff]
        %v1257 = vld [vmem:[%s1234 + $0xb0] sm:$0xff]
        %v1258 = vld [vmem:[%s1234 + $0xb8] sm:$0xff]
        %v1259 = vld [vmem:[%s1234 + $0xc0] sm:$0xff]
        %v1260 = vld [vmem:[%s1234 + $0xc8] sm:$0xff]
        %v1261 = vld [vmem:[%s1234 + $0xd0] sm:$0xff]
        %v1262 = vld [vmem:[%s1234 + $0xd8] sm:$0xff]
        %v1263 = vld [vmem:[%s1234 + $0xe0] sm:$0xff]
        %v1264 = vld [vmem:[%s1234 + $0xe8] sm:$0xff]
        %v1265 = vld [vmem:[%s1234 + $0xf0] sm:$0xff]
        %v1266 = vld [vmem:[%s1234 + $0xf8] sm:$0xff]
        %v1268 = vshrl.u32 %v1233, 16
        %v1270 = vshll.u32 %v1233, 16
        %v1272 = vrot.slane %v1270, 1
        %v1273 = vor.u32 %v1268, %v1272
        %1274 = vrot.lane.b32.xlu0 %v1020, 96
        %v1275 = vpop.permute.xlu0 %1274
        %1276 = vrot.lane.b32.xlu0 %v1027, 96
        %v1277 = vpop.permute.xlu0 %1276
        %1278 = vrot.lane.b32.xlu0 %v1273, 96
        %v1279 = vpop.permute.xlu0 %1278
        %v1280 = vsel %vm325, %v1275, %v1277
        %v1281 = vsel %vm325, %v1277, %v1279
        %v1316 = vunpack.c.l.b16 %v1235
        %v1317 = vunpack.c.h.b16 %v1235
        %v1318 = vunpack.c.l.b16 %v1236
        %v1319 = vunpack.c.h.b16 %v1236
        %v1320 = vunpack.c.l.b16 %v1237
        %v1321 = vunpack.c.h.b16 %v1237
        %v1322 = vunpack.c.l.b16 %v1238
        %v1323 = vunpack.c.h.b16 %v1238
        %v1324 = vunpack.c.l.b16 %v1239
        %v1325 = vunpack.c.h.b16 %v1239
        %v1326 = vunpack.c.l.b16 %v1240
        %v1327 = vunpack.c.h.b16 %v1240
        %v1328 = vunpack.c.l.b16 %v1241
        %v1329 = vunpack.c.h.b16 %v1241
        %v1330 = vunpack.c.l.b16 %v1242
        %v1331 = vunpack.c.h.b16 %v1242
        %v1332 = vunpack.c.l.b16 %v1243
        %v1333 = vunpack.c.h.b16 %v1243
        %v1334 = vunpack.c.l.b16 %v1244
        %v1335 = vunpack.c.h.b16 %v1244
        %v1336 = vunpack.c.l.b16 %v1245
        %v1337 = vunpack.c.h.b16 %v1245
        %v1338 = vunpack.c.l.b16 %v1246
        %v1339 = vunpack.c.h.b16 %v1246
        %v1340 = vunpack.c.l.b16 %v1247
        %v1341 = vunpack.c.h.b16 %v1247
        %v1342 = vunpack.c.l.b16 %v1248
        %v1343 = vunpack.c.h.b16 %v1248
        %v1344 = vunpack.c.l.b16 %v1249
        %v1345 = vunpack.c.h.b16 %v1249
        %v1346 = vunpack.c.l.b16 %v1250
        %v1347 = vunpack.c.h.b16 %v1250
        %v1348 = vunpack.c.l.b16 %v1251
        %v1349 = vunpack.c.h.b16 %v1251
        %v1350 = vunpack.c.l.b16 %v1252
        %v1351 = vunpack.c.h.b16 %v1252
        %v1352 = vunpack.c.l.b16 %v1253
        %v1353 = vunpack.c.h.b16 %v1253
        %v1354 = vunpack.c.l.b16 %v1254
        %v1355 = vunpack.c.h.b16 %v1254
        %v1356 = vunpack.c.l.b16 %v1255
        %v1357 = vunpack.c.h.b16 %v1255
        %v1358 = vunpack.c.l.b16 %v1256
        %v1359 = vunpack.c.h.b16 %v1256
        %v1360 = vunpack.c.l.b16 %v1257
        %v1361 = vunpack.c.h.b16 %v1257
        %v1362 = vunpack.c.l.b16 %v1258
        %v1363 = vunpack.c.h.b16 %v1258
        %v1364 = vunpack.c.l.b16 %v1259
        %v1365 = vunpack.c.h.b16 %v1259
        %v1366 = vunpack.c.l.b16 %v1260
        %v1367 = vunpack.c.h.b16 %v1260
        %v1368 = vunpack.c.l.b16 %v1261
        %v1369 = vunpack.c.h.b16 %v1261
        %v1370 = vunpack.c.l.b16 %v1262
        %v1371 = vunpack.c.h.b16 %v1262
        %v1372 = vunpack.c.l.b16 %v1263
        %v1373 = vunpack.c.h.b16 %v1263
        %v1374 = vunpack.c.l.b16 %v1264
        %v1375 = vunpack.c.h.b16 %v1264
        %v1376 = vunpack.c.l.b16 %v1265
        %v1377 = vunpack.c.h.b16 %v1265
        %v1378 = vunpack.c.l.b16 %v1266
        %v1379 = vunpack.c.h.b16 %v1266
        %v1380 = vpack.c.b16 %v1318, %v1316
        %v1381 = vpack.c.b16 %v1319, %v1317
        %v1382 = vpack.c.b16 %v1322, %v1320
        %v1383 = vpack.c.b16 %v1323, %v1321
        %v1384 = vpack.c.b16 %v1326, %v1324
        %v1385 = vpack.c.b16 %v1327, %v1325
        %v1386 = vpack.c.b16 %v1330, %v1328
        %v1387 = vpack.c.b16 %v1331, %v1329
        %v1388 = vpack.c.b16 %v1334, %v1332
        %v1389 = vpack.c.b16 %v1335, %v1333
        %v1390 = vpack.c.b16 %v1338, %v1336
        %v1391 = vpack.c.b16 %v1339, %v1337
        %v1392 = vpack.c.b16 %v1342, %v1340
        %v1393 = vpack.c.b16 %v1343, %v1341
        %v1394 = vpack.c.b16 %v1346, %v1344
        %v1395 = vpack.c.b16 %v1347, %v1345
        %v1396 = vpack.c.b16 %v1350, %v1348
        %v1397 = vpack.c.b16 %v1351, %v1349
        %v1398 = vpack.c.b16 %v1354, %v1352
        %v1399 = vpack.c.b16 %v1355, %v1353
        %v1400 = vpack.c.b16 %v1358, %v1356
        %v1401 = vpack.c.b16 %v1359, %v1357
        %v1402 = vpack.c.b16 %v1362, %v1360
        %v1403 = vpack.c.b16 %v1363, %v1361
        %v1404 = vpack.c.b16 %v1366, %v1364
        %v1405 = vpack.c.b16 %v1367, %v1365
        %v1406 = vpack.c.b16 %v1370, %v1368
        %v1407 = vpack.c.b16 %v1371, %v1369
        %v1408 = vpack.c.b16 %v1374, %v1372
        %v1409 = vpack.c.b16 %v1375, %v1373
        %v1410 = vpack.c.b16 %v1378, %v1376
        %v1411 = vpack.c.b16 %v1379, %v1377
        %1444 = vmatprep.subr.bf16.mxu0 %v1381
        %1445 = vmatpush1.bf16.msra.mxu0 %v1380
        %1446 = vmatprep.subr.bf16.mxu0 %v1383
        %1447 = vmatpush1.bf16.msra.mxu0 %v1382
        %1448 = vmatprep.subr.bf16.mxu0 %v1385
        %1449 = vmatpush1.bf16.msra.mxu0 %v1384
        %1450 = vmatprep.subr.bf16.mxu0 %v1387
        %1451 = vmatpush1.bf16.msra.mxu0 %v1386
        %1452 = vmatprep.subr.bf16.mxu0 %v1389
        %1453 = vmatpush1.bf16.msra.mxu0 %v1388
        %1454 = vmatprep.subr.bf16.mxu0 %v1391
        %1455 = vmatpush1.bf16.msra.mxu0 %v1390
        %1456 = vmatprep.subr.bf16.mxu0 %v1393
        %1457 = vmatpush1.bf16.msra.mxu0 %v1392
        %1458 = vmatprep.subr.bf16.mxu0 %v1395
        %1459 = vmatpush1.bf16.msra.mxu0 %v1394
        %1460 = vmatprep.subr.bf16.mxu0 %v1397
        %1461 = vmatpush1.bf16.msra.mxu0 %v1396
        %1462 = vmatprep.subr.bf16.mxu0 %v1399
        %1463 = vmatpush1.bf16.msra.mxu0 %v1398
        %1464 = vmatprep.subr.bf16.mxu0 %v1401
        %1465 = vmatpush1.bf16.msra.mxu0 %v1400
        %1466 = vmatprep.subr.bf16.mxu0 %v1403
        %1467 = vmatpush1.bf16.msra.mxu0 %v1402
        %1468 = vmatprep.subr.bf16.mxu0 %v1405
        %1469 = vmatpush1.bf16.msra.mxu0 %v1404
        %1470 = vmatprep.subr.bf16.mxu0 %v1407
        %1471 = vmatpush1.bf16.msra.mxu0 %v1406
        %1472 = vmatprep.subr.bf16.mxu0 %v1409
        %1473 = vmatpush1.bf16.msra.mxu0 %v1408
        %1474 = vmatprep.subr.bf16.mxu0 %v1411
        %1475 = vmatpush1.bf16.msra.mxu0 %v1410
        %1476 = vmatprep.mubr.bf16.mxu0 %v1281
        %1477 = vmatmul.mubr.bf16.gmra.mrb[0].mxu0 %v1280
        %v1478 = vpop.f32.mrb[0].mxu0
        %v1479 = vadd.f32 0.0, %v1478
        %v1480 = vpop.f32.mrb[0].mxu0
        %v1481 = vadd.f32 0.0, %v1480
        %v1482 = vpop.f32.mrb[0].mxu0
        %v1483 = vpop.f32.mrb[0].mxu0
        %1484 = vdwg.mxu0
        %v1485 = vadd.f32 %v1231, %v1479
        %v1486 = vadd.f32 %v1232, %v1481
        %s1487 = scalar_lea.vmem [#allocation2], 1280
        %v1488 = vld [vmem:[%s1487] sm:$0xff]
        %v1489 = vld [vmem:[%s1487 + $0x8] sm:$0xff]
        %v1490 = vld [vmem:[%s1487 + $0x10] sm:$0xff]
        %v1491 = vld [vmem:[%s1487 + $0x18] sm:$0xff]
        %v1492 = vld [vmem:[%s1487 + $0x20] sm:$0xff]
        %v1493 = vld [vmem:[%s1487 + $0x28] sm:$0xff]
        %v1494 = vld [vmem:[%s1487 + $0x30] sm:$0xff]
        %v1495 = vld [vmem:[%s1487 + $0x38] sm:$0xff]
        %v1496 = vld [vmem:[%s1487 + $0x40] sm:$0xff]
        %v1497 = vld [vmem:[%s1487 + $0x48] sm:$0xff]
        %v1498 = vld [vmem:[%s1487 + $0x50] sm:$0xff]
        %v1499 = vld [vmem:[%s1487 + $0x58] sm:$0xff]
        %v1500 = vld [vmem:[%s1487 + $0x60] sm:$0xff]
        %v1501 = vld [vmem:[%s1487 + $0x68] sm:$0xff]
        %v1502 = vld [vmem:[%s1487 + $0x70] sm:$0xff]
        %v1503 = vld [vmem:[%s1487 + $0x78] sm:$0xff]
        %v1504 = vld [vmem:[%s1487 + $0x80] sm:$0xff]
        %v1505 = vld [vmem:[%s1487 + $0x88] sm:$0xff]
        %v1506 = vld [vmem:[%s1487 + $0x90] sm:$0xff]
        %v1507 = vld [vmem:[%s1487 + $0x98] sm:$0xff]
        %v1508 = vld [vmem:[%s1487 + $0xa0] sm:$0xff]
        %v1509 = vld [vmem:[%s1487 + $0xa8] sm:$0xff]
        %v1510 = vld [vmem:[%s1487 + $0xb0] sm:$0xff]
        %v1511 = vld [vmem:[%s1487 + $0xb8] sm:$0xff]
        %v1512 = vld [vmem:[%s1487 + $0xc0] sm:$0xff]
        %v1513 = vld [vmem:[%s1487 + $0xc8] sm:$0xff]
        %v1514 = vld [vmem:[%s1487 + $0xd0] sm:$0xff]
        %v1515 = vld [vmem:[%s1487 + $0xd8] sm:$0xff]
        %v1516 = vld [vmem:[%s1487 + $0xe0] sm:$0xff]
        %v1517 = vld [vmem:[%s1487 + $0xe8] sm:$0xff]
        %v1518 = vld [vmem:[%s1487 + $0xf0] sm:$0xff]
        %v1519 = vld [vmem:[%s1487 + $0xf8] sm:$0xff]
        %1520 = vrot.lane.b32.xlu0 %v1020, 64
        %v1521 = vpop.permute.xlu0 %1520
        %1522 = vrot.lane.b32.xlu0 %v1027, 64
        %v1523 = vpop.permute.xlu0 %1522
        %1524 = vrot.lane.b32.xlu0 %v1273, 64
        %v1525 = vpop.permute.xlu0 %1524
        %v1526 = vsel %vm771, %v1521, %v1523
        %v1527 = vsel %vm771, %v1523, %v1525
        %v1562 = vunpack.c.l.b16 %v1488
        %v1563 = vunpack.c.h.b16 %v1488
        %v1564 = vunpack.c.l.b16 %v1489
        %v1565 = vunpack.c.h.b16 %v1489
        %v1566 = vunpack.c.l.b16 %v1490
        %v1567 = vunpack.c.h.b16 %v1490
        %v1568 = vunpack.c.l.b16 %v1491
        %v1569 = vunpack.c.h.b16 %v1491
        %v1570 = vunpack.c.l.b16 %v1492
        %v1571 = vunpack.c.h.b16 %v1492
        %v1572 = vunpack.c.l.b16 %v1493
        %v1573 = vunpack.c.h.b16 %v1493
        %v1574 = vunpack.c.l.b16 %v1494
        %v1575 = vunpack.c.h.b16 %v1494
        %v1576 = vunpack.c.l.b16 %v1495
        %v1577 = vunpack.c.h.b16 %v1495
        %v1578 = vunpack.c.l.b16 %v1496
        %v1579 = vunpack.c.h.b16 %v1496
        %v1580 = vunpack.c.l.b16 %v1497
        %v1581 = vunpack.c.h.b16 %v1497
        %v1582 = vunpack.c.l.b16 %v1498
        %v1583 = vunpack.c.h.b16 %v1498
        %v1584 = vunpack.c.l.b16 %v1499
        %v1585 = vunpack.c.h.b16 %v1499
        %v1586 = vunpack.c.l.b16 %v1500
        %v1587 = vunpack.c.h.b16 %v1500
        %v1588 = vunpack.c.l.b16 %v1501
        %v1589 = vunpack.c.h.b16 %v1501
        %v1590 = vunpack.c.l.b16 %v1502
        %v1591 = vunpack.c.h.b16 %v1502
        %v1592 = vunpack.c.l.b16 %v1503
        %v1593 = vunpack.c.h.b16 %v1503
        %v1594 = vunpack.c.l.b16 %v1504
        %v1595 = vunpack.c.h.b16 %v1504
        %v1596 = vunpack.c.l.b16 %v1505
        %v1597 = vunpack.c.h.b16 %v1505
        %v1598 = vunpack.c.l.b16 %v1506
        %v1599 = vunpack.c.h.b16 %v1506
        %v1600 = vunpack.c.l.b16 %v1507
        %v1601 = vunpack.c.h.b16 %v1507
        %v1602 = vunpack.c.l.b16 %v1508
        %v1603 = vunpack.c.h.b16 %v1508
        %v1604 = vunpack.c.l.b16 %v1509
        %v1605 = vunpack.c.h.b16 %v1509
        %v1606 = vunpack.c.l.b16 %v1510
        %v1607 = vunpack.c.h.b16 %v1510
        %v1608 = vunpack.c.l.b16 %v1511
        %v1609 = vunpack.c.h.b16 %v1511
        %v1610 = vunpack.c.l.b16 %v1512
        %v1611 = vunpack.c.h.b16 %v1512
        %v1612 = vunpack.c.l.b16 %v1513
        %v1613 = vunpack.c.h.b16 %v1513
        %v1614 = vunpack.c.l.b16 %v1514
        %v1615 = vunpack.c.h.b16 %v1514
        %v1616 = vunpack.c.l.b16 %v1515
        %v1617 = vunpack.c.h.b16 %v1515
        %v1618 = vunpack.c.l.b16 %v1516
        %v1619 = vunpack.c.h.b16 %v1516
        %v1620 = vunpack.c.l.b16 %v1517
        %v1621 = vunpack.c.h.b16 %v1517
        %v1622 = vunpack.c.l.b16 %v1518
        %v1623 = vunpack.c.h.b16 %v1518
        %v1624 = vunpack.c.l.b16 %v1519
        %v1625 = vunpack.c.h.b16 %v1519
        %v1626 = vpack.c.b16 %v1564, %v1562
        %v1627 = vpack.c.b16 %v1565, %v1563
        %v1628 = vpack.c.b16 %v1568, %v1566
        %v1629 = vpack.c.b16 %v1569, %v1567
        %v1630 = vpack.c.b16 %v1572, %v1570
        %v1631 = vpack.c.b16 %v1573, %v1571
        %v1632 = vpack.c.b16 %v1576, %v1574
        %v1633 = vpack.c.b16 %v1577, %v1575
        %v1634 = vpack.c.b16 %v1580, %v1578
        %v1635 = vpack.c.b16 %v1581, %v1579
        %v1636 = vpack.c.b16 %v1584, %v1582
        %v1637 = vpack.c.b16 %v1585, %v1583
        %v1638 = vpack.c.b16 %v1588, %v1586
        %v1639 = vpack.c.b16 %v1589, %v1587
        %v1640 = vpack.c.b16 %v1592, %v1590
        %v1641 = vpack.c.b16 %v1593, %v1591
        %v1642 = vpack.c.b16 %v1596, %v1594
        %v1643 = vpack.c.b16 %v1597, %v1595
        %v1644 = vpack.c.b16 %v1600, %v1598
        %v1645 = vpack.c.b16 %v1601, %v1599
        %v1646 = vpack.c.b16 %v1604, %v1602
        %v1647 = vpack.c.b16 %v1605, %v1603
        %v1648 = vpack.c.b16 %v1608, %v1606
        %v1649 = vpack.c.b16 %v1609, %v1607
        %v1650 = vpack.c.b16 %v1612, %v1610
        %v1651 = vpack.c.b16 %v1613, %v1611
        %v1652 = vpack.c.b16 %v1616, %v1614
        %v1653 = vpack.c.b16 %v1617, %v1615
        %v1654 = vpack.c.b16 %v1620, %v1618
        %v1655 = vpack.c.b16 %v1621, %v1619
        %v1656 = vpack.c.b16 %v1624, %v1622
        %v1657 = vpack.c.b16 %v1625, %v1623
        %1690 = vmatprep.subr.bf16.mxu0 %v1627
        %1691 = vmatpush1.bf16.msra.mxu0 %v1626
        %1692 = vmatprep.subr.bf16.mxu0 %v1629
        %1693 = vmatpush1.bf16.msra.mxu0 %v1628
        %1694 = vmatprep.subr.bf16.mxu0 %v1631
        %1695 = vmatpush1.bf16.msra.mxu0 %v1630
        %1696 = vmatprep.subr.bf16.mxu0 %v1633
        %1697 = vmatpush1.bf16.msra.mxu0 %v1632
        %1698 = vmatprep.subr.bf16.mxu0 %v1635
        %1699 = vmatpush1.bf16.msra.mxu0 %v1634
        %1700 = vmatprep.subr.bf16.mxu0 %v1637
        %1701 = vmatpush1.bf16.msra.mxu0 %v1636
        %1702 = vmatprep.subr.bf16.mxu0 %v1639
        %1703 = vmatpush1.bf16.msra.mxu0 %v1638
        %1704 = vmatprep.subr.bf16.mxu0 %v1641
        %1705 = vmatpush1.bf16.msra.mxu0 %v1640
        %1706 = vmatprep.subr.bf16.mxu0 %v1643
        %1707 = vmatpush1.bf16.msra.mxu0 %v1642
        %1708 = vmatprep.subr.bf16.mxu0 %v1645
        %1709 = vmatpush1.bf16.msra.mxu0 %v1644
        %1710 = vmatprep.subr.bf16.mxu0 %v1647
        %1711 = vmatpush1.bf16.msra.mxu0 %v1646
        %1712 = vmatprep.subr.bf16.mxu0 %v1649
        %1713 = vmatpush1.bf16.msra.mxu0 %v1648
        %1714 = vmatprep.subr.bf16.mxu0 %v1651
        %1715 = vmatpush1.bf16.msra.mxu0 %v1650
        %1716 = vmatprep.subr.bf16.mxu0 %v1653
        %1717 = vmatpush1.bf16.msra.mxu0 %v1652
        %1718 = vmatprep.subr.bf16.mxu0 %v1655
        %1719 = vmatpush1.bf16.msra.mxu0 %v1654
        %1720 = vmatprep.subr.bf16.mxu0 %v1657
        %1721 = vmatpush1.bf16.msra.mxu0 %v1656
        %1722 = vmatprep.mubr.bf16.mxu0 %v1527
        %1723 = vmatmul.mubr.bf16.gmra.mrb[0].mxu0 %v1526
        %v1724 = vpop.f32.mrb[0].mxu0
        %v1725 = vadd.f32 0.0, %v1724
        %v1726 = vpop.f32.mrb[0].mxu0
        %v1727 = vadd.f32 0.0, %v1726
        %v1728 = vpop.f32.mrb[0].mxu0
        %v1729 = vpop.f32.mrb[0].mxu0
        %1730 = vdwg.mxu0
        %v1731 = vadd.f32 %v1485, %v1725
        %v1732 = vadd.f32 %v1486, %v1727
        %s1733 = scalar_lea.vmem [#allocation2], 1536
        %v1734 = vld [vmem:[%s1733] sm:$0xff]
        %v1735 = vld [vmem:[%s1733 + $0x8] sm:$0xff]
        %v1736 = vld [vmem:[%s1733 + $0x10] sm:$0xff]
        %v1737 = vld [vmem:[%s1733 + $0x18] sm:$0xff]
        %v1738 = vld [vmem:[%s1733 + $0x20] sm:$0xff]
        %v1739 = vld [vmem:[%s1733 + $0x28] sm:$0xff]
        %v1740 = vld [vmem:[%s1733 + $0x30] sm:$0xff]
        %v1741 = vld [vmem:[%s1733 + $0x38] sm:$0xff]
        %v1742 = vld [vmem:[%s1733 + $0x40] sm:$0xff]
        %v1743 = vld [vmem:[%s1733 + $0x48] sm:$0xff]
        %v1744 = vld [vmem:[%s1733 + $0x50] sm:$0xff]
        %v1745 = vld [vmem:[%s1733 + $0x58] sm:$0xff]
        %v1746 = vld [vmem:[%s1733 + $0x60] sm:$0xff]
        %v1747 = vld [vmem:[%s1733 + $0x68] sm:$0xff]
        %v1748 = vld [vmem:[%s1733 + $0x70] sm:$0xff]
        %v1749 = vld [vmem:[%s1733 + $0x78] sm:$0xff]
        %v1750 = vld [vmem:[%s1733 + $0x80] sm:$0xff]
        %v1751 = vld [vmem:[%s1733 + $0x88] sm:$0xff]
        %v1752 = vld [vmem:[%s1733 + $0x90] sm:$0xff]
        %v1753 = vld [vmem:[%s1733 + $0x98] sm:$0xff]
        %v1754 = vld [vmem:[%s1733 + $0xa0] sm:$0xff]
        %v1755 = vld [vmem:[%s1733 + $0xa8] sm:$0xff]
        %v1756 = vld [vmem:[%s1733 + $0xb0] sm:$0xff]
        %v1757 = vld [vmem:[%s1733 + $0xb8] sm:$0xff]
        %v1758 = vld [vmem:[%s1733 + $0xc0] sm:$0xff]
        %v1759 = vld [vmem:[%s1733 + $0xc8] sm:$0xff]
        %v1760 = vld [vmem:[%s1733 + $0xd0] sm:$0xff]
        %v1761 = vld [vmem:[%s1733 + $0xd8] sm:$0xff]
        %v1762 = vld [vmem:[%s1733 + $0xe0] sm:$0xff]
        %v1763 = vld [vmem:[%s1733 + $0xe8] sm:$0xff]
        %v1764 = vld [vmem:[%s1733 + $0xf0] sm:$0xff]
        %v1765 = vld [vmem:[%s1733 + $0xf8] sm:$0xff]
        %s1766 = scalar_lea.vmem [#allocation2], 1792
        %v1767 = vld [vmem:[%s1766] sm:$0xff]
        %v1768 = vld [vmem:[%s1766 + $0x8] sm:$0xff]
        %v1769 = vld [vmem:[%s1766 + $0x10] sm:$0xff]
        %v1770 = vld [vmem:[%s1766 + $0x18] sm:$0xff]
        %v1771 = vld [vmem:[%s1766 + $0x20] sm:$0xff]
        %v1772 = vld [vmem:[%s1766 + $0x28] sm:$0xff]
        %v1773 = vld [vmem:[%s1766 + $0x30] sm:$0xff]
        %v1774 = vld [vmem:[%s1766 + $0x38] sm:$0xff]
        %v1775 = vld [vmem:[%s1766 + $0x40] sm:$0xff]
        %v1776 = vld [vmem:[%s1766 + $0x48] sm:$0xff]
        %v1777 = vld [vmem:[%s1766 + $0x50] sm:$0xff]
        %v1778 = vld [vmem:[%s1766 + $0x58] sm:$0xff]
        %v1779 = vld [vmem:[%s1766 + $0x60] sm:$0xff]
        %v1780 = vld [vmem:[%s1766 + $0x68] sm:$0xff]
        %v1781 = vld [vmem:[%s1766 + $0x70] sm:$0xff]
        %v1782 = vld [vmem:[%s1766 + $0x78] sm:$0xff]
        %v1783 = vld [vmem:[%s1766 + $0x80] sm:$0xff]
        %v1784 = vld [vmem:[%s1766 + $0x88] sm:$0xff]
        %v1785 = vld [vmem:[%s1766 + $0x90] sm:$0xff]
        %v1786 = vld [vmem:[%s1766 + $0x98] sm:$0xff]
        %v1787 = vld [vmem:[%s1766 + $0xa0] sm:$0xff]
        %v1788 = vld [vmem:[%s1766 + $0xa8] sm:$0xff]
        %v1789 = vld [vmem:[%s1766 + $0xb0] sm:$0xff]
        %v1790 = vld [vmem:[%s1766 + $0xb8] sm:$0xff]
        %v1791 = vld [vmem:[%s1766 + $0xc0] sm:$0xff]
        %v1792 = vld [vmem:[%s1766 + $0xc8] sm:$0xff]
        %v1793 = vld [vmem:[%s1766 + $0xd0] sm:$0xff]
        %v1794 = vld [vmem:[%s1766 + $0xd8] sm:$0xff]
        %v1795 = vld [vmem:[%s1766 + $0xe0] sm:$0xff]
        %v1796 = vld [vmem:[%s1766 + $0xe8] sm:$0xff]
        %v1797 = vld [vmem:[%s1766 + $0xf0] sm:$0xff]
        %v1798 = vld [vmem:[%s1766 + $0xf8] sm:$0xff]
        %v1831 = vunpack.c.l.b16 %v1767
        %v1832 = vunpack.c.h.b16 %v1767
        %v1833 = vunpack.c.l.b16 %v1768
        %v1834 = vunpack.c.h.b16 %v1768
        %v1835 = vunpack.c.l.b16 %v1769
        %v1836 = vunpack.c.h.b16 %v1769
        %v1837 = vunpack.c.l.b16 %v1770
        %v1838 = vunpack.c.h.b16 %v1770
        %v1839 = vunpack.c.l.b16 %v1771
        %v1840 = vunpack.c.h.b16 %v1771
        %v1841 = vunpack.c.l.b16 %v1772
        %v1842 = vunpack.c.h.b16 %v1772
        %v1843 = vunpack.c.l.b16 %v1773
        %v1844 = vunpack.c.h.b16 %v1773
        %v1845 = vunpack.c.l.b16 %v1774
        %v1846 = vunpack.c.h.b16 %v1774
        %v1847 = vunpack.c.l.b16 %v1775
        %v1848 = vunpack.c.h.b16 %v1775
        %v1849 = vunpack.c.l.b16 %v1776
        %v1850 = vunpack.c.h.b16 %v1776
        %v1851 = vunpack.c.l.b16 %v1777
        %v1852 = vunpack.c.h.b16 %v1777
        %v1853 = vunpack.c.l.b16 %v1778
        %v1854 = vunpack.c.h.b16 %v1778
        %v1855 = vunpack.c.l.b16 %v1779
        %v1856 = vunpack.c.h.b16 %v1779
        %v1857 = vunpack.c.l.b16 %v1780
        %v1858 = vunpack.c.h.b16 %v1780
        %v1859 = vunpack.c.l.b16 %v1781
        %v1860 = vunpack.c.h.b16 %v1781
        %v1861 = vunpack.c.l.b16 %v1782
        %v1862 = vunpack.c.h.b16 %v1782
        %v1863 = vunpack.c.l.b16 %v1783
        %v1864 = vunpack.c.h.b16 %v1783
        %v1865 = vunpack.c.l.b16 %v1784
        %v1866 = vunpack.c.h.b16 %v1784
        %v1867 = vunpack.c.l.b16 %v1785
        %v1868 = vunpack.c.h.b16 %v1785
        %v1869 = vunpack.c.l.b16 %v1786
        %v1870 = vunpack.c.h.b16 %v1786
        %v1871 = vunpack.c.l.b16 %v1787
        %v1872 = vunpack.c.h.b16 %v1787
        %v1873 = vunpack.c.l.b16 %v1788
        %v1874 = vunpack.c.h.b16 %v1788
        %v1875 = vunpack.c.l.b16 %v1789
        %v1876 = vunpack.c.h.b16 %v1789
        %v1877 = vunpack.c.l.b16 %v1790
        %v1878 = vunpack.c.h.b16 %v1790
        %v1879 = vunpack.c.l.b16 %v1791
        %v1880 = vunpack.c.h.b16 %v1791
        %v1881 = vunpack.c.l.b16 %v1792
        %v1882 = vunpack.c.h.b16 %v1792
        %v1883 = vunpack.c.l.b16 %v1793
        %v1884 = vunpack.c.h.b16 %v1793
        %v1885 = vunpack.c.l.b16 %v1794
        %v1886 = vunpack.c.h.b16 %v1794
        %v1887 = vunpack.c.l.b16 %v1795
        %v1888 = vunpack.c.h.b16 %v1795
        %v1889 = vunpack.c.l.b16 %v1796
        %v1890 = vunpack.c.h.b16 %v1796
        %v1891 = vunpack.c.l.b16 %v1797
        %v1892 = vunpack.c.h.b16 %v1797
        %v1893 = vunpack.c.l.b16 %v1798
        %v1894 = vunpack.c.h.b16 %v1798
        %v1895 = vpack.c.b16 %v1833, %v1831
        %v1896 = vpack.c.b16 %v1834, %v1832
        %v1897 = vpack.c.b16 %v1837, %v1835
        %v1898 = vpack.c.b16 %v1838, %v1836
        %v1899 = vpack.c.b16 %v1841, %v1839
        %v1900 = vpack.c.b16 %v1842, %v1840
        %v1901 = vpack.c.b16 %v1845, %v1843
        %v1902 = vpack.c.b16 %v1846, %v1844
        %v1903 = vpack.c.b16 %v1849, %v1847
        %v1904 = vpack.c.b16 %v1850, %v1848
        %v1905 = vpack.c.b16 %v1853, %v1851
        %v1906 = vpack.c.b16 %v1854, %v1852
        %v1907 = vpack.c.b16 %v1857, %v1855
        %v1908 = vpack.c.b16 %v1858, %v1856
        %v1909 = vpack.c.b16 %v1861, %v1859
        %v1910 = vpack.c.b16 %v1862, %v1860
        %v1911 = vpack.c.b16 %v1865, %v1863
        %v1912 = vpack.c.b16 %v1866, %v1864
        %v1913 = vpack.c.b16 %v1869, %v1867
        %v1914 = vpack.c.b16 %v1870, %v1868
        %v1915 = vpack.c.b16 %v1873, %v1871
        %v1916 = vpack.c.b16 %v1874, %v1872
        %v1917 = vpack.c.b16 %v1877, %v1875
        %v1918 = vpack.c.b16 %v1878, %v1876
        %v1919 = vpack.c.b16 %v1881, %v1879
        %v1920 = vpack.c.b16 %v1882, %v1880
        %v1921 = vpack.c.b16 %v1885, %v1883
        %v1922 = vpack.c.b16 %v1886, %v1884
        %v1923 = vpack.c.b16 %v1889, %v1887
        %v1924 = vpack.c.b16 %v1890, %v1888
        %v1925 = vpack.c.b16 %v1893, %v1891
        %v1926 = vpack.c.b16 %v1894, %v1892
        %1959 = vmatprep.subr.bf16.mxu0 %v1896
        %1960 = vmatpush1.bf16.msra.mxu0 %v1895
        %1961 = vmatprep.subr.bf16.mxu0 %v1898
        %1962 = vmatpush1.bf16.msra.mxu0 %v1897
        %1963 = vmatprep.subr.bf16.mxu0 %v1900
        %1964 = vmatpush1.bf16.msra.mxu0 %v1899
        %1965 = vmatprep.subr.bf16.mxu0 %v1902
        %1966 = vmatpush1.bf16.msra.mxu0 %v1901
        %1967 = vmatprep.subr.bf16.mxu0 %v1904
        %1968 = vmatpush1.bf16.msra.mxu0 %v1903
        %1969 = vmatprep.subr.bf16.mxu0 %v1906
        %1970 = vmatpush1.bf16.msra.mxu0 %v1905
        %1971 = vmatprep.subr.bf16.mxu0 %v1908
        %1972 = vmatpush1.bf16.msra.mxu0 %v1907
        %1973 = vmatprep.subr.bf16.mxu0 %v1910
        %1974 = vmatpush1.bf16.msra.mxu0 %v1909
        %1975 = vmatprep.subr.bf16.mxu0 %v1912
        %1976 = vmatpush1.bf16.msra.mxu0 %v1911
        %1977 = vmatprep.subr.bf16.mxu0 %v1914
        %1978 = vmatpush1.bf16.msra.mxu0 %v1913
        %1979 = vmatprep.subr.bf16.mxu0 %v1916
        %1980 = vmatpush1.bf16.msra.mxu0 %v1915
        %1981 = vmatprep.subr.bf16.mxu0 %v1918
        %1982 = vmatpush1.bf16.msra.mxu0 %v1917
        %1983 = vmatprep.subr.bf16.mxu0 %v1920
        %1984 = vmatpush1.bf16.msra.mxu0 %v1919
        %1985 = vmatprep.subr.bf16.mxu0 %v1922
        %1986 = vmatpush1.bf16.msra.mxu0 %v1921
        %1987 = vmatprep.subr.bf16.mxu0 %v1924
        %1988 = vmatpush1.bf16.msra.mxu0 %v1923
        %1989 = vmatprep.subr.bf16.mxu0 %v1926
        %1990 = vmatpush1.bf16.msra.mxu0 %v1925
        %1991 = vmatprep.mubr.bf16.mxu0 %v1281
        %1992 = vmatmul.mubr.bf16.gmra.mrb[0].mxu0 %v1280
        %v1993 = vpop.f32.mrb[0].mxu0
        %v1994 = vadd.f32 0.0, %v1993
        %v1995 = vpop.f32.mrb[0].mxu0
        %v1996 = vadd.f32 0.0, %v1995
        %v1997 = vpop.f32.mrb[0].mxu0
        %v1998 = vpop.f32.mrb[0].mxu0
        %1999 = vdwg.mxu0
        %v2032 = vunpack.c.l.b16 %v1734
        %v2033 = vunpack.c.h.b16 %v1734
        %v2034 = vunpack.c.l.b16 %v1735
        %v2035 = vunpack.c.h.b16 %v1735
        %v2036 = vunpack.c.l.b16 %v1736
        %v2037 = vunpack.c.h.b16 %v1736
        %v2038 = vunpack.c.l.b16 %v1737
        %v2039 = vunpack.c.h.b16 %v1737
        %v2040 = vunpack.c.l.b16 %v1738
        %v2041 = vunpack.c.h.b16 %v1738
        %v2042 = vunpack.c.l.b16 %v1739
        %v2043 = vunpack.c.h.b16 %v1739
        %v2044 = vunpack.c.l.b16 %v1740
        %v2045 = vunpack.c.h.b16 %v1740
        %v2046 = vunpack.c.l.b16 %v1741
        %v2047 = vunpack.c.h.b16 %v1741
        %v2048 = vunpack.c.l.b16 %v1742
        %v2049 = vunpack.c.h.b16 %v1742
        %v2050 = vunpack.c.l.b16 %v1743
        %v2051 = vunpack.c.h.b16 %v1743
        %v2052 = vunpack.c.l.b16 %v1744
        %v2053 = vunpack.c.h.b16 %v1744
        %v2054 = vunpack.c.l.b16 %v1745
        %v2055 = vunpack.c.h.b16 %v1745
        %v2056 = vunpack.c.l.b16 %v1746
        %v2057 = vunpack.c.h.b16 %v1746
        %v2058 = vunpack.c.l.b16 %v1747
        %v2059 = vunpack.c.h.b16 %v1747
        %v2060 = vunpack.c.l.b16 %v1748
        %v2061 = vunpack.c.h.b16 %v1748
        %v2062 = vunpack.c.l.b16 %v1749
        %v2063 = vunpack.c.h.b16 %v1749
        %v2064 = vunpack.c.l.b16 %v1750
        %v2065 = vunpack.c.h.b16 %v1750
        %v2066 = vunpack.c.l.b16 %v1751
        %v2067 = vunpack.c.h.b16 %v1751
        %v2068 = vunpack.c.l.b16 %v1752
        %v2069 = vunpack.c.h.b16 %v1752
        %v2070 = vunpack.c.l.b16 %v1753
        %v2071 = vunpack.c.h.b16 %v1753
        %v2072 = vunpack.c.l.b16 %v1754
        %v2073 = vunpack.c.h.b16 %v1754
        %v2074 = vunpack.c.l.b16 %v1755
        %v2075 = vunpack.c.h.b16 %v1755
        %v2076 = vunpack.c.l.b16 %v1756
        %v2077 = vunpack.c.h.b16 %v1756
        %v2078 = vunpack.c.l.b16 %v1757
        %v2079 = vunpack.c.h.b16 %v1757
        %v2080 = vunpack.c.l.b16 %v1758
        %v2081 = vunpack.c.h.b16 %v1758
        %v2082 = vunpack.c.l.b16 %v1759
        %v2083 = vunpack.c.h.b16 %v1759
        %v2084 = vunpack.c.l.b16 %v1760
        %v2085 = vunpack.c.h.b16 %v1760
        %v2086 = vunpack.c.l.b16 %v1761
        %v2087 = vunpack.c.h.b16 %v1761
        %v2088 = vunpack.c.l.b16 %v1762
        %v2089 = vunpack.c.h.b16 %v1762
        %v2090 = vunpack.c.l.b16 %v1763
        %v2091 = vunpack.c.h.b16 %v1763
        %v2092 = vunpack.c.l.b16 %v1764
        %v2093 = vunpack.c.h.b16 %v1764
        %v2094 = vunpack.c.l.b16 %v1765
        %v2095 = vunpack.c.h.b16 %v1765
        %v2096 = vpack.c.b16 %v2034, %v2032
        %v2097 = vpack.c.b16 %v2035, %v2033
        %v2098 = vpack.c.b16 %v2038, %v2036
        %v2099 = vpack.c.b16 %v2039, %v2037
        %v2100 = vpack.c.b16 %v2042, %v2040
        %v2101 = vpack.c.b16 %v2043, %v2041
        %v2102 = vpack.c.b16 %v2046, %v2044
        %v2103 = vpack.c.b16 %v2047, %v2045
        %v2104 = vpack.c.b16 %v2050, %v2048
        %v2105 = vpack.c.b16 %v2051, %v2049
        %v2106 = vpack.c.b16 %v2054, %v2052
        %v2107 = vpack.c.b16 %v2055, %v2053
        %v2108 = vpack.c.b16 %v2058, %v2056
        %v2109 = vpack.c.b16 %v2059, %v2057
        %v2110 = vpack.c.b16 %v2062, %v2060
        %v2111 = vpack.c.b16 %v2063, %v2061
        %v2112 = vpack.c.b16 %v2066, %v2064
        %v2113 = vpack.c.b16 %v2067, %v2065
        %v2114 = vpack.c.b16 %v2070, %v2068
        %v2115 = vpack.c.b16 %v2071, %v2069
        %v2116 = vpack.c.b16 %v2074, %v2072
        %v2117 = vpack.c.b16 %v2075, %v2073
        %v2118 = vpack.c.b16 %v2078, %v2076
        %v2119 = vpack.c.b16 %v2079, %v2077
        %v2120 = vpack.c.b16 %v2082, %v2080
        %v2121 = vpack.c.b16 %v2083, %v2081
        %v2122 = vpack.c.b16 %v2086, %v2084
        %v2123 = vpack.c.b16 %v2087, %v2085
        %v2124 = vpack.c.b16 %v2090, %v2088
        %v2125 = vpack.c.b16 %v2091, %v2089
        %v2126 = vpack.c.b16 %v2094, %v2092
        %v2127 = vpack.c.b16 %v2095, %v2093
        %2160 = vmatprep.subr.bf16.mxu0 %v2097
        %2161 = vmatpush1.bf16.msra.mxu0 %v2096
        %2162 = vmatprep.subr.bf16.mxu0 %v2099
        %2163 = vmatpush1.bf16.msra.mxu0 %v2098
        %2164 = vmatprep.subr.bf16.mxu0 %v2101
        %2165 = vmatpush1.bf16.msra.mxu0 %v2100
        %2166 = vmatprep.subr.bf16.mxu0 %v2103
        %2167 = vmatpush1.bf16.msra.mxu0 %v2102
        %2168 = vmatprep.subr.bf16.mxu0 %v2105
        %2169 = vmatpush1.bf16.msra.mxu0 %v2104
        %2170 = vmatprep.subr.bf16.mxu0 %v2107
        %2171 = vmatpush1.bf16.msra.mxu0 %v2106
        %2172 = vmatprep.subr.bf16.mxu0 %v2109
        %2173 = vmatpush1.bf16.msra.mxu0 %v2108
        %2174 = vmatprep.subr.bf16.mxu0 %v2111
        %2175 = vmatpush1.bf16.msra.mxu0 %v2110
        %2176 = vmatprep.subr.bf16.mxu0 %v2113
        %2177 = vmatpush1.bf16.msra.mxu0 %v2112
        %2178 = vmatprep.subr.bf16.mxu0 %v2115
        %2179 = vmatpush1.bf16.msra.mxu0 %v2114
        %2180 = vmatprep.subr.bf16.mxu0 %v2117
        %2181 = vmatpush1.bf16.msra.mxu0 %v2116
        %2182 = vmatprep.subr.bf16.mxu0 %v2119
        %2183 = vmatpush1.bf16.msra.mxu0 %v2118
        %2184 = vmatprep.subr.bf16.mxu0 %v2121
        %2185 = vmatpush1.bf16.msra.mxu0 %v2120
        %2186 = vmatprep.subr.bf16.mxu0 %v2123
        %2187 = vmatpush1.bf16.msra.mxu0 %v2122
        %2188 = vmatprep.subr.bf16.mxu0 %v2125
        %2189 = vmatpush1.bf16.msra.mxu0 %v2124
        %2190 = vmatprep.subr.bf16.mxu0 %v2127
        %2191 = vmatpush1.bf16.msra.mxu0 %v2126
        %2192 = vmatprep.mubr.bf16.mxu0 %v1027
        %2193 = vmatmul.mubr.bf16.gmra.mrb[0].mxu0 %v1020
        %v2194 = vpop.f32.mrb[0].mxu0
        %v2195 = vadd.f32 %v1994, %v2194
        %v2196 = vpop.f32.mrb[0].mxu0
        %v2197 = vadd.f32 %v1996, %v2196
        %v2198 = vpop.f32.mrb[0].mxu0
        %v2199 = vpop.f32.mrb[0].mxu0
        %2200 = vdwg.mxu0
        %s2201 = scalar_lea.vmem [#allocation2], 2048
        %v2202 = vld [vmem:[%s2201] sm:$0xff]
        %v2203 = vld [vmem:[%s2201 + $0x8] sm:$0xff]
        %v2204 = vld [vmem:[%s2201 + $0x10] sm:$0xff]
        %v2205 = vld [vmem:[%s2201 + $0x18] sm:$0xff]
        %v2206 = vld [vmem:[%s2201 + $0x20] sm:$0xff]
        %v2207 = vld [vmem:[%s2201 + $0x28] sm:$0xff]
        %v2208 = vld [vmem:[%s2201 + $0x30] sm:$0xff]
        %v2209 = vld [vmem:[%s2201 + $0x38] sm:$0xff]
        %v2210 = vld [vmem:[%s2201 + $0x40] sm:$0xff]
        %v2211 = vld [vmem:[%s2201 + $0x48] sm:$0xff]
        %v2212 = vld [vmem:[%s2201 + $0x50] sm:$0xff]
        %v2213 = vld [vmem:[%s2201 + $0x58] sm:$0xff]
        %v2214 = vld [vmem:[%s2201 + $0x60] sm:$0xff]
        %v2215 = vld [vmem:[%s2201 + $0x68] sm:$0xff]
        %v2216 = vld [vmem:[%s2201 + $0x70] sm:$0xff]
        %v2217 = vld [vmem:[%s2201 + $0x78] sm:$0xff]
        %v2218 = vld [vmem:[%s2201 + $0x80] sm:$0xff]
        %v2219 = vld [vmem:[%s2201 + $0x88] sm:$0xff]
        %v2220 = vld [vmem:[%s2201 + $0x90] sm:$0xff]
        %v2221 = vld [vmem:[%s2201 + $0x98] sm:$0xff]
        %v2222 = vld [vmem:[%s2201 + $0xa0] sm:$0xff]
        %v2223 = vld [vmem:[%s2201 + $0xa8] sm:$0xff]
        %v2224 = vld [vmem:[%s2201 + $0xb0] sm:$0xff]
        %v2225 = vld [vmem:[%s2201 + $0xb8] sm:$0xff]
        %v2226 = vld [vmem:[%s2201 + $0xc0] sm:$0xff]
        %v2227 = vld [vmem:[%s2201 + $0xc8] sm:$0xff]
        %v2228 = vld [vmem:[%s2201 + $0xd0] sm:$0xff]
        %v2229 = vld [vmem:[%s2201 + $0xd8] sm:$0xff]
        %v2230 = vld [vmem:[%s2201 + $0xe0] sm:$0xff]
        %v2231 = vld [vmem:[%s2201 + $0xe8] sm:$0xff]
        %v2232 = vld [vmem:[%s2201 + $0xf0] sm:$0xff]
        %v2233 = vld [vmem:[%s2201 + $0xf8] sm:$0xff]
        %v2266 = vunpack.c.l.b16 %v2202
        %v2267 = vunpack.c.h.b16 %v2202
        %v2268 = vunpack.c.l.b16 %v2203
        %v2269 = vunpack.c.h.b16 %v2203
        %v2270 = vunpack.c.l.b16 %v2204
        %v2271 = vunpack.c.h.b16 %v2204
        %v2272 = vunpack.c.l.b16 %v2205
        %v2273 = vunpack.c.h.b16 %v2205
        %v2274 = vunpack.c.l.b16 %v2206
        %v2275 = vunpack.c.h.b16 %v2206
        %v2276 = vunpack.c.l.b16 %v2207
        %v2277 = vunpack.c.h.b16 %v2207
        %v2278 = vunpack.c.l.b16 %v2208
        %v2279 = vunpack.c.h.b16 %v2208
        %v2280 = vunpack.c.l.b16 %v2209
        %v2281 = vunpack.c.h.b16 %v2209
        %v2282 = vunpack.c.l.b16 %v2210
        %v2283 = vunpack.c.h.b16 %v2210
        %v2284 = vunpack.c.l.b16 %v2211
        %v2285 = vunpack.c.h.b16 %v2211
        %v2286 = vunpack.c.l.b16 %v2212
        %v2287 = vunpack.c.h.b16 %v2212
        %v2288 = vunpack.c.l.b16 %v2213
        %v2289 = vunpack.c.h.b16 %v2213
        %v2290 = vunpack.c.l.b16 %v2214
        %v2291 = vunpack.c.h.b16 %v2214
        %v2292 = vunpack.c.l.b16 %v2215
        %v2293 = vunpack.c.h.b16 %v2215
        %v2294 = vunpack.c.l.b16 %v2216
        %v2295 = vunpack.c.h.b16 %v2216
        %v2296 = vunpack.c.l.b16 %v2217
        %v2297 = vunpack.c.h.b16 %v2217
        %v2298 = vunpack.c.l.b16 %v2218
        %v2299 = vunpack.c.h.b16 %v2218
        %v2300 = vunpack.c.l.b16 %v2219
        %v2301 = vunpack.c.h.b16 %v2219
        %v2302 = vunpack.c.l.b16 %v2220
        %v2303 = vunpack.c.h.b16 %v2220
        %v2304 = vunpack.c.l.b16 %v2221
        %v2305 = vunpack.c.h.b16 %v2221
        %v2306 = vunpack.c.l.b16 %v2222
        %v2307 = vunpack.c.h.b16 %v2222
        %v2308 = vunpack.c.l.b16 %v2223
        %v2309 = vunpack.c.h.b16 %v2223
        %v2310 = vunpack.c.l.b16 %v2224
        %v2311 = vunpack.c.h.b16 %v2224
        %v2312 = vunpack.c.l.b16 %v2225
        %v2313 = vunpack.c.h.b16 %v2225
        %v2314 = vunpack.c.l.b16 %v2226
        %v2315 = vunpack.c.h.b16 %v2226
        %v2316 = vunpack.c.l.b16 %v2227
        %v2317 = vunpack.c.h.b16 %v2227
        %v2318 = vunpack.c.l.b16 %v2228
        %v2319 = vunpack.c.h.b16 %v2228
        %v2320 = vunpack.c.l.b16 %v2229
        %v2321 = vunpack.c.h.b16 %v2229
        %v2322 = vunpack.c.l.b16 %v2230
        %v2323 = vunpack.c.h.b16 %v2230
        %v2324 = vunpack.c.l.b16 %v2231
        %v2325 = vunpack.c.h.b16 %v2231
        %v2326 = vunpack.c.l.b16 %v2232
        %v2327 = vunpack.c.h.b16 %v2232
        %v2328 = vunpack.c.l.b16 %v2233
        %v2329 = vunpack.c.h.b16 %v2233
        %v2330 = vpack.c.b16 %v2268, %v2266
        %v2331 = vpack.c.b16 %v2269, %v2267
        %v2332 = vpack.c.b16 %v2272, %v2270
        %v2333 = vpack.c.b16 %v2273, %v2271
        %v2334 = vpack.c.b16 %v2276, %v2274
        %v2335 = vpack.c.b16 %v2277, %v2275
        %v2336 = vpack.c.b16 %v2280, %v2278
        %v2337 = vpack.c.b16 %v2281, %v2279
        %v2338 = vpack.c.b16 %v2284, %v2282
        %v2339 = vpack.c.b16 %v2285, %v2283
        %v2340 = vpack.c.b16 %v2288, %v2286
        %v2341 = vpack.c.b16 %v2289, %v2287
        %v2342 = vpack.c.b16 %v2292, %v2290
        %v2343 = vpack.c.b16 %v2293, %v2291
        %v2344 = vpack.c.b16 %v2296, %v2294
        %v2345 = vpack.c.b16 %v2297, %v2295
        %v2346 = vpack.c.b16 %v2300, %v2298
        %v2347 = vpack.c.b16 %v2301, %v2299
        %v2348 = vpack.c.b16 %v2304, %v2302
        %v2349 = vpack.c.b16 %v2305, %v2303
        %v2350 = vpack.c.b16 %v2308, %v2306
        %v2351 = vpack.c.b16 %v2309, %v2307
        %v2352 = vpack.c.b16 %v2312, %v2310
        %v2353 = vpack.c.b16 %v2313, %v2311
        %v2354 = vpack.c.b16 %v2316, %v2314
        %v2355 = vpack.c.b16 %v2317, %v2315
        %v2356 = vpack.c.b16 %v2320, %v2318
        %v2357 = vpack.c.b16 %v2321, %v2319
        %v2358 = vpack.c.b16 %v2324, %v2322
        %v2359 = vpack.c.b16 %v2325, %v2323
        %v2360 = vpack.c.b16 %v2328, %v2326
        %v2361 = vpack.c.b16 %v2329, %v2327
        %2394 = vmatprep.subr.bf16.mxu0 %v2331
        %2395 = vmatpush1.bf16.msra.mxu0 %v2330
        %2396 = vmatprep.subr.bf16.mxu0 %v2333
        %2397 = vmatpush1.bf16.msra.mxu0 %v2332
        %2398 = vmatprep.subr.bf16.mxu0 %v2335
        %2399 = vmatpush1.bf16.msra.mxu0 %v2334
        %2400 = vmatprep.subr.bf16.mxu0 %v2337
        %2401 = vmatpush1.bf16.msra.mxu0 %v2336
        %2402 = vmatprep.subr.bf16.mxu0 %v2339
        %2403 = vmatpush1.bf16.msra.mxu0 %v2338
        %2404 = vmatprep.subr.bf16.mxu0 %v2341
        %2405 = vmatpush1.bf16.msra.mxu0 %v2340
        %2406 = vmatprep.subr.bf16.mxu0 %v2343
        %2407 = vmatpush1.bf16.msra.mxu0 %v2342
        %2408 = vmatprep.subr.bf16.mxu0 %v2345
        %2409 = vmatpush1.bf16.msra.mxu0 %v2344
        %2410 = vmatprep.subr.bf16.mxu0 %v2347
        %2411 = vmatpush1.bf16.msra.mxu0 %v2346
        %2412 = vmatprep.subr.bf16.mxu0 %v2349
        %2413 = vmatpush1.bf16.msra.mxu0 %v2348
        %2414 = vmatprep.subr.bf16.mxu0 %v2351
        %2415 = vmatpush1.bf16.msra.mxu0 %v2350
        %2416 = vmatprep.subr.bf16.mxu0 %v2353
        %2417 = vmatpush1.bf16.msra.mxu0 %v2352
        %2418 = vmatprep.subr.bf16.mxu0 %v2355
        %2419 = vmatpush1.bf16.msra.mxu0 %v2354
        %2420 = vmatprep.subr.bf16.mxu0 %v2357
        %2421 = vmatpush1.bf16.msra.mxu0 %v2356
        %2422 = vmatprep.subr.bf16.mxu0 %v2359
        %2423 = vmatpush1.bf16.msra.mxu0 %v2358
        %2424 = vmatprep.subr.bf16.mxu0 %v2361
        %2425 = vmatpush1.bf16.msra.mxu0 %v2360
        %2426 = vmatprep.mubr.bf16.mxu0 %v1527
        %2427 = vmatmul.mubr.bf16.gmra.mrb[0].mxu0 %v1526
        %v2428 = vpop.f32.mrb[0].mxu0
        %v2429 = vadd.f32 0.0, %v2428
        %v2430 = vpop.f32.mrb[0].mxu0
        %v2431 = vadd.f32 0.0, %v2430
        %v2432 = vpop.f32.mrb[0].mxu0
        %v2433 = vpop.f32.mrb[0].mxu0
        %2434 = vdwg.mxu0
        %v2435 = vadd.f32 %v2195, %v2429
        %v2436 = vadd.f32 %v2197, %v2431
        %s2437 = scalar_lea.vmem [#allocation2], 2304
        %v2438 = vld [vmem:[%s2437] sm:$0xff]
        %v2439 = vld [vmem:[%s2437 + $0x8] sm:$0xff]
        %v2440 = vld [vmem:[%s2437 + $0x10] sm:$0xff]
        %v2441 = vld [vmem:[%s2437 + $0x18] sm:$0xff]
        %v2442 = vld [vmem:[%s2437 + $0x20] sm:$0xff]
        %v2443 = vld [vmem:[%s2437 + $0x28] sm:$0xff]
        %v2444 = vld [vmem:[%s2437 + $0x30] sm:$0xff]
        %v2445 = vld [vmem:[%s2437 + $0x38] sm:$0xff]
        %v2446 = vld [vmem:[%s2437 + $0x40] sm:$0xff]
        %v2447 = vld [vmem:[%s2437 + $0x48] sm:$0xff]
        %v2448 = vld [vmem:[%s2437 + $0x50] sm:$0xff]
        %v2449 = vld [vmem:[%s2437 + $0x58] sm:$0xff]
        %v2450 = vld [vmem:[%s2437 + $0x60] sm:$0xff]
        %v2451 = vld [vmem:[%s2437 + $0x68] sm:$0xff]
        %v2452 = vld [vmem:[%s2437 + $0x70] sm:$0xff]
        %v2453 = vld [vmem:[%s2437 + $0x78] sm:$0xff]
        %v2454 = vld [vmem:[%s2437 + $0x80] sm:$0xff]
        %v2455 = vld [vmem:[%s2437 + $0x88] sm:$0xff]
        %v2456 = vld [vmem:[%s2437 + $0x90] sm:$0xff]
        %v2457 = vld [vmem:[%s2437 + $0x98] sm:$0xff]
        %v2458 = vld [vmem:[%s2437 + $0xa0] sm:$0xff]
        %v2459 = vld [vmem:[%s2437 + $0xa8] sm:$0xff]
        %v2460 = vld [vmem:[%s2437 + $0xb0] sm:$0xff]
        %v2461 = vld [vmem:[%s2437 + $0xb8] sm:$0xff]
        %v2462 = vld [vmem:[%s2437 + $0xc0] sm:$0xff]
        %v2463 = vld [vmem:[%s2437 + $0xc8] sm:$0xff]
        %v2464 = vld [vmem:[%s2437 + $0xd0] sm:$0xff]
        %v2465 = vld [vmem:[%s2437 + $0xd8] sm:$0xff]
        %v2466 = vld [vmem:[%s2437 + $0xe0] sm:$0xff]
        %v2467 = vld [vmem:[%s2437 + $0xe8] sm:$0xff]
        %v2468 = vld [vmem:[%s2437 + $0xf0] sm:$0xff]
        %v2469 = vld [vmem:[%s2437 + $0xf8] sm:$0xff]
        %v2472 = vrot.slane %v979, 1
        %v2473 = vrot.slane %v980, 1
        %v2508 = vunpack.c.l.b16 %v2438
        %v2509 = vunpack.c.h.b16 %v2438
        %v2510 = vunpack.c.l.b16 %v2439
        %v2511 = vunpack.c.h.b16 %v2439
        %v2512 = vunpack.c.l.b16 %v2440
        %v2513 = vunpack.c.h.b16 %v2440
        %v2514 = vunpack.c.l.b16 %v2441
        %v2515 = vunpack.c.h.b16 %v2441
        %v2516 = vunpack.c.l.b16 %v2442
        %v2517 = vunpack.c.h.b16 %v2442
        %v2518 = vunpack.c.l.b16 %v2443
        %v2519 = vunpack.c.h.b16 %v2443
        %v2520 = vunpack.c.l.b16 %v2444
        %v2521 = vunpack.c.h.b16 %v2444
        %v2522 = vunpack.c.l.b16 %v2445
        %v2523 = vunpack.c.h.b16 %v2445
        %v2524 = vunpack.c.l.b16 %v2446
        %v2525 = vunpack.c.h.b16 %v2446
        %v2526 = vunpack.c.l.b16 %v2447
        %v2527 = vunpack.c.h.b16 %v2447
        %v2528 = vunpack.c.l.b16 %v2448
        %v2529 = vunpack.c.h.b16 %v2448
        %v2530 = vunpack.c.l.b16 %v2449
        %v2531 = vunpack.c.h.b16 %v2449
        %v2532 = vunpack.c.l.b16 %v2450
        %v2533 = vunpack.c.h.b16 %v2450
        %v2534 = vunpack.c.l.b16 %v2451
        %v2535 = vunpack.c.h.b16 %v2451
        %v2536 = vunpack.c.l.b16 %v2452
        %v2537 = vunpack.c.h.b16 %v2452
        %v2538 = vunpack.c.l.b16 %v2453
        %v2539 = vunpack.c.h.b16 %v2453
        %v2540 = vunpack.c.l.b16 %v2454
        %v2541 = vunpack.c.h.b16 %v2454
        %v2542 = vunpack.c.l.b16 %v2455
        %v2543 = vunpack.c.h.b16 %v2455
        %v2544 = vunpack.c.l.b16 %v2456
        %v2545 = vunpack.c.h.b16 %v2456
        %v2546 = vunpack.c.l.b16 %v2457
        %v2547 = vunpack.c.h.b16 %v2457
        %v2548 = vunpack.c.l.b16 %v2458
        %v2549 = vunpack.c.h.b16 %v2458
        %v2550 = vunpack.c.l.b16 %v2459
        %v2551 = vunpack.c.h.b16 %v2459
        %v2552 = vunpack.c.l.b16 %v2460
        %v2553 = vunpack.c.h.b16 %v2460
        %v2554 = vunpack.c.l.b16 %v2461
        %v2555 = vunpack.c.h.b16 %v2461
        %v2556 = vunpack.c.l.b16 %v2462
        %v2557 = vunpack.c.h.b16 %v2462
        %v2558 = vunpack.c.l.b16 %v2463
        %v2559 = vunpack.c.h.b16 %v2463
        %v2560 = vunpack.c.l.b16 %v2464
        %v2561 = vunpack.c.h.b16 %v2464
        %v2562 = vunpack.c.l.b16 %v2465
        %v2563 = vunpack.c.h.b16 %v2465
        %v2564 = vunpack.c.l.b16 %v2466
        %v2565 = vunpack.c.h.b16 %v2466
        %v2566 = vunpack.c.l.b16 %v2467
        %v2567 = vunpack.c.h.b16 %v2467
        %v2568 = vunpack.c.l.b16 %v2468
        %v2569 = vunpack.c.h.b16 %v2468
        %v2570 = vunpack.c.l.b16 %v2469
        %v2571 = vunpack.c.h.b16 %v2469
        %v2572 = vpack.c.b16 %v2510, %v2508
        %v2573 = vpack.c.b16 %v2511, %v2509
        %v2574 = vpack.c.b16 %v2514, %v2512
        %v2575 = vpack.c.b16 %v2515, %v2513
        %v2576 = vpack.c.b16 %v2518, %v2516
        %v2577 = vpack.c.b16 %v2519, %v2517
        %v2578 = vpack.c.b16 %v2522, %v2520
        %v2579 = vpack.c.b16 %v2523, %v2521
        %v2580 = vpack.c.b16 %v2526, %v2524
        %v2581 = vpack.c.b16 %v2527, %v2525
        %v2582 = vpack.c.b16 %v2530, %v2528
        %v2583 = vpack.c.b16 %v2531, %v2529
        %v2584 = vpack.c.b16 %v2534, %v2532
        %v2585 = vpack.c.b16 %v2535, %v2533
        %v2586 = vpack.c.b16 %v2538, %v2536
        %v2587 = vpack.c.b16 %v2539, %v2537
        %v2588 = vpack.c.b16 %v2542, %v2540
        %v2589 = vpack.c.b16 %v2543, %v2541
        %v2590 = vpack.c.b16 %v2546, %v2544
        %v2591 = vpack.c.b16 %v2547, %v2545
        %v2592 = vpack.c.b16 %v2550, %v2548
        %v2593 = vpack.c.b16 %v2551, %v2549
        %v2594 = vpack.c.b16 %v2554, %v2552
        %v2595 = vpack.c.b16 %v2555, %v2553
        %v2596 = vpack.c.b16 %v2558, %v2556
        %v2597 = vpack.c.b16 %v2559, %v2557
        %v2598 = vpack.c.b16 %v2562, %v2560
        %v2599 = vpack.c.b16 %v2563, %v2561
        %v2600 = vpack.c.b16 %v2566, %v2564
        %v2601 = vpack.c.b16 %v2567, %v2565
        %v2602 = vpack.c.b16 %v2570, %v2568
        %v2603 = vpack.c.b16 %v2571, %v2569
        %2636 = vmatprep.subr.bf16.mxu0 %v2573
        %2637 = vmatpush1.bf16.msra.mxu0 %v2572
        %2638 = vmatprep.subr.bf16.mxu0 %v2575
        %2639 = vmatpush1.bf16.msra.mxu0 %v2574
        %2640 = vmatprep.subr.bf16.mxu0 %v2577
        %2641 = vmatpush1.bf16.msra.mxu0 %v2576
        %2642 = vmatprep.subr.bf16.mxu0 %v2579
        %2643 = vmatpush1.bf16.msra.mxu0 %v2578
        %2644 = vmatprep.subr.bf16.mxu0 %v2581
        %2645 = vmatpush1.bf16.msra.mxu0 %v2580
        %2646 = vmatprep.subr.bf16.mxu0 %v2583
        %2647 = vmatpush1.bf16.msra.mxu0 %v2582
        %2648 = vmatprep.subr.bf16.mxu0 %v2585
        %2649 = vmatpush1.bf16.msra.mxu0 %v2584
        %2650 = vmatprep.subr.bf16.mxu0 %v2587
        %2651 = vmatpush1.bf16.msra.mxu0 %v2586
        %2652 = vmatprep.subr.bf16.mxu0 %v2589
        %2653 = vmatpush1.bf16.msra.mxu0 %v2588
        %2654 = vmatprep.subr.bf16.mxu0 %v2591
        %2655 = vmatpush1.bf16.msra.mxu0 %v2590
        %2656 = vmatprep.subr.bf16.mxu0 %v2593
        %2657 = vmatpush1.bf16.msra.mxu0 %v2592
        %2658 = vmatprep.subr.bf16.mxu0 %v2595
        %2659 = vmatpush1.bf16.msra.mxu0 %v2594
        %2660 = vmatprep.subr.bf16.mxu0 %v2597
        %2661 = vmatpush1.bf16.msra.mxu0 %v2596
        %2662 = vmatprep.subr.bf16.mxu0 %v2599
        %2663 = vmatpush1.bf16.msra.mxu0 %v2598
        %2664 = vmatprep.subr.bf16.mxu0 %v2601
        %2665 = vmatpush1.bf16.msra.mxu0 %v2600
        %2666 = vmatprep.subr.bf16.mxu0 %v2603
        %2667 = vmatpush1.bf16.msra.mxu0 %v2602
        %2668 = vmatprep.mubr.bf16.mxu0 %v2473
        %2669 = vmatmul.mubr.bf16.gmra.mrb[0].mxu0 %v2472
        %v2670 = vpop.f32.mrb[0].mxu0
        %v2671 = vadd.f32 0.0, %v2670
        %v2672 = vpop.f32.mrb[0].mxu0
        %v2673 = vadd.f32 0.0, %v2672
        %v2674 = vpop.f32.mrb[0].mxu0
        %v2675 = vpop.f32.mrb[0].mxu0
        %2676 = vdwg.mxu0
        %v2677 = vadd.f32 %v2435, %v2671
        %v2678 = vadd.f32 %v2436, %v2673
        %s2679 = scalar_lea.vmem [#allocation2], 2560
        %v2680 = vld [vmem:[%s2679] sm:$0xff]
        %v2681 = vld [vmem:[%s2679 + $0x8] sm:$0xff]
        %v2682 = vld [vmem:[%s2679 + $0x10] sm:$0xff]
        %v2683 = vld [vmem:[%s2679 + $0x18] sm:$0xff]
        %v2684 = vld [vmem:[%s2679 + $0x20] sm:$0xff]
        %v2685 = vld [vmem:[%s2679 + $0x28] sm:$0xff]
        %v2686 = vld [vmem:[%s2679 + $0x30] sm:$0xff]
        %v2687 = vld [vmem:[%s2679 + $0x38] sm:$0xff]
        %v2688 = vld [vmem:[%s2679 + $0x40] sm:$0xff]
        %v2689 = vld [vmem:[%s2679 + $0x48] sm:$0xff]
        %v2690 = vld [vmem:[%s2679 + $0x50] sm:$0xff]
        %v2691 = vld [vmem:[%s2679 + $0x58] sm:$0xff]
        %v2692 = vld [vmem:[%s2679 + $0x60] sm:$0xff]
        %v2693 = vld [vmem:[%s2679 + $0x68] sm:$0xff]
        %v2694 = vld [vmem:[%s2679 + $0x70] sm:$0xff]
        %v2695 = vld [vmem:[%s2679 + $0x78] sm:$0xff]
        %v2696 = vld [vmem:[%s2679 + $0x80] sm:$0xff]
        %v2697 = vld [vmem:[%s2679 + $0x88] sm:$0xff]
        %v2698 = vld [vmem:[%s2679 + $0x90] sm:$0xff]
        %v2699 = vld [vmem:[%s2679 + $0x98] sm:$0xff]
        %v2700 = vld [vmem:[%s2679 + $0xa0] sm:$0xff]
        %v2701 = vld [vmem:[%s2679 + $0xa8] sm:$0xff]
        %v2702 = vld [vmem:[%s2679 + $0xb0] sm:$0xff]
        %v2703 = vld [vmem:[%s2679 + $0xb8] sm:$0xff]
        %v2704 = vld [vmem:[%s2679 + $0xc0] sm:$0xff]
        %v2705 = vld [vmem:[%s2679 + $0xc8] sm:$0xff]
        %v2706 = vld [vmem:[%s2679 + $0xd0] sm:$0xff]
        %v2707 = vld [vmem:[%s2679 + $0xd8] sm:$0xff]
        %v2708 = vld [vmem:[%s2679 + $0xe0] sm:$0xff]
        %v2709 = vld [vmem:[%s2679 + $0xe8] sm:$0xff]
        %v2710 = vld [vmem:[%s2679 + $0xf0] sm:$0xff]
        %v2711 = vld [vmem:[%s2679 + $0xf8] sm:$0xff]
        %v2713 = vrot.slane %v1233, 1
        %2714 = vrot.lane.b32.xlu0 %v2472, 96
        %v2715 = vpop.permute.xlu0 %2714
        %2716 = vrot.lane.b32.xlu0 %v2473, 96
        %v2717 = vpop.permute.xlu0 %2716
        %2718 = vrot.lane.b32.xlu0 %v2713, 96
        %v2719 = vpop.permute.xlu0 %2718
        %v2720 = vsel %vm325, %v2715, %v2717
        %v2721 = vsel %vm325, %v2717, %v2719
        %v2756 = vunpack.c.l.b16 %v2680
        %v2757 = vunpack.c.h.b16 %v2680
        %v2758 = vunpack.c.l.b16 %v2681
        %v2759 = vunpack.c.h.b16 %v2681
        %v2760 = vunpack.c.l.b16 %v2682
        %v2761 = vunpack.c.h.b16 %v2682
        %v2762 = vunpack.c.l.b16 %v2683
        %v2763 = vunpack.c.h.b16 %v2683
        %v2764 = vunpack.c.l.b16 %v2684
        %v2765 = vunpack.c.h.b16 %v2684
        %v2766 = vunpack.c.l.b16 %v2685
        %v2767 = vunpack.c.h.b16 %v2685
        %v2768 = vunpack.c.l.b16 %v2686
        %v2769 = vunpack.c.h.b16 %v2686
        %v2770 = vunpack.c.l.b16 %v2687
        %v2771 = vunpack.c.h.b16 %v2687
        %v2772 = vunpack.c.l.b16 %v2688
        %v2773 = vunpack.c.h.b16 %v2688
        %v2774 = vunpack.c.l.b16 %v2689
        %v2775 = vunpack.c.h.b16 %v2689
        %v2776 = vunpack.c.l.b16 %v2690
        %v2777 = vunpack.c.h.b16 %v2690
        %v2778 = vunpack.c.l.b16 %v2691
        %v2779 = vunpack.c.h.b16 %v2691
        %v2780 = vunpack.c.l.b16 %v2692
        %v2781 = vunpack.c.h.b16 %v2692
        %v2782 = vunpack.c.l.b16 %v2693
        %v2783 = vunpack.c.h.b16 %v2693
        %v2784 = vunpack.c.l.b16 %v2694
        %v2785 = vunpack.c.h.b16 %v2694
        %v2786 = vunpack.c.l.b16 %v2695
        %v2787 = vunpack.c.h.b16 %v2695
        %v2788 = vunpack.c.l.b16 %v2696
        %v2789 = vunpack.c.h.b16 %v2696
        %v2790 = vunpack.c.l.b16 %v2697
        %v2791 = vunpack.c.h.b16 %v2697
        %v2792 = vunpack.c.l.b16 %v2698
        %v2793 = vunpack.c.h.b16 %v2698
        %v2794 = vunpack.c.l.b16 %v2699
        %v2795 = vunpack.c.h.b16 %v2699
        %v2796 = vunpack.c.l.b16 %v2700
        %v2797 = vunpack.c.h.b16 %v2700
        %v2798 = vunpack.c.l.b16 %v2701
        %v2799 = vunpack.c.h.b16 %v2701
        %v2800 = vunpack.c.l.b16 %v2702
        %v2801 = vunpack.c.h.b16 %v2702
        %v2802 = vunpack.c.l.b16 %v2703
        %v2803 = vunpack.c.h.b16 %v2703
        %v2804 = vunpack.c.l.b16 %v2704
        %v2805 = vunpack.c.h.b16 %v2704
        %v2806 = vunpack.c.l.b16 %v2705
        %v2807 = vunpack.c.h.b16 %v2705
        %v2808 = vunpack.c.l.b16 %v2706
        %v2809 = vunpack.c.h.b16 %v2706
        %v2810 = vunpack.c.l.b16 %v2707
        %v2811 = vunpack.c.h.b16 %v2707
        %v2812 = vunpack.c.l.b16 %v2708
        %v2813 = vunpack.c.h.b16 %v2708
        %v2814 = vunpack.c.l.b16 %v2709
        %v2815 = vunpack.c.h.b16 %v2709
        %v2816 = vunpack.c.l.b16 %v2710
        %v2817 = vunpack.c.h.b16 %v2710
        %v2818 = vunpack.c.l.b16 %v2711
        %v2819 = vunpack.c.h.b16 %v2711
        %v2820 = vpack.c.b16 %v2758, %v2756
        %v2821 = vpack.c.b16 %v2759, %v2757
        %v2822 = vpack.c.b16 %v2762, %v2760
        %v2823 = vpack.c.b16 %v2763, %v2761
        %v2824 = vpack.c.b16 %v2766, %v2764
        %v2825 = vpack.c.b16 %v2767, %v2765
        %v2826 = vpack.c.b16 %v2770, %v2768
        %v2827 = vpack.c.b16 %v2771, %v2769
        %v2828 = vpack.c.b16 %v2774, %v2772
        %v2829 = vpack.c.b16 %v2775, %v2773
        %v2830 = vpack.c.b16 %v2778, %v2776
        %v2831 = vpack.c.b16 %v2779, %v2777
        %v2832 = vpack.c.b16 %v2782, %v2780
        %v2833 = vpack.c.b16 %v2783, %v2781
        %v2834 = vpack.c.b16 %v2786, %v2784
        %v2835 = vpack.c.b16 %v2787, %v2785
        %v2836 = vpack.c.b16 %v2790, %v2788
        %v2837 = vpack.c.b16 %v2791, %v2789
        %v2838 = vpack.c.b16 %v2794, %v2792
        %v2839 = vpack.c.b16 %v2795, %v2793
        %v2840 = vpack.c.b16 %v2798, %v2796
        %v2841 = vpack.c.b16 %v2799, %v2797
        %v2842 = vpack.c.b16 %v2802, %v2800
        %v2843 = vpack.c.b16 %v2803, %v2801
        %v2844 = vpack.c.b16 %v2806, %v2804
        %v2845 = vpack.c.b16 %v2807, %v2805
        %v2846 = vpack.c.b16 %v2810, %v2808
        %v2847 = vpack.c.b16 %v2811, %v2809
        %v2848 = vpack.c.b16 %v2814, %v2812
        %v2849 = vpack.c.b16 %v2815, %v2813
        %v2850 = vpack.c.b16 %v2818, %v2816
        %v2851 = vpack.c.b16 %v2819, %v2817
        %2884 = vmatprep.subr.bf16.mxu0 %v2821
        %2885 = vmatpush1.bf16.msra.mxu0 %v2820
        %2886 = vmatprep.subr.bf16.mxu0 %v2823
        %2887 = vmatpush1.bf16.msra.mxu0 %v2822
        %2888 = vmatprep.subr.bf16.mxu0 %v2825
        %2889 = vmatpush1.bf16.msra.mxu0 %v2824
        %2890 = vmatprep.subr.bf16.mxu0 %v2827
        %2891 = vmatpush1.bf16.msra.mxu0 %v2826
        %2892 = vmatprep.subr.bf16.mxu0 %v2829
        %2893 = vmatpush1.bf16.msra.mxu0 %v2828
        %2894 = vmatprep.subr.bf16.mxu0 %v2831
        %2895 = vmatpush1.bf16.msra.mxu0 %v2830
        %2896 = vmatprep.subr.bf16.mxu0 %v2833
        %2897 = vmatpush1.bf16.msra.mxu0 %v2832
        %2898 = vmatprep.subr.bf16.mxu0 %v2835
        %2899 = vmatpush1.bf16.msra.mxu0 %v2834
        %2900 = vmatprep.subr.bf16.mxu0 %v2837
        %2901 = vmatpush1.bf16.msra.mxu0 %v2836
        %2902 = vmatprep.subr.bf16.mxu0 %v2839
        %2903 = vmatpush1.bf16.msra.mxu0 %v2838
        %2904 = vmatprep.subr.bf16.mxu0 %v2841
        %2905 = vmatpush1.bf16.msra.mxu0 %v2840
        %2906 = vmatprep.subr.bf16.mxu0 %v2843
        %2907 = vmatpush1.bf16.msra.mxu0 %v2842
        %2908 = vmatprep.subr.bf16.mxu0 %v2845
        %2909 = vmatpush1.bf16.msra.mxu0 %v2844
        %2910 = vmatprep.subr.bf16.mxu0 %v2847
        %2911 = vmatpush1.bf16.msra.mxu0 %v2846
        %2912 = vmatprep.subr.bf16.mxu0 %v2849
        %2913 = vmatpush1.bf16.msra.mxu0 %v2848
        %2914 = vmatprep.subr.bf16.mxu0 %v2851
        %2915 = vmatpush1.bf16.msra.mxu0 %v2850
        %2916 = vmatprep.mubr.bf16.mxu0 %v2721
        %2917 = vmatmul.mubr.bf16.gmra.mrb[0].mxu0 %v2720
        %v2918 = vpop.f32.mrb[0].mxu0
        %v2919 = vadd.f32 0.0, %v2918
        %v2920 = vpop.f32.mrb[0].mxu0
        %v2921 = vadd.f32 0.0, %v2920
        %v2922 = vpop.f32.mrb[0].mxu0
        %v2923 = vpop.f32.mrb[0].mxu0
        %2924 = vdwg.mxu0
        %v2925 = vadd.f32 %v2677, %v2919
        %v2926 = vadd.f32 %v2678, %v2921
        %s2927 = scalar_lea.vmem [#allocation2], 2816
        %v2928 = vld [vmem:[%s2927] sm:$0xff]
        %v2929 = vld [vmem:[%s2927 + $0x8] sm:$0xff]
        %v2930 = vld [vmem:[%s2927 + $0x10] sm:$0xff]
        %v2931 = vld [vmem:[%s2927 + $0x18] sm:$0xff]
        %v2932 = vld [vmem:[%s2927 + $0x20] sm:$0xff]
        %v2933 = vld [vmem:[%s2927 + $0x28] sm:$0xff]
        %v2934 = vld [vmem:[%s2927 + $0x30] sm:$0xff]
        %v2935 = vld [vmem:[%s2927 + $0x38] sm:$0xff]
        %v2936 = vld [vmem:[%s2927 + $0x40] sm:$0xff]
        %v2937 = vld [vmem:[%s2927 + $0x48] sm:$0xff]
        %v2938 = vld [vmem:[%s2927 + $0x50] sm:$0xff]
        %v2939 = vld [vmem:[%s2927 + $0x58] sm:$0xff]
        %v2940 = vld [vmem:[%s2927 + $0x60] sm:$0xff]
        %v2941 = vld [vmem:[%s2927 + $0x68] sm:$0xff]
        %v2942 = vld [vmem:[%s2927 + $0x70] sm:$0xff]
        %v2943 = vld [vmem:[%s2927 + $0x78] sm:$0xff]
        %v2944 = vld [vmem:[%s2927 + $0x80] sm:$0xff]
        %v2945 = vld [vmem:[%s2927 + $0x88] sm:$0xff]
        %v2946 = vld [vmem:[%s2927 + $0x90] sm:$0xff]
        %v2947 = vld [vmem:[%s2927 + $0x98] sm:$0xff]
        %v2948 = vld [vmem:[%s2927 + $0xa0] sm:$0xff]
        %v2949 = vld [vmem:[%s2927 + $0xa8] sm:$0xff]
        %v2950 = vld [vmem:[%s2927 + $0xb0] sm:$0xff]
        %v2951 = vld [vmem:[%s2927 + $0xb8] sm:$0xff]
        %v2952 = vld [vmem:[%s2927 + $0xc0] sm:$0xff]
        %v2953 = vld [vmem:[%s2927 + $0xc8] sm:$0xff]
        %v2954 = vld [vmem:[%s2927 + $0xd0] sm:$0xff]
        %v2955 = vld [vmem:[%s2927 + $0xd8] sm:$0xff]
        %v2956 = vld [vmem:[%s2927 + $0xe0] sm:$0xff]
        %v2957 = vld [vmem:[%s2927 + $0xe8] sm:$0xff]
        %v2958 = vld [vmem:[%s2927 + $0xf0] sm:$0xff]
        %v2959 = vld [vmem:[%s2927 + $0xf8] sm:$0xff]
        %2960 = vrot.lane.b32.xlu0 %v2472, 64
        %v2961 = vpop.permute.xlu0 %2960
        %2962 = vrot.lane.b32.xlu0 %v2473, 64
        %v2963 = vpop.permute.xlu0 %2962
        %2964 = vrot.lane.b32.xlu0 %v2713, 64
        %v2965 = vpop.permute.xlu0 %2964
        %v2966 = vsel %vm771, %v2961, %v2963
        %v2967 = vsel %vm771, %v2963, %v2965
        %v3002 = vunpack.c.l.b16 %v2928
        %v3003 = vunpack.c.h.b16 %v2928
        %v3004 = vunpack.c.l.b16 %v2929
        %v3005 = vunpack.c.h.b16 %v2929
        %v3006 = vunpack.c.l.b16 %v2930
        %v3007 = vunpack.c.h.b16 %v2930
        %v3008 = vunpack.c.l.b16 %v2931
        %v3009 = vunpack.c.h.b16 %v2931
        %v3010 = vunpack.c.l.b16 %v2932
        %v3011 = vunpack.c.h.b16 %v2932
        %v3012 = vunpack.c.l.b16 %v2933
        %v3013 = vunpack.c.h.b16 %v2933
        %v3014 = vunpack.c.l.b16 %v2934
        %v3015 = vunpack.c.h.b16 %v2934
        %v3016 = vunpack.c.l.b16 %v2935
        %v3017 = vunpack.c.h.b16 %v2935
        %v3018 = vunpack.c.l.b16 %v2936
        %v3019 = vunpack.c.h.b16 %v2936
        %v3020 = vunpack.c.l.b16 %v2937
        %v3021 = vunpack.c.h.b16 %v2937
        %v3022 = vunpack.c.l.b16 %v2938
        %v3023 = vunpack.c.h.b16 %v2938
        %v3024 = vunpack.c.l.b16 %v2939
        %v3025 = vunpack.c.h.b16 %v2939
        %v3026 = vunpack.c.l.b16 %v2940
        %v3027 = vunpack.c.h.b16 %v2940
        %v3028 = vunpack.c.l.b16 %v2941
        %v3029 = vunpack.c.h.b16 %v2941
        %v3030 = vunpack.c.l.b16 %v2942
        %v3031 = vunpack.c.h.b16 %v2942
        %v3032 = vunpack.c.l.b16 %v2943
        %v3033 = vunpack.c.h.b16 %v2943
        %v3034 = vunpack.c.l.b16 %v2944
        %v3035 = vunpack.c.h.b16 %v2944
        %v3036 = vunpack.c.l.b16 %v2945
        %v3037 = vunpack.c.h.b16 %v2945
        %v3038 = vunpack.c.l.b16 %v2946
        %v3039 = vunpack.c.h.b16 %v2946
        %v3040 = vunpack.c.l.b16 %v2947
        %v3041 = vunpack.c.h.b16 %v2947
        %v3042 = vunpack.c.l.b16 %v2948
        %v3043 = vunpack.c.h.b16 %v2948
        %v3044 = vunpack.c.l.b16 %v2949
        %v3045 = vunpack.c.h.b16 %v2949
        %v3046 = vunpack.c.l.b16 %v2950
        %v3047 = vunpack.c.h.b16 %v2950
        %v3048 = vunpack.c.l.b16 %v2951
        %v3049 = vunpack.c.h.b16 %v2951
        %v3050 = vunpack.c.l.b16 %v2952
        %v3051 = vunpack.c.h.b16 %v2952
        %v3052 = vunpack.c.l.b16 %v2953
        %v3053 = vunpack.c.h.b16 %v2953
        %v3054 = vunpack.c.l.b16 %v2954
        %v3055 = vunpack.c.h.b16 %v2954
        %v3056 = vunpack.c.l.b16 %v2955
        %v3057 = vunpack.c.h.b16 %v2955
        %v3058 = vunpack.c.l.b16 %v2956
        %v3059 = vunpack.c.h.b16 %v2956
        %v3060 = vunpack.c.l.b16 %v2957
        %v3061 = vunpack.c.h.b16 %v2957
        %v3062 = vunpack.c.l.b16 %v2958
        %v3063 = vunpack.c.h.b16 %v2958
        %v3064 = vunpack.c.l.b16 %v2959
        %v3065 = vunpack.c.h.b16 %v2959
        %v3066 = vpack.c.b16 %v3004, %v3002
        %v3067 = vpack.c.b16 %v3005, %v3003
        %v3068 = vpack.c.b16 %v3008, %v3006
        %v3069 = vpack.c.b16 %v3009, %v3007
        %v3070 = vpack.c.b16 %v3012, %v3010
        %v3071 = vpack.c.b16 %v3013, %v3011
        %v3072 = vpack.c.b16 %v3016, %v3014
        %v3073 = vpack.c.b16 %v3017, %v3015
        %v3074 = vpack.c.b16 %v3020, %v3018
        %v3075 = vpack.c.b16 %v3021, %v3019
        %v3076 = vpack.c.b16 %v3024, %v3022
        %v3077 = vpack.c.b16 %v3025, %v3023
        %v3078 = vpack.c.b16 %v3028, %v3026
        %v3079 = vpack.c.b16 %v3029, %v3027
        %v3080 = vpack.c.b16 %v3032, %v3030
        %v3081 = vpack.c.b16 %v3033, %v3031
        %v3082 = vpack.c.b16 %v3036, %v3034
        %v3083 = vpack.c.b16 %v3037, %v3035
        %v3084 = vpack.c.b16 %v3040, %v3038
        %v3085 = vpack.c.b16 %v3041, %v3039
        %v3086 = vpack.c.b16 %v3044, %v3042
        %v3087 = vpack.c.b16 %v3045, %v3043
        %v3088 = vpack.c.b16 %v3048, %v3046
        %v3089 = vpack.c.b16 %v3049, %v3047
        %v3090 = vpack.c.b16 %v3052, %v3050
        %v3091 = vpack.c.b16 %v3053, %v3051
        %v3092 = vpack.c.b16 %v3056, %v3054
        %v3093 = vpack.c.b16 %v3057, %v3055
        %v3094 = vpack.c.b16 %v3060, %v3058
        %v3095 = vpack.c.b16 %v3061, %v3059
        %v3096 = vpack.c.b16 %v3064, %v3062
        %v3097 = vpack.c.b16 %v3065, %v3063
        %3130 = vmatprep.subr.bf16.mxu0 %v3067
        %3131 = vmatpush1.bf16.msra.mxu0 %v3066
        %3132 = vmatprep.subr.bf16.mxu0 %v3069
        %3133 = vmatpush1.bf16.msra.mxu0 %v3068
        %3134 = vmatprep.subr.bf16.mxu0 %v3071
        %3135 = vmatpush1.bf16.msra.mxu0 %v3070
        %3136 = vmatprep.subr.bf16.mxu0 %v3073
        %3137 = vmatpush1.bf16.msra.mxu0 %v3072
        %3138 = vmatprep.subr.bf16.mxu0 %v3075
        %3139 = vmatpush1.bf16.msra.mxu0 %v3074
        %3140 = vmatprep.subr.bf16.mxu0 %v3077
        %3141 = vmatpush1.bf16.msra.mxu0 %v3076
        %3142 = vmatprep.subr.bf16.mxu0 %v3079
        %3143 = vmatpush1.bf16.msra.mxu0 %v3078
        %3144 = vmatprep.subr.bf16.mxu0 %v3081
        %3145 = vmatpush1.bf16.msra.mxu0 %v3080
        %3146 = vmatprep.subr.bf16.mxu0 %v3083
        %3147 = vmatpush1.bf16.msra.mxu0 %v3082
        %3148 = vmatprep.subr.bf16.mxu0 %v3085
        %3149 = vmatpush1.bf16.msra.mxu0 %v3084
        %3150 = vmatprep.subr.bf16.mxu0 %v3087
        %3151 = vmatpush1.bf16.msra.mxu0 %v3086
        %3152 = vmatprep.subr.bf16.mxu0 %v3089
        %3153 = vmatpush1.bf16.msra.mxu0 %v3088
        %3154 = vmatprep.subr.bf16.mxu0 %v3091
        %3155 = vmatpush1.bf16.msra.mxu0 %v3090
        %3156 = vmatprep.subr.bf16.mxu0 %v3093
        %3157 = vmatpush1.bf16.msra.mxu0 %v3092
        %3158 = vmatprep.subr.bf16.mxu0 %v3095
        %3159 = vmatpush1.bf16.msra.mxu0 %v3094
        %3160 = vmatprep.subr.bf16.mxu0 %v3097
        %3161 = vmatpush1.bf16.msra.mxu0 %v3096
        %3162 = vmatprep.mubr.bf16.mxu0 %v2967
        %3163 = vmatmul.mubr.bf16.gmra.mrb[0].mxu0 %v2966
        %v3164 = vpop.f32.mrb[0].mxu0
        %v3165 = vadd.f32 0.0, %v3164
        %v3166 = vpop.f32.mrb[0].mxu0
        %v3167 = vadd.f32 0.0, %v3166
        %v3168 = vpop.f32.mrb[0].mxu0
        %v3169 = vpop.f32.mrb[0].mxu0
        %3170 = vdwg.mxu0
        %v3171 = vadd.f32 %v2925, %v3165
        %v3172 = vadd.f32 %v2926, %v3167
        %v3173 = vadd.f32 %v1731, %v1732
        %3174 = vadd.xlane.f32.xlu0 %v3173
        %v3175 = vpop.xlane.xlu0 %3174
        %v3176 = vrot.slane %v3175, 4
        %v3177 = vadd.f32 %v3175, %v3176
        %v3178 = vrot.slane %v3177, 2
        %v3179 = vadd.f32 %v3177, %v3178
        %v3180 = vrot.slane %v3179, 1
        %v3181 = vadd.f32 %v3179, %v3180
        %v3182 = vadd.f32 %v3171, %v3172
        %3183 = vadd.xlane.f32.xlu0 %v3182
        %v3184 = vpop.xlane.xlu0 %3183
        %v3185 = vrot.slane %v3184, 4
        %v3186 = vadd.f32 %v3184, %v3185
        %v3187 = vrot.slane %v3186, 2
        %v3188 = vadd.f32 %v3186, %v3187
        %v3189 = vrot.slane %v3188, 1
        %v3190 = vadd.f32 %v3188, %v3189
        %v3191 = vadd.f32 %v3181, %v3190
        %v3192 = vrcp.pop 4096.0
        %v3193 = vmul.f32 %v3191, %v3192
        %v3194 = vsub.f32 %v1731, %v3193
        %v3195 = vsub.f32 %v1732, %v3193
        %v3196 = vmul.f32 %v3194, %v3194
        %v3197 = vmul.f32 %v3195, %v3195
        %v3198 = vadd.f32 %v3196, %v3197
        %3199 = vadd.xlane.f32.xlu0 %v3198
        %v3200 = vpop.xlane.xlu0 %3199
        %v3201 = vrot.slane %v3200, 4
        %v3202 = vadd.f32 %v3200, %v3201
        %v3203 = vrot.slane %v3202, 2
        %v3204 = vadd.f32 %v3202, %v3203
        %v3205 = vrot.slane %v3204, 1
        %v3206 = vadd.f32 %v3204, %v3205
        %v3207 = vsub.f32 %v3171, %v3193
        %v3208 = vsub.f32 %v3172, %v3193
        %v3209 = vmul.f32 %v3207, %v3207
        %v3210 = vmul.f32 %v3208, %v3208
        %v3211 = vadd.f32 %v3209, %v3210
        %3212 = vadd.xlane.f32.xlu0 %v3211
        %v3213 = vpop.xlane.xlu0 %3212
        %v3214 = vrot.slane %v3213, 4
        %v3215 = vadd.f32 %v3213, %v3214
        %v3216 = vrot.slane %v3215, 2
        %v3217 = vadd.f32 %v3215, %v3216
        %v3218 = vrot.slane %v3217, 1
        %v3219 = vadd.f32 %v3217, %v3218
        %v3220 = vadd.f32 %v3206, %v3219
        %v3221 = vmul.f32 %v3220, %v3192
        %v3222 = vadd.f32 %v3221, 1e-05
        %v3223 = vrsqrt.pop %v3222
        %v3224 = vmul.f32 %v3194, %v3223
        %v3225 = vmul.f32 %v3195, %v3223
        %v3226 = vld [vmem:[#allocation4] sm:$0xff]
        %v3227 = vld [vmem:[#allocation4 + $0x8] sm:$0xff]
        %v3228 = vmul.f32 %v3224, %v3226
        %v3229 = vmul.f32 %v3225, %v3227
        %v3230 = vld [vmem:[#allocation6] sm:$0xff]
        %v3231 = vld [vmem:[#allocation6 + $0x8] sm:$0xff]
        %v3232 = vadd.f32 %v3228, %v3230
        %v3233 = vadd.f32 %v3229, %v3231
        %v3234 = vxor.u32 %v3232, 2147483648
        %v3235 = vxor.u32 %v3233, 2147483648
        %v3236 = vmul.f32 %v3234, 1.442695
        %v3237 = vpow.pop %v3236
        %v3238 = vmul.f32 %v3235, 1.442695
        %v3239 = vpow.pop %v3238
        %v3240 = vadd.f32 %v3237, 1.0
        %v3241 = vadd.f32 %v3239, 1.0
        %v3242 = vrcp.pop %v3240
        %v3243 = vmul.f32 1.0, %v3242
        %v3244 = vrcp.pop %v3241
        %v3245 = vmul.f32 1.0, %v3244
        %v3246 = vmul.f32 %v3232, %v3243
        %v3247 = vmul.f32 %v3233, %v3245
        %3248 = vst [vmem:[%s241] sm:$0xff] %v3246
        %3249 = vst [vmem:[%s241 + $0x8] sm:$0xff] %v3247
        %v3250 = vmul.f32 %v3207, %v3223
        %v3251 = vmul.f32 %v3208, %v3223
        %s3252 = scalar_lea.vmem [#allocation4], 16
        %v3253 = vld [vmem:[%s3252] sm:$0xff]
        %v3254 = vld [vmem:[%s3252 + $0x8] sm:$0xff]
        %v3255 = vmul.f32 %v3250, %v3253
        %v3256 = vmul.f32 %v3251, %v3254
        %s3257 = scalar_lea.vmem [#allocation6], 16
        %v3258 = vld [vmem:[%s3257] sm:$0xff]
        %v3259 = vld [vmem:[%s3257 + $0x8] sm:$0xff]
        %v3260 = vadd.f32 %v3255, %v3258
        %v3261 = vadd.f32 %v3256, %v3259
        %v3262 = vxor.u32 %v3260, 2147483648
        %v3263 = vxor.u32 %v3261, 2147483648
        %v3264 = vmul.f32 %v3262, 1.442695
        %v3265 = vpow.pop %v3264
        %v3266 = vmul.f32 %v3263, 1.442695
        %v3267 = vpow.pop %v3266
        %v3268 = vadd.f32 %v3265, 1.0
        %v3269 = vadd.f32 %v3267, 1.0
        %v3270 = vrcp.pop %v3268
        %v3271 = vmul.f32 1.0, %v3270
        %v3272 = vrcp.pop %v3269
        %v3273 = vmul.f32 1.0, %v3272
        %v3274 = vmul.f32 %v3260, %v3271
        %v3275 = vmul.f32 %v3261, %v3273
        %s3276 = scalar_lea.vmem %s241, 16
        %3277 = vst [vmem:[%s3276] sm:$0xff] %v3274
        %3278 = vst [vmem:[%s3276 + $0x8] sm:$0xff] %v3275
        %p3279 = scmp.lt.s32.totalorder %s17, 3
        %s3280 = scalar_select %p3279, %s17, 3
        %s3281 = smul.addr %s3280, 4
        %s3282 = smul.addr %s3281, 8
        %s3283 = scalar_lea.vmem %s4, %s3282
        // Predicated region
        $region49: #{decoder_forward.5} parent=35 // pred_check
          %p3284 = pneg %p124
        $region50: #{decoder_forward.5} parent=35 // pred_check_branch
          %3286 = sbr.rel (%p3284) target = $region52
        $region51: #{decoder_forward.5} parent=35 // pred_region
          _
        $region52: #{decoder_forward.5} parent=35 // pred_fallthru
          _
      $region36: #{decoder_forward.5} parent=5 // pred_fallthru
        _
      %p3287 = scmp.le.s32.totalorder 2, %s12
      // Predicated region
      $region53: #{decoder_forward.5} parent=5 // pred_check
        %p3288 = pneg %p3287
      $region54: #{decoder_forward.5} parent=5 // pred_check_branch
        %3290 = sbr.rel (%p3288) target = $region56
      $region55: #{decoder_forward.5} parent=5 // pred_region
        %s3291 = ssub.s32 %s12, 2
        // Predicated region
        $region57: #{decoder_forward.5} parent=55 // pred_check
          %p3292 = pneg %p130
        $region58: #{decoder_forward.5} parent=55 // pred_check_branch
          %3294 = sbr.rel (%p3292) target = $region60
        $region59: #{decoder_forward.5} parent=55 // pred_region
          %p3295 = scmp.lt.s32.totalorder %s18, 3
          %s3296 = scalar_select %p3295, %s18, 3
          %s3297 = smul.addr %s3296, 4
          %s3298 = smul.addr %s3297, 8
          %s3299 = scalar_lea.vmem %s4, %s3298
        $region60: #{decoder_forward.5} parent=55 // pred_fallthru
          _
      $region56: #{decoder_forward.5} parent=5 // pred_fallthru
        _
    $region6: #{decoder_forward.5} parent=1 // loop_footer
      %s16 = sadd.s32 1, %s12
    $region7: #{decoder_forward.5} parent=1 // loop_footer_branch
      %11 = sbr.rel target = $region3
    $region8: #{decoder_forward.5} parent=1 // loop_exit
      _
    %3300 = vsyncpa [#allocation3], 1
    %s3301 = scalar_lea.sflag [#allocation3], 1
    %3302 = vsyncpa %s3301, 1
    %3303 = vsyncpa [#allocation5], 1

// kernel: decoder_forward.6
$region0: #{decoder_forward.6}
  #allocation0 [shape = 'u32[]', space=smem, size = 0x4, offset = 0x4, fixed_abs, tag = 'smem constant byte address 0x4 - core index']
  #allocation1 [shape = 'u32[144,128]{1,0:T(1,128)}', space=vmem, size = 0x12000, scoped, tag = 'internal scratch']
  %s0 = inlined_call_operand.vmem [shape: f32[4,18,288], index: 0, kind: input, shape index: {}]
  %s1 = inlined_call_operand.vmem [shape: bf16[12,256,256], index: 1, kind: input, shape index: {}]
  %s2 = inlined_call_operand.vmem [shape: f32[2,16,256], index: 2, kind: input, shape index: {}]
  %s3 = inlined_call_operand.vmem [shape: f32[2,16,256], index: 3, kind: input, shape index: {}]
  %s4 = inlined_call_operand.vmem [shape: f32[4,2,16,256], index: 4, kind: output, shape index: {}]
  %s5 = sld [smem:[#allocation0]]
  $region49: #{decoder_forward.6} parent=0
    _
  %s7 = ssub.s32 1, %s5
  %s8 = scalar_select 0, %s7, %s5
  loop: start=0, step=1, limit=6
  $region2: #{decoder_forward.6} parent=0 // loop_pre_header
    _
  $region3: #{decoder_forward.6} parent=0 // loop_header
    %s10 = sphi 0, %s14
    %p11 = scmp.ge.s32.totalorder %s10, 6
    %s20 = sphi 0, %s22
    %s23 = sphi 0, %s20
    %s24 = sphi 0, %s23
    %s40 = sphi 0, %s24
    %s44 = sphi 0, %s44
    %s46 = sphi 0, %s44
    %s47 = sphi 0, %s46
    %s61 = sphi 0, %s47
    %s65 = sphi 0, %s65
    %s67 = sphi 0, %s65
    %s68 = sphi 0, %s67
    %s82 = sphi 0, %s68
    %s86 = sphi 0, %s86
    %s88 = sphi 0, %s86
    %s89 = sphi 0, %s88
    %s103 = sphi 0, %s89
    %s109 = sphi 0, %s111
    %s112 = sphi 0, %s109
    %s113 = sphi 0, %s112
    %s129 = sphi 0, %s113
  $region4: #{decoder_forward.6} parent=0 // loop_header_branch
    %13 = sbr.rel (%p11) target = $region8
  $region5: #{decoder_forward.6} parent=0 // loop_body
    %s15 = ssub.s32 %s10, 1
    %s16 = ssub.s32 %s10, 2
    %s17 = sadd.s32 %s10, 1
    %s18 = ssub.s32 %s10, %s17
    %p19 = scmp.eq.s32.totalorder %s18, 0
    %s21 = sadd.s32 %s20, 1
    %s22 = scalar_select %p19, %s20, %s21
    %p25 = pneg %p19
    %p26 = scmp.eq.s32.totalorder %s10, 3
    %p27 = por %p25, %p26
    %p28 = scmp.ne.s32.totalorder %s20, %s23
    %p29 = scmp.eq.s32.totalorder %s10, 0
    %p30 = por %p28, %p29
    %p31 = scmp.ne.s32.totalorder %s20, %s23
    %p32 = scmp.eq.s32.totalorder %s15, 3
    %p33 = por %p31, %p32
    %p34 = scmp.ne.s32.totalorder %s23, %s24
    %p35 = scmp.eq.s32.totalorder %s15, 0
    %p36 = por %p34, %p35
    %p37 = scmp.ne.s32.totalorder %s23, %s24
    %p38 = scmp.eq.s32.totalorder %s16, 3
    %p39 = por %p37, %p38
    %p41 = scmp.ne.s32.totalorder %s24, %s40
    %p42 = scmp.eq.s32.totalorder %s16, 0
    %p43 = por %p41, %p42
    %s45 = sadd.s32 %s44, 1
    %p48 = scmp.eq.s32.totalorder %s10, 3
    %p49 = scmp.ne.s32.totalorder %s44, %s46
    %p50 = scmp.eq.s32.totalorder %s10, 0
    %p51 = por %p49, %p50
    %p52 = scmp.ne.s32.totalorder %s44, %s46
    %p53 = scmp.eq.s32.totalorder %s15, 3
    %p54 = por %p52, %p53
    %p55 = scmp.ne.s32.totalorder %s46, %s47
    %p56 = scmp.eq.s32.totalorder %s15, 0
    %p57 = por %p55, %p56
    %p58 = scmp.ne.s32.totalorder %s46, %s47
    %p59 = scmp.eq.s32.totalorder %s16, 3
    %p60 = por %p58, %p59
    %p62 = scmp.ne.s32.totalorder %s47, %s61
    %p63 = scmp.eq.s32.totalorder %s16, 0
    %p64 = por %p62, %p63
    %s66 = sadd.s32 %s65, 1
    %p69 = scmp.eq.s32.totalorder %s10, 3
    %p70 = scmp.ne.s32.totalorder %s65, %s67
    %p71 = scmp.eq.s32.totalorder %s10, 0
    %p72 = por %p70, %p71
    %p73 = scmp.ne.s32.totalorder %s65, %s67
    %p74 = scmp.eq.s32.totalorder %s15, 3
    %p75 = por %p73, %p74
    %p76 = scmp.ne.s32.totalorder %s67, %s68
    %p77 = scmp.eq.s32.totalorder %s15, 0
    %p78 = por %p76, %p77
    %p79 = scmp.ne.s32.totalorder %s67, %s68
    %p80 = scmp.eq.s32.totalorder %s16, 3
    %p81 = por %p79, %p80
    %p83 = scmp.ne.s32.totalorder %s68, %s82
    %p84 = scmp.eq.s32.totalorder %s16, 0
    %p85 = por %p83, %p84
    %s87 = sadd.s32 %s86, 1
    %p90 = scmp.eq.s32.totalorder %s10, 3
    %p91 = scmp.ne.s32.totalorder %s86, %s88
    %p92 = scmp.eq.s32.totalorder %s10, 0
    %p93 = por %p91, %p92
    %p94 = scmp.ne.s32.totalorder %s86, %s88
    %p95 = scmp.eq.s32.totalorder %s15, 3
    %p96 = por %p94, %p95
    %p97 = scmp.ne.s32.totalorder %s88, %s89
    %p98 = scmp.eq.s32.totalorder %s15, 0
    %p99 = por %p97, %p98
    %p100 = scmp.ne.s32.totalorder %s88, %s89
    %p101 = scmp.eq.s32.totalorder %s16, 3
    %p102 = por %p100, %p101
    %p104 = scmp.ne.s32.totalorder %s89, %s103
    %p105 = scmp.eq.s32.totalorder %s16, 0
    %p106 = por %p104, %p105
    %s107 = ssub.s32 %s10, %s17
    %p108 = scmp.eq.s32.totalorder %s107, 0
    %s110 = sadd.s32 %s109, 1
    %s111 = scalar_select %p108, %s109, %s110
    %p114 = pneg %p108
    %p115 = scmp.eq.s32.totalorder %s10, 3
    %p116 = por %p114, %p115
    %p117 = scmp.ne.s32.totalorder %s109, %s112
    %p118 = scmp.eq.s32.totalorder %s10, 0
    %p119 = por %p117, %p118
    %p120 = scmp.ne.s32.totalorder %s109, %s112
    %p121 = scmp.eq.s32.totalorder %s15, 3
    %p122 = por %p120, %p121
    %p123 = scmp.ne.s32.totalorder %s112, %s113
    %p124 = scmp.eq.s32.totalorder %s15, 0
    %p125 = por %p123, %p124
    %p126 = scmp.ne.s32.totalorder %s112, %s113
    %p127 = scmp.eq.s32.totalorder %s16, 3
    %p128 = por %p126, %p127
    %p130 = scmp.ne.s32.totalorder %s113, %s129
    %p131 = scmp.eq.s32.totalorder %s16, 0
    %p132 = por %p130, %p131
    %p133 = scmp.le.s32.totalorder 1, %s10
    %p134 = scmp.lt.s32.totalorder %s10, 5
    %p135 = pnand %p133, %p134
    %p136 = pneg %p135
    // Predicated region
    $region9: #{decoder_forward.6} parent=5 // pred_check
      _
    $region10: #{decoder_forward.6} parent=5 // pred_check_branch
      %138 = sbr.rel (%p135) target = $region12
    $region11: #{decoder_forward.6} parent=5 // pred_region
      %s139 = ssub.s32 %s10, 1
      // Predicated region
      $region13: #{decoder_forward.6} parent=11 // pred_check
        %p140 = pneg %p57
      $region14: #{decoder_forward.6} parent=11 // pred_check_branch
        %142 = sbr.rel (%p140) target = $region16
      $region15: #{decoder_forward.6} parent=11 // pred_region
        _
      $region16: #{decoder_forward.6} parent=11 // pred_fallthru
        _
      // Predicated region
      $region17: #{decoder_forward.6} parent=11 // pred_check
        %p143 = pneg %p78
      $region18: #{decoder_forward.6} parent=11 // pred_check_branch
        %145 = sbr.rel (%p143) target = $region20
      $region19: #{decoder_forward.6} parent=11 // pred_region
        _
      $region20: #{decoder_forward.6} parent=11 // pred_fallthru
        _
      // Predicated region
      $region21: #{decoder_forward.6} parent=11 // pred_check
        %p146 = pneg %p99
      $region22: #{decoder_forward.6} parent=11 // pred_check_branch
        %148 = sbr.rel (%p146) target = $region24
      $region23: #{decoder_forward.6} parent=11 // pred_region
        _
      $region24: #{decoder_forward.6} parent=11 // pred_fallthru
        _
    $region12: #{decoder_forward.6} parent=5 // pred_fallthru
      _
    %p149 = scmp.lt.s32.totalorder %s10, 4
    // Predicated region
    $region25: #{decoder_forward.6} parent=5 // pred_check
      %p150 = pneg %p149
    $region26: #{decoder_forward.6} parent=5 // pred_check_branch
      %152 = sbr.rel (%p150) target = $region28
    $region27: #{decoder_forward.6} parent=5 // pred_region
      // Predicated region
      $region29: #{decoder_forward.6} parent=27 // pred_check
        %p153 = pneg %p30
      $region30: #{decoder_forward.6} parent=27 // pred_check_branch
        %155 = sbr.rel (%p153) target = $region32
      $region31: #{decoder_forward.6} parent=27 // pred_region
        %p156 = scmp.lt.s32.totalorder %s10, 3
        %s157 = scalar_select %p156, %s10, 3
        %s158 = smul.addr %s157, 9
        %s159 = smul.addr %s158, 8
        %s160 = scalar_lea.vmem %s0, %s159
      $region32: #{decoder_forward.6} parent=27 // pred_fallthru
        _
    $region28: #{decoder_forward.6} parent=5 // pred_fallthru
      _
    %p161 = scmp.le.s32.totalorder 1, %s10
    %p162 = scmp.lt.s32.totalorder %s10, 5
    %p163 = pnand %p161, %p162
    %p164 = pneg %p163
    // Predicated region
    $region33: #{decoder_forward.6} parent=5 // pred_check
      _
    $region34: #{decoder_forward.6} parent=5 // pred_check_branch
      %166 = sbr.rel (%p163) target = $region36
    $region35: #{decoder_forward.6} parent=5 // pred_region
      %s167 = ssub.s32 %s10, 1
      %p168 = scmp.lt.s32.totalorder %s15, 3
      %s169 = scalar_select %p168, %s15, 3
      %s170 = smul.addr %s169, 9
      %s171 = smul.addr %s170, 8
      %s172 = scalar_lea.vmem %s0, %s171
      %p173 = pneg %p36
      %p174 = pneg %p33
      %p175 = pneg %p57
      %p176 = pneg %p54
      %p177 = pneg %p78
      %p178 = pneg %p75
      %p179 = pneg %p99
      %p180 = pneg %p96
      %p181 = pneg %p125
      %p182 = pneg %p122
      %p183 = scmp.lt.s32.totalorder %s15, 3
      %s184 = scalar_select %p183, %s15, 3
      %s185 = smul.addr %s184, 8
      %s186 = smul.addr %s185, 8
      %s187 = scalar_lea.vmem %s4, %s186
      %p188 = scmp.lt.s32.totalorder %s15, 3
      %s189 = scalar_select %p188, %s15, 3
      %s190 = smul.addr %s189, 9
      %s191 = smul.addr %s190, 8
      %s192 = scalar_lea.vmem %s0, %s191
      %p193 = scmp.lt.s32.totalorder %s15, 3
      %s194 = scalar_select %p193, %s15, 3
      %s195 = smul.addr %s194, 8
      %s196 = smul.addr %s195, 8
      %s197 = scalar_lea.vmem %s4, %s196
      %v198 = vld [vmem:[%s192] sm:$0xff]
      %v199 = vld [vmem:[%s192 + $0x8] sm:$0xff]
      %v200 = vld [vmem:[%s192 + $0x10] sm:$0xff]
      %v201 = vld [vmem:[%s192 + $0x18] sm:$0xff]
      %v202 = vld [vmem:[%s192 + $0x20] sm:$0xff]
      %v203 = vld [vmem:[%s192 + $0x28] sm:$0xff]
      %v204 = vld [vmem:[%s192 + $0x30] sm:$0x3]
      %v205 = vld [vmem:[%s192 + $0x38] sm:$0x3]
      %v206 = vld [vmem:[%s192 + $0x40] sm:$0x3]
      %v207 = vpack.c.bf16 %v201, %v198
      %v208 = vpack.c.bf16 %v202, %v199
      %v209 = vld [vmem:[%s1] sm:$0xff]
      %v210 = vld [vmem:[%s1 + $0x8] sm:$0xff]
      %v211 = vld [vmem:[%s1 + $0x10] sm:$0xff]
      %v212 = vld [vmem:[%s1 + $0x18] sm:$0xff]
      %v213 = vld [vmem:[%s1 + $0x20] sm:$0xff]
      %v214 = vld [vmem:[%s1 + $0x28] sm:$0xff]
      %v215 = vld [vmem:[%s1 + $0x30] sm:$0xff]
      %v216 = vld [vmem:[%s1 + $0x38] sm:$0xff]
      %v217 = vld [vmem:[%s1 + $0x40] sm:$0xff]
      %v218 = vld [vmem:[%s1 + $0x48] sm:$0xff]
      %v219 = vld [vmem:[%s1 + $0x50] sm:$0xff]
      %v220 = vld [vmem:[%s1 + $0x58] sm:$0xff]
      %v221 = vld [vmem:[%s1 + $0x60] sm:$0xff]
      %v222 = vld [vmem:[%s1 + $0x68] sm:$0xff]
      %v223 = vld [vmem:[%s1 + $0x70] sm:$0xff]
      %v224 = vld [vmem:[%s1 + $0x78] sm:$0xff]
      %v225 = vld [vmem:[%s1 + $0x80] sm:$0xff]
      %v226 = vld [vmem:[%s1 + $0x88] sm:$0xff]
      %v227 = vld [vmem:[%s1 + $0x90] sm:$0xff]
      %v228 = vld [vmem:[%s1 + $0x98] sm:$0xff]
      %v229 = vld [vmem:[%s1 + $0xa0] sm:$0xff]
      %v230 = vld [vmem:[%s1 + $0xa8] sm:$0xff]
      %v231 = vld [vmem:[%s1 + $0xb0] sm:$0xff]
      %v232 = vld [vmem:[%s1 + $0xb8] sm:$0xff]
      %v233 = vld [vmem:[%s1 + $0xc0] sm:$0xff]
      %v234 = vld [vmem:[%s1 + $0xc8] sm:$0xff]
      %v235 = vld [vmem:[%s1 + $0xd0] sm:$0xff]
      %v236 = vld [vmem:[%s1 + $0xd8] sm:$0xff]
      %v237 = vld [vmem:[%s1 + $0xe0] sm:$0xff]
      %v238 = vld [vmem:[%s1 + $0xe8] sm:$0xff]
      %v239 = vld [vmem:[%s1 + $0xf0] sm:$0xff]
      %v240 = vld [vmem:[%s1 + $0xf8] sm:$0xff]
      %v241 = vpack.c.bf16 %v203, %v200
      %s242 = scalar_lea.vmem %s1, 256
      %v243 = vld [vmem:[%s242] sm:$0xff]
      %v244 = vld [vmem:[%s242 + $0x8] sm:$0xff]
      %v245 = vld [vmem:[%s242 + $0x10] sm:$0xff]
      %v246 = vld [vmem:[%s242 + $0x18] sm:$0xff]
      %v247 = vld [vmem:[%s242 + $0x20] sm:$0xff]
      %v248 = vld [vmem:[%s242 + $0x28] sm:$0xff]
      %v249 = vld [vmem:[%s242 + $0x30] sm:$0xff]
      %v250 = vld [vmem:[%s242 + $0x38] sm:$0xff]
      %v251 = vld [vmem:[%s242 + $0x40] sm:$0xff]
      %v252 = vld [vmem:[%s242 + $0x48] sm:$0xff]
      %v253 = vld [vmem:[%s242 + $0x50] sm:$0xff]
      %v254 = vld [vmem:[%s242 + $0x58] sm:$0xff]
      %v255 = vld [vmem:[%s242 + $0x60] sm:$0xff]
      %v256 = vld [vmem:[%s242 + $0x68] sm:$0xff]
      %v257 = vld [vmem:[%s242 + $0x70] sm:$0xff]
      %v258 = vld [vmem:[%s242 + $0x78] sm:$0xff]
      %v259 = vld [vmem:[%s242 + $0x80] sm:$0xff]
      %v260 = vld [vmem:[%s242 + $0x88] sm:$0xff]
      %v261 = vld [vmem:[%s242 + $0x90] sm:$0xff]
      %v262 = vld [vmem:[%s242 + $0x98] sm:$0xff]
      %v263 = vld [vmem:[%s242 + $0xa0] sm:$0xff]
      %v264 = vld [vmem:[%s242 + $0xa8] sm:$0xff]
      %v265 = vld [vmem:[%s242 + $0xb0] sm:$0xff]
      %v266 = vld [vmem:[%s242 + $0xb8] sm:$0xff]
      %v267 = vld [vmem:[%s242 + $0xc0] sm:$0xff]
      %v268 = vld [vmem:[%s242 + $0xc8] sm:$0xff]
      %v269 = vld [vmem:[%s242 + $0xd0] sm:$0xff]
      %v270 = vld [vmem:[%s242 + $0xd8] sm:$0xff]
      %v271 = vld [vmem:[%s242 + $0xe0] sm:$0xff]
      %v272 = vld [vmem:[%s242 + $0xe8] sm:$0xff]
      %v273 = vld [vmem:[%s242 + $0xf0] sm:$0xff]
      %v274 = vld [vmem:[%s242 + $0xf8] sm:$0xff]
      %278 = vrot.lane.b32.xlu0 %v207, 112
      %v279 = vpop.permute.xlu0 %278
      %280 = vrot.lane.b32.xlu0 %v208, 112
      %v281 = vpop.permute.xlu0 %280
      %282 = vrot.lane.b32.xlu0 %v241, 112
      %v283 = vpop.permute.xlu0 %282
      %vm284 = vcmask 916480
      %v285 = vsel %vm284, %v279, %v281
      %v286 = vsel %vm284, %v281, %v283
      %v321 = vunpack.c.l.b16 %v243
      %v322 = vunpack.c.h.b16 %v243
      %v323 = vunpack.c.l.b16 %v244
      %v324 = vunpack.c.h.b16 %v244
      %v325 = vunpack.c.l.b16 %v245
      %v326 = vunpack.c.h.b16 %v245
      %v327 = vunpack.c.l.b16 %v246
      %v328 = vunpack.c.h.b16 %v246
      %v329 = vunpack.c.l.b16 %v247
      %v330 = vunpack.c.h.b16 %v247
      %v331 = vunpack.c.l.b16 %v248
      %v332 = vunpack.c.h.b16 %v248
      %v333 = vunpack.c.l.b16 %v249
      %v334 = vunpack.c.h.b16 %v249
      %v335 = vunpack.c.l.b16 %v250
      %v336 = vunpack.c.h.b16 %v250
      %v337 = vunpack.c.l.b16 %v251
      %v338 = vunpack.c.h.b16 %v251
      %v339 = vunpack.c.l.b16 %v252
      %v340 = vunpack.c.h.b16 %v252
      %v341 = vunpack.c.l.b16 %v253
      %v342 = vunpack.c.h.b16 %v253
      %v343 = vunpack.c.l.b16 %v254
      %v344 = vunpack.c.h.b16 %v254
      %v345 = vunpack.c.l.b16 %v255
      %v346 = vunpack.c.h.b16 %v255
      %v347 = vunpack.c.l.b16 %v256
      %v348 = vunpack.c.h.b16 %v256
      %v349 = vunpack.c.l.b16 %v257
      %v350 = vunpack.c.h.b16 %v257
      %v351 = vunpack.c.l.b16 %v258
      %v352 = vunpack.c.h.b16 %v258
      %v353 = vunpack.c.l.b16 %v259
      %v354 = vunpack.c.h.b16 %v259
      %v355 = vunpack.c.l.b16 %v260
      %v356 = vunpack.c.h.b16 %v260
      %v357 = vunpack.c.l.b16 %v261
      %v358 = vunpack.c.h.b16 %v261
      %v359 = vunpack.c.l.b16 %v262
      %v360 = vunpack.c.h.b16 %v262
      %v361 = vunpack.c.l.b16 %v263
      %v362 = vunpack.c.h.b16 %v263
      %v363 = vunpack.c.l.b16 %v264
      %v364 = vunpack.c.h.b16 %v264
      %v365 = vunpack.c.l.b16 %v265
      %v366 = vunpack.c.h.b16 %v265
      %v367 = vunpack.c.l.b16 %v266
      %v368 = vunpack.c.h.b16 %v266
      %v369 = vunpack.c.l.b16 %v267
      %v370 = vunpack.c.h.b16 %v267
      %v371 = vunpack.c.l.b16 %v268
      %v372 = vunpack.c.h.b16 %v268
      %v373 = vunpack.c.l.b16 %v269
      %v374 = vunpack.c.h.b16 %v269
      %v375 = vunpack.c.l.b16 %v270
      %v376 = vunpack.c.h.b16 %v270
      %v377 = vunpack.c.l.b16 %v271
      %v378 = vunpack.c.h.b16 %v271
      %v379 = vunpack.c.l.b16 %v272
      %v380 = vunpack.c.h.b16 %v272
      %v381 = vunpack.c.l.b16 %v273
      %v382 = vunpack.c.h.b16 %v273
      %v383 = vunpack.c.l.b16 %v274
      %v384 = vunpack.c.h.b16 %v274
      %v385 = vpack.c.b16 %v323, %v321
      %v386 = vpack.c.b16 %v324, %v322
      %v387 = vpack.c.b16 %v327, %v325
      %v388 = vpack.c.b16 %v328, %v326
      %v389 = vpack.c.b16 %v331, %v329
      %v390 = vpack.c.b16 %v332, %v330
      %v391 = vpack.c.b16 %v335, %v333
      %v392 = vpack.c.b16 %v336, %v334
      %v393 = vpack.c.b16 %v339, %v337
      %v394 = vpack.c.b16 %v340, %v338
      %v395 = vpack.c.b16 %v343, %v341
      %v396 = vpack.c.b16 %v344, %v342
      %v397 = vpack.c.b16 %v347, %v345
      %v398 = vpack.c.b16 %v348, %v346
      %v399 = vpack.c.b16 %v351, %v349
      %v400 = vpack.c.b16 %v352, %v350
      %v401 = vpack.c.b16 %v355, %v353
      %v402 = vpack.c.b16 %v356, %v354
      %v403 = vpack.c.b16 %v359, %v357
      %v404 = vpack.c.b16 %v360, %v358
      %v405 = vpack.c.b16 %v363, %v361
      %v406 = vpack.c.b16 %v364, %v362
      %v407 = vpack.c.b16 %v367, %v365
      %v408 = vpack.c.b16 %v368, %v366
      %v409 = vpack.c.b16 %v371, %v369
      %v410 = vpack.c.b16 %v372, %v370
      %v411 = vpack.c.b16 %v375, %v373
      %v412 = vpack.c.b16 %v376, %v374
      %v413 = vpack.c.b16 %v379, %v377
      %v414 = vpack.c.b16 %v380, %v378
      %v415 = vpack.c.b16 %v383, %v381
      %v416 = vpack.c.b16 %v384, %v382
      %449 = vmatprep.subr.bf16.mxu0 %v386
      %450 = vmatpush1.bf16.msra.mxu0 %v385
      %451 = vmatprep.subr.bf16.mxu0 %v388
      %452 = vmatpush1.bf16.msra.mxu0 %v387
      %453 = vmatprep.subr.bf16.mxu0 %v390
      %454 = vmatpush1.bf16.msra.mxu0 %v389
      %455 = vmatprep.subr.bf16.mxu0 %v392
      %456 = vmatpush1.bf16.msra.mxu0 %v391
      %457 = vmatprep.subr.bf16.mxu0 %v394
      %458 = vmatpush1.bf16.msra.mxu0 %v393
      %459 = vmatprep.subr.bf16.mxu0 %v396
      %460 = vmatpush1.bf16.msra.mxu0 %v395
      %461 = vmatprep.subr.bf16.mxu0 %v398
      %462 = vmatpush1.bf16.msra.mxu0 %v397
      %463 = vmatprep.subr.bf16.mxu0 %v400
      %464 = vmatpush1.bf16.msra.mxu0 %v399
      %465 = vmatprep.subr.bf16.mxu0 %v402
      %466 = vmatpush1.bf16.msra.mxu0 %v401
      %467 = vmatprep.subr.bf16.mxu0 %v404
      %468 = vmatpush1.bf16.msra.mxu0 %v403
      %469 = vmatprep.subr.bf16.mxu0 %v406
      %470 = vmatpush1.bf16.msra.mxu0 %v405
      %471 = vmatprep.subr.bf16.mxu0 %v408
      %472 = vmatpush1.bf16.msra.mxu0 %v407
      %473 = vmatprep.subr.bf16.mxu0 %v410
      %474 = vmatpush1.bf16.msra.mxu0 %v409
      %475 = vmatprep.subr.bf16.mxu0 %v412
      %476 = vmatpush1.bf16.msra.mxu0 %v411
      %477 = vmatprep.subr.bf16.mxu0 %v414
      %478 = vmatpush1.bf16.msra.mxu0 %v413
      %479 = vmatprep.subr.bf16.mxu0 %v416
      %480 = vmatpush1.bf16.msra.mxu0 %v415
      %481 = vmatprep.mubr.bf16.mxu0 %v286
      %482 = vmatmul.mubr.bf16.gmra.mrb[0].mxu0 %v285
      %v483 = vpop.f32.mrb[0].mxu0
      %v484 = vadd.f32 0.0, %v483
      %v485 = vpop.f32.mrb[0].mxu0
      %v486 = vadd.f32 0.0, %v485
      %v487 = vpop.f32.mrb[0].mxu0
      %v488 = vadd.f32 0.0, %v487
      %v489 = vpop.f32.mrb[0].mxu0
      %v490 = vadd.f32 0.0, %v489
      %491 = vdwg.mxu0
      %v524 = vunpack.c.l.b16 %v209
      %v525 = vunpack.c.h.b16 %v209
      %v526 = vunpack.c.l.b16 %v210
      %v527 = vunpack.c.h.b16 %v210
      %v528 = vunpack.c.l.b16 %v211
      %v529 = vunpack.c.h.b16 %v211
      %v530 = vunpack.c.l.b16 %v212
      %v531 = vunpack.c.h.b16 %v212
      %v532 = vunpack.c.l.b16 %v213
      %v533 = vunpack.c.h.b16 %v213
      %v534 = vunpack.c.l.b16 %v214
      %v535 = vunpack.c.h.b16 %v214
      %v536 = vunpack.c.l.b16 %v215
      %v537 = vunpack.c.h.b16 %v215
      %v538 = vunpack.c.l.b16 %v216
      %v539 = vunpack.c.h.b16 %v216
      %v540 = vunpack.c.l.b16 %v217
      %v541 = vunpack.c.h.b16 %v217
      %v542 = vunpack.c.l.b16 %v218
      %v543 = vunpack.c.h.b16 %v218
      %v544 = vunpack.c.l.b16 %v219
      %v545 = vunpack.c.h.b16 %v219
      %v546 = vunpack.c.l.b16 %v220
      %v547 = vunpack.c.h.b16 %v220
      %v548 = vunpack.c.l.b16 %v221
      %v549 = vunpack.c.h.b16 %v221
      %v550 = vunpack.c.l.b16 %v222
      %v551 = vunpack.c.h.b16 %v222
      %v552 = vunpack.c.l.b16 %v223
      %v553 = vunpack.c.h.b16 %v223
      %v554 = vunpack.c.l.b16 %v224
      %v555 = vunpack.c.h.b16 %v224
      %v556 = vunpack.c.l.b16 %v225
      %v557 = vunpack.c.h.b16 %v225
      %v558 = vunpack.c.l.b16 %v226
      %v559 = vunpack.c.h.b16 %v226
      %v560 = vunpack.c.l.b16 %v227
      %v561 = vunpack.c.h.b16 %v227
      %v562 = vunpack.c.l.b16 %v228
      %v563 = vunpack.c.h.b16 %v228
      %v564 = vunpack.c.l.b16 %v229
      %v565 = vunpack.c.h.b16 %v229
      %v566 = vunpack.c.l.b16 %v230
      %v567 = vunpack.c.h.b16 %v230
      %v568 = vunpack.c.l.b16 %v231
      %v569 = vunpack.c.h.b16 %v231
      %v570 = vunpack.c.l.b16 %v232
      %v571 = vunpack.c.h.b16 %v232
      %v572 = vunpack.c.l.b16 %v233
      %v573 = vunpack.c.h.b16 %v233
      %v574 = vunpack.c.l.b16 %v234
      %v575 = vunpack.c.h.b16 %v234
      %v576 = vunpack.c.l.b16 %v235
      %v577 = vunpack.c.h.b16 %v235
      %v578 = vunpack.c.l.b16 %v236
      %v579 = vunpack.c.h.b16 %v236
      %v580 = vunpack.c.l.b16 %v237
      %v581 = vunpack.c.h.b16 %v237
      %v582 = vunpack.c.l.b16 %v238
      %v583 = vunpack.c.h.b16 %v238
      %v584 = vunpack.c.l.b16 %v239
      %v585 = vunpack.c.h.b16 %v239
      %v586 = vunpack.c.l.b16 %v240
      %v587 = vunpack.c.h.b16 %v240
      %v588 = vpack.c.b16 %v526, %v524
      %v589 = vpack.c.b16 %v527, %v525
      %v590 = vpack.c.b16 %v530, %v528
      %v591 = vpack.c.b16 %v531, %v529
      %v592 = vpack.c.b16 %v534, %v532
      %v593 = vpack.c.b16 %v535, %v533
      %v594 = vpack.c.b16 %v538, %v536
      %v595 = vpack.c.b16 %v539, %v537
      %v596 = vpack.c.b16 %v542, %v540
      %v597 = vpack.c.b16 %v543, %v541
      %v598 = vpack.c.b16 %v546, %v544
      %v599 = vpack.c.b16 %v547, %v545
      %v600 = vpack.c.b16 %v550, %v548
      %v601 = vpack.c.b16 %v551, %v549
      %v602 = vpack.c.b16 %v554, %v552
      %v603 = vpack.c.b16 %v555, %v553
      %v604 = vpack.c.b16 %v558, %v556
      %v605 = vpack.c.b16 %v559, %v557
      %v606 = vpack.c.b16 %v562, %v560
      %v607 = vpack.c.b16 %v563, %v561
      %v608 = vpack.c.b16 %v566, %v564
      %v609 = vpack.c.b16 %v567, %v565
      %v610 = vpack.c.b16 %v570, %v568
      %v611 = vpack.c.b16 %v571, %v569
      %v612 = vpack.c.b16 %v574, %v572
      %v613 = vpack.c.b16 %v575, %v573
      %v614 = vpack.c.b16 %v578, %v576
      %v615 = vpack.c.b16 %v579, %v577
      %v616 = vpack.c.b16 %v582, %v580
      %v617 = vpack.c.b16 %v583, %v581
      %v618 = vpack.c.b16 %v586, %v584
      %v619 = vpack.c.b16 %v587, %v585
      %652 = vmatprep.subr.bf16.mxu0 %v589
      %653 = vmatpush1.bf16.msra.mxu0 %v588
      %654 = vmatprep.subr.bf16.mxu0 %v591
      %655 = vmatpush1.bf16.msra.mxu0 %v590
      %656 = vmatprep.subr.bf16.mxu0 %v593
      %657 = vmatpush1.bf16.msra.mxu0 %v592
      %658 = vmatprep.subr.bf16.mxu0 %v595
      %659 = vmatpush1.bf16.msra.mxu0 %v594
      %660 = vmatprep.subr.bf16.mxu0 %v597
      %661 = vmatpush1.bf16.msra.mxu0 %v596
      %662 = vmatprep.subr.bf16.mxu0 %v599
      %663 = vmatpush1.bf16.msra.mxu0 %v598
      %664 = vmatprep.subr.bf16.mxu0 %v601
      %665 = vmatpush1.bf16.msra.mxu0 %v600
      %666 = vmatprep.subr.bf16.mxu0 %v603
      %667 = vmatpush1.bf16.msra.mxu0 %v602
      %668 = vmatprep.subr.bf16.mxu0 %v605
      %669 = vmatpush1.bf16.msra.mxu0 %v604
      %670 = vmatprep.subr.bf16.mxu0 %v607
      %671 = vmatpush1.bf16.msra.mxu0 %v606
      %672 = vmatprep.subr.bf16.mxu0 %v609
      %673 = vmatpush1.bf16.msra.mxu0 %v608
      %674 = vmatprep.subr.bf16.mxu0 %v611
      %675 = vmatpush1.bf16.msra.mxu0 %v610
      %676 = vmatprep.subr.bf16.mxu0 %v613
      %677 = vmatpush1.bf16.msra.mxu0 %v612
      %678 = vmatprep.subr.bf16.mxu0 %v615
      %679 = vmatpush1.bf16.msra.mxu0 %v614
      %680 = vmatprep.subr.bf16.mxu0 %v617
      %681 = vmatpush1.bf16.msra.mxu0 %v616
      %682 = vmatprep.subr.bf16.mxu0 %v619
      %683 = vmatpush1.bf16.msra.mxu0 %v618
      %684 = vmatprep.mubr.bf16.mxu0 %v208
      %685 = vmatmul.mubr.bf16.gmra.mrb[0].mxu0 %v207
      %v686 = vpop.f32.mrb[0].mxu0
      %v687 = vadd.f32 %v484, %v686
      %v688 = vpop.f32.mrb[0].mxu0
      %v689 = vadd.f32 %v486, %v688
      %v690 = vpop.f32.mrb[0].mxu0
      %v691 = vadd.f32 %v488, %v690
      %v692 = vpop.f32.mrb[0].mxu0
      %v693 = vadd.f32 %v490, %v692
      %694 = vdwg.mxu0
      %s695 = scalar_lea.vmem %s1, 512
      %v696 = vld [vmem:[%s695] sm:$0xff]
      %v697 = vld [vmem:[%s695 + $0x8] sm:$0xff]
      %v698 = vld [vmem:[%s695 + $0x10] sm:$0xff]
      %v699 = vld [vmem:[%s695 + $0x18] sm:$0xff]
      %v700 = vld [vmem:[%s695 + $0x20] sm:$0xff]
      %v701 = vld [vmem:[%s695 + $0x28] sm:$0xff]
      %v702 = vld [vmem:[%s695 + $0x30] sm:$0xff]
      %v703 = vld [vmem:[%s695 + $0x38] sm:$0xff]
      %v704 = vld [vmem:[%s695 + $0x40] sm:$0xff]
      %v705 = vld [vmem:[%s695 + $0x48] sm:$0xff]
      %v706 = vld [vmem:[%s695 + $0x50] sm:$0xff]
      %v707 = vld [vmem:[%s695 + $0x58] sm:$0xff]
      %v708 = vld [vmem:[%s695 + $0x60] sm:$0xff]
      %v709 = vld [vmem:[%s695 + $0x68] sm:$0xff]
      %v710 = vld [vmem:[%s695 + $0x70] sm:$0xff]
      %v711 = vld [vmem:[%s695 + $0x78] sm:$0xff]
      %v712 = vld [vmem:[%s695 + $0x80] sm:$0xff]
      %v713 = vld [vmem:[%s695 + $0x88] sm:$0xff]
      %v714 = vld [vmem:[%s695 + $0x90] sm:$0xff]
      %v715 = vld [vmem:[%s695 + $0x98] sm:$0xff]
      %v716 = vld [vmem:[%s695 + $0xa0] sm:$0xff]
      %v717 = vld [vmem:[%s695 + $0xa8] sm:$0xff]
      %v718 = vld [vmem:[%s695 + $0xb0] sm:$0xff]
      %v719 = vld [vmem:[%s695 + $0xb8] sm:$0xff]
      %v720 = vld [vmem:[%s695 + $0xc0] sm:$0xff]
      %v721 = vld [vmem:[%s695 + $0xc8] sm:$0xff]
      %v722 = vld [vmem:[%s695 + $0xd0] sm:$0xff]
      %v723 = vld [vmem:[%s695 + $0xd8] sm:$0xff]
      %v724 = vld [vmem:[%s695 + $0xe0] sm:$0xff]
      %v725 = vld [vmem:[%s695 + $0xe8] sm:$0xff]
      %v726 = vld [vmem:[%s695 + $0xf0] sm:$0xff]
      %v727 = vld [vmem:[%s695 + $0xf8] sm:$0xff]
      %728 = vrot.lane.b32.xlu0 %v207, 96
      %v729 = vpop.permute.xlu0 %728
      %730 = vrot.lane.b32.xlu0 %v208, 96
      %v731 = vpop.permute.xlu0 %730
      %732 = vrot.lane.b32.xlu0 %v241, 96
      %v733 = vpop.permute.xlu0 %732
      %vm734 = vcmask 785408
      %v735 = vsel %vm734, %v729, %v731
      %v736 = vsel %vm734, %v731, %v733
      %v771 = vunpack.c.l.b16 %v696
      %v772 = vunpack.c.h.b16 %v696
      %v773 = vunpack.c.l.b16 %v697
      %v774 = vunpack.c.h.b16 %v697
      %v775 = vunpack.c.l.b16 %v698
      %v776 = vunpack.c.h.b16 %v698
      %v777 = vunpack.c.l.b16 %v699
      %v778 = vunpack.c.h.b16 %v699
      %v779 = vunpack.c.l.b16 %v700
      %v780 = vunpack.c.h.b16 %v700
      %v781 = vunpack.c.l.b16 %v701
      %v782 = vunpack.c.h.b16 %v701
      %v783 = vunpack.c.l.b16 %v702
      %v784 = vunpack.c.h.b16 %v702
      %v785 = vunpack.c.l.b16 %v703
      %v786 = vunpack.c.h.b16 %v703
      %v787 = vunpack.c.l.b16 %v704
      %v788 = vunpack.c.h.b16 %v704
      %v789 = vunpack.c.l.b16 %v705
      %v790 = vunpack.c.h.b16 %v705
      %v791 = vunpack.c.l.b16 %v706
      %v792 = vunpack.c.h.b16 %v706
      %v793 = vunpack.c.l.b16 %v707
      %v794 = vunpack.c.h.b16 %v707
      %v795 = vunpack.c.l.b16 %v708
      %v796 = vunpack.c.h.b16 %v708
      %v797 = vunpack.c.l.b16 %v709
      %v798 = vunpack.c.h.b16 %v709
      %v799 = vunpack.c.l.b16 %v710
      %v800 = vunpack.c.h.b16 %v710
      %v801 = vunpack.c.l.b16 %v711
      %v802 = vunpack.c.h.b16 %v711
      %v803 = vunpack.c.l.b16 %v712
      %v804 = vunpack.c.h.b16 %v712
      %v805 = vunpack.c.l.b16 %v713
      %v806 = vunpack.c.h.b16 %v713
      %v807 = vunpack.c.l.b16 %v714
      %v808 = vunpack.c.h.b16 %v714
      %v809 = vunpack.c.l.b16 %v715
      %v810 = vunpack.c.h.b16 %v715
      %v811 = vunpack.c.l.b16 %v716
      %v812 = vunpack.c.h.b16 %v716
      %v813 = vunpack.c.l.b16 %v717
      %v814 = vunpack.c.h.b16 %v717
      %v815 = vunpack.c.l.b16 %v718
      %v816 = vunpack.c.h.b16 %v718
      %v817 = vunpack.c.l.b16 %v719
      %v818 = vunpack.c.h.b16 %v719
      %v819 = vunpack.c.l.b16 %v720
      %v820 = vunpack.c.h.b16 %v720
      %v821 = vunpack.c.l.b16 %v721
      %v822 = vunpack.c.h.b16 %v721
      %v823 = vunpack.c.l.b16 %v722
      %v824 = vunpack.c.h.b16 %v722
      %v825 = vunpack.c.l.b16 %v723
      %v826 = vunpack.c.h.b16 %v723
      %v827 = vunpack.c.l.b16 %v724
      %v828 = vunpack.c.h.b16 %v724
      %v829 = vunpack.c.l.b16 %v725
      %v830 = vunpack.c.h.b16 %v725
      %v831 = vunpack.c.l.b16 %v726
      %v832 = vunpack.c.h.b16 %v726
      %v833 = vunpack.c.l.b16 %v727
      %v834 = vunpack.c.h.b16 %v727
      %v835 = vpack.c.b16 %v773, %v771
      %v836 = vpack.c.b16 %v774, %v772
      %v837 = vpack.c.b16 %v777, %v775
      %v838 = vpack.c.b16 %v778, %v776
      %v839 = vpack.c.b16 %v781, %v779
      %v840 = vpack.c.b16 %v782, %v780
      %v841 = vpack.c.b16 %v785, %v783
      %v842 = vpack.c.b16 %v786, %v784
      %v843 = vpack.c.b16 %v789, %v787
      %v844 = vpack.c.b16 %v790, %v788
      %v845 = vpack.c.b16 %v793, %v791
      %v846 = vpack.c.b16 %v794, %v792
      %v847 = vpack.c.b16 %v797, %v795
      %v848 = vpack.c.b16 %v798, %v796
      %v849 = vpack.c.b16 %v801, %v799
      %v850 = vpack.c.b16 %v802, %v800
      %v851 = vpack.c.b16 %v805, %v803
      %v852 = vpack.c.b16 %v806, %v804
      %v853 = vpack.c.b16 %v809, %v807
      %v854 = vpack.c.b16 %v810, %v808
      %v855 = vpack.c.b16 %v813, %v811
      %v856 = vpack.c.b16 %v814, %v812
      %v857 = vpack.c.b16 %v817, %v815
      %v858 = vpack.c.b16 %v818, %v816
      %v859 = vpack.c.b16 %v821, %v819
      %v860 = vpack.c.b16 %v822, %v820
      %v861 = vpack.c.b16 %v825, %v823
      %v862 = vpack.c.b16 %v826, %v824
      %v863 = vpack.c.b16 %v829, %v827
      %v864 = vpack.c.b16 %v830, %v828
      %v865 = vpack.c.b16 %v833, %v831
      %v866 = vpack.c.b16 %v834, %v832
      %899 = vmatprep.subr.bf16.mxu0 %v836
      %900 = vmatpush1.bf16.msra.mxu0 %v835
      %901 = vmatprep.subr.bf16.mxu0 %v838
      %902 = vmatpush1.bf16.msra.mxu0 %v837
      %903 = vmatprep.subr.bf16.mxu0 %v840
      %904 = vmatpush1.bf16.msra.mxu0 %v839
      %905 = vmatprep.subr.bf16.mxu0 %v842
      %906 = vmatpush1.bf16.msra.mxu0 %v841
      %907 = vmatprep.subr.bf16.mxu0 %v844
      %908 = vmatpush1.bf16.msra.mxu0 %v843
      %909 = vmatprep.subr.bf16.mxu0 %v846
      %910 = vmatpush1.bf16.msra.mxu0 %v845
      %911 = vmatprep.subr.bf16.mxu0 %v848
      %912 = vmatpush1.bf16.msra.mxu0 %v847
      %913 = vmatprep.subr.bf16.mxu0 %v850
      %914 = vmatpush1.bf16.msra.mxu0 %v849
      %915 = vmatprep.subr.bf16.mxu0 %v852
      %916 = vmatpush1.bf16.msra.mxu0 %v851
      %917 = vmatprep.subr.bf16.mxu0 %v854
      %918 = vmatpush1.bf16.msra.mxu0 %v853
      %919 = vmatprep.subr.bf16.mxu0 %v856
      %920 = vmatpush1.bf16.msra.mxu0 %v855
      %921 = vmatprep.subr.bf16.mxu0 %v858
      %922 = vmatpush1.bf16.msra.mxu0 %v857
      %923 = vmatprep.subr.bf16.mxu0 %v860
      %924 = vmatpush1.bf16.msra.mxu0 %v859
      %925 = vmatprep.subr.bf16.mxu0 %v862
      %926 = vmatpush1.bf16.msra.mxu0 %v861
      %927 = vmatprep.subr.bf16.mxu0 %v864
      %928 = vmatpush1.bf16.msra.mxu0 %v863
      %929 = vmatprep.subr.bf16.mxu0 %v866
      %930 = vmatpush1.bf16.msra.mxu0 %v865
      %931 = vmatprep.mubr.bf16.mxu0 %v736
      %932 = vmatmul.mubr.bf16.gmra.mrb[0].mxu0 %v735
      %v933 = vpop.f32.mrb[0].mxu0
      %v934 = vadd.f32 0.0, %v933
      %v935 = vpop.f32.mrb[0].mxu0
      %v936 = vadd.f32 0.0, %v935
      %v937 = vpop.f32.mrb[0].mxu0
      %v938 = vadd.f32 0.0, %v937
      %v939 = vpop.f32.mrb[0].mxu0
      %v940 = vadd.f32 0.0, %v939
      %941 = vdwg.mxu0
      %v942 = vadd.f32 %v687, %v934
      %v943 = vadd.f32 %v689, %v936
      %v944 = vadd.f32 %v691, %v938
      %v945 = vadd.f32 %v693, %v940
      %v946 = vpack.c.bf16 %v204, %v204
      %v947 = vpack.c.bf16 %v205, %v205
      %s948 = scalar_lea.vmem %s1, 768
      %v949 = vld [vmem:[%s948] sm:$0xff]
      %v950 = vld [vmem:[%s948 + $0x8] sm:$0xff]
      %v951 = vld [vmem:[%s948 + $0x10] sm:$0xff]
      %v952 = vld [vmem:[%s948 + $0x18] sm:$0xff]
      %v953 = vld [vmem:[%s948 + $0x20] sm:$0xff]
      %v954 = vld [vmem:[%s948 + $0x28] sm:$0xff]
      %v955 = vld [vmem:[%s948 + $0x30] sm:$0xff]
      %v956 = vld [vmem:[%s948 + $0x38] sm:$0xff]
      %v957 = vld [vmem:[%s948 + $0x40] sm:$0xff]
      %v958 = vld [vmem:[%s948 + $0x48] sm:$0xff]
      %v959 = vld [vmem:[%s948 + $0x50] sm:$0xff]
      %v960 = vld [vmem:[%s948 + $0x58] sm:$0xff]
      %v961 = vld [vmem:[%s948 + $0x60] sm:$0xff]
      %v962 = vld [vmem:[%s948 + $0x68] sm:$0xff]
      %v963 = vld [vmem:[%s948 + $0x70] sm:$0xff]
      %v964 = vld [vmem:[%s948 + $0x78] sm:$0xff]
      %v965 = vld [vmem:[%s948 + $0x80] sm:$0xff]
      %v966 = vld [vmem:[%s948 + $0x88] sm:$0xff]
      %v967 = vld [vmem:[%s948 + $0x90] sm:$0xff]
      %v968 = vld [vmem:[%s948 + $0x98] sm:$0xff]
      %v969 = vld [vmem:[%s948 + $0xa0] sm:$0xff]
      %v970 = vld [vmem:[%s948 + $0xa8] sm:$0xff]
      %v971 = vld [vmem:[%s948 + $0xb0] sm:$0xff]
      %v972 = vld [vmem:[%s948 + $0xb8] sm:$0xff]
      %v973 = vld [vmem:[%s948 + $0xc0] sm:$0xff]
      %v974 = vld [vmem:[%s948 + $0xc8] sm:$0xff]
      %v975 = vld [vmem:[%s948 + $0xd0] sm:$0xff]
      %v976 = vld [vmem:[%s948 + $0xd8] sm:$0xff]
      %v977 = vld [vmem:[%s948 + $0xe0] sm:$0xff]
      %v978 = vld [vmem:[%s948 + $0xe8] sm:$0xff]
      %v979 = vld [vmem:[%s948 + $0xf0] sm:$0xff]
      %v980 = vld [vmem:[%s948 + $0xf8] sm:$0xff]
      %vm981 = vsmask.f32 7424
      %v983 = vshrl.u32 %v207, 16
      %v985 = vshll.u32 %v207, 16
      %v987 = vrot.slane %v985, 1
      %v988 = vor.u32 %v983, %v987
      %v990 = vshll.u32 %v946, 16
      %v992 = vrot.slane %v990, 1
      %v993 = vsel %vm981, %v988, %v992
      %v995 = vshrl.u32 %v208, 16
      %v997 = vshll.u32 %v208, 16
      %v999 = vrot.slane %v997, 1
      %v1000 = vor.u32 %v995, %v999
      %v1002 = vshll.u32 %v947, 16
      %v1004 = vrot.slane %v1002, 1
      %v1005 = vsel %vm981, %v1000, %v1004
      %v1040 = vunpack.c.l.b16 %v949
      %v1041 = vunpack.c.h.b16 %v949
      %v1042 = vunpack.c.l.b16 %v950
      %v1043 = vunpack.c.h.b16 %v950
      %v1044 = vunpack.c.l.b16 %v951
      %v1045 = vunpack.c.h.b16 %v951
      %v1046 = vunpack.c.l.b16 %v952
      %v1047 = vunpack.c.h.b16 %v952
      %v1048 = vunpack.c.l.b16 %v953
      %v1049 = vunpack.c.h.b16 %v953
      %v1050 = vunpack.c.l.b16 %v954
      %v1051 = vunpack.c.h.b16 %v954
      %v1052 = vunpack.c.l.b16 %v955
      %v1053 = vunpack.c.h.b16 %v955
      %v1054 = vunpack.c.l.b16 %v956
      %v1055 = vunpack.c.h.b16 %v956
      %v1056 = vunpack.c.l.b16 %v957
      %v1057 = vunpack.c.h.b16 %v957
      %v1058 = vunpack.c.l.b16 %v958
      %v1059 = vunpack.c.h.b16 %v958
      %v1060 = vunpack.c.l.b16 %v959
      %v1061 = vunpack.c.h.b16 %v959
      %v1062 = vunpack.c.l.b16 %v960
      %v1063 = vunpack.c.h.b16 %v960
      %v1064 = vunpack.c.l.b16 %v961
      %v1065 = vunpack.c.h.b16 %v961
      %v1066 = vunpack.c.l.b16 %v962
      %v1067 = vunpack.c.h.b16 %v962
      %v1068 = vunpack.c.l.b16 %v963
      %v1069 = vunpack.c.h.b16 %v963
      %v1070 = vunpack.c.l.b16 %v964
      %v1071 = vunpack.c.h.b16 %v964
      %v1072 = vunpack.c.l.b16 %v965
      %v1073 = vunpack.c.h.b16 %v965
      %v1074 = vunpack.c.l.b16 %v966
      %v1075 = vunpack.c.h.b16 %v966
      %v1076 = vunpack.c.l.b16 %v967
      %v1077 = vunpack.c.h.b16 %v967
      %v1078 = vunpack.c.l.b16 %v968
      %v1079 = vunpack.c.h.b16 %v968
      %v1080 = vunpack.c.l.b16 %v969
      %v1081 = vunpack.c.h.b16 %v969
      %v1082 = vunpack.c.l.b16 %v970
      %v1083 = vunpack.c.h.b16 %v970
      %v1084 = vunpack.c.l.b16 %v971
      %v1085 = vunpack.c.h.b16 %v971
      %v1086 = vunpack.c.l.b16 %v972
      %v1087 = vunpack.c.h.b16 %v972
      %v1088 = vunpack.c.l.b16 %v973
      %v1089 = vunpack.c.h.b16 %v973
      %v1090 = vunpack.c.l.b16 %v974
      %v1091 = vunpack.c.h.b16 %v974
      %v1092 = vunpack.c.l.b16 %v975
      %v1093 = vunpack.c.h.b16 %v975
      %v1094 = vunpack.c.l.b16 %v976
      %v1095 = vunpack.c.h.b16 %v976
      %v1096 = vunpack.c.l.b16 %v977
      %v1097 = vunpack.c.h.b16 %v977
      %v1098 = vunpack.c.l.b16 %v978
      %v1099 = vunpack.c.h.b16 %v978
      %v1100 = vunpack.c.l.b16 %v979
      %v1101 = vunpack.c.h.b16 %v979
      %v1102 = vunpack.c.l.b16 %v980
      %v1103 = vunpack.c.h.b16 %v980
      %v1104 = vpack.c.b16 %v1042, %v1040
      %v1105 = vpack.c.b16 %v1043, %v1041
      %v1106 = vpack.c.b16 %v1046, %v1044
      %v1107 = vpack.c.b16 %v1047, %v1045
      %v1108 = vpack.c.b16 %v1050, %v1048
      %v1109 = vpack.c.b16 %v1051, %v1049
      %v1110 = vpack.c.b16 %v1054, %v1052
      %v1111 = vpack.c.b16 %v1055, %v1053
      %v1112 = vpack.c.b16 %v1058, %v1056
      %v1113 = vpack.c.b16 %v1059, %v1057
      %v1114 = vpack.c.b16 %v1062, %v1060
      %v1115 = vpack.c.b16 %v1063, %v1061
      %v1116 = vpack.c.b16 %v1066, %v1064
      %v1117 = vpack.c.b16 %v1067, %v1065
      %v1118 = vpack.c.b16 %v1070, %v1068
      %v1119 = vpack.c.b16 %v1071, %v1069
      %v1120 = vpack.c.b16 %v1074, %v1072
      %v1121 = vpack.c.b16 %v1075, %v1073
      %v1122 = vpack.c.b16 %v1078, %v1076
      %v1123 = vpack.c.b16 %v1079, %v1077
      %v1124 = vpack.c.b16 %v1082, %v1080
      %v1125 = vpack.c.b16 %v1083, %v1081
      %v1126 = vpack.c.b16 %v1086, %v1084
      %v1127 = vpack.c.b16 %v1087, %v1085
      %v1128 = vpack.c.b16 %v1090, %v1088
      %v1129 = vpack.c.b16 %v1091, %v1089
      %v1130 = vpack.c.b16 %v1094, %v1092
      %v1131 = vpack.c.b16 %v1095, %v1093
      %v1132 = vpack.c.b16 %v1098, %v1096
      %v1133 = vpack.c.b16 %v1099, %v1097
      %v1134 = vpack.c.b16 %v1102, %v1100
      %v1135 = vpack.c.b16 %v1103, %v1101
      %1168 = vmatprep.subr.bf16.mxu0 %v1105
      %1169 = vmatpush1.bf16.msra.mxu0 %v1104
      %1170 = vmatprep.subr.bf16.mxu0 %v1107
      %1171 = vmatpush1.bf16.msra.mxu0 %v1106
      %1172 = vmatprep.subr.bf16.mxu0 %v1109
      %1173 = vmatpush1.bf16.msra.mxu0 %v1108
      %1174 = vmatprep.subr.bf16.mxu0 %v1111
      %1175 = vmatpush1.bf16.msra.mxu0 %v1110
      %1176 = vmatprep.subr.bf16.mxu0 %v1113
      %1177 = vmatpush1.bf16.msra.mxu0 %v1112
      %1178 = vmatprep.subr.bf16.mxu0 %v1115
      %1179 = vmatpush1.bf16.msra.mxu0 %v1114
      %1180 = vmatprep.subr.bf16.mxu0 %v1117
      %1181 = vmatpush1.bf16.msra.mxu0 %v1116
      %1182 = vmatprep.subr.bf16.mxu0 %v1119
      %1183 = vmatpush1.bf16.msra.mxu0 %v1118
      %1184 = vmatprep.subr.bf16.mxu0 %v1121
      %1185 = vmatpush1.bf16.msra.mxu0 %v1120
      %1186 = vmatprep.subr.bf16.mxu0 %v1123
      %1187 = vmatpush1.bf16.msra.mxu0 %v1122
      %1188 = vmatprep.subr.bf16.mxu0 %v1125
      %1189 = vmatpush1.bf16.msra.mxu0 %v1124
      %1190 = vmatprep.subr.bf16.mxu0 %v1127
      %1191 = vmatpush1.bf16.msra.mxu0 %v1126
      %1192 = vmatprep.subr.bf16.mxu0 %v1129
      %1193 = vmatpush1.bf16.msra.mxu0 %v1128
      %1194 = vmatprep.subr.bf16.mxu0 %v1131
      %1195 = vmatpush1.bf16.msra.mxu0 %v1130
      %1196 = vmatprep.subr.bf16.mxu0 %v1133
      %1197 = vmatpush1.bf16.msra.mxu0 %v1132
      %1198 = vmatprep.subr.bf16.mxu0 %v1135
      %1199 = vmatpush1.bf16.msra.mxu0 %v1134
      %1200 = vmatprep.mubr.bf16.mxu0 %v1005
      %1201 = vmatmul.mubr.bf16.gmra.mrb[0].mxu0 %v993
      %v1202 = vpop.f32.mrb[0].mxu0
      %v1203 = vadd.f32 0.0, %v1202
      %v1204 = vpop.f32.mrb[0].mxu0
      %v1205 = vadd.f32 0.0, %v1204
      %v1206 = vpop.f32.mrb[0].mxu0
      %v1207 = vadd.f32 0.0, %v1206
      %v1208 = vpop.f32.mrb[0].mxu0
      %v1209 = vadd.f32 0.0, %v1208
      %1210 = vdwg.mxu0
      %v1211 = vadd.f32 %v942, %v1203
      %v1212 = vadd.f32 %v943, %v1205
      %v1213 = vadd.f32 %v944, %v1207
      %v1214 = vadd.f32 %v945, %v1209
      %v1215 = vpack.c.bf16 %v206, %v206
      %s1216 = scalar_lea.vmem %s1, 1024
      %v1217 = vld [vmem:[%s1216] sm:$0xff]
      %v1218 = vld [vmem:[%s1216 + $0x8] sm:$0xff]
      %v1219 = vld [vmem:[%s1216 + $0x10] sm:$0xff]
      %v1220 = vld [vmem:[%s1216 + $0x18] sm:$0xff]
      %v1221 = vld [vmem:[%s1216 + $0x20] sm:$0xff]
      %v1222 = vld [vmem:[%s1216 + $0x28] sm:$0xff]
      %v1223 = vld [vmem:[%s1216 + $0x30] sm:$0xff]
      %v1224 = vld [vmem:[%s1216 + $0x38] sm:$0xff]
      %v1225 = vld [vmem:[%s1216 + $0x40] sm:$0xff]
      %v1226 = vld [vmem:[%s1216 + $0x48] sm:$0xff]
      %v1227 = vld [vmem:[%s1216 + $0x50] sm:$0xff]
      %v1228 = vld [vmem:[%s1216 + $0x58] sm:$0xff]
      %v1229 = vld [vmem:[%s1216 + $0x60] sm:$0xff]
      %v1230 = vld [vmem:[%s1216 + $0x68] sm:$0xff]
      %v1231 = vld [vmem:[%s1216 + $0x70] sm:$0xff]
      %v1232 = vld [vmem:[%s1216 + $0x78] sm:$0xff]
      %v1233 = vld [vmem:[%s1216 + $0x80] sm:$0xff]
      %v1234 = vld [vmem:[%s1216 + $0x88] sm:$0xff]
      %v1235 = vld [vmem:[%s1216 + $0x90] sm:$0xff]
      %v1236 = vld [vmem:[%s1216 + $0x98] sm:$0xff]
      %v1237 = vld [vmem:[%s1216 + $0xa0] sm:$0xff]
      %v1238 = vld [vmem:[%s1216 + $0xa8] sm:$0xff]
      %v1239 = vld [vmem:[%s1216 + $0xb0] sm:$0xff]
      %v1240 = vld [vmem:[%s1216 + $0xb8] sm:$0xff]
      %v1241 = vld [vmem:[%s1216 + $0xc0] sm:$0xff]
      %v1242 = vld [vmem:[%s1216 + $0xc8] sm:$0xff]
      %v1243 = vld [vmem:[%s1216 + $0xd0] sm:$0xff]
      %v1244 = vld [vmem:[%s1216 + $0xd8] sm:$0xff]
      %v1245 = vld [vmem:[%s1216 + $0xe0] sm:$0xff]
      %v1246 = vld [vmem:[%s1216 + $0xe8] sm:$0xff]
      %v1247 = vld [vmem:[%s1216 + $0xf0] sm:$0xff]
      %v1248 = vld [vmem:[%s1216 + $0xf8] sm:$0xff]
      %v1250 = vshrl.u32 %v241, 16
      %v1252 = vshll.u32 %v241, 16
      %v1254 = vrot.slane %v1252, 1
      %v1255 = vor.u32 %v1250, %v1254
      %v1257 = vshll.u32 %v1215, 16
      %v1259 = vrot.slane %v1257, 1
      %v1260 = vsel %vm981, %v1255, %v1259
      %1261 = vrot.lane.b32.xlu0 %v993, 112
      %v1262 = vpop.permute.xlu0 %1261
      %1263 = vrot.lane.b32.xlu0 %v1005, 112
      %v1264 = vpop.permute.xlu0 %1263
      %1265 = vrot.lane.b32.xlu0 %v1260, 112
      %v1266 = vpop.permute.xlu0 %1265
      %v1267 = vsel %vm284, %v1262, %v1264
      %v1268 = vsel %vm284, %v1264, %v1266
      %v1303 = vunpack.c.l.b16 %v1217
      %v1304 = vunpack.c.h.b16 %v1217
      %v1305 = vunpack.c.l.b16 %v1218
      %v1306 = vunpack.c.h.b16 %v1218
      %v1307 = vunpack.c.l.b16 %v1219
      %v1308 = vunpack.c.h.b16 %v1219
      %v1309 = vunpack.c.l.b16 %v1220
      %v1310 = vunpack.c.h.b16 %v1220
      %v1311 = vunpack.c.l.b16 %v1221
      %v1312 = vunpack.c.h.b16 %v1221
      %v1313 = vunpack.c.l.b16 %v1222
      %v1314 = vunpack.c.h.b16 %v1222
      %v1315 = vunpack.c.l.b16 %v1223
      %v1316 = vunpack.c.h.b16 %v1223
      %v1317 = vunpack.c.l.b16 %v1224
      %v1318 = vunpack.c.h.b16 %v1224
      %v1319 = vunpack.c.l.b16 %v1225
      %v1320 = vunpack.c.h.b16 %v1225
      %v1321 = vunpack.c.l.b16 %v1226
      %v1322 = vunpack.c.h.b16 %v1226
      %v1323 = vunpack.c.l.b16 %v1227
      %v1324 = vunpack.c.h.b16 %v1227
      %v1325 = vunpack.c.l.b16 %v1228
      %v1326 = vunpack.c.h.b16 %v1228
      %v1327 = vunpack.c.l.b16 %v1229
      %v1328 = vunpack.c.h.b16 %v1229
      %v1329 = vunpack.c.l.b16 %v1230
      %v1330 = vunpack.c.h.b16 %v1230
      %v1331 = vunpack.c.l.b16 %v1231
      %v1332 = vunpack.c.h.b16 %v1231
      %v1333 = vunpack.c.l.b16 %v1232
      %v1334 = vunpack.c.h.b16 %v1232
      %v1335 = vunpack.c.l.b16 %v1233
      %v1336 = vunpack.c.h.b16 %v1233
      %v1337 = vunpack.c.l.b16 %v1234
      %v1338 = vunpack.c.h.b16 %v1234
      %v1339 = vunpack.c.l.b16 %v1235
      %v1340 = vunpack.c.h.b16 %v1235
      %v1341 = vunpack.c.l.b16 %v1236
      %v1342 = vunpack.c.h.b16 %v1236
      %v1343 = vunpack.c.l.b16 %v1237
      %v1344 = vunpack.c.h.b16 %v1237
      %v1345 = vunpack.c.l.b16 %v1238
      %v1346 = vunpack.c.h.b16 %v1238
      %v1347 = vunpack.c.l.b16 %v1239
      %v1348 = vunpack.c.h.b16 %v1239
      %v1349 = vunpack.c.l.b16 %v1240
      %v1350 = vunpack.c.h.b16 %v1240
      %v1351 = vunpack.c.l.b16 %v1241
      %v1352 = vunpack.c.h.b16 %v1241
      %v1353 = vunpack.c.l.b16 %v1242
      %v1354 = vunpack.c.h.b16 %v1242
      %v1355 = vunpack.c.l.b16 %v1243
      %v1356 = vunpack.c.h.b16 %v1243
      %v1357 = vunpack.c.l.b16 %v1244
      %v1358 = vunpack.c.h.b16 %v1244
      %v1359 = vunpack.c.l.b16 %v1245
      %v1360 = vunpack.c.h.b16 %v1245
      %v1361 = vunpack.c.l.b16 %v1246
      %v1362 = vunpack.c.h.b16 %v1246
      %v1363 = vunpack.c.l.b16 %v1247
      %v1364 = vunpack.c.h.b16 %v1247
      %v1365 = vunpack.c.l.b16 %v1248
      %v1366 = vunpack.c.h.b16 %v1248
      %v1367 = vpack.c.b16 %v1305, %v1303
      %v1368 = vpack.c.b16 %v1306, %v1304
      %v1369 = vpack.c.b16 %v1309, %v1307
      %v1370 = vpack.c.b16 %v1310, %v1308
      %v1371 = vpack.c.b16 %v1313, %v1311
      %v1372 = vpack.c.b16 %v1314, %v1312
      %v1373 = vpack.c.b16 %v1317, %v1315
      %v1374 = vpack.c.b16 %v1318, %v1316
      %v1375 = vpack.c.b16 %v1321, %v1319
      %v1376 = vpack.c.b16 %v1322, %v1320
      %v1377 = vpack.c.b16 %v1325, %v1323
      %v1378 = vpack.c.b16 %v1326, %v1324
      %v1379 = vpack.c.b16 %v1329, %v1327
      %v1380 = vpack.c.b16 %v1330, %v1328
      %v1381 = vpack.c.b16 %v1333, %v1331
      %v1382 = vpack.c.b16 %v1334, %v1332
      %v1383 = vpack.c.b16 %v1337, %v1335
      %v1384 = vpack.c.b16 %v1338, %v1336
      %v1385 = vpack.c.b16 %v1341, %v1339
      %v1386 = vpack.c.b16 %v1342, %v1340
      %v1387 = vpack.c.b16 %v1345, %v1343
      %v1388 = vpack.c.b16 %v1346, %v1344
      %v1389 = vpack.c.b16 %v1349, %v1347
      %v1390 = vpack.c.b16 %v1350, %v1348
      %v1391 = vpack.c.b16 %v1353, %v1351
      %v1392 = vpack.c.b16 %v1354, %v1352
      %v1393 = vpack.c.b16 %v1357, %v1355
      %v1394 = vpack.c.b16 %v1358, %v1356
      %v1395 = vpack.c.b16 %v1361, %v1359
      %v1396 = vpack.c.b16 %v1362, %v1360
      %v1397 = vpack.c.b16 %v1365, %v1363
      %v1398 = vpack.c.b16 %v1366, %v1364
      %1431 = vmatprep.subr.bf16.mxu0 %v1368
      %1432 = vmatpush1.bf16.msra.mxu0 %v1367
      %1433 = vmatprep.subr.bf16.mxu0 %v1370
      %1434 = vmatpush1.bf16.msra.mxu0 %v1369
      %1435 = vmatprep.subr.bf16.mxu0 %v1372
      %1436 = vmatpush1.bf16.msra.mxu0 %v1371
      %1437 = vmatprep.subr.bf16.mxu0 %v1374
      %1438 = vmatpush1.bf16.msra.mxu0 %v1373
      %1439 = vmatprep.subr.bf16.mxu0 %v1376
      %1440 = vmatpush1.bf16.msra.mxu0 %v1375
      %1441 = vmatprep.subr.bf16.mxu0 %v1378
      %1442 = vmatpush1.bf16.msra.mxu0 %v1377
      %1443 = vmatprep.subr.bf16.mxu0 %v1380
      %1444 = vmatpush1.bf16.msra.mxu0 %v1379
      %1445 = vmatprep.subr.bf16.mxu0 %v1382
      %1446 = vmatpush1.bf16.msra.mxu0 %v1381
      %1447 = vmatprep.subr.bf16.mxu0 %v1384
      %1448 = vmatpush1.bf16.msra.mxu0 %v1383
      %1449 = vmatprep.subr.bf16.mxu0 %v1386
      %1450 = vmatpush1.bf16.msra.mxu0 %v1385
      %1451 = vmatprep.subr.bf16.mxu0 %v1388
      %1452 = vmatpush1.bf16.msra.mxu0 %v1387
      %1453 = vmatprep.subr.bf16.mxu0 %v1390
      %1454 = vmatpush1.bf16.msra.mxu0 %v1389
      %1455 = vmatprep.subr.bf16.mxu0 %v1392
      %1456 = vmatpush1.bf16.msra.mxu0 %v1391
      %1457 = vmatprep.subr.bf16.mxu0 %v1394
      %1458 = vmatpush1.bf16.msra.mxu0 %v1393
      %1459 = vmatprep.subr.bf16.mxu0 %v1396
      %1460 = vmatpush1.bf16.msra.mxu0 %v1395
      %1461 = vmatprep.subr.bf16.mxu0 %v1398
      %1462 = vmatpush1.bf16.msra.mxu0 %v1397
      %1463 = vmatprep.mubr.bf16.mxu0 %v1268
      %1464 = vmatmul.mubr.bf16.gmra.mrb[0].mxu0 %v1267
      %v1465 = vpop.f32.mrb[0].mxu0
      %v1466 = vadd.f32 0.0, %v1465
      %v1467 = vpop.f32.mrb[0].mxu0
      %v1468 = vadd.f32 0.0, %v1467
      %v1469 = vpop.f32.mrb[0].mxu0
      %v1470 = vadd.f32 0.0, %v1469
      %v1471 = vpop.f32.mrb[0].mxu0
      %v1472 = vadd.f32 0.0, %v1471
      %1473 = vdwg.mxu0
      %v1474 = vadd.f32 %v1211, %v1466
      %v1475 = vadd.f32 %v1212, %v1468
      %v1476 = vadd.f32 %v1213, %v1470
      %v1477 = vadd.f32 %v1214, %v1472
      %s1478 = scalar_lea.vmem %s1, 1280
      %v1479 = vld [vmem:[%s1478] sm:$0xff]
      %v1480 = vld [vmem:[%s1478 + $0x8] sm:$0xff]
      %v1481 = vld [vmem:[%s1478 + $0x10] sm:$0xff]
      %v1482 = vld [vmem:[%s1478 + $0x18] sm:$0xff]
      %v1483 = vld [vmem:[%s1478 + $0x20] sm:$0xff]
      %v1484 = vld [vmem:[%s1478 + $0x28] sm:$0xff]
      %v1485 = vld [vmem:[%s1478 + $0x30] sm:$0xff]
      %v1486 = vld [vmem:[%s1478 + $0x38] sm:$0xff]
      %v1487 = vld [vmem:[%s1478 + $0x40] sm:$0xff]
      %v1488 = vld [vmem:[%s1478 + $0x48] sm:$0xff]
      %v1489 = vld [vmem:[%s1478 + $0x50] sm:$0xff]
      %v1490 = vld [vmem:[%s1478 + $0x58] sm:$0xff]
      %v1491 = vld [vmem:[%s1478 + $0x60] sm:$0xff]
      %v1492 = vld [vmem:[%s1478 + $0x68] sm:$0xff]
      %v1493 = vld [vmem:[%s1478 + $0x70] sm:$0xff]
      %v1494 = vld [vmem:[%s1478 + $0x78] sm:$0xff]
      %v1495 = vld [vmem:[%s1478 + $0x80] sm:$0xff]
      %v1496 = vld [vmem:[%s1478 + $0x88] sm:$0xff]
      %v1497 = vld [vmem:[%s1478 + $0x90] sm:$0xff]
      %v1498 = vld [vmem:[%s1478 + $0x98] sm:$0xff]
      %v1499 = vld [vmem:[%s1478 + $0xa0] sm:$0xff]
      %v1500 = vld [vmem:[%s1478 + $0xa8] sm:$0xff]
      %v1501 = vld [vmem:[%s1478 + $0xb0] sm:$0xff]
      %v1502 = vld [vmem:[%s1478 + $0xb8] sm:$0xff]
      %v1503 = vld [vmem:[%s1478 + $0xc0] sm:$0xff]
      %v1504 = vld [vmem:[%s1478 + $0xc8] sm:$0xff]
      %v1505 = vld [vmem:[%s1478 + $0xd0] sm:$0xff]
      %v1506 = vld [vmem:[%s1478 + $0xd8] sm:$0xff]
      %v1507 = vld [vmem:[%s1478 + $0xe0] sm:$0xff]
      %v1508 = vld [vmem:[%s1478 + $0xe8] sm:$0xff]
      %v1509 = vld [vmem:[%s1478 + $0xf0] sm:$0xff]
      %v1510 = vld [vmem:[%s1478 + $0xf8] sm:$0xff]
      %1511 = vrot.lane.b32.xlu0 %v993, 96
      %v1512 = vpop.permute.xlu0 %1511
      %1513 = vrot.lane.b32.xlu0 %v1005, 96
      %v1514 = vpop.permute.xlu0 %1513
      %1515 = vrot.lane.b32.xlu0 %v1260, 96
      %v1516 = vpop.permute.xlu0 %1515
      %v1517 = vsel %vm734, %v1512, %v1514
      %v1518 = vsel %vm734, %v1514, %v1516
      %v1553 = vunpack.c.l.b16 %v1479
      %v1554 = vunpack.c.h.b16 %v1479
      %v1555 = vunpack.c.l.b16 %v1480
      %v1556 = vunpack.c.h.b16 %v1480
      %v1557 = vunpack.c.l.b16 %v1481
      %v1558 = vunpack.c.h.b16 %v1481
      %v1559 = vunpack.c.l.b16 %v1482
      %v1560 = vunpack.c.h.b16 %v1482
      %v1561 = vunpack.c.l.b16 %v1483
      %v1562 = vunpack.c.h.b16 %v1483
      %v1563 = vunpack.c.l.b16 %v1484
      %v1564 = vunpack.c.h.b16 %v1484
      %v1565 = vunpack.c.l.b16 %v1485
      %v1566 = vunpack.c.h.b16 %v1485
      %v1567 = vunpack.c.l.b16 %v1486
      %v1568 = vunpack.c.h.b16 %v1486
      %v1569 = vunpack.c.l.b16 %v1487
      %v1570 = vunpack.c.h.b16 %v1487
      %v1571 = vunpack.c.l.b16 %v1488
      %v1572 = vunpack.c.h.b16 %v1488
      %v1573 = vunpack.c.l.b16 %v1489
      %v1574 = vunpack.c.h.b16 %v1489
      %v1575 = vunpack.c.l.b16 %v1490
      %v1576 = vunpack.c.h.b16 %v1490
      %v1577 = vunpack.c.l.b16 %v1491
      %v1578 = vunpack.c.h.b16 %v1491
      %v1579 = vunpack.c.l.b16 %v1492
      %v1580 = vunpack.c.h.b16 %v1492
      %v1581 = vunpack.c.l.b16 %v1493
      %v1582 = vunpack.c.h.b16 %v1493
      %v1583 = vunpack.c.l.b16 %v1494
      %v1584 = vunpack.c.h.b16 %v1494
      %v1585 = vunpack.c.l.b16 %v1495
      %v1586 = vunpack.c.h.b16 %v1495
      %v1587 = vunpack.c.l.b16 %v1496
      %v1588 = vunpack.c.h.b16 %v1496
      %v1589 = vunpack.c.l.b16 %v1497
      %v1590 = vunpack.c.h.b16 %v1497
      %v1591 = vunpack.c.l.b16 %v1498
      %v1592 = vunpack.c.h.b16 %v1498
      %v1593 = vunpack.c.l.b16 %v1499
      %v1594 = vunpack.c.h.b16 %v1499
      %v1595 = vunpack.c.l.b16 %v1500
      %v1596 = vunpack.c.h.b16 %v1500
      %v1597 = vunpack.c.l.b16 %v1501
      %v1598 = vunpack.c.h.b16 %v1501
      %v1599 = vunpack.c.l.b16 %v1502
      %v1600 = vunpack.c.h.b16 %v1502
      %v1601 = vunpack.c.l.b16 %v1503
      %v1602 = vunpack.c.h.b16 %v1503
      %v1603 = vunpack.c.l.b16 %v1504
      %v1604 = vunpack.c.h.b16 %v1504
      %v1605 = vunpack.c.l.b16 %v1505
      %v1606 = vunpack.c.h.b16 %v1505
      %v1607 = vunpack.c.l.b16 %v1506
      %v1608 = vunpack.c.h.b16 %v1506
      %v1609 = vunpack.c.l.b16 %v1507
      %v1610 = vunpack.c.h.b16 %v1507
      %v1611 = vunpack.c.l.b16 %v1508
      %v1612 = vunpack.c.h.b16 %v1508
      %v1613 = vunpack.c.l.b16 %v1509
      %v1614 = vunpack.c.h.b16 %v1509
      %v1615 = vunpack.c.l.b16 %v1510
      %v1616 = vunpack.c.h.b16 %v1510
      %v1617 = vpack.c.b16 %v1555, %v1553
      %v1618 = vpack.c.b16 %v1556, %v1554
      %v1619 = vpack.c.b16 %v1559, %v1557
      %v1620 = vpack.c.b16 %v1560, %v1558
      %v1621 = vpack.c.b16 %v1563, %v1561
      %v1622 = vpack.c.b16 %v1564, %v1562
      %v1623 = vpack.c.b16 %v1567, %v1565
      %v1624 = vpack.c.b16 %v1568, %v1566
      %v1625 = vpack.c.b16 %v1571, %v1569
      %v1626 = vpack.c.b16 %v1572, %v1570
      %v1627 = vpack.c.b16 %v1575, %v1573
      %v1628 = vpack.c.b16 %v1576, %v1574
      %v1629 = vpack.c.b16 %v1579, %v1577
      %v1630 = vpack.c.b16 %v1580, %v1578
      %v1631 = vpack.c.b16 %v1583, %v1581
      %v1632 = vpack.c.b16 %v1584, %v1582
      %v1633 = vpack.c.b16 %v1587, %v1585
      %v1634 = vpack.c.b16 %v1588, %v1586
      %v1635 = vpack.c.b16 %v1591, %v1589
      %v1636 = vpack.c.b16 %v1592, %v1590
      %v1637 = vpack.c.b16 %v1595, %v1593
      %v1638 = vpack.c.b16 %v1596, %v1594
      %v1639 = vpack.c.b16 %v1599, %v1597
      %v1640 = vpack.c.b16 %v1600, %v1598
      %v1641 = vpack.c.b16 %v1603, %v1601
      %v1642 = vpack.c.b16 %v1604, %v1602
      %v1643 = vpack.c.b16 %v1607, %v1605
      %v1644 = vpack.c.b16 %v1608, %v1606
      %v1645 = vpack.c.b16 %v1611, %v1609
      %v1646 = vpack.c.b16 %v1612, %v1610
      %v1647 = vpack.c.b16 %v1615, %v1613
      %v1648 = vpack.c.b16 %v1616, %v1614
      %1681 = vmatprep.subr.bf16.mxu0 %v1618
      %1682 = vmatpush1.bf16.msra.mxu0 %v1617
      %1683 = vmatprep.subr.bf16.mxu0 %v1620
      %1684 = vmatpush1.bf16.msra.mxu0 %v1619
      %1685 = vmatprep.subr.bf16.mxu0 %v1622
      %1686 = vmatpush1.bf16.msra.mxu0 %v1621
      %1687 = vmatprep.subr.bf16.mxu0 %v1624
      %1688 = vmatpush1.bf16.msra.mxu0 %v1623
      %1689 = vmatprep.subr.bf16.mxu0 %v1626
      %1690 = vmatpush1.bf16.msra.mxu0 %v1625
      %1691 = vmatprep.subr.bf16.mxu0 %v1628
      %1692 = vmatpush1.bf16.msra.mxu0 %v1627
      %1693 = vmatprep.subr.bf16.mxu0 %v1630
      %1694 = vmatpush1.bf16.msra.mxu0 %v1629
      %1695 = vmatprep.subr.bf16.mxu0 %v1632
      %1696 = vmatpush1.bf16.msra.mxu0 %v1631
      %1697 = vmatprep.subr.bf16.mxu0 %v1634
      %1698 = vmatpush1.bf16.msra.mxu0 %v1633
      %1699 = vmatprep.subr.bf16.mxu0 %v1636
      %1700 = vmatpush1.bf16.msra.mxu0 %v1635
      %1701 = vmatprep.subr.bf16.mxu0 %v1638
      %1702 = vmatpush1.bf16.msra.mxu0 %v1637
      %1703 = vmatprep.subr.bf16.mxu0 %v1640
      %1704 = vmatpush1.bf16.msra.mxu0 %v1639
      %1705 = vmatprep.subr.bf16.mxu0 %v1642
      %1706 = vmatpush1.bf16.msra.mxu0 %v1641
      %1707 = vmatprep.subr.bf16.mxu0 %v1644
      %1708 = vmatpush1.bf16.msra.mxu0 %v1643
      %1709 = vmatprep.subr.bf16.mxu0 %v1646
      %1710 = vmatpush1.bf16.msra.mxu0 %v1645
      %1711 = vmatprep.subr.bf16.mxu0 %v1648
      %1712 = vmatpush1.bf16.msra.mxu0 %v1647
      %1713 = vmatprep.mubr.bf16.mxu0 %v1518
      %1714 = vmatmul.mubr.bf16.gmra.mrb[0].mxu0 %v1517
      %v1715 = vpop.f32.mrb[0].mxu0
      %v1716 = vadd.f32 0.0, %v1715
      %v1717 = vpop.f32.mrb[0].mxu0
      %v1718 = vadd.f32 0.0, %v1717
      %v1719 = vpop.f32.mrb[0].mxu0
      %v1720 = vadd.f32 0.0, %v1719
      %v1721 = vpop.f32.mrb[0].mxu0
      %v1722 = vadd.f32 0.0, %v1721
      %1723 = vdwg.mxu0
      %v1724 = vadd.f32 %v1474, %v1716
      %v1725 = vadd.f32 %v1475, %v1718
      %v1726 = vadd.f32 %v1476, %v1720
      %v1727 = vadd.f32 %v1477, %v1722
      %s1728 = scalar_lea.vmem %s1, 1536
      %v1729 = vld [vmem:[%s1728] sm:$0xff]
      %v1730 = vld [vmem:[%s1728 + $0x8] sm:$0xff]
      %v1731 = vld [vmem:[%s1728 + $0x10] sm:$0xff]
      %v1732 = vld [vmem:[%s1728 + $0x18] sm:$0xff]
      %v1733 = vld [vmem:[%s1728 + $0x20] sm:$0xff]
      %v1734 = vld [vmem:[%s1728 + $0x28] sm:$0xff]
      %v1735 = vld [vmem:[%s1728 + $0x30] sm:$0xff]
      %v1736 = vld [vmem:[%s1728 + $0x38] sm:$0xff]
      %v1737 = vld [vmem:[%s1728 + $0x40] sm:$0xff]
      %v1738 = vld [vmem:[%s1728 + $0x48] sm:$0xff]
      %v1739 = vld [vmem:[%s1728 + $0x50] sm:$0xff]
      %v1740 = vld [vmem:[%s1728 + $0x58] sm:$0xff]
      %v1741 = vld [vmem:[%s1728 + $0x60] sm:$0xff]
      %v1742 = vld [vmem:[%s1728 + $0x68] sm:$0xff]
      %v1743 = vld [vmem:[%s1728 + $0x70] sm:$0xff]
      %v1744 = vld [vmem:[%s1728 + $0x78] sm:$0xff]
      %v1745 = vld [vmem:[%s1728 + $0x80] sm:$0xff]
      %v1746 = vld [vmem:[%s1728 + $0x88] sm:$0xff]
      %v1747 = vld [vmem:[%s1728 + $0x90] sm:$0xff]
      %v1748 = vld [vmem:[%s1728 + $0x98] sm:$0xff]
      %v1749 = vld [vmem:[%s1728 + $0xa0] sm:$0xff]
      %v1750 = vld [vmem:[%s1728 + $0xa8] sm:$0xff]
      %v1751 = vld [vmem:[%s1728 + $0xb0] sm:$0xff]
      %v1752 = vld [vmem:[%s1728 + $0xb8] sm:$0xff]
      %v1753 = vld [vmem:[%s1728 + $0xc0] sm:$0xff]
      %v1754 = vld [vmem:[%s1728 + $0xc8] sm:$0xff]
      %v1755 = vld [vmem:[%s1728 + $0xd0] sm:$0xff]
      %v1756 = vld [vmem:[%s1728 + $0xd8] sm:$0xff]
      %v1757 = vld [vmem:[%s1728 + $0xe0] sm:$0xff]
      %v1758 = vld [vmem:[%s1728 + $0xe8] sm:$0xff]
      %v1759 = vld [vmem:[%s1728 + $0xf0] sm:$0xff]
      %v1760 = vld [vmem:[%s1728 + $0xf8] sm:$0xff]
      %s1761 = scalar_lea.vmem %s1, 1792
      %v1762 = vld [vmem:[%s1761] sm:$0xff]
      %v1763 = vld [vmem:[%s1761 + $0x8] sm:$0xff]
      %v1764 = vld [vmem:[%s1761 + $0x10] sm:$0xff]
      %v1765 = vld [vmem:[%s1761 + $0x18] sm:$0xff]
      %v1766 = vld [vmem:[%s1761 + $0x20] sm:$0xff]
      %v1767 = vld [vmem:[%s1761 + $0x28] sm:$0xff]
      %v1768 = vld [vmem:[%s1761 + $0x30] sm:$0xff]
      %v1769 = vld [vmem:[%s1761 + $0x38] sm:$0xff]
      %v1770 = vld [vmem:[%s1761 + $0x40] sm:$0xff]
      %v1771 = vld [vmem:[%s1761 + $0x48] sm:$0xff]
      %v1772 = vld [vmem:[%s1761 + $0x50] sm:$0xff]
      %v1773 = vld [vmem:[%s1761 + $0x58] sm:$0xff]
      %v1774 = vld [vmem:[%s1761 + $0x60] sm:$0xff]
      %v1775 = vld [vmem:[%s1761 + $0x68] sm:$0xff]
      %v1776 = vld [vmem:[%s1761 + $0x70] sm:$0xff]
      %v1777 = vld [vmem:[%s1761 + $0x78] sm:$0xff]
      %v1778 = vld [vmem:[%s1761 + $0x80] sm:$0xff]
      %v1779 = vld [vmem:[%s1761 + $0x88] sm:$0xff]
      %v1780 = vld [vmem:[%s1761 + $0x90] sm:$0xff]
      %v1781 = vld [vmem:[%s1761 + $0x98] sm:$0xff]
      %v1782 = vld [vmem:[%s1761 + $0xa0] sm:$0xff]
      %v1783 = vld [vmem:[%s1761 + $0xa8] sm:$0xff]
      %v1784 = vld [vmem:[%s1761 + $0xb0] sm:$0xff]
      %v1785 = vld [vmem:[%s1761 + $0xb8] sm:$0xff]
      %v1786 = vld [vmem:[%s1761 + $0xc0] sm:$0xff]
      %v1787 = vld [vmem:[%s1761 + $0xc8] sm:$0xff]
      %v1788 = vld [vmem:[%s1761 + $0xd0] sm:$0xff]
      %v1789 = vld [vmem:[%s1761 + $0xd8] sm:$0xff]
      %v1790 = vld [vmem:[%s1761 + $0xe0] sm:$0xff]
      %v1791 = vld [vmem:[%s1761 + $0xe8] sm:$0xff]
      %v1792 = vld [vmem:[%s1761 + $0xf0] sm:$0xff]
      %v1793 = vld [vmem:[%s1761 + $0xf8] sm:$0xff]
      %v1826 = vunpack.c.l.b16 %v1762
      %v1827 = vunpack.c.h.b16 %v1762
      %v1828 = vunpack.c.l.b16 %v1763
      %v1829 = vunpack.c.h.b16 %v1763
      %v1830 = vunpack.c.l.b16 %v1764
      %v1831 = vunpack.c.h.b16 %v1764
      %v1832 = vunpack.c.l.b16 %v1765
      %v1833 = vunpack.c.h.b16 %v1765
      %v1834 = vunpack.c.l.b16 %v1766
      %v1835 = vunpack.c.h.b16 %v1766
      %v1836 = vunpack.c.l.b16 %v1767
      %v1837 = vunpack.c.h.b16 %v1767
      %v1838 = vunpack.c.l.b16 %v1768
      %v1839 = vunpack.c.h.b16 %v1768
      %v1840 = vunpack.c.l.b16 %v1769
      %v1841 = vunpack.c.h.b16 %v1769
      %v1842 = vunpack.c.l.b16 %v1770
      %v1843 = vunpack.c.h.b16 %v1770
      %v1844 = vunpack.c.l.b16 %v1771
      %v1845 = vunpack.c.h.b16 %v1771
      %v1846 = vunpack.c.l.b16 %v1772
      %v1847 = vunpack.c.h.b16 %v1772
      %v1848 = vunpack.c.l.b16 %v1773
      %v1849 = vunpack.c.h.b16 %v1773
      %v1850 = vunpack.c.l.b16 %v1774
      %v1851 = vunpack.c.h.b16 %v1774
      %v1852 = vunpack.c.l.b16 %v1775
      %v1853 = vunpack.c.h.b16 %v1775
      %v1854 = vunpack.c.l.b16 %v1776
      %v1855 = vunpack.c.h.b16 %v1776
      %v1856 = vunpack.c.l.b16 %v1777
      %v1857 = vunpack.c.h.b16 %v1777
      %v1858 = vunpack.c.l.b16 %v1778
      %v1859 = vunpack.c.h.b16 %v1778
      %v1860 = vunpack.c.l.b16 %v1779
      %v1861 = vunpack.c.h.b16 %v1779
      %v1862 = vunpack.c.l.b16 %v1780
      %v1863 = vunpack.c.h.b16 %v1780
      %v1864 = vunpack.c.l.b16 %v1781
      %v1865 = vunpack.c.h.b16 %v1781
      %v1866 = vunpack.c.l.b16 %v1782
      %v1867 = vunpack.c.h.b16 %v1782
      %v1868 = vunpack.c.l.b16 %v1783
      %v1869 = vunpack.c.h.b16 %v1783
      %v1870 = vunpack.c.l.b16 %v1784
      %v1871 = vunpack.c.h.b16 %v1784
      %v1872 = vunpack.c.l.b16 %v1785
      %v1873 = vunpack.c.h.b16 %v1785
      %v1874 = vunpack.c.l.b16 %v1786
      %v1875 = vunpack.c.h.b16 %v1786
      %v1876 = vunpack.c.l.b16 %v1787
      %v1877 = vunpack.c.h.b16 %v1787
      %v1878 = vunpack.c.l.b16 %v1788
      %v1879 = vunpack.c.h.b16 %v1788
      %v1880 = vunpack.c.l.b16 %v1789
      %v1881 = vunpack.c.h.b16 %v1789
      %v1882 = vunpack.c.l.b16 %v1790
      %v1883 = vunpack.c.h.b16 %v1790
      %v1884 = vunpack.c.l.b16 %v1791
      %v1885 = vunpack.c.h.b16 %v1791
      %v1886 = vunpack.c.l.b16 %v1792
      %v1887 = vunpack.c.h.b16 %v1792
      %v1888 = vunpack.c.l.b16 %v1793
      %v1889 = vunpack.c.h.b16 %v1793
      %v1890 = vpack.c.b16 %v1828, %v1826
      %v1891 = vpack.c.b16 %v1829, %v1827
      %v1892 = vpack.c.b16 %v1832, %v1830
      %v1893 = vpack.c.b16 %v1833, %v1831
      %v1894 = vpack.c.b16 %v1836, %v1834
      %v1895 = vpack.c.b16 %v1837, %v1835
      %v1896 = vpack.c.b16 %v1840, %v1838
      %v1897 = vpack.c.b16 %v1841, %v1839
      %v1898 = vpack.c.b16 %v1844, %v1842
      %v1899 = vpack.c.b16 %v1845, %v1843
      %v1900 = vpack.c.b16 %v1848, %v1846
      %v1901 = vpack.c.b16 %v1849, %v1847
      %v1902 = vpack.c.b16 %v1852, %v1850
      %v1903 = vpack.c.b16 %v1853, %v1851
      %v1904 = vpack.c.b16 %v1856, %v1854
      %v1905 = vpack.c.b16 %v1857, %v1855
      %v1906 = vpack.c.b16 %v1860, %v1858
      %v1907 = vpack.c.b16 %v1861, %v1859
      %v1908 = vpack.c.b16 %v1864, %v1862
      %v1909 = vpack.c.b16 %v1865, %v1863
      %v1910 = vpack.c.b16 %v1868, %v1866
      %v1911 = vpack.c.b16 %v1869, %v1867
      %v1912 = vpack.c.b16 %v1872, %v1870
      %v1913 = vpack.c.b16 %v1873, %v1871
      %v1914 = vpack.c.b16 %v1876, %v1874
      %v1915 = vpack.c.b16 %v1877, %v1875
      %v1916 = vpack.c.b16 %v1880, %v1878
      %v1917 = vpack.c.b16 %v1881, %v1879
      %v1918 = vpack.c.b16 %v1884, %v1882
      %v1919 = vpack.c.b16 %v1885, %v1883
      %v1920 = vpack.c.b16 %v1888, %v1886
      %v1921 = vpack.c.b16 %v1889, %v1887
      %1954 = vmatprep.subr.bf16.mxu0 %v1891
      %1955 = vmatpush1.bf16.msra.mxu0 %v1890
      %1956 = vmatprep.subr.bf16.mxu0 %v1893
      %1957 = vmatpush1.bf16.msra.mxu0 %v1892
      %1958 = vmatprep.subr.bf16.mxu0 %v1895
      %1959 = vmatpush1.bf16.msra.mxu0 %v1894
      %1960 = vmatprep.subr.bf16.mxu0 %v1897
      %1961 = vmatpush1.bf16.msra.mxu0 %v1896
      %1962 = vmatprep.subr.bf16.mxu0 %v1899
      %1963 = vmatpush1.bf16.msra.mxu0 %v1898
      %1964 = vmatprep.subr.bf16.mxu0 %v1901
      %1965 = vmatpush1.bf16.msra.mxu0 %v1900
      %1966 = vmatprep.subr.bf16.mxu0 %v1903
      %1967 = vmatpush1.bf16.msra.mxu0 %v1902
      %1968 = vmatprep.subr.bf16.mxu0 %v1905
      %1969 = vmatpush1.bf16.msra.mxu0 %v1904
      %1970 = vmatprep.subr.bf16.mxu0 %v1907
      %1971 = vmatpush1.bf16.msra.mxu0 %v1906
      %1972 = vmatprep.subr.bf16.mxu0 %v1909
      %1973 = vmatpush1.bf16.msra.mxu0 %v1908
      %1974 = vmatprep.subr.bf16.mxu0 %v1911
      %1975 = vmatpush1.bf16.msra.mxu0 %v1910
      %1976 = vmatprep.subr.bf16.mxu0 %v1913
      %1977 = vmatpush1.bf16.msra.mxu0 %v1912
      %1978 = vmatprep.subr.bf16.mxu0 %v1915
      %1979 = vmatpush1.bf16.msra.mxu0 %v1914
      %1980 = vmatprep.subr.bf16.mxu0 %v1917
      %1981 = vmatpush1.bf16.msra.mxu0 %v1916
      %1982 = vmatprep.subr.bf16.mxu0 %v1919
      %1983 = vmatpush1.bf16.msra.mxu0 %v1918
      %1984 = vmatprep.subr.bf16.mxu0 %v1921
      %1985 = vmatpush1.bf16.msra.mxu0 %v1920
      %1986 = vmatprep.mubr.bf16.mxu0 %v1268
      %1987 = vmatmul.mubr.bf16.gmra.mrb[0].mxu0 %v1267
      %v1988 = vpop.f32.mrb[0].mxu0
      %v1989 = vadd.f32 0.0, %v1988
      %v1990 = vpop.f32.mrb[0].mxu0
      %v1991 = vadd.f32 0.0, %v1990
      %v1992 = vpop.f32.mrb[0].mxu0
      %v1993 = vadd.f32 0.0, %v1992
      %v1994 = vpop.f32.mrb[0].mxu0
      %v1995 = vadd.f32 0.0, %v1994
      %1996 = vdwg.mxu0
      %v2029 = vunpack.c.l.b16 %v1729
      %v2030 = vunpack.c.h.b16 %v1729
      %v2031 = vunpack.c.l.b16 %v1730
      %v2032 = vunpack.c.h.b16 %v1730
      %v2033 = vunpack.c.l.b16 %v1731
      %v2034 = vunpack.c.h.b16 %v1731
      %v2035 = vunpack.c.l.b16 %v1732
      %v2036 = vunpack.c.h.b16 %v1732
      %v2037 = vunpack.c.l.b16 %v1733
      %v2038 = vunpack.c.h.b16 %v1733
      %v2039 = vunpack.c.l.b16 %v1734
      %v2040 = vunpack.c.h.b16 %v1734
      %v2041 = vunpack.c.l.b16 %v1735
      %v2042 = vunpack.c.h.b16 %v1735
      %v2043 = vunpack.c.l.b16 %v1736
      %v2044 = vunpack.c.h.b16 %v1736
      %v2045 = vunpack.c.l.b16 %v1737
      %v2046 = vunpack.c.h.b16 %v1737
      %v2047 = vunpack.c.l.b16 %v1738
      %v2048 = vunpack.c.h.b16 %v1738
      %v2049 = vunpack.c.l.b16 %v1739
      %v2050 = vunpack.c.h.b16 %v1739
      %v2051 = vunpack.c.l.b16 %v1740
      %v2052 = vunpack.c.h.b16 %v1740
      %v2053 = vunpack.c.l.b16 %v1741
      %v2054 = vunpack.c.h.b16 %v1741
      %v2055 = vunpack.c.l.b16 %v1742
      %v2056 = vunpack.c.h.b16 %v1742
      %v2057 = vunpack.c.l.b16 %v1743
      %v2058 = vunpack.c.h.b16 %v1743
      %v2059 = vunpack.c.l.b16 %v1744
      %v2060 = vunpack.c.h.b16 %v1744
      %v2061 = vunpack.c.l.b16 %v1745
      %v2062 = vunpack.c.h.b16 %v1745
      %v2063 = vunpack.c.l.b16 %v1746
      %v2064 = vunpack.c.h.b16 %v1746
      %v2065 = vunpack.c.l.b16 %v1747
      %v2066 = vunpack.c.h.b16 %v1747
      %v2067 = vunpack.c.l.b16 %v1748
      %v2068 = vunpack.c.h.b16 %v1748
      %v2069 = vunpack.c.l.b16 %v1749
      %v2070 = vunpack.c.h.b16 %v1749
      %v2071 = vunpack.c.l.b16 %v1750
      %v2072 = vunpack.c.h.b16 %v1750
      %v2073 = vunpack.c.l.b16 %v1751
      %v2074 = vunpack.c.h.b16 %v1751
      %v2075 = vunpack.c.l.b16 %v1752
      %v2076 = vunpack.c.h.b16 %v1752
      %v2077 = vunpack.c.l.b16 %v1753
      %v2078 = vunpack.c.h.b16 %v1753
      %v2079 = vunpack.c.l.b16 %v1754
      %v2080 = vunpack.c.h.b16 %v1754
      %v2081 = vunpack.c.l.b16 %v1755
      %v2082 = vunpack.c.h.b16 %v1755
      %v2083 = vunpack.c.l.b16 %v1756
      %v2084 = vunpack.c.h.b16 %v1756
      %v2085 = vunpack.c.l.b16 %v1757
      %v2086 = vunpack.c.h.b16 %v1757
      %v2087 = vunpack.c.l.b16 %v1758
      %v2088 = vunpack.c.h.b16 %v1758
      %v2089 = vunpack.c.l.b16 %v1759
      %v2090 = vunpack.c.h.b16 %v1759
      %v2091 = vunpack.c.l.b16 %v1760
      %v2092 = vunpack.c.h.b16 %v1760
      %v2093 = vpack.c.b16 %v2031, %v2029
      %v2094 = vpack.c.b16 %v2032, %v2030
      %v2095 = vpack.c.b16 %v2035, %v2033
      %v2096 = vpack.c.b16 %v2036, %v2034
      %v2097 = vpack.c.b16 %v2039, %v2037
      %v2098 = vpack.c.b16 %v2040, %v2038
      %v2099 = vpack.c.b16 %v2043, %v2041
      %v2100 = vpack.c.b16 %v2044, %v2042
      %v2101 = vpack.c.b16 %v2047, %v2045
      %v2102 = vpack.c.b16 %v2048, %v2046
      %v2103 = vpack.c.b16 %v2051, %v2049
      %v2104 = vpack.c.b16 %v2052, %v2050
      %v2105 = vpack.c.b16 %v2055, %v2053
      %v2106 = vpack.c.b16 %v2056, %v2054
      %v2107 = vpack.c.b16 %v2059, %v2057
      %v2108 = vpack.c.b16 %v2060, %v2058
      %v2109 = vpack.c.b16 %v2063, %v2061
      %v2110 = vpack.c.b16 %v2064, %v2062
      %v2111 = vpack.c.b16 %v2067, %v2065
      %v2112 = vpack.c.b16 %v2068, %v2066
      %v2113 = vpack.c.b16 %v2071, %v2069
      %v2114 = vpack.c.b16 %v2072, %v2070
      %v2115 = vpack.c.b16 %v2075, %v2073
      %v2116 = vpack.c.b16 %v2076, %v2074
      %v2117 = vpack.c.b16 %v2079, %v2077
      %v2118 = vpack.c.b16 %v2080, %v2078
      %v2119 = vpack.c.b16 %v2083, %v2081
      %v2120 = vpack.c.b16 %v2084, %v2082
      %v2121 = vpack.c.b16 %v2087, %v2085
      %v2122 = vpack.c.b16 %v2088, %v2086
      %v2123 = vpack.c.b16 %v2091, %v2089
      %v2124 = vpack.c.b16 %v2092, %v2090
      %2157 = vmatprep.subr.bf16.mxu0 %v2094
      %2158 = vmatpush1.bf16.msra.mxu0 %v2093
      %2159 = vmatprep.subr.bf16.mxu0 %v2096
      %2160 = vmatpush1.bf16.msra.mxu0 %v2095
      %2161 = vmatprep.subr.bf16.mxu0 %v2098
      %2162 = vmatpush1.bf16.msra.mxu0 %v2097
      %2163 = vmatprep.subr.bf16.mxu0 %v2100
      %2164 = vmatpush1.bf16.msra.mxu0 %v2099
      %2165 = vmatprep.subr.bf16.mxu0 %v2102
      %2166 = vmatpush1.bf16.msra.mxu0 %v2101
      %2167 = vmatprep.subr.bf16.mxu0 %v2104
      %2168 = vmatpush1.bf16.msra.mxu0 %v2103
      %2169 = vmatprep.subr.bf16.mxu0 %v2106
      %2170 = vmatpush1.bf16.msra.mxu0 %v2105
      %2171 = vmatprep.subr.bf16.mxu0 %v2108
      %2172 = vmatpush1.bf16.msra.mxu0 %v2107
      %2173 = vmatprep.subr.bf16.mxu0 %v2110
      %2174 = vmatpush1.bf16.msra.mxu0 %v2109
      %2175 = vmatprep.subr.bf16.mxu0 %v2112
      %2176 = vmatpush1.bf16.msra.mxu0 %v2111
      %2177 = vmatprep.subr.bf16.mxu0 %v2114
      %2178 = vmatpush1.bf16.msra.mxu0 %v2113
      %2179 = vmatprep.subr.bf16.mxu0 %v2116
      %2180 = vmatpush1.bf16.msra.mxu0 %v2115
      %2181 = vmatprep.subr.bf16.mxu0 %v2118
      %2182 = vmatpush1.bf16.msra.mxu0 %v2117
      %2183 = vmatprep.subr.bf16.mxu0 %v2120
      %2184 = vmatpush1.bf16.msra.mxu0 %v2119
      %2185 = vmatprep.subr.bf16.mxu0 %v2122
      %2186 = vmatpush1.bf16.msra.mxu0 %v2121
      %2187 = vmatprep.subr.bf16.mxu0 %v2124
      %2188 = vmatpush1.bf16.msra.mxu0 %v2123
      %2189 = vmatprep.mubr.bf16.mxu0 %v1005
      %2190 = vmatmul.mubr.bf16.gmra.mrb[0].mxu0 %v993
      %v2191 = vpop.f32.mrb[0].mxu0
      %v2192 = vadd.f32 %v1989, %v2191
      %v2193 = vpop.f32.mrb[0].mxu0
      %v2194 = vadd.f32 %v1991, %v2193
      %v2195 = vpop.f32.mrb[0].mxu0
      %v2196 = vadd.f32 %v1993, %v2195
      %v2197 = vpop.f32.mrb[0].mxu0
      %v2198 = vadd.f32 %v1995, %v2197
      %2199 = vdwg.mxu0
      %s2200 = scalar_lea.vmem %s1, 2048
      %v2201 = vld [vmem:[%s2200] sm:$0xff]
      %v2202 = vld [vmem:[%s2200 + $0x8] sm:$0xff]
      %v2203 = vld [vmem:[%s2200 + $0x10] sm:$0xff]
      %v2204 = vld [vmem:[%s2200 + $0x18] sm:$0xff]
      %v2205 = vld [vmem:[%s2200 + $0x20] sm:$0xff]
      %v2206 = vld [vmem:[%s2200 + $0x28] sm:$0xff]
      %v2207 = vld [vmem:[%s2200 + $0x30] sm:$0xff]
      %v2208 = vld [vmem:[%s2200 + $0x38] sm:$0xff]
      %v2209 = vld [vmem:[%s2200 + $0x40] sm:$0xff]
      %v2210 = vld [vmem:[%s2200 + $0x48] sm:$0xff]
      %v2211 = vld [vmem:[%s2200 + $0x50] sm:$0xff]
      %v2212 = vld [vmem:[%s2200 + $0x58] sm:$0xff]
      %v2213 = vld [vmem:[%s2200 + $0x60] sm:$0xff]
      %v2214 = vld [vmem:[%s2200 + $0x68] sm:$0xff]
      %v2215 = vld [vmem:[%s2200 + $0x70] sm:$0xff]
      %v2216 = vld [vmem:[%s2200 + $0x78] sm:$0xff]
      %v2217 = vld [vmem:[%s2200 + $0x80] sm:$0xff]
      %v2218 = vld [vmem:[%s2200 + $0x88] sm:$0xff]
      %v2219 = vld [vmem:[%s2200 + $0x90] sm:$0xff]
      %v2220 = vld [vmem:[%s2200 + $0x98] sm:$0xff]
      %v2221 = vld [vmem:[%s2200 + $0xa0] sm:$0xff]
      %v2222 = vld [vmem:[%s2200 + $0xa8] sm:$0xff]
      %v2223 = vld [vmem:[%s2200 + $0xb0] sm:$0xff]
      %v2224 = vld [vmem:[%s2200 + $0xb8] sm:$0xff]
      %v2225 = vld [vmem:[%s2200 + $0xc0] sm:$0xff]
      %v2226 = vld [vmem:[%s2200 + $0xc8] sm:$0xff]
      %v2227 = vld [vmem:[%s2200 + $0xd0] sm:$0xff]
      %v2228 = vld [vmem:[%s2200 + $0xd8] sm:$0xff]
      %v2229 = vld [vmem:[%s2200 + $0xe0] sm:$0xff]
      %v2230 = vld [vmem:[%s2200 + $0xe8] sm:$0xff]
      %v2231 = vld [vmem:[%s2200 + $0xf0] sm:$0xff]
      %v2232 = vld [vmem:[%s2200 + $0xf8] sm:$0xff]
      %v2265 = vunpack.c.l.b16 %v2201
      %v2266 = vunpack.c.h.b16 %v2201
      %v2267 = vunpack.c.l.b16 %v2202
      %v2268 = vunpack.c.h.b16 %v2202
      %v2269 = vunpack.c.l.b16 %v2203
      %v2270 = vunpack.c.h.b16 %v2203
      %v2271 = vunpack.c.l.b16 %v2204
      %v2272 = vunpack.c.h.b16 %v2204
      %v2273 = vunpack.c.l.b16 %v2205
      %v2274 = vunpack.c.h.b16 %v2205
      %v2275 = vunpack.c.l.b16 %v2206
      %v2276 = vunpack.c.h.b16 %v2206
      %v2277 = vunpack.c.l.b16 %v2207
      %v2278 = vunpack.c.h.b16 %v2207
      %v2279 = vunpack.c.l.b16 %v2208
      %v2280 = vunpack.c.h.b16 %v2208
      %v2281 = vunpack.c.l.b16 %v2209
      %v2282 = vunpack.c.h.b16 %v2209
      %v2283 = vunpack.c.l.b16 %v2210
      %v2284 = vunpack.c.h.b16 %v2210
      %v2285 = vunpack.c.l.b16 %v2211
      %v2286 = vunpack.c.h.b16 %v2211
      %v2287 = vunpack.c.l.b16 %v2212
      %v2288 = vunpack.c.h.b16 %v2212
      %v2289 = vunpack.c.l.b16 %v2213
      %v2290 = vunpack.c.h.b16 %v2213
      %v2291 = vunpack.c.l.b16 %v2214
      %v2292 = vunpack.c.h.b16 %v2214
      %v2293 = vunpack.c.l.b16 %v2215
      %v2294 = vunpack.c.h.b16 %v2215
      %v2295 = vunpack.c.l.b16 %v2216
      %v2296 = vunpack.c.h.b16 %v2216
      %v2297 = vunpack.c.l.b16 %v2217
      %v2298 = vunpack.c.h.b16 %v2217
      %v2299 = vunpack.c.l.b16 %v2218
      %v2300 = vunpack.c.h.b16 %v2218
      %v2301 = vunpack.c.l.b16 %v2219
      %v2302 = vunpack.c.h.b16 %v2219
      %v2303 = vunpack.c.l.b16 %v2220
      %v2304 = vunpack.c.h.b16 %v2220
      %v2305 = vunpack.c.l.b16 %v2221
      %v2306 = vunpack.c.h.b16 %v2221
      %v2307 = vunpack.c.l.b16 %v2222
      %v2308 = vunpack.c.h.b16 %v2222
      %v2309 = vunpack.c.l.b16 %v2223
      %v2310 = vunpack.c.h.b16 %v2223
      %v2311 = vunpack.c.l.b16 %v2224
      %v2312 = vunpack.c.h.b16 %v2224
      %v2313 = vunpack.c.l.b16 %v2225
      %v2314 = vunpack.c.h.b16 %v2225
      %v2315 = vunpack.c.l.b16 %v2226
      %v2316 = vunpack.c.h.b16 %v2226
      %v2317 = vunpack.c.l.b16 %v2227
      %v2318 = vunpack.c.h.b16 %v2227
      %v2319 = vunpack.c.l.b16 %v2228
      %v2320 = vunpack.c.h.b16 %v2228
      %v2321 = vunpack.c.l.b16 %v2229
      %v2322 = vunpack.c.h.b16 %v2229
      %v2323 = vunpack.c.l.b16 %v2230
      %v2324 = vunpack.c.h.b16 %v2230
      %v2325 = vunpack.c.l.b16 %v2231
      %v2326 = vunpack.c.h.b16 %v2231
      %v2327 = vunpack.c.l.b16 %v2232
      %v2328 = vunpack.c.h.b16 %v2232
      %v2329 = vpack.c.b16 %v2267, %v2265
      %v2330 = vpack.c.b16 %v2268, %v2266
      %v2331 = vpack.c.b16 %v2271, %v2269
      %v2332 = vpack.c.b16 %v2272, %v2270
      %v2333 = vpack.c.b16 %v2275, %v2273
      %v2334 = vpack.c.b16 %v2276, %v2274
      %v2335 = vpack.c.b16 %v2279, %v2277
      %v2336 = vpack.c.b16 %v2280, %v2278
      %v2337 = vpack.c.b16 %v2283, %v2281
      %v2338 = vpack.c.b16 %v2284, %v2282
      %v2339 = vpack.c.b16 %v2287, %v2285
      %v2340 = vpack.c.b16 %v2288, %v2286
      %v2341 = vpack.c.b16 %v2291, %v2289
      %v2342 = vpack.c.b16 %v2292, %v2290
      %v2343 = vpack.c.b16 %v2295, %v2293
      %v2344 = vpack.c.b16 %v2296, %v2294
      %v2345 = vpack.c.b16 %v2299, %v2297
      %v2346 = vpack.c.b16 %v2300, %v2298
      %v2347 = vpack.c.b16 %v2303, %v2301
      %v2348 = vpack.c.b16 %v2304, %v2302
      %v2349 = vpack.c.b16 %v2307, %v2305
      %v2350 = vpack.c.b16 %v2308, %v2306
      %v2351 = vpack.c.b16 %v2311, %v2309
      %v2352 = vpack.c.b16 %v2312, %v2310
      %v2353 = vpack.c.b16 %v2315, %v2313
      %v2354 = vpack.c.b16 %v2316, %v2314
      %v2355 = vpack.c.b16 %v2319, %v2317
      %v2356 = vpack.c.b16 %v2320, %v2318
      %v2357 = vpack.c.b16 %v2323, %v2321
      %v2358 = vpack.c.b16 %v2324, %v2322
      %v2359 = vpack.c.b16 %v2327, %v2325
      %v2360 = vpack.c.b16 %v2328, %v2326
      %2393 = vmatprep.subr.bf16.mxu0 %v2330
      %2394 = vmatpush1.bf16.msra.mxu0 %v2329
      %2395 = vmatprep.subr.bf16.mxu0 %v2332
      %2396 = vmatpush1.bf16.msra.mxu0 %v2331
      %2397 = vmatprep.subr.bf16.mxu0 %v2334
      %2398 = vmatpush1.bf16.msra.mxu0 %v2333
      %2399 = vmatprep.subr.bf16.mxu0 %v2336
      %2400 = vmatpush1.bf16.msra.mxu0 %v2335
      %2401 = vmatprep.subr.bf16.mxu0 %v2338
      %2402 = vmatpush1.bf16.msra.mxu0 %v2337
      %2403 = vmatprep.subr.bf16.mxu0 %v2340
      %2404 = vmatpush1.bf16.msra.mxu0 %v2339
      %2405 = vmatprep.subr.bf16.mxu0 %v2342
      %2406 = vmatpush1.bf16.msra.mxu0 %v2341
      %2407 = vmatprep.subr.bf16.mxu0 %v2344
      %2408 = vmatpush1.bf16.msra.mxu0 %v2343
      %2409 = vmatprep.subr.bf16.mxu0 %v2346
      %2410 = vmatpush1.bf16.msra.mxu0 %v2345
      %2411 = vmatprep.subr.bf16.mxu0 %v2348
      %2412 = vmatpush1.bf16.msra.mxu0 %v2347
      %2413 = vmatprep.subr.bf16.mxu0 %v2350
      %2414 = vmatpush1.bf16.msra.mxu0 %v2349
      %2415 = vmatprep.subr.bf16.mxu0 %v2352
      %2416 = vmatpush1.bf16.msra.mxu0 %v2351
      %2417 = vmatprep.subr.bf16.mxu0 %v2354
      %2418 = vmatpush1.bf16.msra.mxu0 %v2353
      %2419 = vmatprep.subr.bf16.mxu0 %v2356
      %2420 = vmatpush1.bf16.msra.mxu0 %v2355
      %2421 = vmatprep.subr.bf16.mxu0 %v2358
      %2422 = vmatpush1.bf16.msra.mxu0 %v2357
      %2423 = vmatprep.subr.bf16.mxu0 %v2360
      %2424 = vmatpush1.bf16.msra.mxu0 %v2359
      %2425 = vmatprep.mubr.bf16.mxu0 %v1518
      %2426 = vmatmul.mubr.bf16.gmra.mrb[0].mxu0 %v1517
      %v2427 = vpop.f32.mrb[0].mxu0
      %v2428 = vadd.f32 0.0, %v2427
      %v2429 = vpop.f32.mrb[0].mxu0
      %v2430 = vadd.f32 0.0, %v2429
      %v2431 = vpop.f32.mrb[0].mxu0
      %v2432 = vadd.f32 0.0, %v2431
      %v2433 = vpop.f32.mrb[0].mxu0
      %v2434 = vadd.f32 0.0, %v2433
      %2435 = vdwg.mxu0
      %v2436 = vadd.f32 %v2192, %v2428
      %v2437 = vadd.f32 %v2194, %v2430
      %v2438 = vadd.f32 %v2196, %v2432
      %v2439 = vadd.f32 %v2198, %v2434
      %s2440 = scalar_lea.vmem %s1, 2304
      %v2441 = vld [vmem:[%s2440] sm:$0xff]
      %v2442 = vld [vmem:[%s2440 + $0x8] sm:$0xff]
      %v2443 = vld [vmem:[%s2440 + $0x10] sm:$0xff]
      %v2444 = vld [vmem:[%s2440 + $0x18] sm:$0xff]
      %v2445 = vld [vmem:[%s2440 + $0x20] sm:$0xff]
      %v2446 = vld [vmem:[%s2440 + $0x28] sm:$0xff]
      %v2447 = vld [vmem:[%s2440 + $0x30] sm:$0xff]
      %v2448 = vld [vmem:[%s2440 + $0x38] sm:$0xff]
      %v2449 = vld [vmem:[%s2440 + $0x40] sm:$0xff]
      %v2450 = vld [vmem:[%s2440 + $0x48] sm:$0xff]
      %v2451 = vld [vmem:[%s2440 + $0x50] sm:$0xff]
      %v2452 = vld [vmem:[%s2440 + $0x58] sm:$0xff]
      %v2453 = vld [vmem:[%s2440 + $0x60] sm:$0xff]
      %v2454 = vld [vmem:[%s2440 + $0x68] sm:$0xff]
      %v2455 = vld [vmem:[%s2440 + $0x70] sm:$0xff]
      %v2456 = vld [vmem:[%s2440 + $0x78] sm:$0xff]
      %v2457 = vld [vmem:[%s2440 + $0x80] sm:$0xff]
      %v2458 = vld [vmem:[%s2440 + $0x88] sm:$0xff]
      %v2459 = vld [vmem:[%s2440 + $0x90] sm:$0xff]
      %v2460 = vld [vmem:[%s2440 + $0x98] sm:$0xff]
      %v2461 = vld [vmem:[%s2440 + $0xa0] sm:$0xff]
      %v2462 = vld [vmem:[%s2440 + $0xa8] sm:$0xff]
      %v2463 = vld [vmem:[%s2440 + $0xb0] sm:$0xff]
      %v2464 = vld [vmem:[%s2440 + $0xb8] sm:$0xff]
      %v2465 = vld [vmem:[%s2440 + $0xc0] sm:$0xff]
      %v2466 = vld [vmem:[%s2440 + $0xc8] sm:$0xff]
      %v2467 = vld [vmem:[%s2440 + $0xd0] sm:$0xff]
      %v2468 = vld [vmem:[%s2440 + $0xd8] sm:$0xff]
      %v2469 = vld [vmem:[%s2440 + $0xe0] sm:$0xff]
      %v2470 = vld [vmem:[%s2440 + $0xe8] sm:$0xff]
      %v2471 = vld [vmem:[%s2440 + $0xf0] sm:$0xff]
      %v2472 = vld [vmem:[%s2440 + $0xf8] sm:$0xff]
      %vm2475 = vcmask 1046528
      %v2476 = vrot.slane %v207, 1
      %v2477 = vrot.slane %v946, 1
      %v2478 = vsel %vm2475, %v2476, %v2477
      %v2479 = vrot.slane %v208, 1
      %v2480 = vrot.slane %v947, 1
      %v2481 = vsel %vm2475, %v2479, %v2480
      %v2516 = vunpack.c.l.b16 %v2441
      %v2517 = vunpack.c.h.b16 %v2441
      %v2518 = vunpack.c.l.b16 %v2442
      %v2519 = vunpack.c.h.b16 %v2442
      %v2520 = vunpack.c.l.b16 %v2443
      %v2521 = vunpack.c.h.b16 %v2443
      %v2522 = vunpack.c.l.b16 %v2444
      %v2523 = vunpack.c.h.b16 %v2444
      %v2524 = vunpack.c.l.b16 %v2445
      %v2525 = vunpack.c.h.b16 %v2445
      %v2526 = vunpack.c.l.b16 %v2446
      %v2527 = vunpack.c.h.b16 %v2446
      %v2528 = vunpack.c.l.b16 %v2447
      %v2529 = vunpack.c.h.b16 %v2447
      %v2530 = vunpack.c.l.b16 %v2448
      %v2531 = vunpack.c.h.b16 %v2448
      %v2532 = vunpack.c.l.b16 %v2449
      %v2533 = vunpack.c.h.b16 %v2449
      %v2534 = vunpack.c.l.b16 %v2450
      %v2535 = vunpack.c.h.b16 %v2450
      %v2536 = vunpack.c.l.b16 %v2451
      %v2537 = vunpack.c.h.b16 %v2451
      %v2538 = vunpack.c.l.b16 %v2452
      %v2539 = vunpack.c.h.b16 %v2452
      %v2540 = vunpack.c.l.b16 %v2453
      %v2541 = vunpack.c.h.b16 %v2453
      %v2542 = vunpack.c.l.b16 %v2454
      %v2543 = vunpack.c.h.b16 %v2454
      %v2544 = vunpack.c.l.b16 %v2455
      %v2545 = vunpack.c.h.b16 %v2455
      %v2546 = vunpack.c.l.b16 %v2456
      %v2547 = vunpack.c.h.b16 %v2456
      %v2548 = vunpack.c.l.b16 %v2457
      %v2549 = vunpack.c.h.b16 %v2457
      %v2550 = vunpack.c.l.b16 %v2458
      %v2551 = vunpack.c.h.b16 %v2458
      %v2552 = vunpack.c.l.b16 %v2459
      %v2553 = vunpack.c.h.b16 %v2459
      %v2554 = vunpack.c.l.b16 %v2460
      %v2555 = vunpack.c.h.b16 %v2460
      %v2556 = vunpack.c.l.b16 %v2461
      %v2557 = vunpack.c.h.b16 %v2461
      %v2558 = vunpack.c.l.b16 %v2462
      %v2559 = vunpack.c.h.b16 %v2462
      %v2560 = vunpack.c.l.b16 %v2463
      %v2561 = vunpack.c.h.b16 %v2463
      %v2562 = vunpack.c.l.b16 %v2464
      %v2563 = vunpack.c.h.b16 %v2464
      %v2564 = vunpack.c.l.b16 %v2465
      %v2565 = vunpack.c.h.b16 %v2465
      %v2566 = vunpack.c.l.b16 %v2466
      %v2567 = vunpack.c.h.b16 %v2466
      %v2568 = vunpack.c.l.b16 %v2467
      %v2569 = vunpack.c.h.b16 %v2467
      %v2570 = vunpack.c.l.b16 %v2468
      %v2571 = vunpack.c.h.b16 %v2468
      %v2572 = vunpack.c.l.b16 %v2469
      %v2573 = vunpack.c.h.b16 %v2469
      %v2574 = vunpack.c.l.b16 %v2470
      %v2575 = vunpack.c.h.b16 %v2470
      %v2576 = vunpack.c.l.b16 %v2471
      %v2577 = vunpack.c.h.b16 %v2471
      %v2578 = vunpack.c.l.b16 %v2472
      %v2579 = vunpack.c.h.b16 %v2472
      %v2580 = vpack.c.b16 %v2518, %v2516
      %v2581 = vpack.c.b16 %v2519, %v2517
      %v2582 = vpack.c.b16 %v2522, %v2520
      %v2583 = vpack.c.b16 %v2523, %v2521
      %v2584 = vpack.c.b16 %v2526, %v2524
      %v2585 = vpack.c.b16 %v2527, %v2525
      %v2586 = vpack.c.b16 %v2530, %v2528
      %v2587 = vpack.c.b16 %v2531, %v2529
      %v2588 = vpack.c.b16 %v2534, %v2532
      %v2589 = vpack.c.b16 %v2535, %v2533
      %v2590 = vpack.c.b16 %v2538, %v2536
      %v2591 = vpack.c.b16 %v2539, %v2537
      %v2592 = vpack.c.b16 %v2542, %v2540
      %v2593 = vpack.c.b16 %v2543, %v2541
      %v2594 = vpack.c.b16 %v2546, %v2544
      %v2595 = vpack.c.b16 %v2547, %v2545
      %v2596 = vpack.c.b16 %v2550, %v2548
      %v2597 = vpack.c.b16 %v2551, %v2549
      %v2598 = vpack.c.b16 %v2554, %v2552
      %v2599 = vpack.c.b16 %v2555, %v2553
      %v2600 = vpack.c.b16 %v2558, %v2556
      %v2601 = vpack.c.b16 %v2559, %v2557
      %v2602 = vpack.c.b16 %v2562, %v2560
      %v2603 = vpack.c.b16 %v2563, %v2561
      %v2604 = vpack.c.b16 %v2566, %v2564
      %v2605 = vpack.c.b16 %v2567, %v2565
      %v2606 = vpack.c.b16 %v2570, %v2568
      %v2607 = vpack.c.b16 %v2571, %v2569
      %v2608 = vpack.c.b16 %v2574, %v2572
      %v2609 = vpack.c.b16 %v2575, %v2573
      %v2610 = vpack.c.b16 %v2578, %v2576
      %v2611 = vpack.c.b16 %v2579, %v2577
      %2644 = vmatprep.subr.bf16.mxu0 %v2581
      %2645 = vmatpush1.bf16.msra.mxu0 %v2580
      %2646 = vmatprep.subr.bf16.mxu0 %v2583
      %2647 = vmatpush1.bf16.msra.mxu0 %v2582
      %2648 = vmatprep.subr.bf16.mxu0 %v2585
      %2649 = vmatpush1.bf16.msra.mxu0 %v2584
      %2650 = vmatprep.subr.bf16.mxu0 %v2587
      %2651 = vmatpush1.bf16.msra.mxu0 %v2586
      %2652 = vmatprep.subr.bf16.mxu0 %v2589
      %2653 = vmatpush1.bf16.msra.mxu0 %v2588
      %2654 = vmatprep.subr.bf16.mxu0 %v2591
      %2655 = vmatpush1.bf16.msra.mxu0 %v2590
      %2656 = vmatprep.subr.bf16.mxu0 %v2593
      %2657 = vmatpush1.bf16.msra.mxu0 %v2592
      %2658 = vmatprep.subr.bf16.mxu0 %v2595
      %2659 = vmatpush1.bf16.msra.mxu0 %v2594
      %2660 = vmatprep.subr.bf16.mxu0 %v2597
      %2661 = vmatpush1.bf16.msra.mxu0 %v2596
      %2662 = vmatprep.subr.bf16.mxu0 %v2599
      %2663 = vmatpush1.bf16.msra.mxu0 %v2598
      %2664 = vmatprep.subr.bf16.mxu0 %v2601
      %2665 = vmatpush1.bf16.msra.mxu0 %v2600
      %2666 = vmatprep.subr.bf16.mxu0 %v2603
      %2667 = vmatpush1.bf16.msra.mxu0 %v2602
      %2668 = vmatprep.subr.bf16.mxu0 %v2605
      %2669 = vmatpush1.bf16.msra.mxu0 %v2604
      %2670 = vmatprep.subr.bf16.mxu0 %v2607
      %2671 = vmatpush1.bf16.msra.mxu0 %v2606
      %2672 = vmatprep.subr.bf16.mxu0 %v2609
      %2673 = vmatpush1.bf16.msra.mxu0 %v2608
      %2674 = vmatprep.subr.bf16.mxu0 %v2611
      %2675 = vmatpush1.bf16.msra.mxu0 %v2610
      %2676 = vmatprep.mubr.bf16.mxu0 %v2481
      %2677 = vmatmul.mubr.bf16.gmra.mrb[0].mxu0 %v2478
      %v2678 = vpop.f32.mrb[0].mxu0
      %v2679 = vadd.f32 0.0, %v2678
      %v2680 = vpop.f32.mrb[0].mxu0
      %v2681 = vadd.f32 0.0, %v2680
      %v2682 = vpop.f32.mrb[0].mxu0
      %v2683 = vadd.f32 0.0, %v2682
      %v2684 = vpop.f32.mrb[0].mxu0
      %v2685 = vadd.f32 0.0, %v2684
      %2686 = vdwg.mxu0
      %v2687 = vadd.f32 %v2436, %v2679
      %v2688 = vadd.f32 %v2437, %v2681
      %v2689 = vadd.f32 %v2438, %v2683
      %v2690 = vadd.f32 %v2439, %v2685
      %s2691 = scalar_lea.vmem %s1, 2560
      %v2692 = vld [vmem:[%s2691] sm:$0xff]
      %v2693 = vld [vmem:[%s2691 + $0x8] sm:$0xff]
      %v2694 = vld [vmem:[%s2691 + $0x10] sm:$0xff]
      %v2695 = vld [vmem:[%s2691 + $0x18] sm:$0xff]
      %v2696 = vld [vmem:[%s2691 + $0x20] sm:$0xff]
      %v2697 = vld [vmem:[%s2691 + $0x28] sm:$0xff]
      %v2698 = vld [vmem:[%s2691 + $0x30] sm:$0xff]
      %v2699 = vld [vmem:[%s2691 + $0x38] sm:$0xff]
      %v2700 = vld [vmem:[%s2691 + $0x40] sm:$0xff]
      %v2701 = vld [vmem:[%s2691 + $0x48] sm:$0xff]
      %v2702 = vld [vmem:[%s2691 + $0x50] sm:$0xff]
      %v2703 = vld [vmem:[%s2691 + $0x58] sm:$0xff]
      %v2704 = vld [vmem:[%s2691 + $0x60] sm:$0xff]
      %v2705 = vld [vmem:[%s2691 + $0x68] sm:$0xff]
      %v2706 = vld [vmem:[%s2691 + $0x70] sm:$0xff]
      %v2707 = vld [vmem:[%s2691 + $0x78] sm:$0xff]
      %v2708 = vld [vmem:[%s2691 + $0x80] sm:$0xff]
      %v2709 = vld [vmem:[%s2691 + $0x88] sm:$0xff]
      %v2710 = vld [vmem:[%s2691 + $0x90] sm:$0xff]
      %v2711 = vld [vmem:[%s2691 + $0x98] sm:$0xff]
      %v2712 = vld [vmem:[%s2691 + $0xa0] sm:$0xff]
      %v2713 = vld [vmem:[%s2691 + $0xa8] sm:$0xff]
      %v2714 = vld [vmem:[%s2691 + $0xb0] sm:$0xff]
      %v2715 = vld [vmem:[%s2691 + $0xb8] sm:$0xff]
      %v2716 = vld [vmem:[%s2691 + $0xc0] sm:$0xff]
      %v2717 = vld [vmem:[%s2691 + $0xc8] sm:$0xff]
      %v2718 = vld [vmem:[%s2691 + $0xd0] sm:$0xff]
      %v2719 = vld [vmem:[%s2691 + $0xd8] sm:$0xff]
      %v2720 = vld [vmem:[%s2691 + $0xe0] sm:$0xff]
      %v2721 = vld [vmem:[%s2691 + $0xe8] sm:$0xff]
      %v2722 = vld [vmem:[%s2691 + $0xf0] sm:$0xff]
      %v2723 = vld [vmem:[%s2691 + $0xf8] sm:$0xff]
      %v2725 = vrot.slane %v241, 1
      %v2726 = vrot.slane %v1215, 1
      %v2727 = vsel %vm2475, %v2725, %v2726
      %2728 = vrot.lane.b32.xlu0 %v2478, 112
      %v2729 = vpop.permute.xlu0 %2728
      %2730 = vrot.lane.b32.xlu0 %v2481, 112
      %v2731 = vpop.permute.xlu0 %2730
      %2732 = vrot.lane.b32.xlu0 %v2727, 112
      %v2733 = vpop.permute.xlu0 %2732
      %v2734 = vsel %vm284, %v2729, %v2731
      %v2735 = vsel %vm284, %v2731, %v2733
      %v2770 = vunpack.c.l.b16 %v2692
      %v2771 = vunpack.c.h.b16 %v2692
      %v2772 = vunpack.c.l.b16 %v2693
      %v2773 = vunpack.c.h.b16 %v2693
      %v2774 = vunpack.c.l.b16 %v2694
      %v2775 = vunpack.c.h.b16 %v2694
      %v2776 = vunpack.c.l.b16 %v2695
      %v2777 = vunpack.c.h.b16 %v2695
      %v2778 = vunpack.c.l.b16 %v2696
      %v2779 = vunpack.c.h.b16 %v2696
      %v2780 = vunpack.c.l.b16 %v2697
      %v2781 = vunpack.c.h.b16 %v2697
      %v2782 = vunpack.c.l.b16 %v2698
      %v2783 = vunpack.c.h.b16 %v2698
      %v2784 = vunpack.c.l.b16 %v2699
      %v2785 = vunpack.c.h.b16 %v2699
      %v2786 = vunpack.c.l.b16 %v2700
      %v2787 = vunpack.c.h.b16 %v2700
      %v2788 = vunpack.c.l.b16 %v2701
      %v2789 = vunpack.c.h.b16 %v2701
      %v2790 = vunpack.c.l.b16 %v2702
      %v2791 = vunpack.c.h.b16 %v2702
      %v2792 = vunpack.c.l.b16 %v2703
      %v2793 = vunpack.c.h.b16 %v2703
      %v2794 = vunpack.c.l.b16 %v2704
      %v2795 = vunpack.c.h.b16 %v2704
      %v2796 = vunpack.c.l.b16 %v2705
      %v2797 = vunpack.c.h.b16 %v2705
      %v2798 = vunpack.c.l.b16 %v2706
      %v2799 = vunpack.c.h.b16 %v2706
      %v2800 = vunpack.c.l.b16 %v2707
      %v2801 = vunpack.c.h.b16 %v2707
      %v2802 = vunpack.c.l.b16 %v2708
      %v2803 = vunpack.c.h.b16 %v2708
      %v2804 = vunpack.c.l.b16 %v2709
      %v2805 = vunpack.c.h.b16 %v2709
      %v2806 = vunpack.c.l.b16 %v2710
      %v2807 = vunpack.c.h.b16 %v2710
      %v2808 = vunpack.c.l.b16 %v2711
      %v2809 = vunpack.c.h.b16 %v2711
      %v2810 = vunpack.c.l.b16 %v2712
      %v2811 = vunpack.c.h.b16 %v2712
      %v2812 = vunpack.c.l.b16 %v2713
      %v2813 = vunpack.c.h.b16 %v2713
      %v2814 = vunpack.c.l.b16 %v2714
      %v2815 = vunpack.c.h.b16 %v2714
      %v2816 = vunpack.c.l.b16 %v2715
      %v2817 = vunpack.c.h.b16 %v2715
      %v2818 = vunpack.c.l.b16 %v2716
      %v2819 = vunpack.c.h.b16 %v2716
      %v2820 = vunpack.c.l.b16 %v2717
      %v2821 = vunpack.c.h.b16 %v2717
      %v2822 = vunpack.c.l.b16 %v2718
      %v2823 = vunpack.c.h.b16 %v2718
      %v2824 = vunpack.c.l.b16 %v2719
      %v2825 = vunpack.c.h.b16 %v2719
      %v2826 = vunpack.c.l.b16 %v2720
      %v2827 = vunpack.c.h.b16 %v2720
      %v2828 = vunpack.c.l.b16 %v2721
      %v2829 = vunpack.c.h.b16 %v2721
      %v2830 = vunpack.c.l.b16 %v2722
      %v2831 = vunpack.c.h.b16 %v2722
      %v2832 = vunpack.c.l.b16 %v2723
      %v2833 = vunpack.c.h.b16 %v2723
      %v2834 = vpack.c.b16 %v2772, %v2770
      %v2835 = vpack.c.b16 %v2773, %v2771
      %v2836 = vpack.c.b16 %v2776, %v2774
      %v2837 = vpack.c.b16 %v2777, %v2775
      %v2838 = vpack.c.b16 %v2780, %v2778
      %v2839 = vpack.c.b16 %v2781, %v2779
      %v2840 = vpack.c.b16 %v2784, %v2782
      %v2841 = vpack.c.b16 %v2785, %v2783
      %v2842 = vpack.c.b16 %v2788, %v2786
      %v2843 = vpack.c.b16 %v2789, %v2787
      %v2844 = vpack.c.b16 %v2792, %v2790
      %v2845 = vpack.c.b16 %v2793, %v2791
      %v2846 = vpack.c.b16 %v2796, %v2794
      %v2847 = vpack.c.b16 %v2797, %v2795
      %v2848 = vpack.c.b16 %v2800, %v2798
      %v2849 = vpack.c.b16 %v2801, %v2799
      %v2850 = vpack.c.b16 %v2804, %v2802
      %v2851 = vpack.c.b16 %v2805, %v2803
      %v2852 = vpack.c.b16 %v2808, %v2806
      %v2853 = vpack.c.b16 %v2809, %v2807
      %v2854 = vpack.c.b16 %v2812, %v2810
      %v2855 = vpack.c.b16 %v2813, %v2811
      %v2856 = vpack.c.b16 %v2816, %v2814
      %v2857 = vpack.c.b16 %v2817, %v2815
      %v2858 = vpack.c.b16 %v2820, %v2818
      %v2859 = vpack.c.b16 %v2821, %v2819
      %v2860 = vpack.c.b16 %v2824, %v2822
      %v2861 = vpack.c.b16 %v2825, %v2823
      %v2862 = vpack.c.b16 %v2828, %v2826
      %v2863 = vpack.c.b16 %v2829, %v2827
      %v2864 = vpack.c.b16 %v2832, %v2830
      %v2865 = vpack.c.b16 %v2833, %v2831
      %2898 = vmatprep.subr.bf16.mxu0 %v2835
      %2899 = vmatpush1.bf16.msra.mxu0 %v2834
      %2900 = vmatprep.subr.bf16.mxu0 %v2837
      %2901 = vmatpush1.bf16.msra.mxu0 %v2836
      %2902 = vmatprep.subr.bf16.mxu0 %v2839
      %2903 = vmatpush1.bf16.msra.mxu0 %v2838
      %2904 = vmatprep.subr.bf16.mxu0 %v2841
      %2905 = vmatpush1.bf16.msra.mxu0 %v2840
      %2906 = vmatprep.subr.bf16.mxu0 %v2843
      %2907 = vmatpush1.bf16.msra.mxu0 %v2842
      %2908 = vmatprep.subr.bf16.mxu0 %v2845
      %2909 = vmatpush1.bf16.msra.mxu0 %v2844
      %2910 = vmatprep.subr.bf16.mxu0 %v2847
      %2911 = vmatpush1.bf16.msra.mxu0 %v2846
      %2912 = vmatprep.subr.bf16.mxu0 %v2849
      %2913 = vmatpush1.bf16.msra.mxu0 %v2848
      %2914 = vmatprep.subr.bf16.mxu0 %v2851
      %2915 = vmatpush1.bf16.msra.mxu0 %v2850
      %2916 = vmatprep.subr.bf16.mxu0 %v2853
      %2917 = vmatpush1.bf16.msra.mxu0 %v2852
      %2918 = vmatprep.subr.bf16.mxu0 %v2855
      %2919 = vmatpush1.bf16.msra.mxu0 %v2854
      %2920 = vmatprep.subr.bf16.mxu0 %v2857
      %2921 = vmatpush1.bf16.msra.mxu0 %v2856
      %2922 = vmatprep.subr.bf16.mxu0 %v2859
      %2923 = vmatpush1.bf16.msra.mxu0 %v2858
      %2924 = vmatprep.subr.bf16.mxu0 %v2861
      %2925 = vmatpush1.bf16.msra.mxu0 %v2860
      %2926 = vmatprep.subr.bf16.mxu0 %v2863
      %2927 = vmatpush1.bf16.msra.mxu0 %v2862
      %2928 = vmatprep.subr.bf16.mxu0 %v2865
      %2929 = vmatpush1.bf16.msra.mxu0 %v2864
      %2930 = vmatprep.mubr.bf16.mxu0 %v2735
      %2931 = vmatmul.mubr.bf16.gmra.mrb[0].mxu0 %v2734
      %v2932 = vpop.f32.mrb[0].mxu0
      %v2933 = vadd.f32 0.0, %v2932
      %v2934 = vpop.f32.mrb[0].mxu0
      %v2935 = vadd.f32 0.0, %v2934
      %v2936 = vpop.f32.mrb[0].mxu0
      %v2937 = vadd.f32 0.0, %v2936
      %v2938 = vpop.f32.mrb[0].mxu0
      %v2939 = vadd.f32 0.0, %v2938
      %2940 = vdwg.mxu0
      %v2941 = vadd.f32 %v2687, %v2933
      %v2942 = vadd.f32 %v2688, %v2935
      %v2943 = vadd.f32 %v2689, %v2937
      %v2944 = vadd.f32 %v2690, %v2939
      %s2945 = scalar_lea.vmem %s1, 2816
      %v2946 = vld [vmem:[%s2945] sm:$0xff]
      %v2947 = vld [vmem:[%s2945 + $0x8] sm:$0xff]
      %v2948 = vld [vmem:[%s2945 + $0x10] sm:$0xff]
      %v2949 = vld [vmem:[%s2945 + $0x18] sm:$0xff]
      %v2950 = vld [vmem:[%s2945 + $0x20] sm:$0xff]
      %v2951 = vld [vmem:[%s2945 + $0x28] sm:$0xff]
      %v2952 = vld [vmem:[%s2945 + $0x30] sm:$0xff]
      %v2953 = vld [vmem:[%s2945 + $0x38] sm:$0xff]
      %v2954 = vld [vmem:[%s2945 + $0x40] sm:$0xff]
      %v2955 = vld [vmem:[%s2945 + $0x48] sm:$0xff]
      %v2956 = vld [vmem:[%s2945 + $0x50] sm:$0xff]
      %v2957 = vld [vmem:[%s2945 + $0x58] sm:$0xff]
      %v2958 = vld [vmem:[%s2945 + $0x60] sm:$0xff]
      %v2959 = vld [vmem:[%s2945 + $0x68] sm:$0xff]
      %v2960 = vld [vmem:[%s2945 + $0x70] sm:$0xff]
      %v2961 = vld [vmem:[%s2945 + $0x78] sm:$0xff]
      %v2962 = vld [vmem:[%s2945 + $0x80] sm:$0xff]
      %v2963 = vld [vmem:[%s2945 + $0x88] sm:$0xff]
      %v2964 = vld [vmem:[%s2945 + $0x90] sm:$0xff]
      %v2965 = vld [vmem:[%s2945 + $0x98] sm:$0xff]
      %v2966 = vld [vmem:[%s2945 + $0xa0] sm:$0xff]
      %v2967 = vld [vmem:[%s2945 + $0xa8] sm:$0xff]
      %v2968 = vld [vmem:[%s2945 + $0xb0] sm:$0xff]
      %v2969 = vld [vmem:[%s2945 + $0xb8] sm:$0xff]
      %v2970 = vld [vmem:[%s2945 + $0xc0] sm:$0xff]
      %v2971 = vld [vmem:[%s2945 + $0xc8] sm:$0xff]
      %v2972 = vld [vmem:[%s2945 + $0xd0] sm:$0xff]
      %v2973 = vld [vmem:[%s2945 + $0xd8] sm:$0xff]
      %v2974 = vld [vmem:[%s2945 + $0xe0] sm:$0xff]
      %v2975 = vld [vmem:[%s2945 + $0xe8] sm:$0xff]
      %v2976 = vld [vmem:[%s2945 + $0xf0] sm:$0xff]
      %v2977 = vld [vmem:[%s2945 + $0xf8] sm:$0xff]
      %2978 = vrot.lane.b32.xlu0 %v2478, 96
      %v2979 = vpop.permute.xlu0 %2978
      %2980 = vrot.lane.b32.xlu0 %v2481, 96
      %v2981 = vpop.permute.xlu0 %2980
      %2982 = vrot.lane.b32.xlu0 %v2727, 96
      %v2983 = vpop.permute.xlu0 %2982
      %v2984 = vsel %vm734, %v2979, %v2981
      %v2985 = vsel %vm734, %v2981, %v2983
      %v3020 = vunpack.c.l.b16 %v2946
      %v3021 = vunpack.c.h.b16 %v2946
      %v3022 = vunpack.c.l.b16 %v2947
      %v3023 = vunpack.c.h.b16 %v2947
      %v3024 = vunpack.c.l.b16 %v2948
      %v3025 = vunpack.c.h.b16 %v2948
      %v3026 = vunpack.c.l.b16 %v2949
      %v3027 = vunpack.c.h.b16 %v2949
      %v3028 = vunpack.c.l.b16 %v2950
      %v3029 = vunpack.c.h.b16 %v2950
      %v3030 = vunpack.c.l.b16 %v2951
      %v3031 = vunpack.c.h.b16 %v2951
      %v3032 = vunpack.c.l.b16 %v2952
      %v3033 = vunpack.c.h.b16 %v2952
      %v3034 = vunpack.c.l.b16 %v2953
      %v3035 = vunpack.c.h.b16 %v2953
      %v3036 = vunpack.c.l.b16 %v2954
      %v3037 = vunpack.c.h.b16 %v2954
      %v3038 = vunpack.c.l.b16 %v2955
      %v3039 = vunpack.c.h.b16 %v2955
      %v3040 = vunpack.c.l.b16 %v2956
      %v3041 = vunpack.c.h.b16 %v2956
      %v3042 = vunpack.c.l.b16 %v2957
      %v3043 = vunpack.c.h.b16 %v2957
      %v3044 = vunpack.c.l.b16 %v2958
      %v3045 = vunpack.c.h.b16 %v2958
      %v3046 = vunpack.c.l.b16 %v2959
      %v3047 = vunpack.c.h.b16 %v2959
      %v3048 = vunpack.c.l.b16 %v2960
      %v3049 = vunpack.c.h.b16 %v2960
      %v3050 = vunpack.c.l.b16 %v2961
      %v3051 = vunpack.c.h.b16 %v2961
      %v3052 = vunpack.c.l.b16 %v2962
      %v3053 = vunpack.c.h.b16 %v2962
      %v3054 = vunpack.c.l.b16 %v2963
      %v3055 = vunpack.c.h.b16 %v2963
      %v3056 = vunpack.c.l.b16 %v2964
      %v3057 = vunpack.c.h.b16 %v2964
      %v3058 = vunpack.c.l.b16 %v2965
      %v3059 = vunpack.c.h.b16 %v2965
      %v3060 = vunpack.c.l.b16 %v2966
      %v3061 = vunpack.c.h.b16 %v2966
      %v3062 = vunpack.c.l.b16 %v2967
      %v3063 = vunpack.c.h.b16 %v2967
      %v3064 = vunpack.c.l.b16 %v2968
      %v3065 = vunpack.c.h.b16 %v2968
      %v3066 = vunpack.c.l.b16 %v2969
      %v3067 = vunpack.c.h.b16 %v2969
      %v3068 = vunpack.c.l.b16 %v2970
      %v3069 = vunpack.c.h.b16 %v2970
      %v3070 = vunpack.c.l.b16 %v2971
      %v3071 = vunpack.c.h.b16 %v2971
      %v3072 = vunpack.c.l.b16 %v2972
      %v3073 = vunpack.c.h.b16 %v2972
      %v3074 = vunpack.c.l.b16 %v2973
      %v3075 = vunpack.c.h.b16 %v2973
      %v3076 = vunpack.c.l.b16 %v2974
      %v3077 = vunpack.c.h.b16 %v2974
      %v3078 = vunpack.c.l.b16 %v2975
      %v3079 = vunpack.c.h.b16 %v2975
      %v3080 = vunpack.c.l.b16 %v2976
      %v3081 = vunpack.c.h.b16 %v2976
      %v3082 = vunpack.c.l.b16 %v2977
      %v3083 = vunpack.c.h.b16 %v2977
      %v3084 = vpack.c.b16 %v3022, %v3020
      %v3085 = vpack.c.b16 %v3023, %v3021
      %v3086 = vpack.c.b16 %v3026, %v3024
      %v3087 = vpack.c.b16 %v3027, %v3025
      %v3088 = vpack.c.b16 %v3030, %v3028
      %v3089 = vpack.c.b16 %v3031, %v3029
      %v3090 = vpack.c.b16 %v3034, %v3032
      %v3091 = vpack.c.b16 %v3035, %v3033
      %v3092 = vpack.c.b16 %v3038, %v3036
      %v3093 = vpack.c.b16 %v3039, %v3037
      %v3094 = vpack.c.b16 %v3042, %v3040
      %v3095 = vpack.c.b16 %v3043, %v3041
      %v3096 = vpack.c.b16 %v3046, %v3044
      %v3097 = vpack.c.b16 %v3047, %v3045
      %v3098 = vpack.c.b16 %v3050, %v3048
      %v3099 = vpack.c.b16 %v3051, %v3049
      %v3100 = vpack.c.b16 %v3054, %v3052
      %v3101 = vpack.c.b16 %v3055, %v3053
      %v3102 = vpack.c.b16 %v3058, %v3056
      %v3103 = vpack.c.b16 %v3059, %v3057
      %v3104 = vpack.c.b16 %v3062, %v3060
      %v3105 = vpack.c.b16 %v3063, %v3061
      %v3106 = vpack.c.b16 %v3066, %v3064
      %v3107 = vpack.c.b16 %v3067, %v3065
      %v3108 = vpack.c.b16 %v3070, %v3068
      %v3109 = vpack.c.b16 %v3071, %v3069
      %v3110 = vpack.c.b16 %v3074, %v3072
      %v3111 = vpack.c.b16 %v3075, %v3073
      %v3112 = vpack.c.b16 %v3078, %v3076
      %v3113 = vpack.c.b16 %v3079, %v3077
      %v3114 = vpack.c.b16 %v3082, %v3080
      %v3115 = vpack.c.b16 %v3083, %v3081
      %3148 = vmatprep.subr.bf16.mxu0 %v3085
      %3149 = vmatpush1.bf16.msra.mxu0 %v3084
      %3150 = vmatprep.subr.bf16.mxu0 %v3087
      %3151 = vmatpush1.bf16.msra.mxu0 %v3086
      %3152 = vmatprep.subr.bf16.mxu0 %v3089
      %3153 = vmatpush1.bf16.msra.mxu0 %v3088
      %3154 = vmatprep.subr.bf16.mxu0 %v3091
      %3155 = vmatpush1.bf16.msra.mxu0 %v3090
      %3156 = vmatprep.subr.bf16.mxu0 %v3093
      %3157 = vmatpush1.bf16.msra.mxu0 %v3092
      %3158 = vmatprep.subr.bf16.mxu0 %v3095
      %3159 = vmatpush1.bf16.msra.mxu0 %v3094
      %3160 = vmatprep.subr.bf16.mxu0 %v3097
      %3161 = vmatpush1.bf16.msra.mxu0 %v3096
      %3162 = vmatprep.subr.bf16.mxu0 %v3099
      %3163 = vmatpush1.bf16.msra.mxu0 %v3098
      %3164 = vmatprep.subr.bf16.mxu0 %v3101
      %3165 = vmatpush1.bf16.msra.mxu0 %v3100
      %3166 = vmatprep.subr.bf16.mxu0 %v3103
      %3167 = vmatpush1.bf16.msra.mxu0 %v3102
      %3168 = vmatprep.subr.bf16.mxu0 %v3105
      %3169 = vmatpush1.bf16.msra.mxu0 %v3104
      %3170 = vmatprep.subr.bf16.mxu0 %v3107
      %3171 = vmatpush1.bf16.msra.mxu0 %v3106
      %3172 = vmatprep.subr.bf16.mxu0 %v3109
      %3173 = vmatpush1.bf16.msra.mxu0 %v3108
      %3174 = vmatprep.subr.bf16.mxu0 %v3111
      %3175 = vmatpush1.bf16.msra.mxu0 %v3110
      %3176 = vmatprep.subr.bf16.mxu0 %v3113
      %3177 = vmatpush1.bf16.msra.mxu0 %v3112
      %3178 = vmatprep.subr.bf16.mxu0 %v3115
      %3179 = vmatpush1.bf16.msra.mxu0 %v3114
      %3180 = vmatprep.mubr.bf16.mxu0 %v2985
      %3181 = vmatmul.mubr.bf16.gmra.mrb[0].mxu0 %v2984
      %v3182 = vpop.f32.mrb[0].mxu0
      %v3183 = vadd.f32 0.0, %v3182
      %v3184 = vpop.f32.mrb[0].mxu0
      %v3185 = vadd.f32 0.0, %v3184
      %v3186 = vpop.f32.mrb[0].mxu0
      %v3187 = vadd.f32 0.0, %v3186
      %v3188 = vpop.f32.mrb[0].mxu0
      %v3189 = vadd.f32 0.0, %v3188
      %3190 = vdwg.mxu0
      %v3191 = vadd.f32 %v2941, %v3183
      %v3192 = vadd.f32 %v2942, %v3185
      %v3193 = vadd.f32 %v2943, %v3187
      %v3194 = vadd.f32 %v2944, %v3189
      %v3195 = vadd.f32 %v1724, %v1725
      %3196 = vadd.xlane.f32.xlu0 %v3195
      %v3197 = vpop.xlane.xlu0 %3196
      %v3198 = vadd.f32 %v1726, %v1727
      %3199 = vadd.xlane.f32.xlu0 %v3198
      %v3200 = vpop.xlane.xlu0 %3199
      %v3201 = vadd.f32 %v3197, %v3200
      %v3202 = vrot.slane %v3201, 4
      %v3203 = vadd.f32 %v3201, %v3202
      %v3204 = vrot.slane %v3203, 2
      %v3205 = vadd.f32 %v3203, %v3204
      %v3206 = vrot.slane %v3205, 1
      %v3207 = vadd.f32 %v3205, %v3206
      %v3208 = vadd.f32 %v3191, %v3192
      %3209 = vadd.xlane.f32.xlu0 %v3208
      %v3210 = vpop.xlane.xlu0 %3209
      %v3211 = vadd.f32 %v3193, %v3194
      %3212 = vadd.xlane.f32.xlu0 %v3211
      %v3213 = vpop.xlane.xlu0 %3212
      %v3214 = vadd.f32 %v3210, %v3213
      %v3215 = vrot.slane %v3214, 4
      %v3216 = vadd.f32 %v3214, %v3215
      %v3217 = vrot.slane %v3216, 2
      %v3218 = vadd.f32 %v3216, %v3217
      %v3219 = vrot.slane %v3218, 1
      %v3220 = vadd.f32 %v3218, %v3219
      %v3221 = vadd.f32 %v3207, %v3220
      %v3222 = vrcp.pop 8192.0
      %v3223 = vmul.f32 %v3221, %v3222
      %v3224 = vsub.f32 %v1724, %v3223
      %v3225 = vsub.f32 %v1725, %v3223
      %v3226 = vsub.f32 %v1726, %v3223
      %v3227 = vsub.f32 %v1727, %v3223
      %v3228 = vmul.f32 %v3224, %v3224
      %v3229 = vmul.f32 %v3225, %v3225
      %v3230 = vmul.f32 %v3226, %v3226
      %v3231 = vmul.f32 %v3227, %v3227
      %v3232 = vadd.f32 %v3228, %v3229
      %3233 = vadd.xlane.f32.xlu0 %v3232
      %v3234 = vpop.xlane.xlu0 %3233
      %v3235 = vadd.f32 %v3230, %v3231
      %3236 = vadd.xlane.f32.xlu0 %v3235
      %v3237 = vpop.xlane.xlu0 %3236
      %v3238 = vadd.f32 %v3234, %v3237
      %v3239 = vrot.slane %v3238, 4
      %v3240 = vadd.f32 %v3238, %v3239
      %v3241 = vrot.slane %v3240, 2
      %v3242 = vadd.f32 %v3240, %v3241
      %v3243 = vrot.slane %v3242, 1
      %v3244 = vadd.f32 %v3242, %v3243
      %v3245 = vsub.f32 %v3191, %v3223
      %v3246 = vsub.f32 %v3192, %v3223
      %v3247 = vsub.f32 %v3193, %v3223
      %v3248 = vsub.f32 %v3194, %v3223
      %v3249 = vmul.f32 %v3245, %v3245
      %v3250 = vmul.f32 %v3246, %v3246
      %v3251 = vmul.f32 %v3247, %v3247
      %v3252 = vmul.f32 %v3248, %v3248
      %v3253 = vadd.f32 %v3249, %v3250
      %3254 = vadd.xlane.f32.xlu0 %v3253
      %v3255 = vpop.xlane.xlu0 %3254
      %v3256 = vadd.f32 %v3251, %v3252
      %3257 = vadd.xlane.f32.xlu0 %v3256
      %v3258 = vpop.xlane.xlu0 %3257
      %v3259 = vadd.f32 %v3255, %v3258
      %v3260 = vrot.slane %v3259, 4
      %v3261 = vadd.f32 %v3259, %v3260
      %v3262 = vrot.slane %v3261, 2
      %v3263 = vadd.f32 %v3261, %v3262
      %v3264 = vrot.slane %v3263, 1
      %v3265 = vadd.f32 %v3263, %v3264
      %v3266 = vadd.f32 %v3244, %v3265
      %v3267 = vmul.f32 %v3266, %v3222
      %v3268 = vadd.f32 %v3267, 1e-05
      %v3269 = vrsqrt.pop %v3268
      %v3270 = vmul.f32 %v3224, %v3269
      %v3271 = vmul.f32 %v3225, %v3269
      %v3272 = vmul.f32 %v3226, %v3269
      %v3273 = vmul.f32 %v3227, %v3269
      %v3274 = vld [vmem:[%s2] sm:$0xff]
      %v3275 = vld [vmem:[%s2 + $0x8] sm:$0xff]
      %v3276 = vld [vmem:[%s2 + $0x10] sm:$0xff]
      %v3277 = vld [vmem:[%s2 + $0x18] sm:$0xff]
      %v3278 = vmul.f32 %v3270, %v3274
      %v3279 = vmul.f32 %v3271, %v3275
      %v3280 = vmul.f32 %v3272, %v3276
      %v3281 = vmul.f32 %v3273, %v3277
      %v3282 = vld [vmem:[%s3] sm:$0xff]
      %v3283 = vld [vmem:[%s3 + $0x8] sm:$0xff]
      %v3284 = vld [vmem:[%s3 + $0x10] sm:$0xff]
      %v3285 = vld [vmem:[%s3 + $0x18] sm:$0xff]
      %v3286 = vadd.f32 %v3278, %v3282
      %v3287 = vadd.f32 %v3279, %v3283
      %v3288 = vadd.f32 %v3280, %v3284
      %v3289 = vadd.f32 %v3281, %v3285
      %v3290 = vxor.u32 %v3286, 2147483648
      %v3291 = vxor.u32 %v3287, 2147483648
      %v3292 = vxor.u32 %v3288, 2147483648
      %v3293 = vxor.u32 %v3289, 2147483648
      %v3294 = vmul.f32 %v3290, 1.442695
      %v3295 = vpow.pop %v3294
      %v3296 = vmul.f32 %v3291, 1.442695
      %v3297 = vpow.pop %v3296
      %v3298 = vmul.f32 %v3292, 1.442695
      %v3299 = vpow.pop %v3298
      %v3300 = vmul.f32 %v3293, 1.442695
      %v3301 = vpow.pop %v3300
      %v3302 = vadd.f32 %v3295, 1.0
      %v3303 = vadd.f32 %v3297, 1.0
      %v3304 = vadd.f32 %v3299, 1.0
      %v3305 = vadd.f32 %v3301, 1.0
      %v3306 = vrcp.pop %v3302
      %v3307 = vmul.f32 1.0, %v3306
      %v3308 = vrcp.pop %v3303
      %v3309 = vmul.f32 1.0, %v3308
      %v3310 = vrcp.pop %v3304
      %v3311 = vmul.f32 1.0, %v3310
      %v3312 = vrcp.pop %v3305
      %v3313 = vmul.f32 1.0, %v3312
      %v3314 = vmul.f32 %v3286, %v3307
      %v3315 = vmul.f32 %v3287, %v3309
      %v3316 = vmul.f32 %v3288, %v3311
      %v3317 = vmul.f32 %v3289, %v3313
      %3318 = vst [vmem:[%s197] sm:$0xff] %v3314
      %3319 = vst [vmem:[%s197 + $0x8] sm:$0xff] %v3315
      %3320 = vst [vmem:[%s197 + $0x10] sm:$0xff] %v3316
      %3321 = vst [vmem:[%s197 + $0x18] sm:$0xff] %v3317
      %v3322 = vmul.f32 %v3245, %v3269
      %v3323 = vmul.f32 %v3246, %v3269
      %v3324 = vmul.f32 %v3247, %v3269
      %v3325 = vmul.f32 %v3248, %v3269
      %s3326 = scalar_lea.vmem %s2, 32
      %v3327 = vld [vmem:[%s3326] sm:$0xff]
      %v3328 = vld [vmem:[%s3326 + $0x8] sm:$0xff]
      %v3329 = vld [vmem:[%s3326 + $0x10] sm:$0xff]
      %v3330 = vld [vmem:[%s3326 + $0x18] sm:$0xff]
      %v3331 = vmul.f32 %v3322, %v3327
      %v3332 = vmul.f32 %v3323, %v3328
      %v3333 = vmul.f32 %v3324, %v3329
      %v3334 = vmul.f32 %v3325, %v3330
      %s3335 = scalar_lea.vmem %s3, 32
      %v3336 = vld [vmem:[%s3335] sm:$0xff]
      %v3337 = vld [vmem:[%s3335 + $0x8] sm:$0xff]
      %v3338 = vld [vmem:[%s3335 + $0x10] sm:$0xff]
      %v3339 = vld [vmem:[%s3335 + $0x18] sm:$0xff]
      %v3340 = vadd.f32 %v3331, %v3336
      %v3341 = vadd.f32 %v3332, %v3337
      %v3342 = vadd.f32 %v3333, %v3338
      %v3343 = vadd.f32 %v3334, %v3339
      %v3344 = vxor.u32 %v3340, 2147483648
      %v3345 = vxor.u32 %v3341, 2147483648
      %v3346 = vxor.u32 %v3342, 2147483648
      %v3347 = vxor.u32 %v3343, 2147483648
      %v3348 = vmul.f32 %v3344, 1.442695
      %v3349 = vpow.pop %v3348
      %v3350 = vmul.f32 %v3345, 1.442695
      %v3351 = vpow.pop %v3350
      %v3352 = vmul.f32 %v3346, 1.442695
      %v3353 = vpow.pop %v3352
      %v3354 = vmul.f32 %v3347, 1.442695
      %v3355 = vpow.pop %v3354
      %v3356 = vadd.f32 %v3349, 1.0
      %v3357 = vadd.f32 %v3351, 1.0
      %v3358 = vadd.f32 %v3353, 1.0
      %v3359 = vadd.f32 %v3355, 1.0
      %v3360 = vrcp.pop %v3356
      %v3361 = vmul.f32 1.0, %v3360
      %v3362 = vrcp.pop %v3357
      %v3363 = vmul.f32 1.0, %v3362
      %v3364 = vrcp.pop %v3358
      %v3365 = vmul.f32 1.0, %v3364
      %v3366 = vrcp.pop %v3359
      %v3367 = vmul.f32 1.0, %v3366
      %v3368 = vmul.f32 %v3340, %v3361
      %v3369 = vmul.f32 %v3341, %v3363
      %v3370 = vmul.f32 %v3342, %v3365
      %v3371 = vmul.f32 %v3343, %v3367
      %s3372 = scalar_lea.vmem %s197, 32
      %3373 = vst [vmem:[%s3372] sm:$0xff] %v3368
      %3374 = vst [vmem:[%s3372 + $0x8] sm:$0xff] %v3369
      %3375 = vst [vmem:[%s3372 + $0x10] sm:$0xff] %v3370
      %3376 = vst [vmem:[%s3372 + $0x18] sm:$0xff] %v3371
      %p3377 = scmp.lt.s32.totalorder %s15, 3
      %s3378 = scalar_select %p3377, %s15, 3
      %s3379 = smul.addr %s3378, 8
      %s3380 = smul.addr %s3379, 8
      %s3381 = scalar_lea.vmem %s4, %s3380
      // Predicated region
      $region37: #{decoder_forward.6} parent=35 // pred_check
        %p3382 = pneg %p122
      $region38: #{decoder_forward.6} parent=35 // pred_check_branch
        %3384 = sbr.rel (%p3382) target = $region40
      $region39: #{decoder_forward.6} parent=35 // pred_region
        _
      $region40: #{decoder_forward.6} parent=35 // pred_fallthru
        _
    $region36: #{decoder_forward.6} parent=5 // pred_fallthru
      _
    %p3385 = scmp.le.s32.totalorder 2, %s10
    // Predicated region
    $region41: #{decoder_forward.6} parent=5 // pred_check
      %p3386 = pneg %p3385
    $region42: #{decoder_forward.6} parent=5 // pred_check_branch
      %3388 = sbr.rel (%p3386) target = $region44
    $region43: #{decoder_forward.6} parent=5 // pred_region
      %s3389 = ssub.s32 %s10, 2
      // Predicated region
      $region45: #{decoder_forward.6} parent=43 // pred_check
        %p3390 = pneg %p128
      $region46: #{decoder_forward.6} parent=43 // pred_check_branch
        %3392 = sbr.rel (%p3390) target = $region48
      $region47: #{decoder_forward.6} parent=43 // pred_region
        %p3393 = scmp.lt.s32.totalorder %s16, 3
        %s3394 = scalar_select %p3393, %s16, 3
        %s3395 = smul.addr %s3394, 8
        %s3396 = smul.addr %s3395, 8
        %s3397 = scalar_lea.vmem %s4, %s3396
      $region48: #{decoder_forward.6} parent=43 // pred_fallthru
        _
    $region44: #{decoder_forward.6} parent=5 // pred_fallthru
      _
  $region6: #{decoder_forward.6} parent=0 // loop_footer
    %s14 = sadd.s32 1, %s10
  $region7: #{decoder_forward.6} parent=0 // loop_footer_branch
    %9 = sbr.rel target = $region3
  $region8: #{decoder_forward.6} parent=0 // loop_exit
    _

// kernel: decoder_forward.7
$region0: #{decoder_forward.7}
  #allocation0 [shape = 'u32[]', space=smem, size = 0x4, offset = 0x4, fixed_abs, tag = 'smem constant byte address 0x4 - core index']
  #allocation1 [shape = 'u32[144,128]{1,0:T(1,128)}', space=vmem, size = 0x12000, scoped, tag = 'internal scratch']
  %s0 = inlined_call_operand.vmem [shape: f32[4,34,272], index: 0, kind: input, shape index: {}]
  %s1 = inlined_call_operand.vmem [shape: bf16[12,256,192], index: 1, kind: input, shape index: {}]
  %s2 = inlined_call_operand.vmem [shape: f32[1,192], index: 2, kind: input, shape index: {}]
  %s3 = inlined_call_operand.vmem [shape: f32[4,2,32,192], index: 3, kind: output, shape index: {}]
  %s4 = sld [smem:[#allocation0]]
  $region45: #{decoder_forward.7} parent=0
    _
  %s6 = ssub.s32 1, %s4
  %s7 = scalar_select 0, %s6, %s4
  loop: start=0, step=1, limit=6
  $region2: #{decoder_forward.7} parent=0 // loop_pre_header
    _
  $region3: #{decoder_forward.7} parent=0 // loop_header
    %s9 = sphi 0, %s13
    %p10 = scmp.ge.s32.totalorder %s9, 6
    %s19 = sphi 0, %s21
    %s22 = sphi 0, %s19
    %s23 = sphi 0, %s22
    %s39 = sphi 0, %s23
    %s43 = sphi 0, %s43
    %s45 = sphi 0, %s43
    %s46 = sphi 0, %s45
    %s60 = sphi 0, %s46
    %s64 = sphi 0, %s64
    %s66 = sphi 0, %s64
    %s67 = sphi 0, %s66
    %s81 = sphi 0, %s67
    %s87 = sphi 0, %s89
    %s90 = sphi 0, %s87
    %s91 = sphi 0, %s90
    %s107 = sphi 0, %s91
  $region4: #{decoder_forward.7} parent=0 // loop_header_branch
    %12 = sbr.rel (%p10) target = $region8
  $region5: #{decoder_forward.7} parent=0 // loop_body
    %s14 = ssub.s32 %s9, 1
    %s15 = ssub.s32 %s9, 2
    %s16 = sadd.s32 %s9, 1
    %s17 = ssub.s32 %s9, %s16
    %p18 = scmp.eq.s32.totalorder %s17, 0
    %s20 = sadd.s32 %s19, 1
    %s21 = scalar_select %p18, %s19, %s20
    %p24 = pneg %p18
    %p25 = scmp.eq.s32.totalorder %s9, 3
    %p26 = por %p24, %p25
    %p27 = scmp.ne.s32.totalorder %s19, %s22
    %p28 = scmp.eq.s32.totalorder %s9, 0
    %p29 = por %p27, %p28
    %p30 = scmp.ne.s32.totalorder %s19, %s22
    %p31 = scmp.eq.s32.totalorder %s14, 3
    %p32 = por %p30, %p31
    %p33 = scmp.ne.s32.totalorder %s22, %s23
    %p34 = scmp.eq.s32.totalorder %s14, 0
    %p35 = por %p33, %p34
    %p36 = scmp.ne.s32.totalorder %s22, %s23
    %p37 = scmp.eq.s32.totalorder %s15, 3
    %p38 = por %p36, %p37
    %p40 = scmp.ne.s32.totalorder %s23, %s39
    %p41 = scmp.eq.s32.totalorder %s15, 0
    %p42 = por %p40, %p41
    %s44 = sadd.s32 %s43, 1
    %p47 = scmp.eq.s32.totalorder %s9, 3
    %p48 = scmp.ne.s32.totalorder %s43, %s45
    %p49 = scmp.eq.s32.totalorder %s9, 0
    %p50 = por %p48, %p49
    %p51 = scmp.ne.s32.totalorder %s43, %s45
    %p52 = scmp.eq.s32.totalorder %s14, 3
    %p53 = por %p51, %p52
    %p54 = scmp.ne.s32.totalorder %s45, %s46
    %p55 = scmp.eq.s32.totalorder %s14, 0
    %p56 = por %p54, %p55
    %p57 = scmp.ne.s32.totalorder %s45, %s46
    %p58 = scmp.eq.s32.totalorder %s15, 3
    %p59 = por %p57, %p58
    %p61 = scmp.ne.s32.totalorder %s46, %s60
    %p62 = scmp.eq.s32.totalorder %s15, 0
    %p63 = por %p61, %p62
    %s65 = sadd.s32 %s64, 1
    %p68 = scmp.eq.s32.totalorder %s9, 3
    %p69 = scmp.ne.s32.totalorder %s64, %s66
    %p70 = scmp.eq.s32.totalorder %s9, 0
    %p71 = por %p69, %p70
    %p72 = scmp.ne.s32.totalorder %s64, %s66
    %p73 = scmp.eq.s32.totalorder %s14, 3
    %p74 = por %p72, %p73
    %p75 = scmp.ne.s32.totalorder %s66, %s67
    %p76 = scmp.eq.s32.totalorder %s14, 0
    %p77 = por %p75, %p76
    %p78 = scmp.ne.s32.totalorder %s66, %s67
    %p79 = scmp.eq.s32.totalorder %s15, 3
    %p80 = por %p78, %p79
    %p82 = scmp.ne.s32.totalorder %s67, %s81
    %p83 = scmp.eq.s32.totalorder %s15, 0
    %p84 = por %p82, %p83
    %s85 = ssub.s32 %s9, %s16
    %p86 = scmp.eq.s32.totalorder %s85, 0
    %s88 = sadd.s32 %s87, 1
    %s89 = scalar_select %p86, %s87, %s88
    %p92 = pneg %p86
    %p93 = scmp.eq.s32.totalorder %s9, 3
    %p94 = por %p92, %p93
    %p95 = scmp.ne.s32.totalorder %s87, %s90
    %p96 = scmp.eq.s32.totalorder %s9, 0
    %p97 = por %p95, %p96
    %p98 = scmp.ne.s32.totalorder %s87, %s90
    %p99 = scmp.eq.s32.totalorder %s14, 3
    %p100 = por %p98, %p99
    %p101 = scmp.ne.s32.totalorder %s90, %s91
    %p102 = scmp.eq.s32.totalorder %s14, 0
    %p103 = por %p101, %p102
    %p104 = scmp.ne.s32.totalorder %s90, %s91
    %p105 = scmp.eq.s32.totalorder %s15, 3
    %p106 = por %p104, %p105
    %p108 = scmp.ne.s32.totalorder %s91, %s107
    %p109 = scmp.eq.s32.totalorder %s15, 0
    %p110 = por %p108, %p109
    %p111 = scmp.le.s32.totalorder 1, %s9
    %p112 = scmp.lt.s32.totalorder %s9, 5
    %p113 = pnand %p111, %p112
    %p114 = pneg %p113
    // Predicated region
    $region9: #{decoder_forward.7} parent=5 // pred_check
      _
    $region10: #{decoder_forward.7} parent=5 // pred_check_branch
      %116 = sbr.rel (%p113) target = $region12
    $region11: #{decoder_forward.7} parent=5 // pred_region
      %s117 = ssub.s32 %s9, 1
      // Predicated region
      $region13: #{decoder_forward.7} parent=11 // pred_check
        %p118 = pneg %p56
      $region14: #{decoder_forward.7} parent=11 // pred_check_branch
        %120 = sbr.rel (%p118) target = $region16
      $region15: #{decoder_forward.7} parent=11 // pred_region
        _
      $region16: #{decoder_forward.7} parent=11 // pred_fallthru
        _
      // Predicated region
      $region17: #{decoder_forward.7} parent=11 // pred_check
        %p121 = pneg %p77
      $region18: #{decoder_forward.7} parent=11 // pred_check_branch
        %123 = sbr.rel (%p121) target = $region20
      $region19: #{decoder_forward.7} parent=11 // pred_region
        _
      $region20: #{decoder_forward.7} parent=11 // pred_fallthru
        _
    $region12: #{decoder_forward.7} parent=5 // pred_fallthru
      _
    %p124 = scmp.lt.s32.totalorder %s9, 4
    // Predicated region
    $region21: #{decoder_forward.7} parent=5 // pred_check
      %p125 = pneg %p124
    $region22: #{decoder_forward.7} parent=5 // pred_check_branch
      %127 = sbr.rel (%p125) target = $region24
    $region23: #{decoder_forward.7} parent=5 // pred_region
      // Predicated region
      $region25: #{decoder_forward.7} parent=23 // pred_check
        %p128 = pneg %p29
      $region26: #{decoder_forward.7} parent=23 // pred_check_branch
        %130 = sbr.rel (%p128) target = $region28
      $region27: #{decoder_forward.7} parent=23 // pred_region
        %p131 = scmp.lt.s32.totalorder %s9, 3
        %s132 = scalar_select %p131, %s9, 3
        %s133 = smul.addr %s132, 15
        %s134 = smul.addr %s133, 8
        %s135 = scalar_lea.vmem %s0, %s134
      $region28: #{decoder_forward.7} parent=23 // pred_fallthru
        _
    $region24: #{decoder_forward.7} parent=5 // pred_fallthru
      _
    %p136 = scmp.le.s32.totalorder 1, %s9
    %p137 = scmp.lt.s32.totalorder %s9, 5
    %p138 = pnand %p136, %p137
    %p139 = pneg %p138
    // Predicated region
    $region29: #{decoder_forward.7} parent=5 // pred_check
      _
    $region30: #{decoder_forward.7} parent=5 // pred_check_branch
      %141 = sbr.rel (%p138) target = $region32
    $region31: #{decoder_forward.7} parent=5 // pred_region
      %s142 = ssub.s32 %s9, 1
      %p143 = scmp.lt.s32.totalorder %s14, 3
      %s144 = scalar_select %p143, %s14, 3
      %s145 = smul.addr %s144, 15
      %s146 = smul.addr %s145, 8
      %s147 = scalar_lea.vmem %s0, %s146
      %p148 = pneg %p35
      %p149 = pneg %p32
      %p150 = pneg %p56
      %p151 = pneg %p53
      %p152 = pneg %p77
      %p153 = pneg %p74
      %p154 = pneg %p103
      %p155 = pneg %p100
      %p156 = scmp.lt.s32.totalorder %s14, 3
      %s157 = scalar_select %p156, %s14, 3
      %s158 = smul.addr %s157, 16
      %s159 = smul.addr %s158, 8
      %s160 = scalar_lea.vmem %s3, %s159
      %p161 = scmp.lt.s32.totalorder %s14, 3
      %s162 = scalar_select %p161, %s14, 3
      %s163 = smul.addr %s162, 15
      %s164 = smul.addr %s163, 8
      %s165 = scalar_lea.vmem %s0, %s164
      %p166 = scmp.lt.s32.totalorder %s14, 3
      %s167 = scalar_select %p166, %s14, 3
      %s168 = smul.addr %s167, 16
      %s169 = smul.addr %s168, 8
      %s170 = scalar_lea.vmem %s3, %s169
      %v171 = vld [vmem:[%s165] sm:$0xff]
      %v172 = vld [vmem:[%s165 + $0x8] sm:$0xff]
      %v173 = vld [vmem:[%s165 + $0x10] sm:$0xff]
      %v174 = vld [vmem:[%s165 + $0x18] sm:$0xff]
      %v175 = vld [vmem:[%s165 + $0x20] sm:$0xff]
      %v176 = vld [vmem:[%s165 + $0x28] sm:$0xff]
      %v177 = vld [vmem:[%s165 + $0x30] sm:$0xff]
      %v178 = vld [vmem:[%s165 + $0x38] sm:$0xff]
      %v179 = vld [vmem:[%s165 + $0x40] sm:$0xff]
      %v180 = vld [vmem:[%s165 + $0x48] sm:$0xff]
      %v181 = vld [vmem:[%s165 + $0x50] sm:$0xff]
      %v182 = vld [vmem:[%s165 + $0x58] sm:$0xff]
      %v183 = vld [vmem:[%s165 + $0x60] sm:$0x3]
      %v184 = vld [vmem:[%s165 + $0x68] sm:$0x3]
      %v185 = vld [vmem:[%s165 + $0x70] sm:$0x3]
      %v186 = vpack.c.bf16 %v174, %v171
      %v187 = vpack.c.bf16 %v175, %v172
      %v188 = vpack.c.bf16 %v180, %v177
      %v189 = vpack.c.bf16 %v181, %v178
      %v190 = vld [vmem:[%s1] sm:$0xff]
      %v191 = vld [vmem:[%s1 + $0x8] sm:$0xff]
      %v192 = vld [vmem:[%s1 + $0x10] sm:$0xff]
      %v193 = vld [vmem:[%s1 + $0x18] sm:$0xff]
      %v194 = vld [vmem:[%s1 + $0x20] sm:$0xff]
      %v195 = vld [vmem:[%s1 + $0x28] sm:$0xff]
      %v196 = vld [vmem:[%s1 + $0x30] sm:$0xff]
      %v197 = vld [vmem:[%s1 + $0x38] sm:$0xff]
      %v198 = vld [vmem:[%s1 + $0x40] sm:$0xff]
      %v199 = vld [vmem:[%s1 + $0x48] sm:$0xff]
      %v200 = vld [vmem:[%s1 + $0x50] sm:$0xff]
      %v201 = vld [vmem:[%s1 + $0x58] sm:$0xff]
      %v202 = vld [vmem:[%s1 + $0x60] sm:$0xff]
      %v203 = vld [vmem:[%s1 + $0x68] sm:$0xff]
      %v204 = vld [vmem:[%s1 + $0x70] sm:$0xff]
      %v205 = vld [vmem:[%s1 + $0x78] sm:$0xff]
      %v206 = vld [vmem:[%s1 + $0x80] sm:$0xff]
      %v207 = vld [vmem:[%s1 + $0x88] sm:$0xff]
      %v208 = vld [vmem:[%s1 + $0x90] sm:$0xff]
      %v209 = vld [vmem:[%s1 + $0x98] sm:$0xff]
      %v210 = vld [vmem:[%s1 + $0xa0] sm:$0xff]
      %v211 = vld [vmem:[%s1 + $0xa8] sm:$0xff]
      %v212 = vld [vmem:[%s1 + $0xb0] sm:$0xff]
      %v213 = vld [vmem:[%s1 + $0xb8] sm:$0xff]
      %v214 = vld [vmem:[%s1 + $0xc0] sm:$0xff]
      %v215 = vld [vmem:[%s1 + $0xc8] sm:$0xff]
      %v216 = vld [vmem:[%s1 + $0xd0] sm:$0xff]
      %v217 = vld [vmem:[%s1 + $0xd8] sm:$0xff]
      %v218 = vld [vmem:[%s1 + $0xe0] sm:$0xff]
      %v219 = vld [vmem:[%s1 + $0xe8] sm:$0xff]
      %v220 = vld [vmem:[%s1 + $0xf0] sm:$0xff]
      %v221 = vld [vmem:[%s1 + $0xf8] sm:$0xff]
      %v222 = vpack.c.bf16 %v176, %v173
      %v223 = vpack.c.bf16 %v182, %v179
      %s224 = scalar_lea.vmem %s1, 256
      %v225 = vld [vmem:[%s224] sm:$0xff]
      %v226 = vld [vmem:[%s224 + $0x8] sm:$0xff]
      %v227 = vld [vmem:[%s224 + $0x10] sm:$0xff]
      %v228 = vld [vmem:[%s224 + $0x18] sm:$0xff]
      %v229 = vld [vmem:[%s224 + $0x20] sm:$0xff]
      %v230 = vld [vmem:[%s224 + $0x28] sm:$0xff]
      %v231 = vld [vmem:[%s224 + $0x30] sm:$0xff]
      %v232 = vld [vmem:[%s224 + $0x38] sm:$0xff]
      %v233 = vld [vmem:[%s224 + $0x40] sm:$0xff]
      %v234 = vld [vmem:[%s224 + $0x48] sm:$0xff]
      %v235 = vld [vmem:[%s224 + $0x50] sm:$0xff]
      %v236 = vld [vmem:[%s224 + $0x58] sm:$0xff]
      %v237 = vld [vmem:[%s224 + $0x60] sm:$0xff]
      %v238 = vld [vmem:[%s224 + $0x68] sm:$0xff]
      %v239 = vld [vmem:[%s224 + $0x70] sm:$0xff]
      %v240 = vld [vmem:[%s224 + $0x78] sm:$0xff]
      %v241 = vld [vmem:[%s224 + $0x80] sm:$0xff]
      %v242 = vld [vmem:[%s224 + $0x88] sm:$0xff]
      %v243 = vld [vmem:[%s224 + $0x90] sm:$0xff]
      %v244 = vld [vmem:[%s224 + $0x98] sm:$0xff]
      %v245 = vld [vmem:[%s224 + $0xa0] sm:$0xff]
      %v246 = vld [vmem:[%s224 + $0xa8] sm:$0xff]
      %v247 = vld [vmem:[%s224 + $0xb0] sm:$0xff]
      %v248 = vld [vmem:[%s224 + $0xb8] sm:$0xff]
      %v249 = vld [vmem:[%s224 + $0xc0] sm:$0xff]
      %v250 = vld [vmem:[%s224 + $0xc8] sm:$0xff]
      %v251 = vld [vmem:[%s224 + $0xd0] sm:$0xff]
      %v252 = vld [vmem:[%s224 + $0xd8] sm:$0xff]
      %v253 = vld [vmem:[%s224 + $0xe0] sm:$0xff]
      %v254 = vld [vmem:[%s224 + $0xe8] sm:$0xff]
      %v255 = vld [vmem:[%s224 + $0xf0] sm:$0xff]
      %v256 = vld [vmem:[%s224 + $0xf8] sm:$0xff]
      %263 = vrot.lane.b32.xlu0 %v186, 120
      %v264 = vpop.permute.xlu0 %263
      %265 = vrot.lane.b32.xlu0 %v187, 120
      %v266 = vpop.permute.xlu0 %265
      %267 = vrot.lane.b32.xlu0 %v222, 120
      %v268 = vpop.permute.xlu0 %267
      %269 = vrot.lane.b32.xlu0 %v188, 120
      %v270 = vpop.permute.xlu0 %269
      %271 = vrot.lane.b32.xlu0 %v189, 120
      %v272 = vpop.permute.xlu0 %271
      %273 = vrot.lane.b32.xlu0 %v223, 120
      %v274 = vpop.permute.xlu0 %273
      %vm275 = vcmask 982016
      %v276 = vsel %vm275, %v264, %v266
      %v277 = vsel %vm275, %v266, %v268
      %v278 = vsel %vm275, %v270, %v272
      %v279 = vsel %vm275, %v272, %v274
      %v316 = vunpack.c.l.b16 %v225
      %v317 = vunpack.c.h.b16 %v225
      %v318 = vunpack.c.l.b16 %v226
      %v319 = vunpack.c.h.b16 %v226
      %v320 = vunpack.c.l.b16 %v227
      %v321 = vunpack.c.h.b16 %v227
      %v322 = vunpack.c.l.b16 %v228
      %v323 = vunpack.c.h.b16 %v228
      %v324 = vunpack.c.l.b16 %v229
      %v325 = vunpack.c.h.b16 %v229
      %v326 = vunpack.c.l.b16 %v230
      %v327 = vunpack.c.h.b16 %v230
      %v328 = vunpack.c.l.b16 %v231
      %v329 = vunpack.c.h.b16 %v231
      %v330 = vunpack.c.l.b16 %v232
      %v331 = vunpack.c.h.b16 %v232
      %v332 = vunpack.c.l.b16 %v233
      %v333 = vunpack.c.h.b16 %v233
      %v334 = vunpack.c.l.b16 %v234
      %v335 = vunpack.c.h.b16 %v234
      %v336 = vunpack.c.l.b16 %v235
      %v337 = vunpack.c.h.b16 %v235
      %v338 = vunpack.c.l.b16 %v236
      %v339 = vunpack.c.h.b16 %v236
      %v340 = vunpack.c.l.b16 %v237
      %v341 = vunpack.c.h.b16 %v237
      %v342 = vunpack.c.l.b16 %v238
      %v343 = vunpack.c.h.b16 %v238
      %v344 = vunpack.c.l.b16 %v239
      %v345 = vunpack.c.h.b16 %v239
      %v346 = vunpack.c.l.b16 %v240
      %v347 = vunpack.c.h.b16 %v240
      %v348 = vunpack.c.l.b16 %v241
      %v349 = vunpack.c.h.b16 %v241
      %v350 = vunpack.c.l.b16 %v242
      %v351 = vunpack.c.h.b16 %v242
      %v352 = vunpack.c.l.b16 %v243
      %v353 = vunpack.c.h.b16 %v243
      %v354 = vunpack.c.l.b16 %v244
      %v355 = vunpack.c.h.b16 %v244
      %v356 = vunpack.c.l.b16 %v245
      %v357 = vunpack.c.h.b16 %v245
      %v358 = vunpack.c.l.b16 %v246
      %v359 = vunpack.c.h.b16 %v246
      %v360 = vunpack.c.l.b16 %v247
      %v361 = vunpack.c.h.b16 %v247
      %v362 = vunpack.c.l.b16 %v248
      %v363 = vunpack.c.h.b16 %v248
      %v364 = vunpack.c.l.b16 %v249
      %v365 = vunpack.c.h.b16 %v249
      %v366 = vunpack.c.l.b16 %v250
      %v367 = vunpack.c.h.b16 %v250
      %v368 = vunpack.c.l.b16 %v251
      %v369 = vunpack.c.h.b16 %v251
      %v370 = vunpack.c.l.b16 %v252
      %v371 = vunpack.c.h.b16 %v252
      %v372 = vunpack.c.l.b16 %v253
      %v373 = vunpack.c.h.b16 %v253
      %v374 = vunpack.c.l.b16 %v254
      %v375 = vunpack.c.h.b16 %v254
      %v376 = vunpack.c.l.b16 %v255
      %v377 = vunpack.c.h.b16 %v255
      %v378 = vunpack.c.l.b16 %v256
      %v379 = vunpack.c.h.b16 %v256
      %v380 = vpack.c.b16 %v318, %v316
      %v381 = vpack.c.b16 %v319, %v317
      %v382 = vpack.c.b16 %v322, %v320
      %v383 = vpack.c.b16 %v323, %v321
      %v384 = vpack.c.b16 %v326, %v324
      %v385 = vpack.c.b16 %v327, %v325
      %v386 = vpack.c.b16 %v330, %v328
      %v387 = vpack.c.b16 %v331, %v329
      %v388 = vpack.c.b16 %v334, %v332
      %v389 = vpack.c.b16 %v335, %v333
      %v390 = vpack.c.b16 %v338, %v336
      %v391 = vpack.c.b16 %v339, %v337
      %v392 = vpack.c.b16 %v342, %v340
      %v393 = vpack.c.b16 %v343, %v341
      %v394 = vpack.c.b16 %v346, %v344
      %v395 = vpack.c.b16 %v347, %v345
      %v396 = vpack.c.b16 %v350, %v348
      %v397 = vpack.c.b16 %v351, %v349
      %v398 = vpack.c.b16 %v354, %v352
      %v399 = vpack.c.b16 %v355, %v353
      %v400 = vpack.c.b16 %v358, %v356
      %v401 = vpack.c.b16 %v359, %v357
      %v402 = vpack.c.b16 %v362, %v360
      %v403 = vpack.c.b16 %v363, %v361
      %v404 = vpack.c.b16 %v366, %v364
      %v405 = vpack.c.b16 %v367, %v365
      %v406 = vpack.c.b16 %v370, %v368
      %v407 = vpack.c.b16 %v371, %v369
      %v408 = vpack.c.b16 %v374, %v372
      %v409 = vpack.c.b16 %v375, %v373
      %v410 = vpack.c.b16 %v378, %v376
      %v411 = vpack.c.b16 %v379, %v377
      %444 = vmatprep.subr.bf16.mxu0 %v381
      %445 = vmatpush1.bf16.msra.mxu0 %v380
      %446 = vmatprep.subr.bf16.mxu0 %v383
      %447 = vmatpush1.bf16.msra.mxu0 %v382
      %448 = vmatprep.subr.bf16.mxu0 %v385
      %449 = vmatpush1.bf16.msra.mxu0 %v384
      %450 = vmatprep.subr.bf16.mxu0 %v387
      %451 = vmatpush1.bf16.msra.mxu0 %v386
      %452 = vmatprep.subr.bf16.mxu0 %v389
      %453 = vmatpush1.bf16.msra.mxu0 %v388
      %454 = vmatprep.subr.bf16.mxu0 %v391
      %455 = vmatpush1.bf16.msra.mxu0 %v390
      %456 = vmatprep.subr.bf16.mxu0 %v393
      %457 = vmatpush1.bf16.msra.mxu0 %v392
      %458 = vmatprep.subr.bf16.mxu0 %v395
      %459 = vmatpush1.bf16.msra.mxu0 %v394
      %460 = vmatprep.subr.bf16.mxu0 %v397
      %461 = vmatpush1.bf16.msra.mxu0 %v396
      %462 = vmatprep.subr.bf16.mxu0 %v399
      %463 = vmatpush1.bf16.msra.mxu0 %v398
      %464 = vmatprep.subr.bf16.mxu0 %v401
      %465 = vmatpush1.bf16.msra.mxu0 %v400
      %466 = vmatprep.subr.bf16.mxu0 %v403
      %467 = vmatpush1.bf16.msra.mxu0 %v402
      %468 = vmatprep.subr.bf16.mxu0 %v405
      %469 = vmatpush1.bf16.msra.mxu0 %v404
      %470 = vmatprep.subr.bf16.mxu0 %v407
      %471 = vmatpush1.bf16.msra.mxu0 %v406
      %472 = vmatprep.subr.bf16.mxu0 %v409
      %473 = vmatpush1.bf16.msra.mxu0 %v408
      %474 = vmatprep.subr.bf16.mxu0 %v411
      %475 = vmatpush1.bf16.msra.mxu0 %v410
      %476 = vmatprep.mubr.bf16.mxu0 %v277
      %477 = vmatmul.mubr.bf16.gmra.mrb[0].mxu0 %v276
      %v478 = vpop.f32.mrb[0].mxu0
      %v479 = vadd.f32 0.0, %v478
      %v480 = vpop.f32.mrb[0].mxu0
      %v481 = vadd.f32 0.0, %v480
      %v482 = vpop.f32.mrb[0].mxu0
      %v483 = vadd.f32 0.0, %v482
      %v484 = vpop.f32.mrb[0].mxu0
      %v485 = vadd.f32 0.0, %v484
      %486 = vmatprep.mubr.bf16.mxu0 %v279
      %487 = vmatmul.mubr.bf16.gmra.mrb[0].mxu0 %v278
      %v488 = vpop.f32.mrb[0].mxu0
      %v489 = vadd.f32 0.0, %v488
      %v490 = vpop.f32.mrb[0].mxu0
      %v491 = vadd.f32 0.0, %v490
      %v492 = vpop.f32.mrb[0].mxu0
      %v493 = vadd.f32 0.0, %v492
      %v494 = vpop.f32.mrb[0].mxu0
      %v495 = vadd.f32 0.0, %v494
      %496 = vdwg.mxu0
      %v529 = vunpack.c.l.b16 %v190
      %v530 = vunpack.c.h.b16 %v190
      %v531 = vunpack.c.l.b16 %v191
      %v532 = vunpack.c.h.b16 %v191
      %v533 = vunpack.c.l.b16 %v192
      %v534 = vunpack.c.h.b16 %v192
      %v535 = vunpack.c.l.b16 %v193
      %v536 = vunpack.c.h.b16 %v193
      %v537 = vunpack.c.l.b16 %v194
      %v538 = vunpack.c.h.b16 %v194
      %v539 = vunpack.c.l.b16 %v195
      %v540 = vunpack.c.h.b16 %v195
      %v541 = vunpack.c.l.b16 %v196
      %v542 = vunpack.c.h.b16 %v196
      %v543 = vunpack.c.l.b16 %v197
      %v544 = vunpack.c.h.b16 %v197
      %v545 = vunpack.c.l.b16 %v198
      %v546 = vunpack.c.h.b16 %v198
      %v547 = vunpack.c.l.b16 %v199
      %v548 = vunpack.c.h.b16 %v199
      %v549 = vunpack.c.l.b16 %v200
      %v550 = vunpack.c.h.b16 %v200
      %v551 = vunpack.c.l.b16 %v201
      %v552 = vunpack.c.h.b16 %v201
      %v553 = vunpack.c.l.b16 %v202
      %v554 = vunpack.c.h.b16 %v202
      %v555 = vunpack.c.l.b16 %v203
      %v556 = vunpack.c.h.b16 %v203
      %v557 = vunpack.c.l.b16 %v204
      %v558 = vunpack.c.h.b16 %v204
      %v559 = vunpack.c.l.b16 %v205
      %v560 = vunpack.c.h.b16 %v205
      %v561 = vunpack.c.l.b16 %v206
      %v562 = vunpack.c.h.b16 %v206
      %v563 = vunpack.c.l.b16 %v207
      %v564 = vunpack.c.h.b16 %v207
      %v565 = vunpack.c.l.b16 %v208
      %v566 = vunpack.c.h.b16 %v208
      %v567 = vunpack.c.l.b16 %v209
      %v568 = vunpack.c.h.b16 %v209
      %v569 = vunpack.c.l.b16 %v210
      %v570 = vunpack.c.h.b16 %v210
      %v571 = vunpack.c.l.b16 %v211
      %v572 = vunpack.c.h.b16 %v211
      %v573 = vunpack.c.l.b16 %v212
      %v574 = vunpack.c.h.b16 %v212
      %v575 = vunpack.c.l.b16 %v213
      %v576 = vunpack.c.h.b16 %v213
      %v577 = vunpack.c.l.b16 %v214
      %v578 = vunpack.c.h.b16 %v214
      %v579 = vunpack.c.l.b16 %v215
      %v580 = vunpack.c.h.b16 %v215
      %v581 = vunpack.c.l.b16 %v216
      %v582 = vunpack.c.h.b16 %v216
      %v583 = vunpack.c.l.b16 %v217
      %v584 = vunpack.c.h.b16 %v217
      %v585 = vunpack.c.l.b16 %v218
      %v586 = vunpack.c.h.b16 %v218
      %v587 = vunpack.c.l.b16 %v219
      %v588 = vunpack.c.h.b16 %v219
      %v589 = vunpack.c.l.b16 %v220
      %v590 = vunpack.c.h.b16 %v220
      %v591 = vunpack.c.l.b16 %v221
      %v592 = vunpack.c.h.b16 %v221
      %v593 = vpack.c.b16 %v531, %v529
      %v594 = vpack.c.b16 %v532, %v530
      %v595 = vpack.c.b16 %v535, %v533
      %v596 = vpack.c.b16 %v536, %v534
      %v597 = vpack.c.b16 %v539, %v537
      %v598 = vpack.c.b16 %v540, %v538
      %v599 = vpack.c.b16 %v543, %v541
      %v600 = vpack.c.b16 %v544, %v542
      %v601 = vpack.c.b16 %v547, %v545
      %v602 = vpack.c.b16 %v548, %v546
      %v603 = vpack.c.b16 %v551, %v549
      %v604 = vpack.c.b16 %v552, %v550
      %v605 = vpack.c.b16 %v555, %v553
      %v606 = vpack.c.b16 %v556, %v554
      %v607 = vpack.c.b16 %v559, %v557
      %v608 = vpack.c.b16 %v560, %v558
      %v609 = vpack.c.b16 %v563, %v561
      %v610 = vpack.c.b16 %v564, %v562
      %v611 = vpack.c.b16 %v567, %v565
      %v612 = vpack.c.b16 %v568, %v566
      %v613 = vpack.c.b16 %v571, %v569
      %v614 = vpack.c.b16 %v572, %v570
      %v615 = vpack.c.b16 %v575, %v573
      %v616 = vpack.c.b16 %v576, %v574
      %v617 = vpack.c.b16 %v579, %v577
      %v618 = vpack.c.b16 %v580, %v578
      %v619 = vpack.c.b16 %v583, %v581
      %v620 = vpack.c.b16 %v584, %v582
      %v621 = vpack.c.b16 %v587, %v585
      %v622 = vpack.c.b16 %v588, %v586
      %v623 = vpack.c.b16 %v591, %v589
      %v624 = vpack.c.b16 %v592, %v590
      %657 = vmatprep.subr.bf16.mxu0 %v594
      %658 = vmatpush1.bf16.msra.mxu0 %v593
      %659 = vmatprep.subr.bf16.mxu0 %v596
      %660 = vmatpush1.bf16.msra.mxu0 %v595
      %661 = vmatprep.subr.bf16.mxu0 %v598
      %662 = vmatpush1.bf16.msra.mxu0 %v597
      %663 = vmatprep.subr.bf16.mxu0 %v600
      %664 = vmatpush1.bf16.msra.mxu0 %v599
      %665 = vmatprep.subr.bf16.mxu0 %v602
      %666 = vmatpush1.bf16.msra.mxu0 %v601
      %667 = vmatprep.subr.bf16.mxu0 %v604
      %668 = vmatpush1.bf16.msra.mxu0 %v603
      %669 = vmatprep.subr.bf16.mxu0 %v606
      %670 = vmatpush1.bf16.msra.mxu0 %v605
      %671 = vmatprep.subr.bf16.mxu0 %v608
      %672 = vmatpush1.bf16.msra.mxu0 %v607
      %673 = vmatprep.subr.bf16.mxu0 %v610
      %674 = vmatpush1.bf16.msra.mxu0 %v609
      %675 = vmatprep.subr.bf16.mxu0 %v612
      %676 = vmatpush1.bf16.msra.mxu0 %v611
      %677 = vmatprep.subr.bf16.mxu0 %v614
      %678 = vmatpush1.bf16.msra.mxu0 %v613
      %679 = vmatprep.subr.bf16.mxu0 %v616
      %680 = vmatpush1.bf16.msra.mxu0 %v615
      %681 = vmatprep.subr.bf16.mxu0 %v618
      %682 = vmatpush1.bf16.msra.mxu0 %v617
      %683 = vmatprep.subr.bf16.mxu0 %v620
      %684 = vmatpush1.bf16.msra.mxu0 %v619
      %685 = vmatprep.subr.bf16.mxu0 %v622
      %686 = vmatpush1.bf16.msra.mxu0 %v621
      %687 = vmatprep.subr.bf16.mxu0 %v624
      %688 = vmatpush1.bf16.msra.mxu0 %v623
      %689 = vmatprep.mubr.bf16.mxu0 %v187
      %690 = vmatmul.mubr.bf16.gmra.mrb[0].mxu0 %v186
      %v691 = vpop.f32.mrb[0].mxu0
      %v692 = vadd.f32 %v479, %v691
      %v693 = vpop.f32.mrb[0].mxu0
      %v694 = vadd.f32 %v481, %v693
      %v695 = vpop.f32.mrb[0].mxu0
      %v696 = vadd.f32 %v483, %v695
      %v697 = vpop.f32.mrb[0].mxu0
      %v698 = vadd.f32 %v485, %v697
      %699 = vmatprep.mubr.bf16.mxu0 %v189
      %700 = vmatmul.mubr.bf16.gmra.mrb[0].mxu0 %v188
      %v701 = vpop.f32.mrb[0].mxu0
      %v702 = vadd.f32 %v489, %v701
      %v703 = vpop.f32.mrb[0].mxu0
      %v704 = vadd.f32 %v491, %v703
      %v705 = vpop.f32.mrb[0].mxu0
      %v706 = vadd.f32 %v493, %v705
      %v707 = vpop.f32.mrb[0].mxu0
      %v708 = vadd.f32 %v495, %v707
      %709 = vdwg.mxu0
      %s710 = scalar_lea.vmem %s1, 512
      %v711 = vld [vmem:[%s710] sm:$0xff]
      %v712 = vld [vmem:[%s710 + $0x8] sm:$0xff]
      %v713 = vld [vmem:[%s710 + $0x10] sm:$0xff]
      %v714 = vld [vmem:[%s710 + $0x18] sm:$0xff]
      %v715 = vld [vmem:[%s710 + $0x20] sm:$0xff]
      %v716 = vld [vmem:[%s710 + $0x28] sm:$0xff]
      %v717 = vld [vmem:[%s710 + $0x30] sm:$0xff]
      %v718 = vld [vmem:[%s710 + $0x38] sm:$0xff]
      %v719 = vld [vmem:[%s710 + $0x40] sm:$0xff]
      %v720 = vld [vmem:[%s710 + $0x48] sm:$0xff]
      %v721 = vld [vmem:[%s710 + $0x50] sm:$0xff]
      %v722 = vld [vmem:[%s710 + $0x58] sm:$0xff]
      %v723 = vld [vmem:[%s710 + $0x60] sm:$0xff]
      %v724 = vld [vmem:[%s710 + $0x68] sm:$0xff]
      %v725 = vld [vmem:[%s710 + $0x70] sm:$0xff]
      %v726 = vld [vmem:[%s710 + $0x78] sm:$0xff]
      %v727 = vld [vmem:[%s710 + $0x80] sm:$0xff]
      %v728 = vld [vmem:[%s710 + $0x88] sm:$0xff]
      %v729 = vld [vmem:[%s710 + $0x90] sm:$0xff]
      %v730 = vld [vmem:[%s710 + $0x98] sm:$0xff]
      %v731 = vld [vmem:[%s710 + $0xa0] sm:$0xff]
      %v732 = vld [vmem:[%s710 + $0xa8] sm:$0xff]
      %v733 = vld [vmem:[%s710 + $0xb0] sm:$0xff]
      %v734 = vld [vmem:[%s710 + $0xb8] sm:$0xff]
      %v735 = vld [vmem:[%s710 + $0xc0] sm:$0xff]
      %v736 = vld [vmem:[%s710 + $0xc8] sm:$0xff]
      %v737 = vld [vmem:[%s710 + $0xd0] sm:$0xff]
      %v738 = vld [vmem:[%s710 + $0xd8] sm:$0xff]
      %v739 = vld [vmem:[%s710 + $0xe0] sm:$0xff]
      %v740 = vld [vmem:[%s710 + $0xe8] sm:$0xff]
      %v741 = vld [vmem:[%s710 + $0xf0] sm:$0xff]
      %v742 = vld [vmem:[%s710 + $0xf8] sm:$0xff]
      %743 = vrot.lane.b32.xlu0 %v186, 112
      %v744 = vpop.permute.xlu0 %743
      %745 = vrot.lane.b32.xlu0 %v187, 112
      %v746 = vpop.permute.xlu0 %745
      %747 = vrot.lane.b32.xlu0 %v222, 112
      %v748 = vpop.permute.xlu0 %747
      %749 = vrot.lane.b32.xlu0 %v188, 112
      %v750 = vpop.permute.xlu0 %749
      %751 = vrot.lane.b32.xlu0 %v189, 112
      %v752 = vpop.permute.xlu0 %751
      %753 = vrot.lane.b32.xlu0 %v223, 112
      %v754 = vpop.permute.xlu0 %753
      %vm755 = vcmask 916480
      %v756 = vsel %vm755, %v744, %v746
      %v757 = vsel %vm755, %v746, %v748
      %v758 = vsel %vm755, %v750, %v752
      %v759 = vsel %vm755, %v752, %v754
      %v796 = vunpack.c.l.b16 %v711
      %v797 = vunpack.c.h.b16 %v711
      %v798 = vunpack.c.l.b16 %v712
      %v799 = vunpack.c.h.b16 %v712
      %v800 = vunpack.c.l.b16 %v713
      %v801 = vunpack.c.h.b16 %v713
      %v802 = vunpack.c.l.b16 %v714
      %v803 = vunpack.c.h.b16 %v714
      %v804 = vunpack.c.l.b16 %v715
      %v805 = vunpack.c.h.b16 %v715
      %v806 = vunpack.c.l.b16 %v716
      %v807 = vunpack.c.h.b16 %v716
      %v808 = vunpack.c.l.b16 %v717
      %v809 = vunpack.c.h.b16 %v717
      %v810 = vunpack.c.l.b16 %v718
      %v811 = vunpack.c.h.b16 %v718
      %v812 = vunpack.c.l.b16 %v719
      %v813 = vunpack.c.h.b16 %v719
      %v814 = vunpack.c.l.b16 %v720
      %v815 = vunpack.c.h.b16 %v720
      %v816 = vunpack.c.l.b16 %v721
      %v817 = vunpack.c.h.b16 %v721
      %v818 = vunpack.c.l.b16 %v722
      %v819 = vunpack.c.h.b16 %v722
      %v820 = vunpack.c.l.b16 %v723
      %v821 = vunpack.c.h.b16 %v723
      %v822 = vunpack.c.l.b16 %v724
      %v823 = vunpack.c.h.b16 %v724
      %v824 = vunpack.c.l.b16 %v725
      %v825 = vunpack.c.h.b16 %v725
      %v826 = vunpack.c.l.b16 %v726
      %v827 = vunpack.c.h.b16 %v726
      %v828 = vunpack.c.l.b16 %v727
      %v829 = vunpack.c.h.b16 %v727
      %v830 = vunpack.c.l.b16 %v728
      %v831 = vunpack.c.h.b16 %v728
      %v832 = vunpack.c.l.b16 %v729
      %v833 = vunpack.c.h.b16 %v729
      %v834 = vunpack.c.l.b16 %v730
      %v835 = vunpack.c.h.b16 %v730
      %v836 = vunpack.c.l.b16 %v731
      %v837 = vunpack.c.h.b16 %v731
      %v838 = vunpack.c.l.b16 %v732
      %v839 = vunpack.c.h.b16 %v732
      %v840 = vunpack.c.l.b16 %v733
      %v841 = vunpack.c.h.b16 %v733
      %v842 = vunpack.c.l.b16 %v734
      %v843 = vunpack.c.h.b16 %v734
      %v844 = vunpack.c.l.b16 %v735
      %v845 = vunpack.c.h.b16 %v735
      %v846 = vunpack.c.l.b16 %v736
      %v847 = vunpack.c.h.b16 %v736
      %v848 = vunpack.c.l.b16 %v737
      %v849 = vunpack.c.h.b16 %v737
      %v850 = vunpack.c.l.b16 %v738
      %v851 = vunpack.c.h.b16 %v738
      %v852 = vunpack.c.l.b16 %v739
      %v853 = vunpack.c.h.b16 %v739
      %v854 = vunpack.c.l.b16 %v740
      %v855 = vunpack.c.h.b16 %v740
      %v856 = vunpack.c.l.b16 %v741
      %v857 = vunpack.c.h.b16 %v741
      %v858 = vunpack.c.l.b16 %v742
      %v859 = vunpack.c.h.b16 %v742
      %v860 = vpack.c.b16 %v798, %v796
      %v861 = vpack.c.b16 %v799, %v797
      %v862 = vpack.c.b16 %v802, %v800
      %v863 = vpack.c.b16 %v803, %v801
      %v864 = vpack.c.b16 %v806, %v804
      %v865 = vpack.c.b16 %v807, %v805
      %v866 = vpack.c.b16 %v810, %v808
      %v867 = vpack.c.b16 %v811, %v809
      %v868 = vpack.c.b16 %v814, %v812
      %v869 = vpack.c.b16 %v815, %v813
      %v870 = vpack.c.b16 %v818, %v816
      %v871 = vpack.c.b16 %v819, %v817
      %v872 = vpack.c.b16 %v822, %v820
      %v873 = vpack.c.b16 %v823, %v821
      %v874 = vpack.c.b16 %v826, %v824
      %v875 = vpack.c.b16 %v827, %v825
      %v876 = vpack.c.b16 %v830, %v828
      %v877 = vpack.c.b16 %v831, %v829
      %v878 = vpack.c.b16 %v834, %v832
      %v879 = vpack.c.b16 %v835, %v833
      %v880 = vpack.c.b16 %v838, %v836
      %v881 = vpack.c.b16 %v839, %v837
      %v882 = vpack.c.b16 %v842, %v840
      %v883 = vpack.c.b16 %v843, %v841
      %v884 = vpack.c.b16 %v846, %v844
      %v885 = vpack.c.b16 %v847, %v845
      %v886 = vpack.c.b16 %v850, %v848
      %v887 = vpack.c.b16 %v851, %v849
      %v888 = vpack.c.b16 %v854, %v852
      %v889 = vpack.c.b16 %v855, %v853
      %v890 = vpack.c.b16 %v858, %v856
      %v891 = vpack.c.b16 %v859, %v857
      %924 = vmatprep.subr.bf16.mxu0 %v861
      %925 = vmatpush1.bf16.msra.mxu0 %v860
      %926 = vmatprep.subr.bf16.mxu0 %v863
      %927 = vmatpush1.bf16.msra.mxu0 %v862
      %928 = vmatprep.subr.bf16.mxu0 %v865
      %929 = vmatpush1.bf16.msra.mxu0 %v864
      %930 = vmatprep.subr.bf16.mxu0 %v867
      %931 = vmatpush1.bf16.msra.mxu0 %v866
      %932 = vmatprep.subr.bf16.mxu0 %v869
      %933 = vmatpush1.bf16.msra.mxu0 %v868
      %934 = vmatprep.subr.bf16.mxu0 %v871
      %935 = vmatpush1.bf16.msra.mxu0 %v870
      %936 = vmatprep.subr.bf16.mxu0 %v873
      %937 = vmatpush1.bf16.msra.mxu0 %v872
      %938 = vmatprep.subr.bf16.mxu0 %v875
      %939 = vmatpush1.bf16.msra.mxu0 %v874
      %940 = vmatprep.subr.bf16.mxu0 %v877
      %941 = vmatpush1.bf16.msra.mxu0 %v876
      %942 = vmatprep.subr.bf16.mxu0 %v879
      %943 = vmatpush1.bf16.msra.mxu0 %v878
      %944 = vmatprep.subr.bf16.mxu0 %v881
      %945 = vmatpush1.bf16.msra.mxu0 %v880
      %946 = vmatprep.subr.bf16.mxu0 %v883
      %947 = vmatpush1.bf16.msra.mxu0 %v882
      %948 = vmatprep.subr.bf16.mxu0 %v885
      %949 = vmatpush1.bf16.msra.mxu0 %v884
      %950 = vmatprep.subr.bf16.mxu0 %v887
      %951 = vmatpush1.bf16.msra.mxu0 %v886
      %952 = vmatprep.subr.bf16.mxu0 %v889
      %953 = vmatpush1.bf16.msra.mxu0 %v888
      %954 = vmatprep.subr.bf16.mxu0 %v891
      %955 = vmatpush1.bf16.msra.mxu0 %v890
      %956 = vmatprep.mubr.bf16.mxu0 %v757
      %957 = vmatmul.mubr.bf16.gmra.mrb[0].mxu0 %v756
      %v958 = vpop.f32.mrb[0].mxu0
      %v959 = vadd.f32 0.0, %v958
      %v960 = vpop.f32.mrb[0].mxu0
      %v961 = vadd.f32 0.0, %v960
      %v962 = vpop.f32.mrb[0].mxu0
      %v963 = vadd.f32 0.0, %v962
      %v964 = vpop.f32.mrb[0].mxu0
      %v965 = vadd.f32 0.0, %v964
      %966 = vmatprep.mubr.bf16.mxu0 %v759
      %967 = vmatmul.mubr.bf16.gmra.mrb[0].mxu0 %v758
      %v968 = vpop.f32.mrb[0].mxu0
      %v969 = vadd.f32 0.0, %v968
      %v970 = vpop.f32.mrb[0].mxu0
      %v971 = vadd.f32 0.0, %v970
      %v972 = vpop.f32.mrb[0].mxu0
      %v973 = vadd.f32 0.0, %v972
      %v974 = vpop.f32.mrb[0].mxu0
      %v975 = vadd.f32 0.0, %v974
      %976 = vdwg.mxu0
      %v977 = vadd.f32 %v692, %v959
      %v978 = vadd.f32 %v694, %v961
      %v979 = vadd.f32 %v696, %v963
      %v980 = vadd.f32 %v698, %v965
      %v981 = vadd.f32 %v702, %v969
      %v982 = vadd.f32 %v704, %v971
      %v983 = vadd.f32 %v706, %v973
      %v984 = vadd.f32 %v708, %v975
      %v985 = vpack.c.bf16 %v183, %v183
      %v986 = vpack.c.bf16 %v184, %v184
      %s987 = scalar_lea.vmem %s1, 768
      %v988 = vld [vmem:[%s987] sm:$0xff]
      %v989 = vld [vmem:[%s987 + $0x8] sm:$0xff]
      %v990 = vld [vmem:[%s987 + $0x10] sm:$0xff]
      %v991 = vld [vmem:[%s987 + $0x18] sm:$0xff]
      %v992 = vld [vmem:[%s987 + $0x20] sm:$0xff]
      %v993 = vld [vmem:[%s987 + $0x28] sm:$0xff]
      %v994 = vld [vmem:[%s987 + $0x30] sm:$0xff]
      %v995 = vld [vmem:[%s987 + $0x38] sm:$0xff]
      %v996 = vld [vmem:[%s987 + $0x40] sm:$0xff]
      %v997 = vld [vmem:[%s987 + $0x48] sm:$0xff]
      %v998 = vld [vmem:[%s987 + $0x50] sm:$0xff]
      %v999 = vld [vmem:[%s987 + $0x58] sm:$0xff]
      %v1000 = vld [vmem:[%s987 + $0x60] sm:$0xff]
      %v1001 = vld [vmem:[%s987 + $0x68] sm:$0xff]
      %v1002 = vld [vmem:[%s987 + $0x70] sm:$0xff]
      %v1003 = vld [vmem:[%s987 + $0x78] sm:$0xff]
      %v1004 = vld [vmem:[%s987 + $0x80] sm:$0xff]
      %v1005 = vld [vmem:[%s987 + $0x88] sm:$0xff]
      %v1006 = vld [vmem:[%s987 + $0x90] sm:$0xff]
      %v1007 = vld [vmem:[%s987 + $0x98] sm:$0xff]
      %v1008 = vld [vmem:[%s987 + $0xa0] sm:$0xff]
      %v1009 = vld [vmem:[%s987 + $0xa8] sm:$0xff]
      %v1010 = vld [vmem:[%s987 + $0xb0] sm:$0xff]
      %v1011 = vld [vmem:[%s987 + $0xb8] sm:$0xff]
      %v1012 = vld [vmem:[%s987 + $0xc0] sm:$0xff]
      %v1013 = vld [vmem:[%s987 + $0xc8] sm:$0xff]
      %v1014 = vld [vmem:[%s987 + $0xd0] sm:$0xff]
      %v1015 = vld [vmem:[%s987 + $0xd8] sm:$0xff]
      %v1016 = vld [vmem:[%s987 + $0xe0] sm:$0xff]
      %v1017 = vld [vmem:[%s987 + $0xe8] sm:$0xff]
      %v1018 = vld [vmem:[%s987 + $0xf0] sm:$0xff]
      %v1019 = vld [vmem:[%s987 + $0xf8] sm:$0xff]
      %vm1020 = vsmask.f32 7424
      %v1022 = vshrl.u32 %v186, 16
      %v1024 = vshll.u32 %v186, 16
      %v1026 = vrot.slane %v1024, 1
      %v1027 = vor.u32 %v1022, %v1026
      %v1029 = vshll.u32 %v188, 16
      %v1031 = vrot.slane %v1029, 1
      %v1032 = vsel %vm1020, %v1027, %v1031
      %v1034 = vshrl.u32 %v187, 16
      %v1036 = vshll.u32 %v187, 16
      %v1038 = vrot.slane %v1036, 1
      %v1039 = vor.u32 %v1034, %v1038
      %v1041 = vshll.u32 %v189, 16
      %v1043 = vrot.slane %v1041, 1
      %v1044 = vsel %vm1020, %v1039, %v1043
      %v1045 = vshrl.u32 %v188, 16
      %v1047 = vor.u32 %v1045, %v1031
      %v1049 = vshll.u32 %v985, 16
      %v1051 = vrot.slane %v1049, 1
      %v1052 = vsel %vm1020, %v1047, %v1051
      %v1053 = vshrl.u32 %v189, 16
      %v1055 = vor.u32 %v1053, %v1043
      %v1057 = vshll.u32 %v986, 16
      %v1059 = vrot.slane %v1057, 1
      %v1060 = vsel %vm1020, %v1055, %v1059
      %v1097 = vunpack.c.l.b16 %v988
      %v1098 = vunpack.c.h.b16 %v988
      %v1099 = vunpack.c.l.b16 %v989
      %v1100 = vunpack.c.h.b16 %v989
      %v1101 = vunpack.c.l.b16 %v990
      %v1102 = vunpack.c.h.b16 %v990
      %v1103 = vunpack.c.l.b16 %v991
      %v1104 = vunpack.c.h.b16 %v991
      %v1105 = vunpack.c.l.b16 %v992
      %v1106 = vunpack.c.h.b16 %v992
      %v1107 = vunpack.c.l.b16 %v993
      %v1108 = vunpack.c.h.b16 %v993
      %v1109 = vunpack.c.l.b16 %v994
      %v1110 = vunpack.c.h.b16 %v994
      %v1111 = vunpack.c.l.b16 %v995
      %v1112 = vunpack.c.h.b16 %v995
      %v1113 = vunpack.c.l.b16 %v996
      %v1114 = vunpack.c.h.b16 %v996
      %v1115 = vunpack.c.l.b16 %v997
      %v1116 = vunpack.c.h.b16 %v997
      %v1117 = vunpack.c.l.b16 %v998
      %v1118 = vunpack.c.h.b16 %v998
      %v1119 = vunpack.c.l.b16 %v999
      %v1120 = vunpack.c.h.b16 %v999
      %v1121 = vunpack.c.l.b16 %v1000
      %v1122 = vunpack.c.h.b16 %v1000
      %v1123 = vunpack.c.l.b16 %v1001
      %v1124 = vunpack.c.h.b16 %v1001
      %v1125 = vunpack.c.l.b16 %v1002
      %v1126 = vunpack.c.h.b16 %v1002
      %v1127 = vunpack.c.l.b16 %v1003
      %v1128 = vunpack.c.h.b16 %v1003
      %v1129 = vunpack.c.l.b16 %v1004
      %v1130 = vunpack.c.h.b16 %v1004
      %v1131 = vunpack.c.l.b16 %v1005
      %v1132 = vunpack.c.h.b16 %v1005
      %v1133 = vunpack.c.l.b16 %v1006
      %v1134 = vunpack.c.h.b16 %v1006
      %v1135 = vunpack.c.l.b16 %v1007
      %v1136 = vunpack.c.h.b16 %v1007
      %v1137 = vunpack.c.l.b16 %v1008
      %v1138 = vunpack.c.h.b16 %v1008
      %v1139 = vunpack.c.l.b16 %v1009
      %v1140 = vunpack.c.h.b16 %v1009
      %v1141 = vunpack.c.l.b16 %v1010
      %v1142 = vunpack.c.h.b16 %v1010
      %v1143 = vunpack.c.l.b16 %v1011
      %v1144 = vunpack.c.h.b16 %v1011
      %v1145 = vunpack.c.l.b16 %v1012
      %v1146 = vunpack.c.h.b16 %v1012
      %v1147 = vunpack.c.l.b16 %v1013
      %v1148 = vunpack.c.h.b16 %v1013
      %v1149 = vunpack.c.l.b16 %v1014
      %v1150 = vunpack.c.h.b16 %v1014
      %v1151 = vunpack.c.l.b16 %v1015
      %v1152 = vunpack.c.h.b16 %v1015
      %v1153 = vunpack.c.l.b16 %v1016
      %v1154 = vunpack.c.h.b16 %v1016
      %v1155 = vunpack.c.l.b16 %v1017
      %v1156 = vunpack.c.h.b16 %v1017
      %v1157 = vunpack.c.l.b16 %v1018
      %v1158 = vunpack.c.h.b16 %v1018
      %v1159 = vunpack.c.l.b16 %v1019
      %v1160 = vunpack.c.h.b16 %v1019
      %v1161 = vpack.c.b16 %v1099, %v1097
      %v1162 = vpack.c.b16 %v1100, %v1098
      %v1163 = vpack.c.b16 %v1103, %v1101
      %v1164 = vpack.c.b16 %v1104, %v1102
      %v1165 = vpack.c.b16 %v1107, %v1105
      %v1166 = vpack.c.b16 %v1108, %v1106
      %v1167 = vpack.c.b16 %v1111, %v1109
      %v1168 = vpack.c.b16 %v1112, %v1110
      %v1169 = vpack.c.b16 %v1115, %v1113
      %v1170 = vpack.c.b16 %v1116, %v1114
      %v1171 = vpack.c.b16 %v1119, %v1117
      %v1172 = vpack.c.b16 %v1120, %v1118
      %v1173 = vpack.c.b16 %v1123, %v1121
      %v1174 = vpack.c.b16 %v1124, %v1122
      %v1175 = vpack.c.b16 %v1127, %v1125
      %v1176 = vpack.c.b16 %v1128, %v1126
      %v1177 = vpack.c.b16 %v1131, %v1129
      %v1178 = vpack.c.b16 %v1132, %v1130
      %v1179 = vpack.c.b16 %v1135, %v1133
      %v1180 = vpack.c.b16 %v1136, %v1134
      %v1181 = vpack.c.b16 %v1139, %v1137
      %v1182 = vpack.c.b16 %v1140, %v1138
      %v1183 = vpack.c.b16 %v1143, %v1141
      %v1184 = vpack.c.b16 %v1144, %v1142
      %v1185 = vpack.c.b16 %v1147, %v1145
      %v1186 = vpack.c.b16 %v1148, %v1146
      %v1187 = vpack.c.b16 %v1151, %v1149
      %v1188 = vpack.c.b16 %v1152, %v1150
      %v1189 = vpack.c.b16 %v1155, %v1153
      %v1190 = vpack.c.b16 %v1156, %v1154
      %v1191 = vpack.c.b16 %v1159, %v1157
      %v1192 = vpack.c.b16 %v1160, %v1158
      %1225 = vmatprep.subr.bf16.mxu0 %v1162
      %1226 = vmatpush1.bf16.msra.mxu0 %v1161
      %1227 = vmatprep.subr.bf16.mxu0 %v1164
      %1228 = vmatpush1.bf16.msra.mxu0 %v1163
      %1229 = vmatprep.subr.bf16.mxu0 %v1166
      %1230 = vmatpush1.bf16.msra.mxu0 %v1165
      %1231 = vmatprep.subr.bf16.mxu0 %v1168
      %1232 = vmatpush1.bf16.msra.mxu0 %v1167
      %1233 = vmatprep.subr.bf16.mxu0 %v1170
      %1234 = vmatpush1.bf16.msra.mxu0 %v1169
      %1235 = vmatprep.subr.bf16.mxu0 %v1172
      %1236 = vmatpush1.bf16.msra.mxu0 %v1171
      %1237 = vmatprep.subr.bf16.mxu0 %v1174
      %1238 = vmatpush1.bf16.msra.mxu0 %v1173
      %1239 = vmatprep.subr.bf16.mxu0 %v1176
      %1240 = vmatpush1.bf16.msra.mxu0 %v1175
      %1241 = vmatprep.subr.bf16.mxu0 %v1178
      %1242 = vmatpush1.bf16.msra.mxu0 %v1177
      %1243 = vmatprep.subr.bf16.mxu0 %v1180
      %1244 = vmatpush1.bf16.msra.mxu0 %v1179
      %1245 = vmatprep.subr.bf16.mxu0 %v1182
      %1246 = vmatpush1.bf16.msra.mxu0 %v1181
      %1247 = vmatprep.subr.bf16.mxu0 %v1184
      %1248 = vmatpush1.bf16.msra.mxu0 %v1183
      %1249 = vmatprep.subr.bf16.mxu0 %v1186
      %1250 = vmatpush1.bf16.msra.mxu0 %v1185
      %1251 = vmatprep.subr.bf16.mxu0 %v1188
      %1252 = vmatpush1.bf16.msra.mxu0 %v1187
      %1253 = vmatprep.subr.bf16.mxu0 %v1190
      %1254 = vmatpush1.bf16.msra.mxu0 %v1189
      %1255 = vmatprep.subr.bf16.mxu0 %v1192
      %1256 = vmatpush1.bf16.msra.mxu0 %v1191
      %1257 = vmatprep.mubr.bf16.mxu0 %v1044
      %1258 = vmatmul.mubr.bf16.gmra.mrb[0].mxu0 %v1032
      %v1259 = vpop.f32.mrb[0].mxu0
      %v1260 = vadd.f32 0.0, %v1259
      %v1261 = vpop.f32.mrb[0].mxu0
      %v1262 = vadd.f32 0.0, %v1261
      %v1263 = vpop.f32.mrb[0].mxu0
      %v1264 = vadd.f32 0.0, %v1263
      %v1265 = vpop.f32.mrb[0].mxu0
      %v1266 = vadd.f32 0.0, %v1265
      %1267 = vmatprep.mubr.bf16.mxu0 %v1060
      %1268 = vmatmul.mubr.bf16.gmra.mrb[0].mxu0 %v1052
      %v1269 = vpop.f32.mrb[0].mxu0
      %v1270 = vadd.f32 0.0, %v1269
      %v1271 = vpop.f32.mrb[0].mxu0
      %v1272 = vadd.f32 0.0, %v1271
      %v1273 = vpop.f32.mrb[0].mxu0
      %v1274 = vadd.f32 0.0, %v1273
      %v1275 = vpop.f32.mrb[0].mxu0
      %v1276 = vadd.f32 0.0, %v1275
      %1277 = vdwg.mxu0
      %v1278 = vadd.f32 %v977, %v1260
      %v1279 = vadd.f32 %v978, %v1262
      %v1280 = vadd.f32 %v979, %v1264
      %v1281 = vadd.f32 %v980, %v1266
      %v1282 = vadd.f32 %v981, %v1270
      %v1283 = vadd.f32 %v982, %v1272
      %v1284 = vadd.f32 %v983, %v1274
      %v1285 = vadd.f32 %v984, %v1276
      %v1286 = vpack.c.bf16 %v185, %v185
      %s1287 = scalar_lea.vmem %s1, 1024
      %v1288 = vld [vmem:[%s1287] sm:$0xff]
      %v1289 = vld [vmem:[%s1287 + $0x8] sm:$0xff]
      %v1290 = vld [vmem:[%s1287 + $0x10] sm:$0xff]
      %v1291 = vld [vmem:[%s1287 + $0x18] sm:$0xff]
      %v1292 = vld [vmem:[%s1287 + $0x20] sm:$0xff]
      %v1293 = vld [vmem:[%s1287 + $0x28] sm:$0xff]
      %v1294 = vld [vmem:[%s1287 + $0x30] sm:$0xff]
      %v1295 = vld [vmem:[%s1287 + $0x38] sm:$0xff]
      %v1296 = vld [vmem:[%s1287 + $0x40] sm:$0xff]
      %v1297 = vld [vmem:[%s1287 + $0x48] sm:$0xff]
      %v1298 = vld [vmem:[%s1287 + $0x50] sm:$0xff]
      %v1299 = vld [vmem:[%s1287 + $0x58] sm:$0xff]
      %v1300 = vld [vmem:[%s1287 + $0x60] sm:$0xff]
      %v1301 = vld [vmem:[%s1287 + $0x68] sm:$0xff]
      %v1302 = vld [vmem:[%s1287 + $0x70] sm:$0xff]
      %v1303 = vld [vmem:[%s1287 + $0x78] sm:$0xff]
      %v1304 = vld [vmem:[%s1287 + $0x80] sm:$0xff]
      %v1305 = vld [vmem:[%s1287 + $0x88] sm:$0xff]
      %v1306 = vld [vmem:[%s1287 + $0x90] sm:$0xff]
      %v1307 = vld [vmem:[%s1287 + $0x98] sm:$0xff]
      %v1308 = vld [vmem:[%s1287 + $0xa0] sm:$0xff]
      %v1309 = vld [vmem:[%s1287 + $0xa8] sm:$0xff]
      %v1310 = vld [vmem:[%s1287 + $0xb0] sm:$0xff]
      %v1311 = vld [vmem:[%s1287 + $0xb8] sm:$0xff]
      %v1312 = vld [vmem:[%s1287 + $0xc0] sm:$0xff]
      %v1313 = vld [vmem:[%s1287 + $0xc8] sm:$0xff]
      %v1314 = vld [vmem:[%s1287 + $0xd0] sm:$0xff]
      %v1315 = vld [vmem:[%s1287 + $0xd8] sm:$0xff]
      %v1316 = vld [vmem:[%s1287 + $0xe0] sm:$0xff]
      %v1317 = vld [vmem:[%s1287 + $0xe8] sm:$0xff]
      %v1318 = vld [vmem:[%s1287 + $0xf0] sm:$0xff]
      %v1319 = vld [vmem:[%s1287 + $0xf8] sm:$0xff]
      %v1321 = vshrl.u32 %v222, 16
      %v1323 = vshll.u32 %v222, 16
      %v1325 = vrot.slane %v1323, 1
      %v1326 = vor.u32 %v1321, %v1325
      %v1328 = vshll.u32 %v223, 16
      %v1330 = vrot.slane %v1328, 1
      %v1331 = vsel %vm1020, %v1326, %v1330
      %v1332 = vshrl.u32 %v223, 16
      %v1334 = vor.u32 %v1332, %v1330
      %v1336 = vshll.u32 %v1286, 16
      %v1338 = vrot.slane %v1336, 1
      %v1339 = vsel %vm1020, %v1334, %v1338
      %1340 = vrot.lane.b32.xlu0 %v1032, 120
      %v1341 = vpop.permute.xlu0 %1340
      %1342 = vrot.lane.b32.xlu0 %v1044, 120
      %v1343 = vpop.permute.xlu0 %1342
      %1344 = vrot.lane.b32.xlu0 %v1331, 120
      %v1345 = vpop.permute.xlu0 %1344
      %1346 = vrot.lane.b32.xlu0 %v1052, 120
      %v1347 = vpop.permute.xlu0 %1346
      %1348 = vrot.lane.b32.xlu0 %v1060, 120
      %v1349 = vpop.permute.xlu0 %1348
      %1350 = vrot.lane.b32.xlu0 %v1339, 120
      %v1351 = vpop.permute.xlu0 %1350
      %v1352 = vsel %vm275, %v1341, %v1343
      %v1353 = vsel %vm275, %v1343, %v1345
      %v1354 = vsel %vm275, %v1347, %v1349
      %v1355 = vsel %vm275, %v1349, %v1351
      %v1392 = vunpack.c.l.b16 %v1288
      %v1393 = vunpack.c.h.b16 %v1288
      %v1394 = vunpack.c.l.b16 %v1289
      %v1395 = vunpack.c.h.b16 %v1289
      %v1396 = vunpack.c.l.b16 %v1290
      %v1397 = vunpack.c.h.b16 %v1290
      %v1398 = vunpack.c.l.b16 %v1291
      %v1399 = vunpack.c.h.b16 %v1291
      %v1400 = vunpack.c.l.b16 %v1292
      %v1401 = vunpack.c.h.b16 %v1292
      %v1402 = vunpack.c.l.b16 %v1293
      %v1403 = vunpack.c.h.b16 %v1293
      %v1404 = vunpack.c.l.b16 %v1294
      %v1405 = vunpack.c.h.b16 %v1294
      %v1406 = vunpack.c.l.b16 %v1295
      %v1407 = vunpack.c.h.b16 %v1295
      %v1408 = vunpack.c.l.b16 %v1296
      %v1409 = vunpack.c.h.b16 %v1296
      %v1410 = vunpack.c.l.b16 %v1297
      %v1411 = vunpack.c.h.b16 %v1297
      %v1412 = vunpack.c.l.b16 %v1298
      %v1413 = vunpack.c.h.b16 %v1298
      %v1414 = vunpack.c.l.b16 %v1299
      %v1415 = vunpack.c.h.b16 %v1299
      %v1416 = vunpack.c.l.b16 %v1300
      %v1417 = vunpack.c.h.b16 %v1300
      %v1418 = vunpack.c.l.b16 %v1301
      %v1419 = vunpack.c.h.b16 %v1301
      %v1420 = vunpack.c.l.b16 %v1302
      %v1421 = vunpack.c.h.b16 %v1302
      %v1422 = vunpack.c.l.b16 %v1303
      %v1423 = vunpack.c.h.b16 %v1303
      %v1424 = vunpack.c.l.b16 %v1304
      %v1425 = vunpack.c.h.b16 %v1304
      %v1426 = vunpack.c.l.b16 %v1305
      %v1427 = vunpack.c.h.b16 %v1305
      %v1428 = vunpack.c.l.b16 %v1306
      %v1429 = vunpack.c.h.b16 %v1306
      %v1430 = vunpack.c.l.b16 %v1307
      %v1431 = vunpack.c.h.b16 %v1307
      %v1432 = vunpack.c.l.b16 %v1308
      %v1433 = vunpack.c.h.b16 %v1308
      %v1434 = vunpack.c.l.b16 %v1309
      %v1435 = vunpack.c.h.b16 %v1309
      %v1436 = vunpack.c.l.b16 %v1310
      %v1437 = vunpack.c.h.b16 %v1310
      %v1438 = vunpack.c.l.b16 %v1311
      %v1439 = vunpack.c.h.b16 %v1311
      %v1440 = vunpack.c.l.b16 %v1312
      %v1441 = vunpack.c.h.b16 %v1312
      %v1442 = vunpack.c.l.b16 %v1313
      %v1443 = vunpack.c.h.b16 %v1313
      %v1444 = vunpack.c.l.b16 %v1314
      %v1445 = vunpack.c.h.b16 %v1314
      %v1446 = vunpack.c.l.b16 %v1315
      %v1447 = vunpack.c.h.b16 %v1315
      %v1448 = vunpack.c.l.b16 %v1316
      %v1449 = vunpack.c.h.b16 %v1316
      %v1450 = vunpack.c.l.b16 %v1317
      %v1451 = vunpack.c.h.b16 %v1317
      %v1452 = vunpack.c.l.b16 %v1318
      %v1453 = vunpack.c.h.b16 %v1318
      %v1454 = vunpack.c.l.b16 %v1319
      %v1455 = vunpack.c.h.b16 %v1319
      %v1456 = vpack.c.b16 %v1394, %v1392
      %v1457 = vpack.c.b16 %v1395, %v1393
      %v1458 = vpack.c.b16 %v1398, %v1396
      %v1459 = vpack.c.b16 %v1399, %v1397
      %v1460 = vpack.c.b16 %v1402, %v1400
      %v1461 = vpack.c.b16 %v1403, %v1401
      %v1462 = vpack.c.b16 %v1406, %v1404
      %v1463 = vpack.c.b16 %v1407, %v1405
      %v1464 = vpack.c.b16 %v1410, %v1408
      %v1465 = vpack.c.b16 %v1411, %v1409
      %v1466 = vpack.c.b16 %v1414, %v1412
      %v1467 = vpack.c.b16 %v1415, %v1413
      %v1468 = vpack.c.b16 %v1418, %v1416
      %v1469 = vpack.c.b16 %v1419, %v1417
      %v1470 = vpack.c.b16 %v1422, %v1420
      %v1471 = vpack.c.b16 %v1423, %v1421
      %v1472 = vpack.c.b16 %v1426, %v1424
      %v1473 = vpack.c.b16 %v1427, %v1425
      %v1474 = vpack.c.b16 %v1430, %v1428
      %v1475 = vpack.c.b16 %v1431, %v1429
      %v1476 = vpack.c.b16 %v1434, %v1432
      %v1477 = vpack.c.b16 %v1435, %v1433
      %v1478 = vpack.c.b16 %v1438, %v1436
      %v1479 = vpack.c.b16 %v1439, %v1437
      %v1480 = vpack.c.b16 %v1442, %v1440
      %v1481 = vpack.c.b16 %v1443, %v1441
      %v1482 = vpack.c.b16 %v1446, %v1444
      %v1483 = vpack.c.b16 %v1447, %v1445
      %v1484 = vpack.c.b16 %v1450, %v1448
      %v1485 = vpack.c.b16 %v1451, %v1449
      %v1486 = vpack.c.b16 %v1454, %v1452
      %v1487 = vpack.c.b16 %v1455, %v1453
      %1520 = vmatprep.subr.bf16.mxu0 %v1457
      %1521 = vmatpush1.bf16.msra.mxu0 %v1456
      %1522 = vmatprep.subr.bf16.mxu0 %v1459
      %1523 = vmatpush1.bf16.msra.mxu0 %v1458
      %1524 = vmatprep.subr.bf16.mxu0 %v1461
      %1525 = vmatpush1.bf16.msra.mxu0 %v1460
      %1526 = vmatprep.subr.bf16.mxu0 %v1463
      %1527 = vmatpush1.bf16.msra.mxu0 %v1462
      %1528 = vmatprep.subr.bf16.mxu0 %v1465
      %1529 = vmatpush1.bf16.msra.mxu0 %v1464
      %1530 = vmatprep.subr.bf16.mxu0 %v1467
      %1531 = vmatpush1.bf16.msra.mxu0 %v1466
      %1532 = vmatprep.subr.bf16.mxu0 %v1469
      %1533 = vmatpush1.bf16.msra.mxu0 %v1468
      %1534 = vmatprep.subr.bf16.mxu0 %v1471
      %1535 = vmatpush1.bf16.msra.mxu0 %v1470
      %1536 = vmatprep.subr.bf16.mxu0 %v1473
      %1537 = vmatpush1.bf16.msra.mxu0 %v1472
      %1538 = vmatprep.subr.bf16.mxu0 %v1475
      %1539 = vmatpush1.bf16.msra.mxu0 %v1474
      %1540 = vmatprep.subr.bf16.mxu0 %v1477
      %1541 = vmatpush1.bf16.msra.mxu0 %v1476
      %1542 = vmatprep.subr.bf16.mxu0 %v1479
      %1543 = vmatpush1.bf16.msra.mxu0 %v1478
      %1544 = vmatprep.subr.bf16.mxu0 %v1481
      %1545 = vmatpush1.bf16.msra.mxu0 %v1480
      %1546 = vmatprep.subr.bf16.mxu0 %v1483
      %1547 = vmatpush1.bf16.msra.mxu0 %v1482
      %1548 = vmatprep.subr.bf16.mxu0 %v1485
      %1549 = vmatpush1.bf16.msra.mxu0 %v1484
      %1550 = vmatprep.subr.bf16.mxu0 %v1487
      %1551 = vmatpush1.bf16.msra.mxu0 %v1486
      %1552 = vmatprep.mubr.bf16.mxu0 %v1353
      %1553 = vmatmul.mubr.bf16.gmra.mrb[0].mxu0 %v1352
      %v1554 = vpop.f32.mrb[0].mxu0
      %v1555 = vadd.f32 0.0, %v1554
      %v1556 = vpop.f32.mrb[0].mxu0
      %v1557 = vadd.f32 0.0, %v1556
      %v1558 = vpop.f32.mrb[0].mxu0
      %v1559 = vadd.f32 0.0, %v1558
      %v1560 = vpop.f32.mrb[0].mxu0
      %v1561 = vadd.f32 0.0, %v1560
      %1562 = vmatprep.mubr.bf16.mxu0 %v1355
      %1563 = vmatmul.mubr.bf16.gmra.mrb[0].mxu0 %v1354
      %v1564 = vpop.f32.mrb[0].mxu0
      %v1565 = vadd.f32 0.0, %v1564
      %v1566 = vpop.f32.mrb[0].mxu0
      %v1567 = vadd.f32 0.0, %v1566
      %v1568 = vpop.f32.mrb[0].mxu0
      %v1569 = vadd.f32 0.0, %v1568
      %v1570 = vpop.f32.mrb[0].mxu0
      %v1571 = vadd.f32 0.0, %v1570
      %1572 = vdwg.mxu0
      %v1573 = vadd.f32 %v1278, %v1555
      %v1574 = vadd.f32 %v1279, %v1557
      %v1575 = vadd.f32 %v1280, %v1559
      %v1576 = vadd.f32 %v1281, %v1561
      %v1577 = vadd.f32 %v1282, %v1565
      %v1578 = vadd.f32 %v1283, %v1567
      %v1579 = vadd.f32 %v1284, %v1569
      %v1580 = vadd.f32 %v1285, %v1571
      %s1581 = scalar_lea.vmem %s1, 1280
      %v1582 = vld [vmem:[%s1581] sm:$0xff]
      %v1583 = vld [vmem:[%s1581 + $0x8] sm:$0xff]
      %v1584 = vld [vmem:[%s1581 + $0x10] sm:$0xff]
      %v1585 = vld [vmem:[%s1581 + $0x18] sm:$0xff]
      %v1586 = vld [vmem:[%s1581 + $0x20] sm:$0xff]
      %v1587 = vld [vmem:[%s1581 + $0x28] sm:$0xff]
      %v1588 = vld [vmem:[%s1581 + $0x30] sm:$0xff]
      %v1589 = vld [vmem:[%s1581 + $0x38] sm:$0xff]
      %v1590 = vld [vmem:[%s1581 + $0x40] sm:$0xff]
      %v1591 = vld [vmem:[%s1581 + $0x48] sm:$0xff]
      %v1592 = vld [vmem:[%s1581 + $0x50] sm:$0xff]
      %v1593 = vld [vmem:[%s1581 + $0x58] sm:$0xff]
      %v1594 = vld [vmem:[%s1581 + $0x60] sm:$0xff]
      %v1595 = vld [vmem:[%s1581 + $0x68] sm:$0xff]
      %v1596 = vld [vmem:[%s1581 + $0x70] sm:$0xff]
      %v1597 = vld [vmem:[%s1581 + $0x78] sm:$0xff]
      %v1598 = vld [vmem:[%s1581 + $0x80] sm:$0xff]
      %v1599 = vld [vmem:[%s1581 + $0x88] sm:$0xff]
      %v1600 = vld [vmem:[%s1581 + $0x90] sm:$0xff]
      %v1601 = vld [vmem:[%s1581 + $0x98] sm:$0xff]
      %v1602 = vld [vmem:[%s1581 + $0xa0] sm:$0xff]
      %v1603 = vld [vmem:[%s1581 + $0xa8] sm:$0xff]
      %v1604 = vld [vmem:[%s1581 + $0xb0] sm:$0xff]
      %v1605 = vld [vmem:[%s1581 + $0xb8] sm:$0xff]
      %v1606 = vld [vmem:[%s1581 + $0xc0] sm:$0xff]
      %v1607 = vld [vmem:[%s1581 + $0xc8] sm:$0xff]
      %v1608 = vld [vmem:[%s1581 + $0xd0] sm:$0xff]
      %v1609 = vld [vmem:[%s1581 + $0xd8] sm:$0xff]
      %v1610 = vld [vmem:[%s1581 + $0xe0] sm:$0xff]
      %v1611 = vld [vmem:[%s1581 + $0xe8] sm:$0xff]
      %v1612 = vld [vmem:[%s1581 + $0xf0] sm:$0xff]
      %v1613 = vld [vmem:[%s1581 + $0xf8] sm:$0xff]
      %1614 = vrot.lane.b32.xlu0 %v1032, 112
      %v1615 = vpop.permute.xlu0 %1614
      %1616 = vrot.lane.b32.xlu0 %v1044, 112
      %v1617 = vpop.permute.xlu0 %1616
      %1618 = vrot.lane.b32.xlu0 %v1331, 112
      %v1619 = vpop.permute.xlu0 %1618
      %1620 = vrot.lane.b32.xlu0 %v1052, 112
      %v1621 = vpop.permute.xlu0 %1620
      %1622 = vrot.lane.b32.xlu0 %v1060, 112
      %v1623 = vpop.permute.xlu0 %1622
      %1624 = vrot.lane.b32.xlu0 %v1339, 112
      %v1625 = vpop.permute.xlu0 %1624
      %v1626 = vsel %vm755, %v1615, %v1617
      %v1627 = vsel %vm755, %v1617, %v1619
      %v1628 = vsel %vm755, %v1621, %v1623
      %v1629 = vsel %vm755, %v1623, %v1625
      %v1666 = vunpack.c.l.b16 %v1582
      %v1667 = vunpack.c.h.b16 %v1582
      %v1668 = vunpack.c.l.b16 %v1583
      %v1669 = vunpack.c.h.b16 %v1583
      %v1670 = vunpack.c.l.b16 %v1584
      %v1671 = vunpack.c.h.b16 %v1584
      %v1672 = vunpack.c.l.b16 %v1585
      %v1673 = vunpack.c.h.b16 %v1585
      %v1674 = vunpack.c.l.b16 %v1586
      %v1675 = vunpack.c.h.b16 %v1586
      %v1676 = vunpack.c.l.b16 %v1587
      %v1677 = vunpack.c.h.b16 %v1587
      %v1678 = vunpack.c.l.b16 %v1588
      %v1679 = vunpack.c.h.b16 %v1588
      %v1680 = vunpack.c.l.b16 %v1589
      %v1681 = vunpack.c.h.b16 %v1589
      %v1682 = vunpack.c.l.b16 %v1590
      %v1683 = vunpack.c.h.b16 %v1590
      %v1684 = vunpack.c.l.b16 %v1591
      %v1685 = vunpack.c.h.b16 %v1591
      %v1686 = vunpack.c.l.b16 %v1592
      %v1687 = vunpack.c.h.b16 %v1592
      %v1688 = vunpack.c.l.b16 %v1593
      %v1689 = vunpack.c.h.b16 %v1593
      %v1690 = vunpack.c.l.b16 %v1594
      %v1691 = vunpack.c.h.b16 %v1594
      %v1692 = vunpack.c.l.b16 %v1595
      %v1693 = vunpack.c.h.b16 %v1595
      %v1694 = vunpack.c.l.b16 %v1596
      %v1695 = vunpack.c.h.b16 %v1596
      %v1696 = vunpack.c.l.b16 %v1597
      %v1697 = vunpack.c.h.b16 %v1597
      %v1698 = vunpack.c.l.b16 %v1598
      %v1699 = vunpack.c.h.b16 %v1598
      %v1700 = vunpack.c.l.b16 %v1599
      %v1701 = vunpack.c.h.b16 %v1599
      %v1702 = vunpack.c.l.b16 %v1600
      %v1703 = vunpack.c.h.b16 %v1600
      %v1704 = vunpack.c.l.b16 %v1601
      %v1705 = vunpack.c.h.b16 %v1601
      %v1706 = vunpack.c.l.b16 %v1602
      %v1707 = vunpack.c.h.b16 %v1602
      %v1708 = vunpack.c.l.b16 %v1603
      %v1709 = vunpack.c.h.b16 %v1603
      %v1710 = vunpack.c.l.b16 %v1604
      %v1711 = vunpack.c.h.b16 %v1604
      %v1712 = vunpack.c.l.b16 %v1605
      %v1713 = vunpack.c.h.b16 %v1605
      %v1714 = vunpack.c.l.b16 %v1606
      %v1715 = vunpack.c.h.b16 %v1606
      %v1716 = vunpack.c.l.b16 %v1607
      %v1717 = vunpack.c.h.b16 %v1607
      %v1718 = vunpack.c.l.b16 %v1608
      %v1719 = vunpack.c.h.b16 %v1608
      %v1720 = vunpack.c.l.b16 %v1609
      %v1721 = vunpack.c.h.b16 %v1609
      %v1722 = vunpack.c.l.b16 %v1610
      %v1723 = vunpack.c.h.b16 %v1610
      %v1724 = vunpack.c.l.b16 %v1611
      %v1725 = vunpack.c.h.b16 %v1611
      %v1726 = vunpack.c.l.b16 %v1612
      %v1727 = vunpack.c.h.b16 %v1612
      %v1728 = vunpack.c.l.b16 %v1613
      %v1729 = vunpack.c.h.b16 %v1613
      %v1730 = vpack.c.b16 %v1668, %v1666
      %v1731 = vpack.c.b16 %v1669, %v1667
      %v1732 = vpack.c.b16 %v1672, %v1670
      %v1733 = vpack.c.b16 %v1673, %v1671
      %v1734 = vpack.c.b16 %v1676, %v1674
      %v1735 = vpack.c.b16 %v1677, %v1675
      %v1736 = vpack.c.b16 %v1680, %v1678
      %v1737 = vpack.c.b16 %v1681, %v1679
      %v1738 = vpack.c.b16 %v1684, %v1682
      %v1739 = vpack.c.b16 %v1685, %v1683
      %v1740 = vpack.c.b16 %v1688, %v1686
      %v1741 = vpack.c.b16 %v1689, %v1687
      %v1742 = vpack.c.b16 %v1692, %v1690
      %v1743 = vpack.c.b16 %v1693, %v1691
      %v1744 = vpack.c.b16 %v1696, %v1694
      %v1745 = vpack.c.b16 %v1697, %v1695
      %v1746 = vpack.c.b16 %v1700, %v1698
      %v1747 = vpack.c.b16 %v1701, %v1699
      %v1748 = vpack.c.b16 %v1704, %v1702
      %v1749 = vpack.c.b16 %v1705, %v1703
      %v1750 = vpack.c.b16 %v1708, %v1706
      %v1751 = vpack.c.b16 %v1709, %v1707
      %v1752 = vpack.c.b16 %v1712, %v1710
      %v1753 = vpack.c.b16 %v1713, %v1711
      %v1754 = vpack.c.b16 %v1716, %v1714
      %v1755 = vpack.c.b16 %v1717, %v1715
      %v1756 = vpack.c.b16 %v1720, %v1718
      %v1757 = vpack.c.b16 %v1721, %v1719
      %v1758 = vpack.c.b16 %v1724, %v1722
      %v1759 = vpack.c.b16 %v1725, %v1723
      %v1760 = vpack.c.b16 %v1728, %v1726
      %v1761 = vpack.c.b16 %v1729, %v1727
      %1794 = vmatprep.subr.bf16.mxu0 %v1731
      %1795 = vmatpush1.bf16.msra.mxu0 %v1730
      %1796 = vmatprep.subr.bf16.mxu0 %v1733
      %1797 = vmatpush1.bf16.msra.mxu0 %v1732
      %1798 = vmatprep.subr.bf16.mxu0 %v1735
      %1799 = vmatpush1.bf16.msra.mxu0 %v1734
      %1800 = vmatprep.subr.bf16.mxu0 %v1737
      %1801 = vmatpush1.bf16.msra.mxu0 %v1736
      %1802 = vmatprep.subr.bf16.mxu0 %v1739
      %1803 = vmatpush1.bf16.msra.mxu0 %v1738
      %1804 = vmatprep.subr.bf16.mxu0 %v1741
      %1805 = vmatpush1.bf16.msra.mxu0 %v1740
      %1806 = vmatprep.subr.bf16.mxu0 %v1743
      %1807 = vmatpush1.bf16.msra.mxu0 %v1742
      %1808 = vmatprep.subr.bf16.mxu0 %v1745
      %1809 = vmatpush1.bf16.msra.mxu0 %v1744
      %1810 = vmatprep.subr.bf16.mxu0 %v1747
      %1811 = vmatpush1.bf16.msra.mxu0 %v1746
      %1812 = vmatprep.subr.bf16.mxu0 %v1749
      %1813 = vmatpush1.bf16.msra.mxu0 %v1748
      %1814 = vmatprep.subr.bf16.mxu0 %v1751
      %1815 = vmatpush1.bf16.msra.mxu0 %v1750
      %1816 = vmatprep.subr.bf16.mxu0 %v1753
      %1817 = vmatpush1.bf16.msra.mxu0 %v1752
      %1818 = vmatprep.subr.bf16.mxu0 %v1755
      %1819 = vmatpush1.bf16.msra.mxu0 %v1754
      %1820 = vmatprep.subr.bf16.mxu0 %v1757
      %1821 = vmatpush1.bf16.msra.mxu0 %v1756
      %1822 = vmatprep.subr.bf16.mxu0 %v1759
      %1823 = vmatpush1.bf16.msra.mxu0 %v1758
      %1824 = vmatprep.subr.bf16.mxu0 %v1761
      %1825 = vmatpush1.bf16.msra.mxu0 %v1760
      %1826 = vmatprep.mubr.bf16.mxu0 %v1627
      %1827 = vmatmul.mubr.bf16.gmra.mrb[0].mxu0 %v1626
      %v1828 = vpop.f32.mrb[0].mxu0
      %v1829 = vadd.f32 0.0, %v1828
      %v1830 = vpop.f32.mrb[0].mxu0
      %v1831 = vadd.f32 0.0, %v1830
      %v1832 = vpop.f32.mrb[0].mxu0
      %v1833 = vadd.f32 0.0, %v1832
      %v1834 = vpop.f32.mrb[0].mxu0
      %v1835 = vadd.f32 0.0, %v1834
      %1836 = vmatprep.mubr.bf16.mxu0 %v1629
      %1837 = vmatmul.mubr.bf16.gmra.mrb[0].mxu0 %v1628
      %v1838 = vpop.f32.mrb[0].mxu0
      %v1839 = vadd.f32 0.0, %v1838
      %v1840 = vpop.f32.mrb[0].mxu0
      %v1841 = vadd.f32 0.0, %v1840
      %v1842 = vpop.f32.mrb[0].mxu0
      %v1843 = vadd.f32 0.0, %v1842
      %v1844 = vpop.f32.mrb[0].mxu0
      %v1845 = vadd.f32 0.0, %v1844
      %1846 = vdwg.mxu0
      %v1847 = vadd.f32 %v1573, %v1829
      %v1848 = vadd.f32 %v1574, %v1831
      %v1849 = vadd.f32 %v1575, %v1833
      %v1850 = vadd.f32 %v1576, %v1835
      %v1851 = vadd.f32 %v1577, %v1839
      %v1852 = vadd.f32 %v1578, %v1841
      %v1853 = vadd.f32 %v1579, %v1843
      %v1854 = vadd.f32 %v1580, %v1845
      %s1855 = scalar_lea.vmem %s1, 1536
      %v1856 = vld [vmem:[%s1855] sm:$0xff]
      %v1857 = vld [vmem:[%s1855 + $0x8] sm:$0xff]
      %v1858 = vld [vmem:[%s1855 + $0x10] sm:$0xff]
      %v1859 = vld [vmem:[%s1855 + $0x18] sm:$0xff]
      %v1860 = vld [vmem:[%s1855 + $0x20] sm:$0xff]
      %v1861 = vld [vmem:[%s1855 + $0x28] sm:$0xff]
      %v1862 = vld [vmem:[%s1855 + $0x30] sm:$0xff]
      %v1863 = vld [vmem:[%s1855 + $0x38] sm:$0xff]
      %v1864 = vld [vmem:[%s1855 + $0x40] sm:$0xff]
      %v1865 = vld [vmem:[%s1855 + $0x48] sm:$0xff]
      %v1866 = vld [vmem:[%s1855 + $0x50] sm:$0xff]
      %v1867 = vld [vmem:[%s1855 + $0x58] sm:$0xff]
      %v1868 = vld [vmem:[%s1855 + $0x60] sm:$0xff]
      %v1869 = vld [vmem:[%s1855 + $0x68] sm:$0xff]
      %v1870 = vld [vmem:[%s1855 + $0x70] sm:$0xff]
      %v1871 = vld [vmem:[%s1855 + $0x78] sm:$0xff]
      %v1872 = vld [vmem:[%s1855 + $0x80] sm:$0xff]
      %v1873 = vld [vmem:[%s1855 + $0x88] sm:$0xff]
      %v1874 = vld [vmem:[%s1855 + $0x90] sm:$0xff]
      %v1875 = vld [vmem:[%s1855 + $0x98] sm:$0xff]
      %v1876 = vld [vmem:[%s1855 + $0xa0] sm:$0xff]
      %v1877 = vld [vmem:[%s1855 + $0xa8] sm:$0xff]
      %v1878 = vld [vmem:[%s1855 + $0xb0] sm:$0xff]
      %v1879 = vld [vmem:[%s1855 + $0xb8] sm:$0xff]
      %v1880 = vld [vmem:[%s1855 + $0xc0] sm:$0xff]
      %v1881 = vld [vmem:[%s1855 + $0xc8] sm:$0xff]
      %v1882 = vld [vmem:[%s1855 + $0xd0] sm:$0xff]
      %v1883 = vld [vmem:[%s1855 + $0xd8] sm:$0xff]
      %v1884 = vld [vmem:[%s1855 + $0xe0] sm:$0xff]
      %v1885 = vld [vmem:[%s1855 + $0xe8] sm:$0xff]
      %v1886 = vld [vmem:[%s1855 + $0xf0] sm:$0xff]
      %v1887 = vld [vmem:[%s1855 + $0xf8] sm:$0xff]
      %s1888 = scalar_lea.vmem %s1, 1792
      %v1889 = vld [vmem:[%s1888] sm:$0xff]
      %v1890 = vld [vmem:[%s1888 + $0x8] sm:$0xff]
      %v1891 = vld [vmem:[%s1888 + $0x10] sm:$0xff]
      %v1892 = vld [vmem:[%s1888 + $0x18] sm:$0xff]
      %v1893 = vld [vmem:[%s1888 + $0x20] sm:$0xff]
      %v1894 = vld [vmem:[%s1888 + $0x28] sm:$0xff]
      %v1895 = vld [vmem:[%s1888 + $0x30] sm:$0xff]
      %v1896 = vld [vmem:[%s1888 + $0x38] sm:$0xff]
      %v1897 = vld [vmem:[%s1888 + $0x40] sm:$0xff]
      %v1898 = vld [vmem:[%s1888 + $0x48] sm:$0xff]
      %v1899 = vld [vmem:[%s1888 + $0x50] sm:$0xff]
      %v1900 = vld [vmem:[%s1888 + $0x58] sm:$0xff]
      %v1901 = vld [vmem:[%s1888 + $0x60] sm:$0xff]
      %v1902 = vld [vmem:[%s1888 + $0x68] sm:$0xff]
      %v1903 = vld [vmem:[%s1888 + $0x70] sm:$0xff]
      %v1904 = vld [vmem:[%s1888 + $0x78] sm:$0xff]
      %v1905 = vld [vmem:[%s1888 + $0x80] sm:$0xff]
      %v1906 = vld [vmem:[%s1888 + $0x88] sm:$0xff]
      %v1907 = vld [vmem:[%s1888 + $0x90] sm:$0xff]
      %v1908 = vld [vmem:[%s1888 + $0x98] sm:$0xff]
      %v1909 = vld [vmem:[%s1888 + $0xa0] sm:$0xff]
      %v1910 = vld [vmem:[%s1888 + $0xa8] sm:$0xff]
      %v1911 = vld [vmem:[%s1888 + $0xb0] sm:$0xff]
      %v1912 = vld [vmem:[%s1888 + $0xb8] sm:$0xff]
      %v1913 = vld [vmem:[%s1888 + $0xc0] sm:$0xff]
      %v1914 = vld [vmem:[%s1888 + $0xc8] sm:$0xff]
      %v1915 = vld [vmem:[%s1888 + $0xd0] sm:$0xff]
      %v1916 = vld [vmem:[%s1888 + $0xd8] sm:$0xff]
      %v1917 = vld [vmem:[%s1888 + $0xe0] sm:$0xff]
      %v1918 = vld [vmem:[%s1888 + $0xe8] sm:$0xff]
      %v1919 = vld [vmem:[%s1888 + $0xf0] sm:$0xff]
      %v1920 = vld [vmem:[%s1888 + $0xf8] sm:$0xff]
      %v1953 = vunpack.c.l.b16 %v1889
      %v1954 = vunpack.c.h.b16 %v1889
      %v1955 = vunpack.c.l.b16 %v1890
      %v1956 = vunpack.c.h.b16 %v1890
      %v1957 = vunpack.c.l.b16 %v1891
      %v1958 = vunpack.c.h.b16 %v1891
      %v1959 = vunpack.c.l.b16 %v1892
      %v1960 = vunpack.c.h.b16 %v1892
      %v1961 = vunpack.c.l.b16 %v1893
      %v1962 = vunpack.c.h.b16 %v1893
      %v1963 = vunpack.c.l.b16 %v1894
      %v1964 = vunpack.c.h.b16 %v1894
      %v1965 = vunpack.c.l.b16 %v1895
      %v1966 = vunpack.c.h.b16 %v1895
      %v1967 = vunpack.c.l.b16 %v1896
      %v1968 = vunpack.c.h.b16 %v1896
      %v1969 = vunpack.c.l.b16 %v1897
      %v1970 = vunpack.c.h.b16 %v1897
      %v1971 = vunpack.c.l.b16 %v1898
      %v1972 = vunpack.c.h.b16 %v1898
      %v1973 = vunpack.c.l.b16 %v1899
      %v1974 = vunpack.c.h.b16 %v1899
      %v1975 = vunpack.c.l.b16 %v1900
      %v1976 = vunpack.c.h.b16 %v1900
      %v1977 = vunpack.c.l.b16 %v1901
      %v1978 = vunpack.c.h.b16 %v1901
      %v1979 = vunpack.c.l.b16 %v1902
      %v1980 = vunpack.c.h.b16 %v1902
      %v1981 = vunpack.c.l.b16 %v1903
      %v1982 = vunpack.c.h.b16 %v1903
      %v1983 = vunpack.c.l.b16 %v1904
      %v1984 = vunpack.c.h.b16 %v1904
      %v1985 = vunpack.c.l.b16 %v1905
      %v1986 = vunpack.c.h.b16 %v1905
      %v1987 = vunpack.c.l.b16 %v1906
      %v1988 = vunpack.c.h.b16 %v1906
      %v1989 = vunpack.c.l.b16 %v1907
      %v1990 = vunpack.c.h.b16 %v1907
      %v1991 = vunpack.c.l.b16 %v1908
      %v1992 = vunpack.c.h.b16 %v1908
      %v1993 = vunpack.c.l.b16 %v1909
      %v1994 = vunpack.c.h.b16 %v1909
      %v1995 = vunpack.c.l.b16 %v1910
      %v1996 = vunpack.c.h.b16 %v1910
      %v1997 = vunpack.c.l.b16 %v1911
      %v1998 = vunpack.c.h.b16 %v1911
      %v1999 = vunpack.c.l.b16 %v1912
      %v2000 = vunpack.c.h.b16 %v1912
      %v2001 = vunpack.c.l.b16 %v1913
      %v2002 = vunpack.c.h.b16 %v1913
      %v2003 = vunpack.c.l.b16 %v1914
      %v2004 = vunpack.c.h.b16 %v1914
      %v2005 = vunpack.c.l.b16 %v1915
      %v2006 = vunpack.c.h.b16 %v1915
      %v2007 = vunpack.c.l.b16 %v1916
      %v2008 = vunpack.c.h.b16 %v1916
      %v2009 = vunpack.c.l.b16 %v1917
      %v2010 = vunpack.c.h.b16 %v1917
      %v2011 = vunpack.c.l.b16 %v1918
      %v2012 = vunpack.c.h.b16 %v1918
      %v2013 = vunpack.c.l.b16 %v1919
      %v2014 = vunpack.c.h.b16 %v1919
      %v2015 = vunpack.c.l.b16 %v1920
      %v2016 = vunpack.c.h.b16 %v1920
      %v2017 = vpack.c.b16 %v1955, %v1953
      %v2018 = vpack.c.b16 %v1956, %v1954
      %v2019 = vpack.c.b16 %v1959, %v1957
      %v2020 = vpack.c.b16 %v1960, %v1958
      %v2021 = vpack.c.b16 %v1963, %v1961
      %v2022 = vpack.c.b16 %v1964, %v1962
      %v2023 = vpack.c.b16 %v1967, %v1965
      %v2024 = vpack.c.b16 %v1968, %v1966
      %v2025 = vpack.c.b16 %v1971, %v1969
      %v2026 = vpack.c.b16 %v1972, %v1970
      %v2027 = vpack.c.b16 %v1975, %v1973
      %v2028 = vpack.c.b16 %v1976, %v1974
      %v2029 = vpack.c.b16 %v1979, %v1977
      %v2030 = vpack.c.b16 %v1980, %v1978
      %v2031 = vpack.c.b16 %v1983, %v1981
      %v2032 = vpack.c.b16 %v1984, %v1982
      %v2033 = vpack.c.b16 %v1987, %v1985
      %v2034 = vpack.c.b16 %v1988, %v1986
      %v2035 = vpack.c.b16 %v1991, %v1989
      %v2036 = vpack.c.b16 %v1992, %v1990
      %v2037 = vpack.c.b16 %v1995, %v1993
      %v2038 = vpack.c.b16 %v1996, %v1994
      %v2039 = vpack.c.b16 %v1999, %v1997
      %v2040 = vpack.c.b16 %v2000, %v1998
      %v2041 = vpack.c.b16 %v2003, %v2001
      %v2042 = vpack.c.b16 %v2004, %v2002
      %v2043 = vpack.c.b16 %v2007, %v2005
      %v2044 = vpack.c.b16 %v2008, %v2006
      %v2045 = vpack.c.b16 %v2011, %v2009
      %v2046 = vpack.c.b16 %v2012, %v2010
      %v2047 = vpack.c.b16 %v2015, %v2013
      %v2048 = vpack.c.b16 %v2016, %v2014
      %2081 = vmatprep.subr.bf16.mxu0 %v2018
      %2082 = vmatpush1.bf16.msra.mxu0 %v2017
      %2083 = vmatprep.subr.bf16.mxu0 %v2020
      %2084 = vmatpush1.bf16.msra.mxu0 %v2019
      %2085 = vmatprep.subr.bf16.mxu0 %v2022
      %2086 = vmatpush1.bf16.msra.mxu0 %v2021
      %2087 = vmatprep.subr.bf16.mxu0 %v2024
      %2088 = vmatpush1.bf16.msra.mxu0 %v2023
      %2089 = vmatprep.subr.bf16.mxu0 %v2026
      %2090 = vmatpush1.bf16.msra.mxu0 %v2025
      %2091 = vmatprep.subr.bf16.mxu0 %v2028
      %2092 = vmatpush1.bf16.msra.mxu0 %v2027
      %2093 = vmatprep.subr.bf16.mxu0 %v2030
      %2094 = vmatpush1.bf16.msra.mxu0 %v2029
      %2095 = vmatprep.subr.bf16.mxu0 %v2032
      %2096 = vmatpush1.bf16.msra.mxu0 %v2031
      %2097 = vmatprep.subr.bf16.mxu0 %v2034
      %2098 = vmatpush1.bf16.msra.mxu0 %v2033
      %2099 = vmatprep.subr.bf16.mxu0 %v2036
      %2100 = vmatpush1.bf16.msra.mxu0 %v2035
      %2101 = vmatprep.subr.bf16.mxu0 %v2038
      %2102 = vmatpush1.bf16.msra.mxu0 %v2037
      %2103 = vmatprep.subr.bf16.mxu0 %v2040
      %2104 = vmatpush1.bf16.msra.mxu0 %v2039
      %2105 = vmatprep.subr.bf16.mxu0 %v2042
      %2106 = vmatpush1.bf16.msra.mxu0 %v2041
      %2107 = vmatprep.subr.bf16.mxu0 %v2044
      %2108 = vmatpush1.bf16.msra.mxu0 %v2043
      %2109 = vmatprep.subr.bf16.mxu0 %v2046
      %2110 = vmatpush1.bf16.msra.mxu0 %v2045
      %2111 = vmatprep.subr.bf16.mxu0 %v2048
      %2112 = vmatpush1.bf16.msra.mxu0 %v2047
      %2113 = vmatprep.mubr.bf16.mxu0 %v1353
      %2114 = vmatmul.mubr.bf16.gmra.mrb[0].mxu0 %v1352
      %v2115 = vpop.f32.mrb[0].mxu0
      %v2116 = vadd.f32 0.0, %v2115
      %v2117 = vpop.f32.mrb[0].mxu0
      %v2118 = vadd.f32 0.0, %v2117
      %v2119 = vpop.f32.mrb[0].mxu0
      %v2120 = vadd.f32 0.0, %v2119
      %v2121 = vpop.f32.mrb[0].mxu0
      %v2122 = vadd.f32 0.0, %v2121
      %2123 = vmatprep.mubr.bf16.mxu0 %v1355
      %2124 = vmatmul.mubr.bf16.gmra.mrb[0].mxu0 %v1354
      %v2125 = vpop.f32.mrb[0].mxu0
      %v2126 = vadd.f32 0.0, %v2125
      %v2127 = vpop.f32.mrb[0].mxu0
      %v2128 = vadd.f32 0.0, %v2127
      %v2129 = vpop.f32.mrb[0].mxu0
      %v2130 = vadd.f32 0.0, %v2129
      %v2131 = vpop.f32.mrb[0].mxu0
      %v2132 = vadd.f32 0.0, %v2131
      %2133 = vdwg.mxu0
      %v2166 = vunpack.c.l.b16 %v1856
      %v2167 = vunpack.c.h.b16 %v1856
      %v2168 = vunpack.c.l.b16 %v1857
      %v2169 = vunpack.c.h.b16 %v1857
      %v2170 = vunpack.c.l.b16 %v1858
      %v2171 = vunpack.c.h.b16 %v1858
      %v2172 = vunpack.c.l.b16 %v1859
      %v2173 = vunpack.c.h.b16 %v1859
      %v2174 = vunpack.c.l.b16 %v1860
      %v2175 = vunpack.c.h.b16 %v1860
      %v2176 = vunpack.c.l.b16 %v1861
      %v2177 = vunpack.c.h.b16 %v1861
      %v2178 = vunpack.c.l.b16 %v1862
      %v2179 = vunpack.c.h.b16 %v1862
      %v2180 = vunpack.c.l.b16 %v1863
      %v2181 = vunpack.c.h.b16 %v1863
      %v2182 = vunpack.c.l.b16 %v1864
      %v2183 = vunpack.c.h.b16 %v1864
      %v2184 = vunpack.c.l.b16 %v1865
      %v2185 = vunpack.c.h.b16 %v1865
      %v2186 = vunpack.c.l.b16 %v1866
      %v2187 = vunpack.c.h.b16 %v1866
      %v2188 = vunpack.c.l.b16 %v1867
      %v2189 = vunpack.c.h.b16 %v1867
      %v2190 = vunpack.c.l.b16 %v1868
      %v2191 = vunpack.c.h.b16 %v1868
      %v2192 = vunpack.c.l.b16 %v1869
      %v2193 = vunpack.c.h.b16 %v1869
      %v2194 = vunpack.c.l.b16 %v1870
      %v2195 = vunpack.c.h.b16 %v1870
      %v2196 = vunpack.c.l.b16 %v1871
      %v2197 = vunpack.c.h.b16 %v1871
      %v2198 = vunpack.c.l.b16 %v1872
      %v2199 = vunpack.c.h.b16 %v1872
      %v2200 = vunpack.c.l.b16 %v1873
      %v2201 = vunpack.c.h.b16 %v1873
      %v2202 = vunpack.c.l.b16 %v1874
      %v2203 = vunpack.c.h.b16 %v1874
      %v2204 = vunpack.c.l.b16 %v1875
      %v2205 = vunpack.c.h.b16 %v1875
      %v2206 = vunpack.c.l.b16 %v1876
      %v2207 = vunpack.c.h.b16 %v1876
      %v2208 = vunpack.c.l.b16 %v1877
      %v2209 = vunpack.c.h.b16 %v1877
      %v2210 = vunpack.c.l.b16 %v1878
      %v2211 = vunpack.c.h.b16 %v1878
      %v2212 = vunpack.c.l.b16 %v1879
      %v2213 = vunpack.c.h.b16 %v1879
      %v2214 = vunpack.c.l.b16 %v1880
      %v2215 = vunpack.c.h.b16 %v1880
      %v2216 = vunpack.c.l.b16 %v1881
      %v2217 = vunpack.c.h.b16 %v1881
      %v2218 = vunpack.c.l.b16 %v1882
      %v2219 = vunpack.c.h.b16 %v1882
      %v2220 = vunpack.c.l.b16 %v1883
      %v2221 = vunpack.c.h.b16 %v1883
      %v2222 = vunpack.c.l.b16 %v1884
      %v2223 = vunpack.c.h.b16 %v1884
      %v2224 = vunpack.c.l.b16 %v1885
      %v2225 = vunpack.c.h.b16 %v1885
      %v2226 = vunpack.c.l.b16 %v1886
      %v2227 = vunpack.c.h.b16 %v1886
      %v2228 = vunpack.c.l.b16 %v1887
      %v2229 = vunpack.c.h.b16 %v1887
      %v2230 = vpack.c.b16 %v2168, %v2166
      %v2231 = vpack.c.b16 %v2169, %v2167
      %v2232 = vpack.c.b16 %v2172, %v2170
      %v2233 = vpack.c.b16 %v2173, %v2171
      %v2234 = vpack.c.b16 %v2176, %v2174
      %v2235 = vpack.c.b16 %v2177, %v2175
      %v2236 = vpack.c.b16 %v2180, %v2178
      %v2237 = vpack.c.b16 %v2181, %v2179
      %v2238 = vpack.c.b16 %v2184, %v2182
      %v2239 = vpack.c.b16 %v2185, %v2183
      %v2240 = vpack.c.b16 %v2188, %v2186
      %v2241 = vpack.c.b16 %v2189, %v2187
      %v2242 = vpack.c.b16 %v2192, %v2190
      %v2243 = vpack.c.b16 %v2193, %v2191
      %v2244 = vpack.c.b16 %v2196, %v2194
      %v2245 = vpack.c.b16 %v2197, %v2195
      %v2246 = vpack.c.b16 %v2200, %v2198
      %v2247 = vpack.c.b16 %v2201, %v2199
      %v2248 = vpack.c.b16 %v2204, %v2202
      %v2249 = vpack.c.b16 %v2205, %v2203
      %v2250 = vpack.c.b16 %v2208, %v2206
      %v2251 = vpack.c.b16 %v2209, %v2207
      %v2252 = vpack.c.b16 %v2212, %v2210
      %v2253 = vpack.c.b16 %v2213, %v2211
      %v2254 = vpack.c.b16 %v2216, %v2214
      %v2255 = vpack.c.b16 %v2217, %v2215
      %v2256 = vpack.c.b16 %v2220, %v2218
      %v2257 = vpack.c.b16 %v2221, %v2219
      %v2258 = vpack.c.b16 %v2224, %v2222
      %v2259 = vpack.c.b16 %v2225, %v2223
      %v2260 = vpack.c.b16 %v2228, %v2226
      %v2261 = vpack.c.b16 %v2229, %v2227
      %2294 = vmatprep.subr.bf16.mxu0 %v2231
      %2295 = vmatpush1.bf16.msra.mxu0 %v2230
      %2296 = vmatprep.subr.bf16.mxu0 %v2233
      %2297 = vmatpush1.bf16.msra.mxu0 %v2232
      %2298 = vmatprep.subr.bf16.mxu0 %v2235
      %2299 = vmatpush1.bf16.msra.mxu0 %v2234
      %2300 = vmatprep.subr.bf16.mxu0 %v2237
      %2301 = vmatpush1.bf16.msra.mxu0 %v2236
      %2302 = vmatprep.subr.bf16.mxu0 %v2239
      %2303 = vmatpush1.bf16.msra.mxu0 %v2238
      %2304 = vmatprep.subr.bf16.mxu0 %v2241
      %2305 = vmatpush1.bf16.msra.mxu0 %v2240
      %2306 = vmatprep.subr.bf16.mxu0 %v2243
      %2307 = vmatpush1.bf16.msra.mxu0 %v2242
      %2308 = vmatprep.subr.bf16.mxu0 %v2245
      %2309 = vmatpush1.bf16.msra.mxu0 %v2244
      %2310 = vmatprep.subr.bf16.mxu0 %v2247
      %2311 = vmatpush1.bf16.msra.mxu0 %v2246
      %2312 = vmatprep.subr.bf16.mxu0 %v2249
      %2313 = vmatpush1.bf16.msra.mxu0 %v2248
      %2314 = vmatprep.subr.bf16.mxu0 %v2251
      %2315 = vmatpush1.bf16.msra.mxu0 %v2250
      %2316 = vmatprep.subr.bf16.mxu0 %v2253
      %2317 = vmatpush1.bf16.msra.mxu0 %v2252
      %2318 = vmatprep.subr.bf16.mxu0 %v2255
      %2319 = vmatpush1.bf16.msra.mxu0 %v2254
      %2320 = vmatprep.subr.bf16.mxu0 %v2257
      %2321 = vmatpush1.bf16.msra.mxu0 %v2256
      %2322 = vmatprep.subr.bf16.mxu0 %v2259
      %2323 = vmatpush1.bf16.msra.mxu0 %v2258
      %2324 = vmatprep.subr.bf16.mxu0 %v2261
      %2325 = vmatpush1.bf16.msra.mxu0 %v2260
      %2326 = vmatprep.mubr.bf16.mxu0 %v1044
      %2327 = vmatmul.mubr.bf16.gmra.mrb[0].mxu0 %v1032
      %v2328 = vpop.f32.mrb[0].mxu0
      %v2329 = vadd.f32 %v2116, %v2328
      %v2330 = vpop.f32.mrb[0].mxu0
      %v2331 = vadd.f32 %v2118, %v2330
      %v2332 = vpop.f32.mrb[0].mxu0
      %v2333 = vadd.f32 %v2120, %v2332
      %v2334 = vpop.f32.mrb[0].mxu0
      %v2335 = vadd.f32 %v2122, %v2334
      %2336 = vmatprep.mubr.bf16.mxu0 %v1060
      %2337 = vmatmul.mubr.bf16.gmra.mrb[0].mxu0 %v1052
      %v2338 = vpop.f32.mrb[0].mxu0
      %v2339 = vadd.f32 %v2126, %v2338
      %v2340 = vpop.f32.mrb[0].mxu0
      %v2341 = vadd.f32 %v2128, %v2340
      %v2342 = vpop.f32.mrb[0].mxu0
      %v2343 = vadd.f32 %v2130, %v2342
      %v2344 = vpop.f32.mrb[0].mxu0
      %v2345 = vadd.f32 %v2132, %v2344
      %2346 = vdwg.mxu0
      %s2347 = scalar_lea.vmem %s1, 2048
      %v2348 = vld [vmem:[%s2347] sm:$0xff]
      %v2349 = vld [vmem:[%s2347 + $0x8] sm:$0xff]
      %v2350 = vld [vmem:[%s2347 + $0x10] sm:$0xff]
      %v2351 = vld [vmem:[%s2347 + $0x18] sm:$0xff]
      %v2352 = vld [vmem:[%s2347 + $0x20] sm:$0xff]
      %v2353 = vld [vmem:[%s2347 + $0x28] sm:$0xff]
      %v2354 = vld [vmem:[%s2347 + $0x30] sm:$0xff]
      %v2355 = vld [vmem:[%s2347 + $0x38] sm:$0xff]
      %v2356 = vld [vmem:[%s2347 + $0x40] sm:$0xff]
      %v2357 = vld [vmem:[%s2347 + $0x48] sm:$0xff]
      %v2358 = vld [vmem:[%s2347 + $0x50] sm:$0xff]
      %v2359 = vld [vmem:[%s2347 + $0x58] sm:$0xff]
      %v2360 = vld [vmem:[%s2347 + $0x60] sm:$0xff]
      %v2361 = vld [vmem:[%s2347 + $0x68] sm:$0xff]
      %v2362 = vld [vmem:[%s2347 + $0x70] sm:$0xff]
      %v2363 = vld [vmem:[%s2347 + $0x78] sm:$0xff]
      %v2364 = vld [vmem:[%s2347 + $0x80] sm:$0xff]
      %v2365 = vld [vmem:[%s2347 + $0x88] sm:$0xff]
      %v2366 = vld [vmem:[%s2347 + $0x90] sm:$0xff]
      %v2367 = vld [vmem:[%s2347 + $0x98] sm:$0xff]
      %v2368 = vld [vmem:[%s2347 + $0xa0] sm:$0xff]
      %v2369 = vld [vmem:[%s2347 + $0xa8] sm:$0xff]
      %v2370 = vld [vmem:[%s2347 + $0xb0] sm:$0xff]
      %v2371 = vld [vmem:[%s2347 + $0xb8] sm:$0xff]
      %v2372 = vld [vmem:[%s2347 + $0xc0] sm:$0xff]
      %v2373 = vld [vmem:[%s2347 + $0xc8] sm:$0xff]
      %v2374 = vld [vmem:[%s2347 + $0xd0] sm:$0xff]
      %v2375 = vld [vmem:[%s2347 + $0xd8] sm:$0xff]
      %v2376 = vld [vmem:[%s2347 + $0xe0] sm:$0xff]
      %v2377 = vld [vmem:[%s2347 + $0xe8] sm:$0xff]
      %v2378 = vld [vmem:[%s2347 + $0xf0] sm:$0xff]
      %v2379 = vld [vmem:[%s2347 + $0xf8] sm:$0xff]
      %v2412 = vunpack.c.l.b16 %v2348
      %v2413 = vunpack.c.h.b16 %v2348
      %v2414 = vunpack.c.l.b16 %v2349
      %v2415 = vunpack.c.h.b16 %v2349
      %v2416 = vunpack.c.l.b16 %v2350
      %v2417 = vunpack.c.h.b16 %v2350
      %v2418 = vunpack.c.l.b16 %v2351
      %v2419 = vunpack.c.h.b16 %v2351
      %v2420 = vunpack.c.l.b16 %v2352
      %v2421 = vunpack.c.h.b16 %v2352
      %v2422 = vunpack.c.l.b16 %v2353
      %v2423 = vunpack.c.h.b16 %v2353
      %v2424 = vunpack.c.l.b16 %v2354
      %v2425 = vunpack.c.h.b16 %v2354
      %v2426 = vunpack.c.l.b16 %v2355
      %v2427 = vunpack.c.h.b16 %v2355
      %v2428 = vunpack.c.l.b16 %v2356
      %v2429 = vunpack.c.h.b16 %v2356
      %v2430 = vunpack.c.l.b16 %v2357
      %v2431 = vunpack.c.h.b16 %v2357
      %v2432 = vunpack.c.l.b16 %v2358
      %v2433 = vunpack.c.h.b16 %v2358
      %v2434 = vunpack.c.l.b16 %v2359
      %v2435 = vunpack.c.h.b16 %v2359
      %v2436 = vunpack.c.l.b16 %v2360
      %v2437 = vunpack.c.h.b16 %v2360
      %v2438 = vunpack.c.l.b16 %v2361
      %v2439 = vunpack.c.h.b16 %v2361
      %v2440 = vunpack.c.l.b16 %v2362
      %v2441 = vunpack.c.h.b16 %v2362
      %v2442 = vunpack.c.l.b16 %v2363
      %v2443 = vunpack.c.h.b16 %v2363
      %v2444 = vunpack.c.l.b16 %v2364
      %v2445 = vunpack.c.h.b16 %v2364
      %v2446 = vunpack.c.l.b16 %v2365
      %v2447 = vunpack.c.h.b16 %v2365
      %v2448 = vunpack.c.l.b16 %v2366
      %v2449 = vunpack.c.h.b16 %v2366
      %v2450 = vunpack.c.l.b16 %v2367
      %v2451 = vunpack.c.h.b16 %v2367
      %v2452 = vunpack.c.l.b16 %v2368
      %v2453 = vunpack.c.h.b16 %v2368
      %v2454 = vunpack.c.l.b16 %v2369
      %v2455 = vunpack.c.h.b16 %v2369
      %v2456 = vunpack.c.l.b16 %v2370
      %v2457 = vunpack.c.h.b16 %v2370
      %v2458 = vunpack.c.l.b16 %v2371
      %v2459 = vunpack.c.h.b16 %v2371
      %v2460 = vunpack.c.l.b16 %v2372
      %v2461 = vunpack.c.h.b16 %v2372
      %v2462 = vunpack.c.l.b16 %v2373
      %v2463 = vunpack.c.h.b16 %v2373
      %v2464 = vunpack.c.l.b16 %v2374
      %v2465 = vunpack.c.h.b16 %v2374
      %v2466 = vunpack.c.l.b16 %v2375
      %v2467 = vunpack.c.h.b16 %v2375
      %v2468 = vunpack.c.l.b16 %v2376
      %v2469 = vunpack.c.h.b16 %v2376
      %v2470 = vunpack.c.l.b16 %v2377
      %v2471 = vunpack.c.h.b16 %v2377
      %v2472 = vunpack.c.l.b16 %v2378
      %v2473 = vunpack.c.h.b16 %v2378
      %v2474 = vunpack.c.l.b16 %v2379
      %v2475 = vunpack.c.h.b16 %v2379
      %v2476 = vpack.c.b16 %v2414, %v2412
      %v2477 = vpack.c.b16 %v2415, %v2413
      %v2478 = vpack.c.b16 %v2418, %v2416
      %v2479 = vpack.c.b16 %v2419, %v2417
      %v2480 = vpack.c.b16 %v2422, %v2420
      %v2481 = vpack.c.b16 %v2423, %v2421
      %v2482 = vpack.c.b16 %v2426, %v2424
      %v2483 = vpack.c.b16 %v2427, %v2425
      %v2484 = vpack.c.b16 %v2430, %v2428
      %v2485 = vpack.c.b16 %v2431, %v2429
      %v2486 = vpack.c.b16 %v2434, %v2432
      %v2487 = vpack.c.b16 %v2435, %v2433
      %v2488 = vpack.c.b16 %v2438, %v2436
      %v2489 = vpack.c.b16 %v2439, %v2437
      %v2490 = vpack.c.b16 %v2442, %v2440
      %v2491 = vpack.c.b16 %v2443, %v2441
      %v2492 = vpack.c.b16 %v2446, %v2444
      %v2493 = vpack.c.b16 %v2447, %v2445
      %v2494 = vpack.c.b16 %v2450, %v2448
      %v2495 = vpack.c.b16 %v2451, %v2449
      %v2496 = vpack.c.b16 %v2454, %v2452
      %v2497 = vpack.c.b16 %v2455, %v2453
      %v2498 = vpack.c.b16 %v2458, %v2456
      %v2499 = vpack.c.b16 %v2459, %v2457
      %v2500 = vpack.c.b16 %v2462, %v2460
      %v2501 = vpack.c.b16 %v2463, %v2461
      %v2502 = vpack.c.b16 %v2466, %v2464
      %v2503 = vpack.c.b16 %v2467, %v2465
      %v2504 = vpack.c.b16 %v2470, %v2468
      %v2505 = vpack.c.b16 %v2471, %v2469
      %v2506 = vpack.c.b16 %v2474, %v2472
      %v2507 = vpack.c.b16 %v2475, %v2473
      %2540 = vmatprep.subr.bf16.mxu0 %v2477
      %2541 = vmatpush1.bf16.msra.mxu0 %v2476
      %2542 = vmatprep.subr.bf16.mxu0 %v2479
      %2543 = vmatpush1.bf16.msra.mxu0 %v2478
      %2544 = vmatprep.subr.bf16.mxu0 %v2481
      %2545 = vmatpush1.bf16.msra.mxu0 %v2480
      %2546 = vmatprep.subr.bf16.mxu0 %v2483
      %2547 = vmatpush1.bf16.msra.mxu0 %v2482
      %2548 = vmatprep.subr.bf16.mxu0 %v2485
      %2549 = vmatpush1.bf16.msra.mxu0 %v2484
      %2550 = vmatprep.subr.bf16.mxu0 %v2487
      %2551 = vmatpush1.bf16.msra.mxu0 %v2486
      %2552 = vmatprep.subr.bf16.mxu0 %v2489
      %2553 = vmatpush1.bf16.msra.mxu0 %v2488
      %2554 = vmatprep.subr.bf16.mxu0 %v2491
      %2555 = vmatpush1.bf16.msra.mxu0 %v2490
      %2556 = vmatprep.subr.bf16.mxu0 %v2493
      %2557 = vmatpush1.bf16.msra.mxu0 %v2492
      %2558 = vmatprep.subr.bf16.mxu0 %v2495
      %2559 = vmatpush1.bf16.msra.mxu0 %v2494
      %2560 = vmatprep.subr.bf16.mxu0 %v2497
      %2561 = vmatpush1.bf16.msra.mxu0 %v2496
      %2562 = vmatprep.subr.bf16.mxu0 %v2499
      %2563 = vmatpush1.bf16.msra.mxu0 %v2498
      %2564 = vmatprep.subr.bf16.mxu0 %v2501
      %2565 = vmatpush1.bf16.msra.mxu0 %v2500
      %2566 = vmatprep.subr.bf16.mxu0 %v2503
      %2567 = vmatpush1.bf16.msra.mxu0 %v2502
      %2568 = vmatprep.subr.bf16.mxu0 %v2505
      %2569 = vmatpush1.bf16.msra.mxu0 %v2504
      %2570 = vmatprep.subr.bf16.mxu0 %v2507
      %2571 = vmatpush1.bf16.msra.mxu0 %v2506
      %2572 = vmatprep.mubr.bf16.mxu0 %v1627
      %2573 = vmatmul.mubr.bf16.gmra.mrb[0].mxu0 %v1626
      %v2574 = vpop.f32.mrb[0].mxu0
      %v2575 = vadd.f32 0.0, %v2574
      %v2576 = vpop.f32.mrb[0].mxu0
      %v2577 = vadd.f32 0.0, %v2576
      %v2578 = vpop.f32.mrb[0].mxu0
      %v2579 = vadd.f32 0.0, %v2578
      %v2580 = vpop.f32.mrb[0].mxu0
      %v2581 = vadd.f32 0.0, %v2580
      %2582 = vmatprep.mubr.bf16.mxu0 %v1629
      %2583 = vmatmul.mubr.bf16.gmra.mrb[0].mxu0 %v1628
      %v2584 = vpop.f32.mrb[0].mxu0
      %v2585 = vadd.f32 0.0, %v2584
      %v2586 = vpop.f32.mrb[0].mxu0
      %v2587 = vadd.f32 0.0, %v2586
      %v2588 = vpop.f32.mrb[0].mxu0
      %v2589 = vadd.f32 0.0, %v2588
      %v2590 = vpop.f32.mrb[0].mxu0
      %v2591 = vadd.f32 0.0, %v2590
      %2592 = vdwg.mxu0
      %v2593 = vadd.f32 %v2329, %v2575
      %v2594 = vadd.f32 %v2331, %v2577
      %v2595 = vadd.f32 %v2333, %v2579
      %v2596 = vadd.f32 %v2335, %v2581
      %v2597 = vadd.f32 %v2339, %v2585
      %v2598 = vadd.f32 %v2341, %v2587
      %v2599 = vadd.f32 %v2343, %v2589
      %v2600 = vadd.f32 %v2345, %v2591
      %s2601 = scalar_lea.vmem %s1, 2304
      %v2602 = vld [vmem:[%s2601] sm:$0xff]
      %v2603 = vld [vmem:[%s2601 + $0x8] sm:$0xff]
      %v2604 = vld [vmem:[%s2601 + $0x10] sm:$0xff]
      %v2605 = vld [vmem:[%s2601 + $0x18] sm:$0xff]
      %v2606 = vld [vmem:[%s2601 + $0x20] sm:$0xff]
      %v2607 = vld [vmem:[%s2601 + $0x28] sm:$0xff]
      %v2608 = vld [vmem:[%s2601 + $0x30] sm:$0xff]
      %v2609 = vld [vmem:[%s2601 + $0x38] sm:$0xff]
      %v2610 = vld [vmem:[%s2601 + $0x40] sm:$0xff]
      %v2611 = vld [vmem:[%s2601 + $0x48] sm:$0xff]
      %v2612 = vld [vmem:[%s2601 + $0x50] sm:$0xff]
      %v2613 = vld [vmem:[%s2601 + $0x58] sm:$0xff]
      %v2614 = vld [vmem:[%s2601 + $0x60] sm:$0xff]
      %v2615 = vld [vmem:[%s2601 + $0x68] sm:$0xff]
      %v2616 = vld [vmem:[%s2601 + $0x70] sm:$0xff]
      %v2617 = vld [vmem:[%s2601 + $0x78] sm:$0xff]
      %v2618 = vld [vmem:[%s2601 + $0x80] sm:$0xff]
      %v2619 = vld [vmem:[%s2601 + $0x88] sm:$0xff]
      %v2620 = vld [vmem:[%s2601 + $0x90] sm:$0xff]
      %v2621 = vld [vmem:[%s2601 + $0x98] sm:$0xff]
      %v2622 = vld [vmem:[%s2601 + $0xa0] sm:$0xff]
      %v2623 = vld [vmem:[%s2601 + $0xa8] sm:$0xff]
      %v2624 = vld [vmem:[%s2601 + $0xb0] sm:$0xff]
      %v2625 = vld [vmem:[%s2601 + $0xb8] sm:$0xff]
      %v2626 = vld [vmem:[%s2601 + $0xc0] sm:$0xff]
      %v2627 = vld [vmem:[%s2601 + $0xc8] sm:$0xff]
      %v2628 = vld [vmem:[%s2601 + $0xd0] sm:$0xff]
      %v2629 = vld [vmem:[%s2601 + $0xd8] sm:$0xff]
      %v2630 = vld [vmem:[%s2601 + $0xe0] sm:$0xff]
      %v2631 = vld [vmem:[%s2601 + $0xe8] sm:$0xff]
      %v2632 = vld [vmem:[%s2601 + $0xf0] sm:$0xff]
      %v2633 = vld [vmem:[%s2601 + $0xf8] sm:$0xff]
      %vm2636 = vcmask 1046528
      %v2637 = vrot.slane %v186, 1
      %v2638 = vrot.slane %v188, 1
      %v2639 = vsel %vm2636, %v2637, %v2638
      %v2640 = vrot.slane %v187, 1
      %v2641 = vrot.slane %v189, 1
      %v2642 = vsel %vm2636, %v2640, %v2641
      %v2643 = vrot.slane %v985, 1
      %v2644 = vsel %vm2636, %v2638, %v2643
      %v2645 = vrot.slane %v986, 1
      %v2646 = vsel %vm2636, %v2641, %v2645
      %v2683 = vunpack.c.l.b16 %v2602
      %v2684 = vunpack.c.h.b16 %v2602
      %v2685 = vunpack.c.l.b16 %v2603
      %v2686 = vunpack.c.h.b16 %v2603
      %v2687 = vunpack.c.l.b16 %v2604
      %v2688 = vunpack.c.h.b16 %v2604
      %v2689 = vunpack.c.l.b16 %v2605
      %v2690 = vunpack.c.h.b16 %v2605
      %v2691 = vunpack.c.l.b16 %v2606
      %v2692 = vunpack.c.h.b16 %v2606
      %v2693 = vunpack.c.l.b16 %v2607
      %v2694 = vunpack.c.h.b16 %v2607
      %v2695 = vunpack.c.l.b16 %v2608
      %v2696 = vunpack.c.h.b16 %v2608
      %v2697 = vunpack.c.l.b16 %v2609
      %v2698 = vunpack.c.h.b16 %v2609
      %v2699 = vunpack.c.l.b16 %v2610
      %v2700 = vunpack.c.h.b16 %v2610
      %v2701 = vunpack.c.l.b16 %v2611
      %v2702 = vunpack.c.h.b16 %v2611
      %v2703 = vunpack.c.l.b16 %v2612
      %v2704 = vunpack.c.h.b16 %v2612
      %v2705 = vunpack.c.l.b16 %v2613
      %v2706 = vunpack.c.h.b16 %v2613
      %v2707 = vunpack.c.l.b16 %v2614
      %v2708 = vunpack.c.h.b16 %v2614
      %v2709 = vunpack.c.l.b16 %v2615
      %v2710 = vunpack.c.h.b16 %v2615
      %v2711 = vunpack.c.l.b16 %v2616
      %v2712 = vunpack.c.h.b16 %v2616
      %v2713 = vunpack.c.l.b16 %v2617
      %v2714 = vunpack.c.h.b16 %v2617
      %v2715 = vunpack.c.l.b16 %v2618
      %v2716 = vunpack.c.h.b16 %v2618
      %v2717 = vunpack.c.l.b16 %v2619
      %v2718 = vunpack.c.h.b16 %v2619
      %v2719 = vunpack.c.l.b16 %v2620
      %v2720 = vunpack.c.h.b16 %v2620
      %v2721 = vunpack.c.l.b16 %v2621
      %v2722 = vunpack.c.h.b16 %v2621
      %v2723 = vunpack.c.l.b16 %v2622
      %v2724 = vunpack.c.h.b16 %v2622
      %v2725 = vunpack.c.l.b16 %v2623
      %v2726 = vunpack.c.h.b16 %v2623
      %v2727 = vunpack.c.l.b16 %v2624
      %v2728 = vunpack.c.h.b16 %v2624
      %v2729 = vunpack.c.l.b16 %v2625
      %v2730 = vunpack.c.h.b16 %v2625
      %v2731 = vunpack.c.l.b16 %v2626
      %v2732 = vunpack.c.h.b16 %v2626
      %v2733 = vunpack.c.l.b16 %v2627
      %v2734 = vunpack.c.h.b16 %v2627
      %v2735 = vunpack.c.l.b16 %v2628
      %v2736 = vunpack.c.h.b16 %v2628
      %v2737 = vunpack.c.l.b16 %v2629
      %v2738 = vunpack.c.h.b16 %v2629
      %v2739 = vunpack.c.l.b16 %v2630
      %v2740 = vunpack.c.h.b16 %v2630
      %v2741 = vunpack.c.l.b16 %v2631
      %v2742 = vunpack.c.h.b16 %v2631
      %v2743 = vunpack.c.l.b16 %v2632
      %v2744 = vunpack.c.h.b16 %v2632
      %v2745 = vunpack.c.l.b16 %v2633
      %v2746 = vunpack.c.h.b16 %v2633
      %v2747 = vpack.c.b16 %v2685, %v2683
      %v2748 = vpack.c.b16 %v2686, %v2684
      %v2749 = vpack.c.b16 %v2689, %v2687
      %v2750 = vpack.c.b16 %v2690, %v2688
      %v2751 = vpack.c.b16 %v2693, %v2691
      %v2752 = vpack.c.b16 %v2694, %v2692
      %v2753 = vpack.c.b16 %v2697, %v2695
      %v2754 = vpack.c.b16 %v2698, %v2696
      %v2755 = vpack.c.b16 %v2701, %v2699
      %v2756 = vpack.c.b16 %v2702, %v2700
      %v2757 = vpack.c.b16 %v2705, %v2703
      %v2758 = vpack.c.b16 %v2706, %v2704
      %v2759 = vpack.c.b16 %v2709, %v2707
      %v2760 = vpack.c.b16 %v2710, %v2708
      %v2761 = vpack.c.b16 %v2713, %v2711
      %v2762 = vpack.c.b16 %v2714, %v2712
      %v2763 = vpack.c.b16 %v2717, %v2715
      %v2764 = vpack.c.b16 %v2718, %v2716
      %v2765 = vpack.c.b16 %v2721, %v2719
      %v2766 = vpack.c.b16 %v2722, %v2720
      %v2767 = vpack.c.b16 %v2725, %v2723
      %v2768 = vpack.c.b16 %v2726, %v2724
      %v2769 = vpack.c.b16 %v2729, %v2727
      %v2770 = vpack.c.b16 %v2730, %v2728
      %v2771 = vpack.c.b16 %v2733, %v2731
      %v2772 = vpack.c.b16 %v2734, %v2732
      %v2773 = vpack.c.b16 %v2737, %v2735
      %v2774 = vpack.c.b16 %v2738, %v2736
      %v2775 = vpack.c.b16 %v2741, %v2739
      %v2776 = vpack.c.b16 %v2742, %v2740
      %v2777 = vpack.c.b16 %v2745, %v2743
      %v2778 = vpack.c.b16 %v2746, %v2744
      %2811 = vmatprep.subr.bf16.mxu0 %v2748
      %2812 = vmatpush1.bf16.msra.mxu0 %v2747
      %2813 = vmatprep.subr.bf16.mxu0 %v2750
      %2814 = vmatpush1.bf16.msra.mxu0 %v2749
      %2815 = vmatprep.subr.bf16.mxu0 %v2752
      %2816 = vmatpush1.bf16.msra.mxu0 %v2751
      %2817 = vmatprep.subr.bf16.mxu0 %v2754
      %2818 = vmatpush1.bf16.msra.mxu0 %v2753
      %2819 = vmatprep.subr.bf16.mxu0 %v2756
      %2820 = vmatpush1.bf16.msra.mxu0 %v2755
      %2821 = vmatprep.subr.bf16.mxu0 %v2758
      %2822 = vmatpush1.bf16.msra.mxu0 %v2757
      %2823 = vmatprep.subr.bf16.mxu0 %v2760
      %2824 = vmatpush1.bf16.msra.mxu0 %v2759
      %2825 = vmatprep.subr.bf16.mxu0 %v2762
      %2826 = vmatpush1.bf16.msra.mxu0 %v2761
      %2827 = vmatprep.subr.bf16.mxu0 %v2764
      %2828 = vmatpush1.bf16.msra.mxu0 %v2763
      %2829 = vmatprep.subr.bf16.mxu0 %v2766
      %2830 = vmatpush1.bf16.msra.mxu0 %v2765
      %2831 = vmatprep.subr.bf16.mxu0 %v2768
      %2832 = vmatpush1.bf16.msra.mxu0 %v2767
      %2833 = vmatprep.subr.bf16.mxu0 %v2770
      %2834 = vmatpush1.bf16.msra.mxu0 %v2769
      %2835 = vmatprep.subr.bf16.mxu0 %v2772
      %2836 = vmatpush1.bf16.msra.mxu0 %v2771
      %2837 = vmatprep.subr.bf16.mxu0 %v2774
      %2838 = vmatpush1.bf16.msra.mxu0 %v2773
      %2839 = vmatprep.subr.bf16.mxu0 %v2776
      %2840 = vmatpush1.bf16.msra.mxu0 %v2775
      %2841 = vmatprep.subr.bf16.mxu0 %v2778
      %2842 = vmatpush1.bf16.msra.mxu0 %v2777
      %2843 = vmatprep.mubr.bf16.mxu0 %v2642
      %2844 = vmatmul.mubr.bf16.gmra.mrb[0].mxu0 %v2639
      %v2845 = vpop.f32.mrb[0].mxu0
      %v2846 = vadd.f32 0.0, %v2845
      %v2847 = vpop.f32.mrb[0].mxu0
      %v2848 = vadd.f32 0.0, %v2847
      %v2849 = vpop.f32.mrb[0].mxu0
      %v2850 = vadd.f32 0.0, %v2849
      %v2851 = vpop.f32.mrb[0].mxu0
      %v2852 = vadd.f32 0.0, %v2851
      %2853 = vmatprep.mubr.bf16.mxu0 %v2646
      %2854 = vmatmul.mubr.bf16.gmra.mrb[0].mxu0 %v2644
      %v2855 = vpop.f32.mrb[0].mxu0
      %v2856 = vadd.f32 0.0, %v2855
      %v2857 = vpop.f32.mrb[0].mxu0
      %v2858 = vadd.f32 0.0, %v2857
      %v2859 = vpop.f32.mrb[0].mxu0
      %v2860 = vadd.f32 0.0, %v2859
      %v2861 = vpop.f32.mrb[0].mxu0
      %v2862 = vadd.f32 0.0, %v2861
      %2863 = vdwg.mxu0
      %v2864 = vadd.f32 %v2593, %v2846
      %v2865 = vadd.f32 %v2594, %v2848
      %v2866 = vadd.f32 %v2595, %v2850
      %v2867 = vadd.f32 %v2596, %v2852
      %v2868 = vadd.f32 %v2597, %v2856
      %v2869 = vadd.f32 %v2598, %v2858
      %v2870 = vadd.f32 %v2599, %v2860
      %v2871 = vadd.f32 %v2600, %v2862
      %s2872 = scalar_lea.vmem %s1, 2560
      %v2873 = vld [vmem:[%s2872] sm:$0xff]
      %v2874 = vld [vmem:[%s2872 + $0x8] sm:$0xff]
      %v2875 = vld [vmem:[%s2872 + $0x10] sm:$0xff]
      %v2876 = vld [vmem:[%s2872 + $0x18] sm:$0xff]
      %v2877 = vld [vmem:[%s2872 + $0x20] sm:$0xff]
      %v2878 = vld [vmem:[%s2872 + $0x28] sm:$0xff]
      %v2879 = vld [vmem:[%s2872 + $0x30] sm:$0xff]
      %v2880 = vld [vmem:[%s2872 + $0x38] sm:$0xff]
      %v2881 = vld [vmem:[%s2872 + $0x40] sm:$0xff]
      %v2882 = vld [vmem:[%s2872 + $0x48] sm:$0xff]
      %v2883 = vld [vmem:[%s2872 + $0x50] sm:$0xff]
      %v2884 = vld [vmem:[%s2872 + $0x58] sm:$0xff]
      %v2885 = vld [vmem:[%s2872 + $0x60] sm:$0xff]
      %v2886 = vld [vmem:[%s2872 + $0x68] sm:$0xff]
      %v2887 = vld [vmem:[%s2872 + $0x70] sm:$0xff]
      %v2888 = vld [vmem:[%s2872 + $0x78] sm:$0xff]
      %v2889 = vld [vmem:[%s2872 + $0x80] sm:$0xff]
      %v2890 = vld [vmem:[%s2872 + $0x88] sm:$0xff]
      %v2891 = vld [vmem:[%s2872 + $0x90] sm:$0xff]
      %v2892 = vld [vmem:[%s2872 + $0x98] sm:$0xff]
      %v2893 = vld [vmem:[%s2872 + $0xa0] sm:$0xff]
      %v2894 = vld [vmem:[%s2872 + $0xa8] sm:$0xff]
      %v2895 = vld [vmem:[%s2872 + $0xb0] sm:$0xff]
      %v2896 = vld [vmem:[%s2872 + $0xb8] sm:$0xff]
      %v2897 = vld [vmem:[%s2872 + $0xc0] sm:$0xff]
      %v2898 = vld [vmem:[%s2872 + $0xc8] sm:$0xff]
      %v2899 = vld [vmem:[%s2872 + $0xd0] sm:$0xff]
      %v2900 = vld [vmem:[%s2872 + $0xd8] sm:$0xff]
      %v2901 = vld [vmem:[%s2872 + $0xe0] sm:$0xff]
      %v2902 = vld [vmem:[%s2872 + $0xe8] sm:$0xff]
      %v2903 = vld [vmem:[%s2872 + $0xf0] sm:$0xff]
      %v2904 = vld [vmem:[%s2872 + $0xf8] sm:$0xff]
      %v2906 = vrot.slane %v222, 1
      %v2907 = vrot.slane %v223, 1
      %v2908 = vsel %vm2636, %v2906, %v2907
      %v2909 = vrot.slane %v1286, 1
      %v2910 = vsel %vm2636, %v2907, %v2909
      %2911 = vrot.lane.b32.xlu0 %v2639, 120
      %v2912 = vpop.permute.xlu0 %2911
      %2913 = vrot.lane.b32.xlu0 %v2642, 120
      %v2914 = vpop.permute.xlu0 %2913
      %2915 = vrot.lane.b32.xlu0 %v2908, 120
      %v2916 = vpop.permute.xlu0 %2915
      %2917 = vrot.lane.b32.xlu0 %v2644, 120
      %v2918 = vpop.permute.xlu0 %2917
      %2919 = vrot.lane.b32.xlu0 %v2646, 120
      %v2920 = vpop.permute.xlu0 %2919
      %2921 = vrot.lane.b32.xlu0 %v2910, 120
      %v2922 = vpop.permute.xlu0 %2921
      %v2923 = vsel %vm275, %v2912, %v2914
      %v2924 = vsel %vm275, %v2914, %v2916
      %v2925 = vsel %vm275, %v2918, %v2920
      %v2926 = vsel %vm275, %v2920, %v2922
      %v2963 = vunpack.c.l.b16 %v2873
      %v2964 = vunpack.c.h.b16 %v2873
      %v2965 = vunpack.c.l.b16 %v2874
      %v2966 = vunpack.c.h.b16 %v2874
      %v2967 = vunpack.c.l.b16 %v2875
      %v2968 = vunpack.c.h.b16 %v2875
      %v2969 = vunpack.c.l.b16 %v2876
      %v2970 = vunpack.c.h.b16 %v2876
      %v2971 = vunpack.c.l.b16 %v2877
      %v2972 = vunpack.c.h.b16 %v2877
      %v2973 = vunpack.c.l.b16 %v2878
      %v2974 = vunpack.c.h.b16 %v2878
      %v2975 = vunpack.c.l.b16 %v2879
      %v2976 = vunpack.c.h.b16 %v2879
      %v2977 = vunpack.c.l.b16 %v2880
      %v2978 = vunpack.c.h.b16 %v2880
      %v2979 = vunpack.c.l.b16 %v2881
      %v2980 = vunpack.c.h.b16 %v2881
      %v2981 = vunpack.c.l.b16 %v2882
      %v2982 = vunpack.c.h.b16 %v2882
      %v2983 = vunpack.c.l.b16 %v2883
      %v2984 = vunpack.c.h.b16 %v2883
      %v2985 = vunpack.c.l.b16 %v2884
      %v2986 = vunpack.c.h.b16 %v2884
      %v2987 = vunpack.c.l.b16 %v2885
      %v2988 = vunpack.c.h.b16 %v2885
      %v2989 = vunpack.c.l.b16 %v2886
      %v2990 = vunpack.c.h.b16 %v2886
      %v2991 = vunpack.c.l.b16 %v2887
      %v2992 = vunpack.c.h.b16 %v2887
      %v2993 = vunpack.c.l.b16 %v2888
      %v2994 = vunpack.c.h.b16 %v2888
      %v2995 = vunpack.c.l.b16 %v2889
      %v2996 = vunpack.c.h.b16 %v2889
      %v2997 = vunpack.c.l.b16 %v2890
      %v2998 = vunpack.c.h.b16 %v2890
      %v2999 = vunpack.c.l.b16 %v2891
      %v3000 = vunpack.c.h.b16 %v2891
      %v3001 = vunpack.c.l.b16 %v2892
      %v3002 = vunpack.c.h.b16 %v2892
      %v3003 = vunpack.c.l.b16 %v2893
      %v3004 = vunpack.c.h.b16 %v2893
      %v3005 = vunpack.c.l.b16 %v2894
      %v3006 = vunpack.c.h.b16 %v2894
      %v3007 = vunpack.c.l.b16 %v2895
      %v3008 = vunpack.c.h.b16 %v2895
      %v3009 = vunpack.c.l.b16 %v2896
      %v3010 = vunpack.c.h.b16 %v2896
      %v3011 = vunpack.c.l.b16 %v2897
      %v3012 = vunpack.c.h.b16 %v2897
      %v3013 = vunpack.c.l.b16 %v2898
      %v3014 = vunpack.c.h.b16 %v2898
      %v3015 = vunpack.c.l.b16 %v2899
      %v3016 = vunpack.c.h.b16 %v2899
      %v3017 = vunpack.c.l.b16 %v2900
      %v3018 = vunpack.c.h.b16 %v2900
      %v3019 = vunpack.c.l.b16 %v2901
      %v3020 = vunpack.c.h.b16 %v2901
      %v3021 = vunpack.c.l.b16 %v2902
      %v3022 = vunpack.c.h.b16 %v2902
      %v3023 = vunpack.c.l.b16 %v2903
      %v3024 = vunpack.c.h.b16 %v2903
      %v3025 = vunpack.c.l.b16 %v2904
      %v3026 = vunpack.c.h.b16 %v2904
      %v3027 = vpack.c.b16 %v2965, %v2963
      %v3028 = vpack.c.b16 %v2966, %v2964
      %v3029 = vpack.c.b16 %v2969, %v2967
      %v3030 = vpack.c.b16 %v2970, %v2968
      %v3031 = vpack.c.b16 %v2973, %v2971
      %v3032 = vpack.c.b16 %v2974, %v2972
      %v3033 = vpack.c.b16 %v2977, %v2975
      %v3034 = vpack.c.b16 %v2978, %v2976
      %v3035 = vpack.c.b16 %v2981, %v2979
      %v3036 = vpack.c.b16 %v2982, %v2980
      %v3037 = vpack.c.b16 %v2985, %v2983
      %v3038 = vpack.c.b16 %v2986, %v2984
      %v3039 = vpack.c.b16 %v2989, %v2987
      %v3040 = vpack.c.b16 %v2990, %v2988
      %v3041 = vpack.c.b16 %v2993, %v2991
      %v3042 = vpack.c.b16 %v2994, %v2992
      %v3043 = vpack.c.b16 %v2997, %v2995
      %v3044 = vpack.c.b16 %v2998, %v2996
      %v3045 = vpack.c.b16 %v3001, %v2999
      %v3046 = vpack.c.b16 %v3002, %v3000
      %v3047 = vpack.c.b16 %v3005, %v3003
      %v3048 = vpack.c.b16 %v3006, %v3004
      %v3049 = vpack.c.b16 %v3009, %v3007
      %v3050 = vpack.c.b16 %v3010, %v3008
      %v3051 = vpack.c.b16 %v3013, %v3011
      %v3052 = vpack.c.b16 %v3014, %v3012
      %v3053 = vpack.c.b16 %v3017, %v3015
      %v3054 = vpack.c.b16 %v3018, %v3016
      %v3055 = vpack.c.b16 %v3021, %v3019
      %v3056 = vpack.c.b16 %v3022, %v3020
      %v3057 = vpack.c.b16 %v3025, %v3023
      %v3058 = vpack.c.b16 %v3026, %v3024
      %3091 = vmatprep.subr.bf16.mxu0 %v3028
      %3092 = vmatpush1.bf16.msra.mxu0 %v3027
      %3093 = vmatprep.subr.bf16.mxu0 %v3030
      %3094 = vmatpush1.bf16.msra.mxu0 %v3029
      %3095 = vmatprep.subr.bf16.mxu0 %v3032
      %3096 = vmatpush1.bf16.msra.mxu0 %v3031
      %3097 = vmatprep.subr.bf16.mxu0 %v3034
      %3098 = vmatpush1.bf16.msra.mxu0 %v3033
      %3099 = vmatprep.subr.bf16.mxu0 %v3036
      %3100 = vmatpush1.bf16.msra.mxu0 %v3035
      %3101 = vmatprep.subr.bf16.mxu0 %v3038
      %3102 = vmatpush1.bf16.msra.mxu0 %v3037
      %3103 = vmatprep.subr.bf16.mxu0 %v3040
      %3104 = vmatpush1.bf16.msra.mxu0 %v3039
      %3105 = vmatprep.subr.bf16.mxu0 %v3042
      %3106 = vmatpush1.bf16.msra.mxu0 %v3041
      %3107 = vmatprep.subr.bf16.mxu0 %v3044
      %3108 = vmatpush1.bf16.msra.mxu0 %v3043
      %3109 = vmatprep.subr.bf16.mxu0 %v3046
      %3110 = vmatpush1.bf16.msra.mxu0 %v3045
      %3111 = vmatprep.subr.bf16.mxu0 %v3048
      %3112 = vmatpush1.bf16.msra.mxu0 %v3047
      %3113 = vmatprep.subr.bf16.mxu0 %v3050
      %3114 = vmatpush1.bf16.msra.mxu0 %v3049
      %3115 = vmatprep.subr.bf16.mxu0 %v3052
      %3116 = vmatpush1.bf16.msra.mxu0 %v3051
      %3117 = vmatprep.subr.bf16.mxu0 %v3054
      %3118 = vmatpush1.bf16.msra.mxu0 %v3053
      %3119 = vmatprep.subr.bf16.mxu0 %v3056
      %3120 = vmatpush1.bf16.msra.mxu0 %v3055
      %3121 = vmatprep.subr.bf16.mxu0 %v3058
      %3122 = vmatpush1.bf16.msra.mxu0 %v3057
      %3123 = vmatprep.mubr.bf16.mxu0 %v2924
      %3124 = vmatmul.mubr.bf16.gmra.mrb[0].mxu0 %v2923
      %v3125 = vpop.f32.mrb[0].mxu0
      %v3126 = vadd.f32 0.0, %v3125
      %v3127 = vpop.f32.mrb[0].mxu0
      %v3128 = vadd.f32 0.0, %v3127
      %v3129 = vpop.f32.mrb[0].mxu0
      %v3130 = vadd.f32 0.0, %v3129
      %v3131 = vpop.f32.mrb[0].mxu0
      %v3132 = vadd.f32 0.0, %v3131
      %3133 = vmatprep.mubr.bf16.mxu0 %v2926
      %3134 = vmatmul.mubr.bf16.gmra.mrb[0].mxu0 %v2925
      %v3135 = vpop.f32.mrb[0].mxu0
      %v3136 = vadd.f32 0.0, %v3135
      %v3137 = vpop.f32.mrb[0].mxu0
      %v3138 = vadd.f32 0.0, %v3137
      %v3139 = vpop.f32.mrb[0].mxu0
      %v3140 = vadd.f32 0.0, %v3139
      %v3141 = vpop.f32.mrb[0].mxu0
      %v3142 = vadd.f32 0.0, %v3141
      %3143 = vdwg.mxu0
      %v3144 = vadd.f32 %v2864, %v3126
      %v3145 = vadd.f32 %v2865, %v3128
      %v3146 = vadd.f32 %v2866, %v3130
      %v3147 = vadd.f32 %v2867, %v3132
      %v3148 = vadd.f32 %v2868, %v3136
      %v3149 = vadd.f32 %v2869, %v3138
      %v3150 = vadd.f32 %v2870, %v3140
      %v3151 = vadd.f32 %v2871, %v3142
      %s3152 = scalar_lea.vmem %s1, 2816
      %v3153 = vld [vmem:[%s3152] sm:$0xff]
      %v3154 = vld [vmem:[%s3152 + $0x8] sm:$0xff]
      %v3155 = vld [vmem:[%s3152 + $0x10] sm:$0xff]
      %v3156 = vld [vmem:[%s3152 + $0x18] sm:$0xff]
      %v3157 = vld [vmem:[%s3152 + $0x20] sm:$0xff]
      %v3158 = vld [vmem:[%s3152 + $0x28] sm:$0xff]
      %v3159 = vld [vmem:[%s3152 + $0x30] sm:$0xff]
      %v3160 = vld [vmem:[%s3152 + $0x38] sm:$0xff]
      %v3161 = vld [vmem:[%s3152 + $0x40] sm:$0xff]
      %v3162 = vld [vmem:[%s3152 + $0x48] sm:$0xff]
      %v3163 = vld [vmem:[%s3152 + $0x50] sm:$0xff]
      %v3164 = vld [vmem:[%s3152 + $0x58] sm:$0xff]
      %v3165 = vld [vmem:[%s3152 + $0x60] sm:$0xff]
      %v3166 = vld [vmem:[%s3152 + $0x68] sm:$0xff]
      %v3167 = vld [vmem:[%s3152 + $0x70] sm:$0xff]
      %v3168 = vld [vmem:[%s3152 + $0x78] sm:$0xff]
      %v3169 = vld [vmem:[%s3152 + $0x80] sm:$0xff]
      %v3170 = vld [vmem:[%s3152 + $0x88] sm:$0xff]
      %v3171 = vld [vmem:[%s3152 + $0x90] sm:$0xff]
      %v3172 = vld [vmem:[%s3152 + $0x98] sm:$0xff]
      %v3173 = vld [vmem:[%s3152 + $0xa0] sm:$0xff]
      %v3174 = vld [vmem:[%s3152 + $0xa8] sm:$0xff]
      %v3175 = vld [vmem:[%s3152 + $0xb0] sm:$0xff]
      %v3176 = vld [vmem:[%s3152 + $0xb8] sm:$0xff]
      %v3177 = vld [vmem:[%s3152 + $0xc0] sm:$0xff]
      %v3178 = vld [vmem:[%s3152 + $0xc8] sm:$0xff]
      %v3179 = vld [vmem:[%s3152 + $0xd0] sm:$0xff]
      %v3180 = vld [vmem:[%s3152 + $0xd8] sm:$0xff]
      %v3181 = vld [vmem:[%s3152 + $0xe0] sm:$0xff]
      %v3182 = vld [vmem:[%s3152 + $0xe8] sm:$0xff]
      %v3183 = vld [vmem:[%s3152 + $0xf0] sm:$0xff]
      %v3184 = vld [vmem:[%s3152 + $0xf8] sm:$0xff]
      %3185 = vrot.lane.b32.xlu0 %v2639, 112
      %v3186 = vpop.permute.xlu0 %3185
      %3187 = vrot.lane.b32.xlu0 %v2642, 112
      %v3188 = vpop.permute.xlu0 %3187
      %3189 = vrot.lane.b32.xlu0 %v2908, 112
      %v3190 = vpop.permute.xlu0 %3189
      %3191 = vrot.lane.b32.xlu0 %v2644, 112
      %v3192 = vpop.permute.xlu0 %3191
      %3193 = vrot.lane.b32.xlu0 %v2646, 112
      %v3194 = vpop.permute.xlu0 %3193
      %3195 = vrot.lane.b32.xlu0 %v2910, 112
      %v3196 = vpop.permute.xlu0 %3195
      %v3197 = vsel %vm755, %v3186, %v3188
      %v3198 = vsel %vm755, %v3188, %v3190
      %v3199 = vsel %vm755, %v3192, %v3194
      %v3200 = vsel %vm755, %v3194, %v3196
      %v3237 = vunpack.c.l.b16 %v3153
      %v3238 = vunpack.c.h.b16 %v3153
      %v3239 = vunpack.c.l.b16 %v3154
      %v3240 = vunpack.c.h.b16 %v3154
      %v3241 = vunpack.c.l.b16 %v3155
      %v3242 = vunpack.c.h.b16 %v3155
      %v3243 = vunpack.c.l.b16 %v3156
      %v3244 = vunpack.c.h.b16 %v3156
      %v3245 = vunpack.c.l.b16 %v3157
      %v3246 = vunpack.c.h.b16 %v3157
      %v3247 = vunpack.c.l.b16 %v3158
      %v3248 = vunpack.c.h.b16 %v3158
      %v3249 = vunpack.c.l.b16 %v3159
      %v3250 = vunpack.c.h.b16 %v3159
      %v3251 = vunpack.c.l.b16 %v3160
      %v3252 = vunpack.c.h.b16 %v3160
      %v3253 = vunpack.c.l.b16 %v3161
      %v3254 = vunpack.c.h.b16 %v3161
      %v3255 = vunpack.c.l.b16 %v3162
      %v3256 = vunpack.c.h.b16 %v3162
      %v3257 = vunpack.c.l.b16 %v3163
      %v3258 = vunpack.c.h.b16 %v3163
      %v3259 = vunpack.c.l.b16 %v3164
      %v3260 = vunpack.c.h.b16 %v3164
      %v3261 = vunpack.c.l.b16 %v3165
      %v3262 = vunpack.c.h.b16 %v3165
      %v3263 = vunpack.c.l.b16 %v3166
      %v3264 = vunpack.c.h.b16 %v3166
      %v3265 = vunpack.c.l.b16 %v3167
      %v3266 = vunpack.c.h.b16 %v3167
      %v3267 = vunpack.c.l.b16 %v3168
      %v3268 = vunpack.c.h.b16 %v3168
      %v3269 = vunpack.c.l.b16 %v3169
      %v3270 = vunpack.c.h.b16 %v3169
      %v3271 = vunpack.c.l.b16 %v3170
      %v3272 = vunpack.c.h.b16 %v3170
      %v3273 = vunpack.c.l.b16 %v3171
      %v3274 = vunpack.c.h.b16 %v3171
      %v3275 = vunpack.c.l.b16 %v3172
      %v3276 = vunpack.c.h.b16 %v3172
      %v3277 = vunpack.c.l.b16 %v3173
      %v3278 = vunpack.c.h.b16 %v3173
      %v3279 = vunpack.c.l.b16 %v3174
      %v3280 = vunpack.c.h.b16 %v3174
      %v3281 = vunpack.c.l.b16 %v3175
      %v3282 = vunpack.c.h.b16 %v3175
      %v3283 = vunpack.c.l.b16 %v3176
      %v3284 = vunpack.c.h.b16 %v3176
      %v3285 = vunpack.c.l.b16 %v3177
      %v3286 = vunpack.c.h.b16 %v3177
      %v3287 = vunpack.c.l.b16 %v3178
      %v3288 = vunpack.c.h.b16 %v3178
      %v3289 = vunpack.c.l.b16 %v3179
      %v3290 = vunpack.c.h.b16 %v3179
      %v3291 = vunpack.c.l.b16 %v3180
      %v3292 = vunpack.c.h.b16 %v3180
      %v3293 = vunpack.c.l.b16 %v3181
      %v3294 = vunpack.c.h.b16 %v3181
      %v3295 = vunpack.c.l.b16 %v3182
      %v3296 = vunpack.c.h.b16 %v3182
      %v3297 = vunpack.c.l.b16 %v3183
      %v3298 = vunpack.c.h.b16 %v3183
      %v3299 = vunpack.c.l.b16 %v3184
      %v3300 = vunpack.c.h.b16 %v3184
      %v3301 = vpack.c.b16 %v3239, %v3237
      %v3302 = vpack.c.b16 %v3240, %v3238
      %v3303 = vpack.c.b16 %v3243, %v3241
      %v3304 = vpack.c.b16 %v3244, %v3242
      %v3305 = vpack.c.b16 %v3247, %v3245
      %v3306 = vpack.c.b16 %v3248, %v3246
      %v3307 = vpack.c.b16 %v3251, %v3249
      %v3308 = vpack.c.b16 %v3252, %v3250
      %v3309 = vpack.c.b16 %v3255, %v3253
      %v3310 = vpack.c.b16 %v3256, %v3254
      %v3311 = vpack.c.b16 %v3259, %v3257
      %v3312 = vpack.c.b16 %v3260, %v3258
      %v3313 = vpack.c.b16 %v3263, %v3261
      %v3314 = vpack.c.b16 %v3264, %v3262
      %v3315 = vpack.c.b16 %v3267, %v3265
      %v3316 = vpack.c.b16 %v3268, %v3266
      %v3317 = vpack.c.b16 %v3271, %v3269
      %v3318 = vpack.c.b16 %v3272, %v3270
      %v3319 = vpack.c.b16 %v3275, %v3273
      %v3320 = vpack.c.b16 %v3276, %v3274
      %v3321 = vpack.c.b16 %v3279, %v3277
      %v3322 = vpack.c.b16 %v3280, %v3278
      %v3323 = vpack.c.b16 %v3283, %v3281
      %v3324 = vpack.c.b16 %v3284, %v3282
      %v3325 = vpack.c.b16 %v3287, %v3285
      %v3326 = vpack.c.b16 %v3288, %v3286
      %v3327 = vpack.c.b16 %v3291, %v3289
      %v3328 = vpack.c.b16 %v3292, %v3290
      %v3329 = vpack.c.b16 %v3295, %v3293
      %v3330 = vpack.c.b16 %v3296, %v3294
      %v3331 = vpack.c.b16 %v3299, %v3297
      %v3332 = vpack.c.b16 %v3300, %v3298
      %3365 = vmatprep.subr.bf16.mxu0 %v3302
      %3366 = vmatpush1.bf16.msra.mxu0 %v3301
      %3367 = vmatprep.subr.bf16.mxu0 %v3304
      %3368 = vmatpush1.bf16.msra.mxu0 %v3303
      %3369 = vmatprep.subr.bf16.mxu0 %v3306
      %3370 = vmatpush1.bf16.msra.mxu0 %v3305
      %3371 = vmatprep.subr.bf16.mxu0 %v3308
      %3372 = vmatpush1.bf16.msra.mxu0 %v3307
      %3373 = vmatprep.subr.bf16.mxu0 %v3310
      %3374 = vmatpush1.bf16.msra.mxu0 %v3309
      %3375 = vmatprep.subr.bf16.mxu0 %v3312
      %3376 = vmatpush1.bf16.msra.mxu0 %v3311
      %3377 = vmatprep.subr.bf16.mxu0 %v3314
      %3378 = vmatpush1.bf16.msra.mxu0 %v3313
      %3379 = vmatprep.subr.bf16.mxu0 %v3316
      %3380 = vmatpush1.bf16.msra.mxu0 %v3315
      %3381 = vmatprep.subr.bf16.mxu0 %v3318
      %3382 = vmatpush1.bf16.msra.mxu0 %v3317
      %3383 = vmatprep.subr.bf16.mxu0 %v3320
      %3384 = vmatpush1.bf16.msra.mxu0 %v3319
      %3385 = vmatprep.subr.bf16.mxu0 %v3322
      %3386 = vmatpush1.bf16.msra.mxu0 %v3321
      %3387 = vmatprep.subr.bf16.mxu0 %v3324
      %3388 = vmatpush1.bf16.msra.mxu0 %v3323
      %3389 = vmatprep.subr.bf16.mxu0 %v3326
      %3390 = vmatpush1.bf16.msra.mxu0 %v3325
      %3391 = vmatprep.subr.bf16.mxu0 %v3328
      %3392 = vmatpush1.bf16.msra.mxu0 %v3327
      %3393 = vmatprep.subr.bf16.mxu0 %v3330
      %3394 = vmatpush1.bf16.msra.mxu0 %v3329
      %3395 = vmatprep.subr.bf16.mxu0 %v3332
      %3396 = vmatpush1.bf16.msra.mxu0 %v3331
      %3397 = vmatprep.mubr.bf16.mxu0 %v3198
      %3398 = vmatmul.mubr.bf16.gmra.mrb[0].mxu0 %v3197
      %v3399 = vpop.f32.mrb[0].mxu0
      %v3400 = vadd.f32 0.0, %v3399
      %v3401 = vpop.f32.mrb[0].mxu0
      %v3402 = vadd.f32 0.0, %v3401
      %v3403 = vpop.f32.mrb[0].mxu0
      %v3404 = vadd.f32 0.0, %v3403
      %v3405 = vpop.f32.mrb[0].mxu0
      %v3406 = vadd.f32 0.0, %v3405
      %3407 = vmatprep.mubr.bf16.mxu0 %v3200
      %3408 = vmatmul.mubr.bf16.gmra.mrb[0].mxu0 %v3199
      %v3409 = vpop.f32.mrb[0].mxu0
      %v3410 = vadd.f32 0.0, %v3409
      %v3411 = vpop.f32.mrb[0].mxu0
      %v3412 = vadd.f32 0.0, %v3411
      %v3413 = vpop.f32.mrb[0].mxu0
      %v3414 = vadd.f32 0.0, %v3413
      %v3415 = vpop.f32.mrb[0].mxu0
      %v3416 = vadd.f32 0.0, %v3415
      %3417 = vdwg.mxu0
      %v3418 = vadd.f32 %v3144, %v3400
      %v3419 = vadd.f32 %v3145, %v3402
      %v3420 = vadd.f32 %v3146, %v3404
      %v3421 = vadd.f32 %v3147, %v3406
      %v3422 = vadd.f32 %v3148, %v3410
      %v3423 = vadd.f32 %v3149, %v3412
      %v3424 = vadd.f32 %v3150, %v3414
      %v3425 = vadd.f32 %v3151, %v3416
      %v3426 = vld [vmem:[%s2] sm:$0x3]
      %v3428 = vlaneseq
      %v3429 = vshrl.u32 %v3428, 7
      %v3430 = vsub.s32 0, %v3429
      %v3431 = vrot.slane %v3426, %v3430
      %v3432 = vlaneseq
      %v3433 = vshrl.u32 %v3432, 7
      %v3434 = vsub.s32 1, %v3433
      %v3435 = vrot.slane %v3426, %v3434
      %v3438 = vadd.f32 %v1847, %v3431
      %v3439 = vadd.f32 %v1848, %v3435
      %v3440 = vadd.f32 %v1849, %v3431
      %v3441 = vadd.f32 %v1850, %v3435
      %v3442 = vadd.f32 %v1851, %v3431
      %v3443 = vadd.f32 %v1852, %v3435
      %v3444 = vadd.f32 %v1853, %v3431
      %v3445 = vadd.f32 %v1854, %v3435
      %3446 = vst [vmem:[%s170] sm:$0xff] %v3438
      %vm3447 = vcmask 523264
      %3448 = vst.msk [vmem:[%s170 + $0x8] sm:$0xff] %vm3447, %v3439
      %3449 = vst [vmem:[%s170 + $0x10] sm:$0xff] %v3440
      %3450 = vst.msk [vmem:[%s170 + $0x18] sm:$0xff] %vm3447, %v3441
      %3451 = vst [vmem:[%s170 + $0x20] sm:$0xff] %v3442
      %3452 = vst.msk [vmem:[%s170 + $0x28] sm:$0xff] %vm3447, %v3443
      %3453 = vst [vmem:[%s170 + $0x30] sm:$0xff] %v3444
      %3454 = vst.msk [vmem:[%s170 + $0x38] sm:$0xff] %vm3447, %v3445
      %v3455 = vld [vmem:[%s2] sm:$0x3]
      %v3457 = vlaneseq
      %v3458 = vshrl.u32 %v3457, 7
      %v3459 = vsub.s32 0, %v3458
      %v3460 = vrot.slane %v3455, %v3459
      %v3461 = vlaneseq
      %v3462 = vshrl.u32 %v3461, 7
      %v3463 = vsub.s32 1, %v3462
      %v3464 = vrot.slane %v3455, %v3463
      %v3467 = vadd.f32 %v3418, %v3460
      %v3468 = vadd.f32 %v3419, %v3464
      %v3469 = vadd.f32 %v3420, %v3460
      %v3470 = vadd.f32 %v3421, %v3464
      %v3471 = vadd.f32 %v3422, %v3460
      %v3472 = vadd.f32 %v3423, %v3464
      %v3473 = vadd.f32 %v3424, %v3460
      %v3474 = vadd.f32 %v3425, %v3464
      %s3475 = scalar_lea.vmem %s170, 64
      %3476 = vst [vmem:[%s3475] sm:$0xff] %v3467
      %3477 = vst.msk [vmem:[%s3475 + $0x8] sm:$0xff] %vm3447, %v3468
      %3478 = vst [vmem:[%s3475 + $0x10] sm:$0xff] %v3469
      %3479 = vst.msk [vmem:[%s3475 + $0x18] sm:$0xff] %vm3447, %v3470
      %3480 = vst [vmem:[%s3475 + $0x20] sm:$0xff] %v3471
      %3481 = vst.msk [vmem:[%s3475 + $0x28] sm:$0xff] %vm3447, %v3472
      %3482 = vst [vmem:[%s3475 + $0x30] sm:$0xff] %v3473
      %3483 = vst.msk [vmem:[%s3475 + $0x38] sm:$0xff] %vm3447, %v3474
      %p3484 = scmp.lt.s32.totalorder %s14, 3
      %s3485 = scalar_select %p3484, %s14, 3
      %s3486 = smul.addr %s3485, 16
      %s3487 = smul.addr %s3486, 8
      %s3488 = scalar_lea.vmem %s3, %s3487
      // Predicated region
      $region33: #{decoder_forward.7} parent=31 // pred_check
        %p3489 = pneg %p100
      $region34: #{decoder_forward.7} parent=31 // pred_check_branch
        %3491 = sbr.rel (%p3489) target = $region36
      $region35: #{decoder_forward.7} parent=31 // pred_region
        _
      $region36: #{decoder_forward.7} parent=31 // pred_fallthru
        _
    $region32: #{decoder_forward.7} parent=5 // pred_fallthru
      _
    %p3492 = scmp.le.s32.totalorder 2, %s9
    // Predicated region
    $region37: #{decoder_forward.7} parent=5 // pred_check
      %p3493 = pneg %p3492
    $region38: #{decoder_forward.7} parent=5 // pred_check_branch
      %3495 = sbr.rel (%p3493) target = $region40
    $region39: #{decoder_forward.7} parent=5 // pred_region
      %s3496 = ssub.s32 %s9, 2
      // Predicated region
      $region41: #{decoder_forward.7} parent=39 // pred_check
        %p3497 = pneg %p106
      $region42: #{decoder_forward.7} parent=39 // pred_check_branch
        %3499 = sbr.rel (%p3497) target = $region44
      $region43: #{decoder_forward.7} parent=39 // pred_region
        %p3500 = scmp.lt.s32.totalorder %s15, 3
        %s3501 = scalar_select %p3500, %s15, 3
        %s3502 = smul.addr %s3501, 16
        %s3503 = smul.addr %s3502, 8
        %s3504 = scalar_lea.vmem %s3, %s3503
      $region44: #{decoder_forward.7} parent=39 // pred_fallthru
        _
    $region40: #{decoder_forward.7} parent=5 // pred_fallthru
      _
  $region6: #{decoder_forward.7} parent=0 // loop_footer
    %s13 = sadd.s32 1, %s9
  $region7: #{decoder_forward.7} parent=0 // loop_footer_branch
    %8 = sbr.rel target = $region3
  $region8: #{decoder_forward.7} parent=0 // loop_exit
    _

</llo_original>
